<compile_context>
chip_gen: v6e
topology: v6e:2x2x1
jax: 0.10.0
libtpu: 0.0.40
codegen_flags: <defaults>
</compile_context>

<pallas_src>
import functools
import math

import jax
import jax.numpy as jnp
from jax import lax
from jax.experimental import pallas as pl
from jax.experimental.pallas import tpu as pltpu


def _round_up(x, m):
    return ((x + m - 1) // m) * m


# ----------------------------------------------------------------------------
# Tiled matmul + bias (+ optional ReLU) Pallas kernel.
#   grid = (M/tm, N/tn, K/tk); K is the last ("arbitrary") axis, the f32
#   output block is resident across K and used directly as the accumulator.
#   bf16 operands, f32 accumulation.
# ----------------------------------------------------------------------------
def _matmul_bias_kernel(a_ref, b_ref, bias_ref, o_ref, *, relu):
    k = pl.program_id(2)

    @pl.when(k == 0)
    def _():
        o_ref[...] = jnp.zeros_like(o_ref)

    o_ref[...] += jnp.dot(a_ref[...], b_ref[...],
                          preferred_element_type=jnp.float32)

    @pl.when(k == pl.num_programs(2) - 1)
    def _():
        r = o_ref[...] + bias_ref[...]
        if relu:
            r = jnp.maximum(r, 0.0)
        o_ref[...] = r


def matmul_bias(a, b, bias, relu=False):
    """(M,K) @ (K,N) + bias[N], optional ReLU. bf16 MXU inputs, f32 accum/out."""
    M, K = a.shape
    K2, N = b.shape
    assert K == K2

    # Tile selection: keep blocks MXU-shaped and (8,128)-aligned; pad with
    # zeros (zeros do not change the matmul) and slice the result back.
    tm = 256 if M > 256 else _round_up(M, 8)
    tn = 512 if N > 512 else _round_up(N, 128)
    tk = 1024 if K > 1024 else _round_up(K, 128)
    Mp, Np, Kp = _round_up(M, tm), _round_up(N, tn), _round_up(K, tk)

    a_p = a.astype(jnp.bfloat16)
    if (Mp, Kp) != (M, K):
        a_p = jnp.pad(a_p, ((0, Mp - M), (0, Kp - K)))
    b_p = b.astype(jnp.bfloat16)
    if (Kp, Np) != (K, N):
        b_p = jnp.pad(b_p, ((0, Kp - K), (0, Np - N)))
    bias_p = bias.astype(jnp.float32).reshape(1, N)
    if Np != N:
        bias_p = jnp.pad(bias_p, ((0, 0), (0, Np - N)))

    kern = functools.partial(_matmul_bias_kernel, relu=relu)
    out = pl.pallas_call(
        kern,
        out_shape=jax.ShapeDtypeStruct((Mp, Np), jnp.float32),
        grid_spec=pltpu.PrefetchScalarGridSpec(
            num_scalar_prefetch=0,
            grid=(Mp // tm, Np // tn, Kp // tk),
            in_specs=[
                pl.BlockSpec((tm, tk), lambda i, j, k: (i, k)),
                pl.BlockSpec((tk, tn), lambda i, j, k: (k, j)),
                pl.BlockSpec((1, tn), lambda i, j, k: (0, j)),
            ],
            out_specs=pl.BlockSpec((tm, tn), lambda i, j, k: (i, j)),
        ),
        compiler_params=pltpu.CompilerParams(
            dimension_semantics=("parallel", "parallel", "arbitrary"),
        ),
    )(a_p, b_p, bias_p)

    if (Mp, Np) != (M, N):
        out = out[:M, :N]
    return out


# ----------------------------------------------------------------------------
# Bidirectional GRU recurrence kernel.
#   grid = (2,) over {fwd, bwd} directions, marked "parallel" (uses the second
#   TensorCore on v7x).  The whole time loop runs inside the kernel with
#   W_hh^T (bf16) and b_hh resident in VMEM; hidden state lives in a VMEM
#   scratch.  Gate order matches PyTorch: [r; z; n].
# ----------------------------------------------------------------------------
def _gru_bidir_kernel(xg_ref, whht_ref, bhh_ref, o_ref, h_ref, *, hidden,
                      seq_len):
    h_ref[...] = jnp.zeros_like(h_ref)
    H = hidden

    def step(t, carry):
        h = h_ref[...]                                  # (B, H) f32
        xg = xg_ref[pl.ds(t, 1)][0]                     # (B, 3H) f32
        hg = jnp.dot(h.astype(jnp.bfloat16), whht_ref[...],
                     preferred_element_type=jnp.float32) + bhh_ref[...]
        r = jax.nn.sigmoid(xg[:, :H] + hg[:, :H])
        z = jax.nn.sigmoid(xg[:, H:2 * H] + hg[:, H:2 * H])
        n = jnp.tanh(xg[:, 2 * H:] + r * hg[:, 2 * H:])
        h_new = (1.0 - z) * n + z * h
        h_ref[...] = h_new
        o_ref[pl.ds(t, 1)] = h_new[None]
        return carry

    lax.fori_loop(0, seq_len, step, 0)


def gru_bidir_recurrence(xg_stack, whht_stack, bhh_stack):
    """xg_stack: (2, T, B, 3H) f32 precomputed input gates (bwd already
    time-reversed); whht_stack: (2, H, 3H); bhh_stack: (2, 1, 3H).
    Returns (2, T, B, H) f32 hidden states per direction."""
    D, T, B, G = xg_stack.shape
    H = G // 3
    kern = functools.partial(_gru_bidir_kernel, hidden=H, seq_len=T)
    return pl.pallas_call(
        kern,
        out_shape=jax.ShapeDtypeStruct((D, T, B, H), jnp.float32),
        grid_spec=pltpu.PrefetchScalarGridSpec(
            num_scalar_prefetch=0,
            grid=(D,),
            in_specs=[
                pl.BlockSpec((None, T, B, G), lambda d: (d, 0, 0, 0)),
                pl.BlockSpec((None, H, G), lambda d: (d, 0, 0)),
                pl.BlockSpec((None, 1, G), lambda d: (d, 0, 0)),
            ],
            out_specs=pl.BlockSpec((None, T, B, H), lambda d: (d, 0, 0, 0)),
            scratch_shapes=[pltpu.VMEM((B, H), jnp.float32)],
        ),
        compiler_params=pltpu.CompilerParams(
            dimension_semantics=("parallel",),
        ),
    )(xg_stack.astype(jnp.float32), whht_stack.astype(jnp.bfloat16),
      bhh_stack.astype(jnp.float32))


def bigru(x_seq, params):
    """Bidirectional single-layer GRU.  x_seq: (T, B, F) -> (T, B, 2H)."""
    T, B, F = x_seq.shape
    H = params["fwd"]["w_hh"].shape[1]
    x2d = x_seq.reshape(T * B, F)

    # Fused fwd+bwd input projection: one (T*B, F) @ (F, 6H) matmul.
    w_ih_cat = jnp.concatenate(
        [jnp.transpose(params["fwd"]["w_ih"]),
         jnp.transpose(params["bwd"]["w_ih"])], axis=1)          # (F, 6H)
    b_ih_cat = jnp.concatenate([params["fwd"]["b_ih"],
                                params["bwd"]["b_ih"]])          # (6H,)
    xg = matmul_bias(x2d, w_ih_cat, b_ih_cat).reshape(T, B, 6 * H)

    xg_fwd = xg[..., :3 * H]
    xg_bwd = xg[..., 3 * H:][::-1]                               # reverse time
    xg_stack = jnp.stack([xg_fwd, xg_bwd], axis=0)               # (2, T, B, 3H)

    whht = jnp.stack([jnp.transpose(params["fwd"]["w_hh"]),
                      jnp.transpose(params["bwd"]["w_hh"])], axis=0)  # (2,H,3H)
    bhh = jnp.stack([params["fwd"]["b_hh"],
                     params["bwd"]["b_hh"]], axis=0).reshape(2, 1, 3 * H)

    h = gru_bidir_recurrence(xg_stack, whht, bhh)                # (2, T, B, H)
    return jnp.concatenate([h[0], h[1][::-1]], axis=-1)          # (T, B, 2H)


# ----------------------------------------------------------------------------
# Conv3d (k=3, stride=1, pad=1) + ReLU via channels-last bf16 im2col + Pallas
# matmul (OC is zero-padded to a lane-dense 128 inside matmul_bias).
# ----------------------------------------------------------------------------
def conv3d_relu_cl(x_cl, w, b):
    # x_cl: (B, T, H, W, C) channels-last; w: (OC, C, 3, 3, 3); b: (OC,)
    B, T, H, W, C = x_cl.shape
    OC = w.shape[0]
    xp = jnp.pad(x_cl, ((0, 0), (1, 1), (1, 1), (1, 1), (0, 0)))
    xp = xp.astype(jnp.bfloat16)
    taps = [xp[:, dt:dt + T, dh:dh + H, dw:dw + W, :]
            for dt in range(3) for dh in range(3) for dw in range(3)]
    patches = jnp.stack(taps, axis=-1)                   # (B,T,H,W,C,27) bf16
    a = patches.reshape(B * T * H * W, C * 27)           # feature idx = c*27+tap
    wc = jnp.transpose(w.reshape(OC, C * 27))            # (C*27, OC), same order
    y = matmul_bias(a, wc, b, relu=True)                 # (B*T*H*W, OC) f32
    return y.reshape(B, T, H, W, OC)


def cnn3d_x2(x_cl, params):
    y = conv3d_relu_cl(x_cl, params["w1"], params["b1"])
    y = conv3d_relu_cl(y, params["w2"], params["b2"])
    return y


# ----------------------------------------------------------------------------
# Full model forward (LipNetCNNSeparate, separate_step=2, dictype='anno_data_mydic')
# ----------------------------------------------------------------------------
def lipnet_forward(x, params, separate_step=2):
    B, C, T, H, W = x.shape
    x_cl = jnp.transpose(x, (0, 2, 3, 4, 1))             # (B, T, H, W, C)

    sep_num = T // separate_step
    outs = []
    for step in range(separate_step):
        start = step * sep_num
        end = T if step == separate_step - 1 else (step + 1) * sep_num
        outs.append(cnn3d_x2(x_cl[:, start:end], params["cnn"][step]))
    feat = jnp.concatenate(outs, axis=1)                  # (B, T, 4, 8, 96)

    # Match PyTorch's (T, B, C*H*W) flatten: channel-major feature ordering.
    feat = jnp.transpose(feat, (1, 0, 4, 2, 3)).reshape(T, B, -1)  # (T, B, 3072)

    out = bigru(feat, params["gru1"])                     # (T, B, 512)
    # dropout: identity (eval mode)
    out = bigru(out, params["gru2"])                      # (T, B, 512)
    # dropout: identity (eval mode)

    logits = matmul_bias(out.reshape(T * B, out.shape[-1]),
                         jnp.transpose(params["fc"]["w"]),
                         params["fc"]["b"])               # (T*B, 26)
    logits = logits.reshape(T, B, -1)
    return jnp.transpose(logits, (1, 0, 2))               # (B, T, 26)


# ----------------------------------------------------------------------------
# Deterministic parameter init (synthetic weights, PyTorch shapes).
# ----------------------------------------------------------------------------
def init_params(key, in_ch=3, num_classes=26, separate_step=2):
    keys = iter(jax.random.split(key, 64))

    def conv_w(k, oc, ic):
        fan_in = ic * 27
        std = math.sqrt(2.0 / fan_in)
        return jax.random.normal(k, (oc, ic, 3, 3, 3), jnp.float32) * std

    cnn = []
    for _ in range(separate_step):
        cnn.append({
            "w1": conv_w(next(keys), 32, in_ch),
            "b1": jnp.zeros((32,), jnp.float32),
            "w2": conv_w(next(keys), 96, 32),
            "b2": jnp.zeros((96,), jnp.float32),
        })

    stdv = math.sqrt(2.0 / (96 * 3 * 6 + 256))
    bound = math.sqrt(3.0) * stdv

    def gru_dir(kw, kh, kb, input_size, hidden=256):
        return {
            "w_ih": jax.random.uniform(kw, (3 * hidden, input_size),
                                       jnp.float32, -bound, bound),
            "w_hh": jax.random.uniform(kh, (3 * hidden, hidden),
                                       jnp.float32, -bound, bound),
            "b_ih": jnp.zeros((3 * hidden,), jnp.float32),
            "b_hh": jax.random.uniform(kb, (3 * hidden,), jnp.float32,
                                       -1.0 / math.sqrt(hidden),
                                       1.0 / math.sqrt(hidden)),
        }

    gru1 = {"fwd": gru_dir(next(keys), next(keys), next(keys), 96 * 4 * 8),
            "bwd": gru_dir(next(keys), next(keys), next(keys), 96 * 4 * 8)}
    gru2 = {"fwd": gru_dir(next(keys), next(keys), next(keys), 512),
            "bwd": gru_dir(next(keys), next(keys), next(keys), 512)}

    fc = {
        "w": jax.random.normal(next(keys), (num_classes, 512), jnp.float32)
             / math.sqrt(512.0),
        "b": jnp.zeros((num_classes,), jnp.float32),
    }
    return {"cnn": cnn, "gru1": gru1, "gru2": gru2, "fc": fc}


if __name__ == "__main__":
    key = jax.random.PRNGKey(0)
    pkey, xkey = jax.random.split(key)

    # Small shapes consistent with the module: B=2, C=3 (rgb), T=8, H=4, W=8
    # so the per-frame CNN feature is 96*4*8 = 3072 as gru1 requires.
    B, C, T, H, W = 2, 3, 8, 4, 8
    x = jax.random.normal(xkey, (B, C, T, H, W), jnp.float32)

    params = init_params(pkey, in_ch=C, num_classes=26, separate_step=2)

    fwd = jax.jit(functools.partial(lipnet_forward, separate_step=2))
    out = fwd(x, params)
    out = jax.block_until_ready(out)
    assert out.shape == (B, T, 26), out.shape
    assert jnp.all(jnp.isfinite(out))
    print("KERNEL_OK")
</pallas_src>

<mosaic_0001>
module attributes {stable_mosaic.version = 11 : i64} {
  func.func @_matmul_bias_kernel(%arg0: i32, %arg1: i32, %arg2: i32, %arg3: memref<256x128xbf16, #tpu.memory_space<vmem>>, %arg4: memref<128x128xbf16, #tpu.memory_space<vmem>>, %arg5: memref<1x128xf32, #tpu.memory_space<vmem>>, %arg6: memref<256x128xf32, #tpu.memory_space<vmem>>) attributes {dimension_semantics = [#tpu.dimension_semantics<parallel>, #tpu.dimension_semantics<parallel>, #tpu.dimension_semantics<arbitrary>], iteration_bounds = array<i64: 1, 1, 1>, scalar_prefetch = 0 : i64, scratch_operands = 0 : i64, tpu.core_type = #tpu.core_type<tc>, window_params = [{transform_indices = @transform_0, window_bounds = array<i64: 256, 128>}, {transform_indices = @transform_1, window_bounds = array<i64: 128, 128>}, {transform_indices = @transform_2, window_bounds = array<i64: 1, 128>}, {transform_indices = @transform_3, window_bounds = array<i64: 256, 128>}]} {
    %c0_i32 = arith.constant 0 : i32
    %0 = arith.cmpi eq, %arg2, %c0_i32 : i32
    %1 = arith.extui %0 : i1 to i32
    %c0_i32_0 = arith.constant 0 : i32
    %2 = arith.cmpi ne, %1, %c0_i32_0 : i32
    scf.if %2 {
      %cst_10 = arith.constant 0.000000e+00 : f32
      %12 = vector.broadcast %cst_10 : f32 to vector<256x128xf32>
      %c0_11 = arith.constant 0 : index
      %c0_12 = arith.constant 0 : index
      %13 = vector.load %arg6[%c0_11, %c0_12] : memref<256x128xf32, #tpu.memory_space<vmem>>, vector<256x128xf32>
      tpu.vector_store %arg6[%c0_11, %c0_12], %12 {strides = array<i32>} : memref<256x128xf32, #tpu.memory_space<vmem>>, vector<256x128xf32>,
    } else {
    }
    %c0 = arith.constant 0 : index
    %c0_1 = arith.constant 0 : index
    %3 = vector.load %arg6[%c0, %c0_1] : memref<256x128xf32, #tpu.memory_space<vmem>>, vector<256x128xf32>
    %c0_2 = arith.constant 0 : index
    %c0_3 = arith.constant 0 : index
    %4 = vector.load %arg3[%c0_2, %c0_3] : memref<256x128xbf16, #tpu.memory_space<vmem>>, vector<256x128xbf16>
    %c0_4 = arith.constant 0 : index
    %c0_5 = arith.constant 0 : index
    %5 = vector.load %arg4[%c0_4, %c0_5] : memref<128x128xbf16, #tpu.memory_space<vmem>>, vector<128x128xbf16>
    %cst = arith.constant dense<0.000000e+00> : vector<256x128xf32>
    %6 = tpu.matmul %4, %5, %cst {dimension_numbers = #tpu.dot_dimension_numbers<[1], [0], [0], [1], [0, 0, 1, 1], [], []>} : vector<256x128xbf16>, vector<128x128xbf16>, vector<256x128xf32> -> vector<256x128xf32>
    %7 = arith.addf %3, %6 : vector<256x128xf32>
    %c0_6 = arith.constant 0 : index
    %c0_7 = arith.constant 0 : index
    %8 = vector.load %arg6[%c0_6, %c0_7] : memref<256x128xf32, #tpu.memory_space<vmem>>, vector<256x128xf32>
    tpu.vector_store %arg6[%c0_6, %c0_7], %7 {strides = array<i32>} : memref<256x128xf32, #tpu.memory_space<vmem>>, vector<256x128xf32>,
    %c0_i32_8 = arith.constant 0 : i32
    %9 = arith.cmpi eq, %arg2, %c0_i32_8 : i32
    %10 = arith.extui %9 : i1 to i32
    %c0_i32_9 = arith.constant 0 : i32
    %11 = arith.cmpi ne, %10, %c0_i32_9 : i32
    scf.if %11 {
      %c0_10 = arith.constant 0 : index
      %c0_11 = arith.constant 0 : index
      %12 = vector.load %arg6[%c0_10, %c0_11] : memref<256x128xf32, #tpu.memory_space<vmem>>, vector<256x128xf32>
      %c0_12 = arith.constant 0 : index
      %c0_13 = arith.constant 0 : index
      %13 = vector.load %arg5[%c0_12, %c0_13] : memref<1x128xf32, #tpu.memory_space<vmem>>, vector<1x128xf32>
      %14 = vector.broadcast %13 : vector<1x128xf32> to vector<256x128xf32>
      %15 = arith.addf %12, %14 : vector<256x128xf32>
      %cst_14 = arith.constant 0.000000e+00 : f32
      %16 = vector.broadcast %cst_14 : f32 to vector<256x128xf32>
      %17 = arith.maximumf %15, %16 : vector<256x128xf32>
      %c0_15 = arith.constant 0 : index
      %c0_16 = arith.constant 0 : index
      %18 = vector.load %arg6[%c0_15, %c0_16] : memref<256x128xf32, #tpu.memory_space<vmem>>, vector<256x128xf32>
      tpu.vector_store %arg6[%c0_15, %c0_16], %17 {strides = array<i32>} : memref<256x128xf32, #tpu.memory_space<vmem>>, vector<256x128xf32>,
    } else {
    }
    return
  }
  func.func @transform_0(%arg0: i32, %arg1: i32, %arg2: i32) -> (i32, i32) {
    %c0_i32 = arith.constant 0 : i32
    return %arg0, %arg2 : i32, i32
  }
  func.func @transform_1(%arg0: i32, %arg1: i32, %arg2: i32) -> (i32, i32) {
    %c0_i32 = arith.constant 0 : i32
    return %arg2, %arg1 : i32, i32
  }
  func.func @transform_2(%arg0: i32, %arg1: i32, %arg2: i32) -> (i32, i32) {
    %c0_i32 = arith.constant 0 : i32
    %c0_i32_0 = arith.constant 0 : i32
    return %c0_i32, %arg1 : i32, i32
  }
  func.func @transform_3(%arg0: i32, %arg1: i32, %arg2: i32) -> (i32, i32) {
    %c0_i32 = arith.constant 0 : i32
    return %arg0, %arg1 : i32, i32
  }
}

module attributes {stable_mosaic.version = 11 : i64} {
  func.func @_matmul_bias_kernel(%arg0: i32, %arg1: i32, %arg2: i32, %arg3: memref<256x896xbf16, #tpu.memory_space<vmem>>, %arg4: memref<896x128xbf16, #tpu.memory_space<vmem>>, %arg5: memref<1x128xf32, #tpu.memory_space<vmem>>, %arg6: memref<256x128xf32, #tpu.memory_space<vmem>>) attributes {dimension_semantics = [#tpu.dimension_semantics<parallel>, #tpu.dimension_semantics<parallel>, #tpu.dimension_semantics<arbitrary>], iteration_bounds = array<i64: 1, 1, 1>, scalar_prefetch = 0 : i64, scratch_operands = 0 : i64, tpu.core_type = #tpu.core_type<tc>, window_params = [{transform_indices = @transform_0, window_bounds = array<i64: 256, 896>}, {transform_indices = @transform_1, window_bounds = array<i64: 896, 128>}, {transform_indices = @transform_2, window_bounds = array<i64: 1, 128>}, {transform_indices = @transform_3, window_bounds = array<i64: 256, 128>}]} {
    %c0_i32 = arith.constant 0 : i32
    %0 = arith.cmpi eq, %arg2, %c0_i32 : i32
    %1 = arith.extui %0 : i1 to i32
    %c0_i32_0 = arith.constant 0 : i32
    %2 = arith.cmpi ne, %1, %c0_i32_0 : i32
    scf.if %2 {
      %cst_10 = arith.constant 0.000000e+00 : f32
      %12 = vector.broadcast %cst_10 : f32 to vector<256x128xf32>
      %c0_11 = arith.constant 0 : index
      %c0_12 = arith.constant 0 : index
      %13 = vector.load %arg6[%c0_11, %c0_12] : memref<256x128xf32, #tpu.memory_space<vmem>>, vector<256x128xf32>
      tpu.vector_store %arg6[%c0_11, %c0_12], %12 {strides = array<i32>} : memref<256x128xf32, #tpu.memory_space<vmem>>, vector<256x128xf32>,
    } else {
    }
    %c0 = arith.constant 0 : index
    %c0_1 = arith.constant 0 : index
    %3 = vector.load %arg6[%c0, %c0_1] : memref<256x128xf32, #tpu.memory_space<vmem>>, vector<256x128xf32>
    %c0_2 = arith.constant 0 : index
    %c0_3 = arith.constant 0 : index
    %4 = vector.load %arg3[%c0_2, %c0_3] : memref<256x896xbf16, #tpu.memory_space<vmem>>, vector<256x896xbf16>
    %c0_4 = arith.constant 0 : index
    %c0_5 = arith.constant 0 : index
    %5 = vector.load %arg4[%c0_4, %c0_5] : memref<896x128xbf16, #tpu.memory_space<vmem>>, vector<896x128xbf16>
    %cst = arith.constant dense<0.000000e+00> : vector<256x128xf32>
    %6 = tpu.matmul %4, %5, %cst {dimension_numbers = #tpu.dot_dimension_numbers<[1], [0], [0], [1], [0, 0, 1, 1], [], []>} : vector<256x896xbf16>, vector<896x128xbf16>, vector<256x128xf32> -> vector<256x128xf32>
    %7 = arith.addf %3, %6 : vector<256x128xf32>
    %c0_6 = arith.constant 0 : index
    %c0_7 = arith.constant 0 : index
    %8 = vector.load %arg6[%c0_6, %c0_7] : memref<256x128xf32, #tpu.memory_space<vmem>>, vector<256x128xf32>
    tpu.vector_store %arg6[%c0_6, %c0_7], %7 {strides = array<i32>} : memref<256x128xf32, #tpu.memory_space<vmem>>, vector<256x128xf32>,
    %c0_i32_8 = arith.constant 0 : i32
    %9 = arith.cmpi eq, %arg2, %c0_i32_8 : i32
    %10 = arith.extui %9 : i1 to i32
    %c0_i32_9 = arith.constant 0 : i32
    %11 = arith.cmpi ne, %10, %c0_i32_9 : i32
    scf.if %11 {
      %c0_10 = arith.constant 0 : index
      %c0_11 = arith.constant 0 : index
      %12 = vector.load %arg6[%c0_10, %c0_11] : memref<256x128xf32, #tpu.memory_space<vmem>>, vector<256x128xf32>
      %c0_12 = arith.constant 0 : index
      %c0_13 = arith.constant 0 : index
      %13 = vector.load %arg5[%c0_12, %c0_13] : memref<1x128xf32, #tpu.memory_space<vmem>>, vector<1x128xf32>
      %14 = vector.broadcast %13 : vector<1x128xf32> to vector<256x128xf32>
      %15 = arith.addf %12, %14 : vector<256x128xf32>
      %cst_14 = arith.constant 0.000000e+00 : f32
      %16 = vector.broadcast %cst_14 : f32 to vector<256x128xf32>
      %17 = arith.maximumf %15, %16 : vector<256x128xf32>
      %c0_15 = arith.constant 0 : index
      %c0_16 = arith.constant 0 : index
      %18 = vector.load %arg6[%c0_15, %c0_16] : memref<256x128xf32, #tpu.memory_space<vmem>>, vector<256x128xf32>
      tpu.vector_store %arg6[%c0_15, %c0_16], %17 {strides = array<i32>} : memref<256x128xf32, #tpu.memory_space<vmem>>, vector<256x128xf32>,
    } else {
    }
    return
  }
  func.func @transform_0(%arg0: i32, %arg1: i32, %arg2: i32) -> (i32, i32) {
    %c0_i32 = arith.constant 0 : i32
    return %arg0, %arg2 : i32, i32
  }
  func.func @transform_1(%arg0: i32, %arg1: i32, %arg2: i32) -> (i32, i32) {
    %c0_i32 = arith.constant 0 : i32
    return %arg2, %arg1 : i32, i32
  }
  func.func @transform_2(%arg0: i32, %arg1: i32, %arg2: i32) -> (i32, i32) {
    %c0_i32 = arith.constant 0 : i32
    %c0_i32_0 = arith.constant 0 : i32
    return %c0_i32, %arg1 : i32, i32
  }
  func.func @transform_3(%arg0: i32, %arg1: i32, %arg2: i32) -> (i32, i32) {
    %c0_i32 = arith.constant 0 : i32
    return %arg0, %arg1 : i32, i32
  }
}

module attributes {stable_mosaic.version = 11 : i64} {
  func.func @_matmul_bias_kernel(%arg0: i32, %arg1: i32, %arg2: i32, %arg3: memref<16x1024xbf16, #tpu.memory_space<vmem>>, %arg4: memref<1024x512xbf16, #tpu.memory_space<vmem>>, %arg5: memref<1x512xf32, #tpu.memory_space<vmem>>, %arg6: memref<16x512xf32, #tpu.memory_space<vmem>>) attributes {dimension_semantics = [#tpu.dimension_semantics<parallel>, #tpu.dimension_semantics<parallel>, #tpu.dimension_semantics<arbitrary>], iteration_bounds = array<i64: 1, 3, 3>, scalar_prefetch = 0 : i64, scratch_operands = 0 : i64, tpu.core_type = #tpu.core_type<tc>, window_params = [{transform_indices = @transform_0, window_bounds = array<i64: 16, 1024>}, {transform_indices = @transform_1, window_bounds = array<i64: 1024, 512>}, {transform_indices = @transform_2, window_bounds = array<i64: 1, 512>}, {transform_indices = @transform_3, window_bounds = array<i64: 16, 512>}]} {
    %c0_i32 = arith.constant 0 : i32
    %0 = arith.cmpi eq, %arg2, %c0_i32 : i32
    %1 = arith.extui %0 : i1 to i32
    %c0_i32_0 = arith.constant 0 : i32
    %2 = arith.cmpi ne, %1, %c0_i32_0 : i32
    scf.if %2 {
      %cst_9 = arith.constant 0.000000e+00 : f32
      %12 = vector.broadcast %cst_9 : f32 to vector<16x512xf32>
      %c0_10 = arith.constant 0 : index
      %c0_11 = arith.constant 0 : index
      %13 = vector.load %arg6[%c0_10, %c0_11] : memref<16x512xf32, #tpu.memory_space<vmem>>, vector<16x512xf32>
      tpu.vector_store %arg6[%c0_10, %c0_11], %12 {strides = array<i32>} : memref<16x512xf32, #tpu.memory_space<vmem>>, vector<16x512xf32>,
    } else {
    }
    %c0 = arith.constant 0 : index
    %c0_1 = arith.constant 0 : index
    %3 = vector.load %arg6[%c0, %c0_1] : memref<16x512xf32, #tpu.memory_space<vmem>>, vector<16x512xf32>
    %c0_2 = arith.constant 0 : index
    %c0_3 = arith.constant 0 : index
    %4 = vector.load %arg3[%c0_2, %c0_3] : memref<16x1024xbf16, #tpu.memory_space<vmem>>, vector<16x1024xbf16>
    %c0_4 = arith.constant 0 : index
    %c0_5 = arith.constant 0 : index
    %5 = vector.load %arg4[%c0_4, %c0_5] : memref<1024x512xbf16, #tpu.memory_space<vmem>>, vector<1024x512xbf16>
    %cst = arith.constant dense<0.000000e+00> : vector<16x512xf32>
    %6 = tpu.matmul %4, %5, %cst {dimension_numbers = #tpu.dot_dimension_numbers<[1], [0], [0], [1], [0, 0, 1, 1], [], []>} : vector<16x1024xbf16>, vector<1024x512xbf16>, vector<16x512xf32> -> vector<16x512xf32>
    %7 = arith.addf %3, %6 : vector<16x512xf32>
    %c0_6 = arith.constant 0 : index
    %c0_7 = arith.constant 0 : index
    %8 = vector.load %arg6[%c0_6, %c0_7] : memref<16x512xf32, #tpu.memory_space<vmem>>, vector<16x512xf32>
    tpu.vector_store %arg6[%c0_6, %c0_7], %7 {strides = array<i32>} : memref<16x512xf32, #tpu.memory_space<vmem>>, vector<16x512xf32>,
    %c2_i32 = arith.constant 2 : i32
    %9 = arith.cmpi eq, %arg2, %c2_i32 : i32
    %10 = arith.extui %9 : i1 to i32
    %c0_i32_8 = arith.constant 0 : i32
    %11 = arith.cmpi ne, %10, %c0_i32_8 : i32
    scf.if %11 {
      %c0_9 = arith.constant 0 : index
      %c0_10 = arith.constant 0 : index
      %12 = vector.load %arg6[%c0_9, %c0_10] : memref<16x512xf32, #tpu.memory_space<vmem>>, vector<16x512xf32>
      %c0_11 = arith.constant 0 : index
      %c0_12 = arith.constant 0 : index
      %13 = vector.load %arg5[%c0_11, %c0_12] : memref<1x512xf32, #tpu.memory_space<vmem>>, vector<1x512xf32>
      %14 = vector.broadcast %13 : vector<1x512xf32> to vector<16x512xf32>
      %15 = arith.addf %12, %14 : vector<16x512xf32>
      %c0_13 = arith.constant 0 : index
      %c0_14 = arith.constant 0 : index
      %16 = vector.load %arg6[%c0_13, %c0_14] : memref<16x512xf32, #tpu.memory_space<vmem>>, vector<16x512xf32>
      tpu.vector_store %arg6[%c0_13, %c0_14], %15 {strides = array<i32>} : memref<16x512xf32, #tpu.memory_space<vmem>>, vector<16x512xf32>,
    } else {
    }
    return
  }
  func.func @transform_0(%arg0: i32, %arg1: i32, %arg2: i32) -> (i32, i32) {
    %c0_i32 = arith.constant 0 : i32
    return %arg0, %arg2 : i32, i32
  }
  func.func @transform_1(%arg0: i32, %arg1: i32, %arg2: i32) -> (i32, i32) {
    %c0_i32 = arith.constant 0 : i32
    return %arg2, %arg1 : i32, i32
  }
  func.func @transform_2(%arg0: i32, %arg1: i32, %arg2: i32) -> (i32, i32) {
    %c0_i32 = arith.constant 0 : i32
    %c0_i32_0 = arith.constant 0 : i32
    return %c0_i32, %arg1 : i32, i32
  }
  func.func @transform_3(%arg0: i32, %arg1: i32, %arg2: i32) -> (i32, i32) {
    %c0_i32 = arith.constant 0 : i32
    return %arg0, %arg1 : i32, i32
  }
}

module attributes {stable_mosaic.version = 11 : i64} {
  func.func @_gru_bidir_kernel(%arg0: i32, %arg1: memref<1x8x2x768xf32, #tpu.memory_space<vmem>>, %arg2: memref<1x256x768xbf16, #tpu.memory_space<vmem>>, %arg3: memref<1x1x768xf32, #tpu.memory_space<vmem>>, %arg4: memref<1x8x2x256xf32, #tpu.memory_space<vmem>>, %arg5: memref<2x256xf32, #tpu.memory_space<vmem>>) attributes {dimension_semantics = [#tpu.dimension_semantics<parallel>], iteration_bounds = array<i64: 2>, scalar_prefetch = 0 : i64, scratch_operands = 1 : i64, tpu.core_type = #tpu.core_type<tc>, window_params = [{transform_indices = @transform_0, window_bounds = array<i64: 1, 8, 2, 768>}, {transform_indices = @transform_1, window_bounds = array<i64: 1, 256, 768>}, {transform_indices = @transform_2, window_bounds = array<i64: 1, 1, 768>}, {transform_indices = @transform_3, window_bounds = array<i64: 1, 8, 2, 256>}]} {
    %cst = arith.constant 0.000000e+00 : f32
    %0 = vector.broadcast %cst : f32 to vector<2x256xf32>
    %c0 = arith.constant 0 : index
    %c0_0 = arith.constant 0 : index
    %1 = vector.load %arg5[%c0, %c0_0] : memref<2x256xf32, #tpu.memory_space<vmem>>, vector<2x256xf32>
    tpu.vector_store %arg5[%c0, %c0_0], %0 {strides = array<i32>} : memref<2x256xf32, #tpu.memory_space<vmem>>, vector<2x256xf32>,
    %c0_i32 = arith.constant 0 : i32
    %c8_i32 = arith.constant 8 : i32
    %2 = arith.addi %c0_i32, %c8_i32 : i32
    %c1_i32 = arith.constant 1 : i32
    scf.for %arg6 = %c0_i32 to %2 step %c1_i32  : i32 {
      %c0_2 = arith.constant 0 : index
      %c0_3 = arith.constant 0 : index
      %3 = vector.load %arg5[%c0_2, %c0_3] : memref<2x256xf32, #tpu.memory_space<vmem>>, vector<2x256xf32>
      %c0_4 = arith.constant 0 : index
      %4 = arith.index_cast %arg6 : i32 to index
      %c0_5 = arith.constant 0 : index
      %c0_6 = arith.constant 0 : index
      %5 = vector.load %arg1[%c0_4, %4, %c0_5, %c0_6] : memref<1x8x2x768xf32, #tpu.memory_space<vmem>>, vector<1x1x2x768xf32>
      %6 = vector.shape_cast %5 : vector<1x1x2x768xf32> to vector<1x2x768xf32>
      %7 = vector.shape_cast %6 : vector<1x2x768xf32> to vector<2x768xf32>
      %8 = arith.truncf %3 : vector<2x256xf32> to vector<2x256xbf16>
      %c0_7 = arith.constant 0 : index
      %c0_8 = arith.constant 0 : index
      %c0_9 = arith.constant 0 : index
      %9 = vector.load %arg2[%c0_7, %c0_8, %c0_9] : memref<1x256x768xbf16, #tpu.memory_space<vmem>>, vector<1x256x768xbf16>
      %10 = vector.shape_cast %9 : vector<1x256x768xbf16> to vector<256x768xbf16>
      %cst_10 = arith.constant dense<0.000000e+00> : vector<2x768xf32>
      %11 = tpu.matmul %8, %10, %cst_10 {dimension_numbers = #tpu.dot_dimension_numbers<[1], [0], [0], [1], [0, 0, 1, 1], [], []>} : vector<2x256xbf16>, vector<256x768xbf16>, vector<2x768xf32> -> vector<2x768xf32>
      %c0_11 = arith.constant 0 : index
      %c0_12 = arith.constant 0 : index
      %c0_13 = arith.constant 0 : index
      %12 = vector.load %arg3[%c0_11, %c0_12, %c0_13] : memref<1x1x768xf32, #tpu.memory_space<vmem>>, vector<1x1x768xf32>
      %13 = vector.shape_cast %12 : vector<1x1x768xf32> to vector<1x768xf32>
      %14 = vector.broadcast %13 : vector<1x768xf32> to vector<2x768xf32>
      %15 = arith.addf %11, %14 : vector<2x768xf32>
      %16 = vector.extract_strided_slice %7 {offsets = [0, 0], sizes = [2, 256], strides = [1, 1]} : vector<2x768xf32> to vector<2x256xf32>
      %17 = vector.extract_strided_slice %15 {offsets = [0, 0], sizes = [2, 256], strides = [1, 1]} : vector<2x768xf32> to vector<2x256xf32>
      %18 = arith.addf %16, %17 : vector<2x256xf32>
      %19 = arith.negf %18 : vector<2x256xf32>
      %20 = math.exp %19 : vector<2x256xf32>
      %cst_14 = arith.constant 1.000000e+00 : f32
      %21 = vector.broadcast %cst_14 : f32 to vector<2x256xf32>
      %22 = arith.addf %21, %20 : vector<2x256xf32>
      %23 = arith.divf %21, %22 : vector<2x256xf32>
      %24 = vector.extract_strided_slice %7 {offsets = [0, 256], sizes = [2, 256], strides = [1, 1]} : vector<2x768xf32> to vector<2x256xf32>
      %25 = vector.extract_strided_slice %15 {offsets = [0, 256], sizes = [2, 256], strides = [1, 1]} : vector<2x768xf32> to vector<2x256xf32>
      %26 = arith.addf %24, %25 : vector<2x256xf32>
      %27 = arith.negf %26 : vector<2x256xf32>
      %28 = math.exp %27 : vector<2x256xf32>
      %cst_15 = arith.constant 1.000000e+00 : f32
      %29 = vector.broadcast %cst_15 : f32 to vector<2x256xf32>
      %30 = arith.addf %29, %28 : vector<2x256xf32>
      %31 = arith.divf %29, %30 : vector<2x256xf32>
      %32 = vector.extract_strided_slice %7 {offsets = [0, 512], sizes = [2, 256], strides = [1, 1]} : vector<2x768xf32> to vector<2x256xf32>
      %33 = vector.extract_strided_slice %15 {offsets = [0, 512], sizes = [2, 256], strides = [1, 1]} : vector<2x768xf32> to vector<2x256xf32>
      %34 = arith.mulf %23, %33 : vector<2x256xf32>
      %35 = arith.addf %32, %34 : vector<2x256xf32>
      %36 = math.tanh %35 : vector<2x256xf32>
      %cst_16 = arith.constant 1.000000e+00 : f32
      %37 = vector.broadcast %cst_16 : f32 to vector<2x256xf32>
      %38 = arith.subf %37, %31 : vector<2x256xf32>
      %39 = arith.mulf %38, %36 : vector<2x256xf32>
      %40 = arith.mulf %31, %3 : vector<2x256xf32>
      %41 = arith.addf %39, %40 : vector<2x256xf32>
      %c0_17 = arith.constant 0 : index
      %c0_18 = arith.constant 0 : index
      %42 = vector.load %arg5[%c0_17, %c0_18] : memref<2x256xf32, #tpu.memory_space<vmem>>, vector<2x256xf32>
      tpu.vector_store %arg5[%c0_17, %c0_18], %41 {strides = array<i32>} : memref<2x256xf32, #tpu.memory_space<vmem>>, vector<2x256xf32>,
      %43 = vector.shape_cast %41 : vector<2x256xf32> to vector<1x2x256xf32>
      %c0_19 = arith.constant 0 : index
      %44 = arith.index_cast %arg6 : i32 to index
      %c0_20 = arith.constant 0 : index
      %c0_21 = arith.constant 0 : index
      %45 = vector.load %arg4[%c0_19, %44, %c0_20, %c0_21] : memref<1x8x2x256xf32, #tpu.memory_space<vmem>>, vector<1x1x2x256xf32>
      %46 = vector.shape_cast %45 : vector<1x1x2x256xf32> to vector<1x2x256xf32>
      %47 = vector.shape_cast %43 : vector<1x2x256xf32> to vector<1x1x2x256xf32>
      tpu.vector_store %arg4[%c0_19, %44, %c0_20, %c0_21], %47 {strides = array<i32>} : memref<1x8x2x256xf32, #tpu.memory_space<vmem>>, vector<1x1x2x256xf32>,
    }
    %c8_i32_1 = arith.constant 8 : i32
    return
  }
  func.func @transform_0(%arg0: i32) -> (i32, i32, i32, i32) {
    %c0_i32 = arith.constant 0 : i32
    %c0_i32_0 = arith.constant 0 : i32
    %c0_i32_1 = arith.constant 0 : i32
    %c0_i32_2 = arith.constant 0 : i32
    return %arg0, %c0_i32, %c0_i32_0, %c0_i32_1 : i32, i32, i32, i32
  }
  func.func @transform_1(%arg0: i32) -> (i32, i32, i32) {
    %c0_i32 = arith.constant 0 : i32
    %c0_i32_0 = arith.constant 0 : i32
    %c0_i32_1 = arith.constant 0 : i32
    return %arg0, %c0_i32, %c0_i32_0 : i32, i32, i32
  }
  func.func @transform_2(%arg0: i32) -> (i32, i32, i32) {
    %c0_i32 = arith.constant 0 : i32
    %c0_i32_0 = arith.constant 0 : i32
    %c0_i32_1 = arith.constant 0 : i32
    return %arg0, %c0_i32, %c0_i32_0 : i32, i32, i32
  }
  func.func @transform_3(%arg0: i32) -> (i32, i32, i32, i32) {
    %c0_i32 = arith.constant 0 : i32
    %c0_i32_0 = arith.constant 0 : i32
    %c0_i32_1 = arith.constant 0 : i32
    %c0_i32_2 = arith.constant 0 : i32
    return %arg0, %c0_i32, %c0_i32_0, %c0_i32_1 : i32, i32, i32, i32
  }
}

module attributes {stable_mosaic.version = 11 : i64} {
  func.func @_matmul_bias_kernel(%arg0: i32, %arg1: i32, %arg2: i32, %arg3: memref<16x512xbf16, #tpu.memory_space<vmem>>, %arg4: memref<512x512xbf16, #tpu.memory_space<vmem>>, %arg5: memref<1x512xf32, #tpu.memory_space<vmem>>, %arg6: memref<16x512xf32, #tpu.memory_space<vmem>>) attributes {dimension_semantics = [#tpu.dimension_semantics<parallel>, #tpu.dimension_semantics<parallel>, #tpu.dimension_semantics<arbitrary>], iteration_bounds = array<i64: 1, 3, 1>, scalar_prefetch = 0 : i64, scratch_operands = 0 : i64, tpu.core_type = #tpu.core_type<tc>, window_params = [{transform_indices = @transform_0, window_bounds = array<i64: 16, 512>}, {transform_indices = @transform_1, window_bounds = array<i64: 512, 512>}, {transform_indices = @transform_2, window_bounds = array<i64: 1, 512>}, {transform_indices = @transform_3, window_bounds = array<i64: 16, 512>}]} {
    %c0_i32 = arith.constant 0 : i32
    %0 = arith.cmpi eq, %arg2, %c0_i32 : i32
    %1 = arith.extui %0 : i1 to i32
    %c0_i32_0 = arith.constant 0 : i32
    %2 = arith.cmpi ne, %1, %c0_i32_0 : i32
    scf.if %2 {
      %cst_10 = arith.constant 0.000000e+00 : f32
      %12 = vector.broadcast %cst_10 : f32 to vector<16x512xf32>
      %c0_11 = arith.constant 0 : index
      %c0_12 = arith.constant 0 : index
      %13 = vector.load %arg6[%c0_11, %c0_12] : memref<16x512xf32, #tpu.memory_space<vmem>>, vector<16x512xf32>
      tpu.vector_store %arg6[%c0_11, %c0_12], %12 {strides = array<i32>} : memref<16x512xf32, #tpu.memory_space<vmem>>, vector<16x512xf32>,
    } else {
    }
    %c0 = arith.constant 0 : index
    %c0_1 = arith.constant 0 : index
    %3 = vector.load %arg6[%c0, %c0_1] : memref<16x512xf32, #tpu.memory_space<vmem>>, vector<16x512xf32>
    %c0_2 = arith.constant 0 : index
    %c0_3 = arith.constant 0 : index
    %4 = vector.load %arg3[%c0_2, %c0_3] : memref<16x512xbf16, #tpu.memory_space<vmem>>, vector<16x512xbf16>
    %c0_4 = arith.constant 0 : index
    %c0_5 = arith.constant 0 : index
    %5 = vector.load %arg4[%c0_4, %c0_5] : memref<512x512xbf16, #tpu.memory_space<vmem>>, vector<512x512xbf16>
    %cst = arith.constant dense<0.000000e+00> : vector<16x512xf32>
    %6 = tpu.matmul %4, %5, %cst {dimension_numbers = #tpu.dot_dimension_numbers<[1], [0], [0], [1], [0, 0, 1, 1], [], []>} : vector<16x512xbf16>, vector<512x512xbf16>, vector<16x512xf32> -> vector<16x512xf32>
    %7 = arith.addf %3, %6 : vector<16x512xf32>
    %c0_6 = arith.constant 0 : index
    %c0_7 = arith.constant 0 : index
    %8 = vector.load %arg6[%c0_6, %c0_7] : memref<16x512xf32, #tpu.memory_space<vmem>>, vector<16x512xf32>
    tpu.vector_store %arg6[%c0_6, %c0_7], %7 {strides = array<i32>} : memref<16x512xf32, #tpu.memory_space<vmem>>, vector<16x512xf32>,
    %c0_i32_8 = arith.constant 0 : i32
    %9 = arith.cmpi eq, %arg2, %c0_i32_8 : i32
    %10 = arith.extui %9 : i1 to i32
    %c0_i32_9 = arith.constant 0 : i32
    %11 = arith.cmpi ne, %10, %c0_i32_9 : i32
    scf.if %11 {
      %c0_10 = arith.constant 0 : index
      %c0_11 = arith.constant 0 : index
      %12 = vector.load %arg6[%c0_10, %c0_11] : memref<16x512xf32, #tpu.memory_space<vmem>>, vector<16x512xf32>
      %c0_12 = arith.constant 0 : index
      %c0_13 = arith.constant 0 : index
      %13 = vector.load %arg5[%c0_12, %c0_13] : memref<1x512xf32, #tpu.memory_space<vmem>>, vector<1x512xf32>
      %14 = vector.broadcast %13 : vector<1x512xf32> to vector<16x512xf32>
      %15 = arith.addf %12, %14 : vector<16x512xf32>
      %c0_14 = arith.constant 0 : index
      %c0_15 = arith.constant 0 : index
      %16 = vector.load %arg6[%c0_14, %c0_15] : memref<16x512xf32, #tpu.memory_space<vmem>>, vector<16x512xf32>
      tpu.vector_store %arg6[%c0_14, %c0_15], %15 {strides = array<i32>} : memref<16x512xf32, #tpu.memory_space<vmem>>, vector<16x512xf32>,
    } else {
    }
    return
  }
  func.func @transform_0(%arg0: i32, %arg1: i32, %arg2: i32) -> (i32, i32) {
    %c0_i32 = arith.constant 0 : i32
    return %arg0, %arg2 : i32, i32
  }
  func.func @transform_1(%arg0: i32, %arg1: i32, %arg2: i32) -> (i32, i32) {
    %c0_i32 = arith.constant 0 : i32
    return %arg2, %arg1 : i32, i32
  }
  func.func @transform_2(%arg0: i32, %arg1: i32, %arg2: i32) -> (i32, i32) {
    %c0_i32 = arith.constant 0 : i32
    %c0_i32_0 = arith.constant 0 : i32
    return %c0_i32, %arg1 : i32, i32
  }
  func.func @transform_3(%arg0: i32, %arg1: i32, %arg2: i32) -> (i32, i32) {
    %c0_i32 = arith.constant 0 : i32
    return %arg0, %arg1 : i32, i32
  }
}

module attributes {stable_mosaic.version = 11 : i64} {
  func.func @_matmul_bias_kernel(%arg0: i32, %arg1: i32, %arg2: i32, %arg3: memref<16x512xbf16, #tpu.memory_space<vmem>>, %arg4: memref<512x128xbf16, #tpu.memory_space<vmem>>, %arg5: memref<1x128xf32, #tpu.memory_space<vmem>>, %arg6: memref<16x128xf32, #tpu.memory_space<vmem>>) attributes {dimension_semantics = [#tpu.dimension_semantics<parallel>, #tpu.dimension_semantics<parallel>, #tpu.dimension_semantics<arbitrary>], iteration_bounds = array<i64: 1, 1, 1>, scalar_prefetch = 0 : i64, scratch_operands = 0 : i64, tpu.core_type = #tpu.core_type<tc>, window_params = [{transform_indices = @transform_0, window_bounds = array<i64: 16, 512>}, {transform_indices = @transform_1, window_bounds = array<i64: 512, 128>}, {transform_indices = @transform_2, window_bounds = array<i64: 1, 128>}, {transform_indices = @transform_3, window_bounds = array<i64: 16, 128>}]} {
    %c0_i32 = arith.constant 0 : i32
    %0 = arith.cmpi eq, %arg2, %c0_i32 : i32
    %1 = arith.extui %0 : i1 to i32
    %c0_i32_0 = arith.constant 0 : i32
    %2 = arith.cmpi ne, %1, %c0_i32_0 : i32
    scf.if %2 {
      %cst_10 = arith.constant 0.000000e+00 : f32
      %12 = vector.broadcast %cst_10 : f32 to vector<16x128xf32>
      %c0_11 = arith.constant 0 : index
      %c0_12 = arith.constant 0 : index
      %13 = vector.load %arg6[%c0_11, %c0_12] : memref<16x128xf32, #tpu.memory_space<vmem>>, vector<16x128xf32>
      tpu.vector_store %arg6[%c0_11, %c0_12], %12 {strides = array<i32>} : memref<16x128xf32, #tpu.memory_space<vmem>>, vector<16x128xf32>,
    } else {
    }
    %c0 = arith.constant 0 : index
    %c0_1 = arith.constant 0 : index
    %3 = vector.load %arg6[%c0, %c0_1] : memref<16x128xf32, #tpu.memory_space<vmem>>, vector<16x128xf32>
    %c0_2 = arith.constant 0 : index
    %c0_3 = arith.constant 0 : index
    %4 = vector.load %arg3[%c0_2, %c0_3] : memref<16x512xbf16, #tpu.memory_space<vmem>>, vector<16x512xbf16>
    %c0_4 = arith.constant 0 : index
    %c0_5 = arith.constant 0 : index
    %5 = vector.load %arg4[%c0_4, %c0_5] : memref<512x128xbf16, #tpu.memory_space<vmem>>, vector<512x128xbf16>
    %cst = arith.constant dense<0.000000e+00> : vector<16x128xf32>
    %6 = tpu.matmul %4, %5, %cst {dimension_numbers = #tpu.dot_dimension_numbers<[1], [0], [0], [1], [0, 0, 1, 1], [], []>} : vector<16x512xbf16>, vector<512x128xbf16>, vector<16x128xf32> -> vector<16x128xf32>
    %7 = arith.addf %3, %6 : vector<16x128xf32>
    %c0_6 = arith.constant 0 : index
    %c0_7 = arith.constant 0 : index
    %8 = vector.load %arg6[%c0_6, %c0_7] : memref<16x128xf32, #tpu.memory_space<vmem>>, vector<16x128xf32>
    tpu.vector_store %arg6[%c0_6, %c0_7], %7 {strides = array<i32>} : memref<16x128xf32, #tpu.memory_space<vmem>>, vector<16x128xf32>,
    %c0_i32_8 = arith.constant 0 : i32
    %9 = arith.cmpi eq, %arg2, %c0_i32_8 : i32
    %10 = arith.extui %9 : i1 to i32
    %c0_i32_9 = arith.constant 0 : i32
    %11 = arith.cmpi ne, %10, %c0_i32_9 : i32
    scf.if %11 {
      %c0_10 = arith.constant 0 : index
      %c0_11 = arith.constant 0 : index
      %12 = vector.load %arg6[%c0_10, %c0_11] : memref<16x128xf32, #tpu.memory_space<vmem>>, vector<16x128xf32>
      %c0_12 = arith.constant 0 : index
      %c0_13 = arith.constant 0 : index
      %13 = vector.load %arg5[%c0_12, %c0_13] : memref<1x128xf32, #tpu.memory_space<vmem>>, vector<1x128xf32>
      %14 = vector.broadcast %13 : vector<1x128xf32> to vector<16x128xf32>
      %15 = arith.addf %12, %14 : vector<16x128xf32>
      %c0_14 = arith.constant 0 : index
      %c0_15 = arith.constant 0 : index
      %16 = vector.load %arg6[%c0_14, %c0_15] : memref<16x128xf32, #tpu.memory_space<vmem>>, vector<16x128xf32>
      tpu.vector_store %arg6[%c0_14, %c0_15], %15 {strides = array<i32>} : memref<16x128xf32, #tpu.memory_space<vmem>>, vector<16x128xf32>,
    } else {
    }
    return
  }
  func.func @transform_0(%arg0: i32, %arg1: i32, %arg2: i32) -> (i32, i32) {
    %c0_i32 = arith.constant 0 : i32
    return %arg0, %arg2 : i32, i32
  }
  func.func @transform_1(%arg0: i32, %arg1: i32, %arg2: i32) -> (i32, i32) {
    %c0_i32 = arith.constant 0 : i32
    return %arg2, %arg1 : i32, i32
  }
  func.func @transform_2(%arg0: i32, %arg1: i32, %arg2: i32) -> (i32, i32) {
    %c0_i32 = arith.constant 0 : i32
    %c0_i32_0 = arith.constant 0 : i32
    return %c0_i32, %arg1 : i32, i32
  }
  func.func @transform_3(%arg0: i32, %arg1: i32, %arg2: i32) -> (i32, i32) {
    %c0_i32 = arith.constant 0 : i32
    return %arg0, %arg1 : i32, i32
  }
}

</mosaic_0001>

<llo_original>
// kernel: lipnet_forward.9
$region0: #{lipnet_forward.9}
  #allocation0 [shape = 'u32[]', space=smem, size = 0x4, offset = 0x4, fixed_abs, tag = 'smem constant byte address 0x4 - core index']
  #allocation1 [shape = 'u32[144,128]{1,0:T(1,128)}', space=vmem, size = 0x12000, scoped, tag = 'internal scratch']
  %s0 = inlined_call_operand.vmem [shape: bf16[256,128], index: 0, kind: input, shape index: {}]
  %s1 = inlined_call_operand.vmem [shape: bf16[128,128], index: 1, kind: input, shape index: {}]
  %s2 = inlined_call_operand.vmem [shape: f32[1,128], index: 2, kind: input, shape index: {}]
  %s3 = inlined_call_operand.vmem [shape: f32[256,128], index: 3, kind: output, shape index: {}]
  %s4 = sld [smem:[#allocation0]]
  $region30: #{lipnet_forward.9} parent=0
    _
  %s6 = ssub.s32 1, %s4
  %s7 = scalar_select 0, %s6, %s4
  // Predicated region
  $region2: #{lipnet_forward.9} parent=0 // pred_check
    _
  $region3: #{lipnet_forward.9} parent=0 // pred_check_branch
    %9 = sbr.rel (0) target = $region5
  $region4: #{lipnet_forward.9} parent=0 // pred_region
    _
  $region5: #{lipnet_forward.9} parent=0 // pred_fallthru
    _
  // Predicated region
  $region6: #{lipnet_forward.9} parent=0 // pred_check
    _
  $region7: #{lipnet_forward.9} parent=0 // pred_check_branch
    %11 = sbr.rel (0) target = $region9
  $region8: #{lipnet_forward.9} parent=0 // pred_region
    _
  $region9: #{lipnet_forward.9} parent=0 // pred_fallthru
    _
  // Predicated region
  $region10: #{lipnet_forward.9} parent=0 // pred_check
    _
  $region11: #{lipnet_forward.9} parent=0 // pred_check_branch
    %13 = sbr.rel (0) target = $region13
  $region12: #{lipnet_forward.9} parent=0 // pred_region
    _
  $region13: #{lipnet_forward.9} parent=0 // pred_fallthru
    _
  %p15 = scmp.eq.s32.totalorder 0, 0
  // Predicated region
  $region14: #{lipnet_forward.9} parent=0 // pred_check
    %p16 = pneg %p15
  $region15: #{lipnet_forward.9} parent=0 // pred_check_branch
    %18 = sbr.rel (%p16) target = $region17
  $region16: #{lipnet_forward.9} parent=0 // pred_region
    %19 = vst [vmem:[%s3] sm:$0xff] 0.0
    %20 = vst [vmem:[%s3 + $0x8] sm:$0xff] 0.0
    %21 = vst [vmem:[%s3 + $0x10] sm:$0xff] 0.0
    %22 = vst [vmem:[%s3 + $0x18] sm:$0xff] 0.0
    %23 = vst [vmem:[%s3 + $0x20] sm:$0xff] 0.0
    %24 = vst [vmem:[%s3 + $0x28] sm:$0xff] 0.0
    %25 = vst [vmem:[%s3 + $0x30] sm:$0xff] 0.0
    %26 = vst [vmem:[%s3 + $0x38] sm:$0xff] 0.0
    %27 = vst [vmem:[%s3 + $0x40] sm:$0xff] 0.0
    %28 = vst [vmem:[%s3 + $0x48] sm:$0xff] 0.0
    %29 = vst [vmem:[%s3 + $0x50] sm:$0xff] 0.0
    %30 = vst [vmem:[%s3 + $0x58] sm:$0xff] 0.0
    %31 = vst [vmem:[%s3 + $0x60] sm:$0xff] 0.0
    %32 = vst [vmem:[%s3 + $0x68] sm:$0xff] 0.0
    %33 = vst [vmem:[%s3 + $0x70] sm:$0xff] 0.0
    %34 = vst [vmem:[%s3 + $0x78] sm:$0xff] 0.0
    %35 = vst [vmem:[%s3 + $0x80] sm:$0xff] 0.0
    %36 = vst [vmem:[%s3 + $0x88] sm:$0xff] 0.0
    %37 = vst [vmem:[%s3 + $0x90] sm:$0xff] 0.0
    %38 = vst [vmem:[%s3 + $0x98] sm:$0xff] 0.0
    %39 = vst [vmem:[%s3 + $0xa0] sm:$0xff] 0.0
    %40 = vst [vmem:[%s3 + $0xa8] sm:$0xff] 0.0
    %41 = vst [vmem:[%s3 + $0xb0] sm:$0xff] 0.0
    %42 = vst [vmem:[%s3 + $0xb8] sm:$0xff] 0.0
    %43 = vst [vmem:[%s3 + $0xc0] sm:$0xff] 0.0
    %44 = vst [vmem:[%s3 + $0xc8] sm:$0xff] 0.0
    %45 = vst [vmem:[%s3 + $0xd0] sm:$0xff] 0.0
    %46 = vst [vmem:[%s3 + $0xd8] sm:$0xff] 0.0
    %47 = vst [vmem:[%s3 + $0xe0] sm:$0xff] 0.0
    %48 = vst [vmem:[%s3 + $0xe8] sm:$0xff] 0.0
    %49 = vst [vmem:[%s3 + $0xf0] sm:$0xff] 0.0
    %50 = vst [vmem:[%s3 + $0xf8] sm:$0xff] 0.0
  $region17: #{lipnet_forward.9} parent=0 // pred_fallthru
    _
  %v51 = vld [vmem:[%s3] sm:$0xff]
  %v52 = vld [vmem:[%s3 + $0x8] sm:$0xff]
  %v53 = vld [vmem:[%s3 + $0x10] sm:$0xff]
  %v54 = vld [vmem:[%s3 + $0x18] sm:$0xff]
  %v55 = vld [vmem:[%s3 + $0x20] sm:$0xff]
  %v56 = vld [vmem:[%s3 + $0x28] sm:$0xff]
  %v57 = vld [vmem:[%s3 + $0x30] sm:$0xff]
  %v58 = vld [vmem:[%s3 + $0x38] sm:$0xff]
  %v59 = vld [vmem:[%s3 + $0x40] sm:$0xff]
  %v60 = vld [vmem:[%s3 + $0x48] sm:$0xff]
  %v61 = vld [vmem:[%s3 + $0x50] sm:$0xff]
  %v62 = vld [vmem:[%s3 + $0x58] sm:$0xff]
  %v63 = vld [vmem:[%s3 + $0x60] sm:$0xff]
  %v64 = vld [vmem:[%s3 + $0x68] sm:$0xff]
  %v65 = vld [vmem:[%s3 + $0x70] sm:$0xff]
  %v66 = vld [vmem:[%s3 + $0x78] sm:$0xff]
  %v67 = vld [vmem:[%s3 + $0x80] sm:$0xff]
  %v68 = vld [vmem:[%s3 + $0x88] sm:$0xff]
  %v69 = vld [vmem:[%s3 + $0x90] sm:$0xff]
  %v70 = vld [vmem:[%s3 + $0x98] sm:$0xff]
  %v71 = vld [vmem:[%s3 + $0xa0] sm:$0xff]
  %v72 = vld [vmem:[%s3 + $0xa8] sm:$0xff]
  %v73 = vld [vmem:[%s3 + $0xb0] sm:$0xff]
  %v74 = vld [vmem:[%s3 + $0xb8] sm:$0xff]
  %v75 = vld [vmem:[%s3 + $0xc0] sm:$0xff]
  %v76 = vld [vmem:[%s3 + $0xc8] sm:$0xff]
  %v77 = vld [vmem:[%s3 + $0xd0] sm:$0xff]
  %v78 = vld [vmem:[%s3 + $0xd8] sm:$0xff]
  %v79 = vld [vmem:[%s3 + $0xe0] sm:$0xff]
  %v80 = vld [vmem:[%s3 + $0xe8] sm:$0xff]
  %v81 = vld [vmem:[%s3 + $0xf0] sm:$0xff]
  %v82 = vld [vmem:[%s3 + $0xf8] sm:$0xff]
  %v83 = vld [vmem:[%s0] sm:$0xf]
  %v84 = vld [vmem:[%s0 + $0x4] sm:$0xf]
  %v85 = vld [vmem:[%s0 + $0x8] sm:$0xf]
  %v86 = vld [vmem:[%s0 + $0xc] sm:$0xf]
  %v87 = vld [vmem:[%s0 + $0x10] sm:$0xf]
  %v88 = vld [vmem:[%s0 + $0x14] sm:$0xf]
  %v89 = vld [vmem:[%s0 + $0x18] sm:$0xf]
  %v90 = vld [vmem:[%s0 + $0x1c] sm:$0xf]
  %v91 = vld [vmem:[%s0 + $0x20] sm:$0xf]
  %v92 = vld [vmem:[%s0 + $0x24] sm:$0xf]
  %v93 = vld [vmem:[%s0 + $0x28] sm:$0xf]
  %v94 = vld [vmem:[%s0 + $0x2c] sm:$0xf]
  %v95 = vld [vmem:[%s0 + $0x30] sm:$0xf]
  %v96 = vld [vmem:[%s0 + $0x34] sm:$0xf]
  %v97 = vld [vmem:[%s0 + $0x38] sm:$0xf]
  %v98 = vld [vmem:[%s0 + $0x3c] sm:$0xf]
  %v99 = vld [vmem:[%s0 + $0x40] sm:$0xf]
  %v100 = vld [vmem:[%s0 + $0x44] sm:$0xf]
  %v101 = vld [vmem:[%s0 + $0x48] sm:$0xf]
  %v102 = vld [vmem:[%s0 + $0x4c] sm:$0xf]
  %v103 = vld [vmem:[%s0 + $0x50] sm:$0xf]
  %v104 = vld [vmem:[%s0 + $0x54] sm:$0xf]
  %v105 = vld [vmem:[%s0 + $0x58] sm:$0xf]
  %v106 = vld [vmem:[%s0 + $0x5c] sm:$0xf]
  %v107 = vld [vmem:[%s0 + $0x60] sm:$0xf]
  %v108 = vld [vmem:[%s0 + $0x64] sm:$0xf]
  %v109 = vld [vmem:[%s0 + $0x68] sm:$0xf]
  %v110 = vld [vmem:[%s0 + $0x6c] sm:$0xf]
  %v111 = vld [vmem:[%s0 + $0x70] sm:$0xf]
  %v112 = vld [vmem:[%s0 + $0x74] sm:$0xf]
  %v113 = vld [vmem:[%s0 + $0x78] sm:$0xf]
  %v114 = vld [vmem:[%s0 + $0x7c] sm:$0xf]
  %v115 = vld [vmem:[%s1] sm:$0xf]
  %v116 = vld [vmem:[%s1 + $0x4] sm:$0xf]
  %v117 = vld [vmem:[%s1 + $0x8] sm:$0xf]
  %v118 = vld [vmem:[%s1 + $0xc] sm:$0xf]
  %v119 = vld [vmem:[%s1 + $0x10] sm:$0xf]
  %v120 = vld [vmem:[%s1 + $0x14] sm:$0xf]
  %v121 = vld [vmem:[%s1 + $0x18] sm:$0xf]
  %v122 = vld [vmem:[%s1 + $0x1c] sm:$0xf]
  %v123 = vld [vmem:[%s1 + $0x20] sm:$0xf]
  %v124 = vld [vmem:[%s1 + $0x24] sm:$0xf]
  %v125 = vld [vmem:[%s1 + $0x28] sm:$0xf]
  %v126 = vld [vmem:[%s1 + $0x2c] sm:$0xf]
  %v127 = vld [vmem:[%s1 + $0x30] sm:$0xf]
  %v128 = vld [vmem:[%s1 + $0x34] sm:$0xf]
  %v129 = vld [vmem:[%s1 + $0x38] sm:$0xf]
  %v130 = vld [vmem:[%s1 + $0x3c] sm:$0xf]
  %v163 = vunpack.c.l.b16 %v83
  %v164 = vunpack.c.l.b16 %v84
  %v165 = vunpack.c.l.b16 %v85
  %v166 = vunpack.c.l.b16 %v86
  %v167 = vunpack.c.l.b16 %v87
  %v168 = vunpack.c.l.b16 %v88
  %v169 = vunpack.c.l.b16 %v89
  %v170 = vunpack.c.l.b16 %v90
  %v171 = vunpack.c.l.b16 %v91
  %v172 = vunpack.c.l.b16 %v92
  %v173 = vunpack.c.l.b16 %v93
  %v174 = vunpack.c.l.b16 %v94
  %v175 = vunpack.c.l.b16 %v95
  %v176 = vunpack.c.l.b16 %v96
  %v177 = vunpack.c.l.b16 %v97
  %v178 = vunpack.c.l.b16 %v98
  %v179 = vunpack.c.l.b16 %v99
  %v180 = vunpack.c.l.b16 %v100
  %v181 = vunpack.c.l.b16 %v101
  %v182 = vunpack.c.l.b16 %v102
  %v183 = vunpack.c.l.b16 %v103
  %v184 = vunpack.c.l.b16 %v104
  %v185 = vunpack.c.l.b16 %v105
  %v186 = vunpack.c.l.b16 %v106
  %v187 = vunpack.c.l.b16 %v107
  %v188 = vunpack.c.l.b16 %v108
  %v189 = vunpack.c.l.b16 %v109
  %v190 = vunpack.c.l.b16 %v110
  %v191 = vunpack.c.l.b16 %v111
  %v192 = vunpack.c.l.b16 %v112
  %v193 = vunpack.c.l.b16 %v113
  %v194 = vunpack.c.l.b16 %v114
  %v195 = vpack.c.b16 %v164, %v163
  %v196 = vpack.c.b16 %v166, %v165
  %v197 = vpack.c.b16 %v168, %v167
  %v198 = vpack.c.b16 %v170, %v169
  %v199 = vpack.c.b16 %v172, %v171
  %v200 = vpack.c.b16 %v174, %v173
  %v201 = vpack.c.b16 %v176, %v175
  %v202 = vpack.c.b16 %v178, %v177
  %v203 = vpack.c.b16 %v180, %v179
  %v204 = vpack.c.b16 %v182, %v181
  %v205 = vpack.c.b16 %v184, %v183
  %v206 = vpack.c.b16 %v186, %v185
  %v207 = vpack.c.b16 %v188, %v187
  %v208 = vpack.c.b16 %v190, %v189
  %v209 = vpack.c.b16 %v192, %v191
  %v210 = vpack.c.b16 %v194, %v193
  %v243 = vunpack.c.l.b16 %v115
  %v244 = vunpack.c.l.b16 %v116
  %v245 = vunpack.c.l.b16 %v117
  %v246 = vunpack.c.l.b16 %v118
  %v247 = vunpack.c.l.b16 %v119
  %v248 = vunpack.c.l.b16 %v120
  %v249 = vunpack.c.l.b16 %v121
  %v250 = vunpack.c.l.b16 %v122
  %v251 = vunpack.c.l.b16 %v123
  %v252 = vunpack.c.l.b16 %v124
  %v253 = vunpack.c.l.b16 %v125
  %v254 = vunpack.c.l.b16 %v126
  %v255 = vunpack.c.l.b16 %v127
  %v256 = vunpack.c.l.b16 %v128
  %v257 = vunpack.c.l.b16 %v129
  %v258 = vunpack.c.l.b16 %v130
  %v259 = vpack.c.b16 %v244, %v243
  %v260 = vpack.c.b16 %v246, %v245
  %v261 = vpack.c.b16 %v248, %v247
  %v262 = vpack.c.b16 %v250, %v249
  %v263 = vpack.c.b16 %v252, %v251
  %v264 = vpack.c.b16 %v254, %v253
  %v265 = vpack.c.b16 %v256, %v255
  %v266 = vpack.c.b16 %v258, %v257
  %275 = vmatprep.subr.bf16.mxu0 0
  %276 = vmatpush1.bf16.msra.mxu0 %v266
  %277 = vmatprep.subr.bf16.mxu0 0
  %278 = vmatpush1.bf16.msra.mxu0 %v265
  %279 = vmatprep.subr.bf16.mxu0 0
  %280 = vmatpush1.bf16.msra.mxu0 %v264
  %281 = vmatprep.subr.bf16.mxu0 0
  %282 = vmatpush1.bf16.msra.mxu0 %v263
  %283 = vmatprep.subr.bf16.mxu0 0
  %284 = vmatpush1.bf16.msra.mxu0 %v262
  %285 = vmatprep.subr.bf16.mxu0 0
  %286 = vmatpush1.bf16.msra.mxu0 %v261
  %287 = vmatprep.subr.bf16.mxu0 0
  %288 = vmatpush1.bf16.msra.mxu0 %v260
  %289 = vmatprep.subr.bf16.mxu0 0
  %290 = vmatpush1.bf16.msra.mxu0 %v259
  %291 = vmatprep.subr.bf16.mxu0 0
  %292 = vmatpush2.bf16.msra.mxu0 0
  %293 = vmatprep.subr.bf16.mxu0 0
  %294 = vmatpush2.bf16.msra.mxu0 0
  %295 = vmatprep.subr.bf16.mxu0 0
  %296 = vmatpush2.bf16.msra.mxu0 0
  %297 = vmatprep.subr.bf16.mxu0 0
  %298 = vmatpush2.bf16.msra.mxu0 0
  %299 = vmatprep.subr.bf16.mxu0 0
  %300 = vmatpush2.bf16.msra.mxu0 0
  %301 = vmatprep.subr.bf16.mxu0 0
  %302 = vmatpush2.bf16.msra.mxu0 0
  %303 = vmatprep.subr.bf16.mxu0 0
  %304 = vmatpush2.bf16.msra.mxu0 0
  %305 = vmatprep.subr.bf16.mxu0 0
  %306 = vmatpush2.bf16.msra.mxu0 0
  %307 = vmatprep.mubr.bf16.mxu0 0
  %308 = vmatmul.mubr.bf16.gmra.mxu0 %v195
  %v309 = vpop.f32.mrf.mxu0
  %v310 = vadd.f32 0.0, %v309
  %v311 = vpop.f32.mrf.mxu0
  %v312 = vpop.f32.mrf.mxu0
  %v313 = vadd.f32 0.0, %v312
  %v314 = vpop.f32.mrf.mxu0
  %315 = vmatprep.mubr.bf16.mxu0 0
  %316 = vmatmul.mubr.bf16.gmra.mxu0 %v196
  %v317 = vpop.f32.mrf.mxu0
  %v318 = vadd.f32 0.0, %v317
  %v319 = vpop.f32.mrf.mxu0
  %v320 = vpop.f32.mrf.mxu0
  %v321 = vadd.f32 0.0, %v320
  %v322 = vpop.f32.mrf.mxu0
  %323 = vmatprep.mubr.bf16.mxu0 0
  %324 = vmatmul.mubr.bf16.gmra.mxu0 %v197
  %v325 = vpop.f32.mrf.mxu0
  %v326 = vadd.f32 0.0, %v325
  %v327 = vpop.f32.mrf.mxu0
  %v328 = vpop.f32.mrf.mxu0
  %v329 = vadd.f32 0.0, %v328
  %v330 = vpop.f32.mrf.mxu0
  %331 = vmatprep.mubr.bf16.mxu0 0
  %332 = vmatmul.mubr.bf16.gmra.mxu0 %v198
  %v333 = vpop.f32.mrf.mxu0
  %v334 = vadd.f32 0.0, %v333
  %v335 = vpop.f32.mrf.mxu0
  %v336 = vpop.f32.mrf.mxu0
  %v337 = vadd.f32 0.0, %v336
  %v338 = vpop.f32.mrf.mxu0
  %339 = vmatprep.mubr.bf16.mxu0 0
  %340 = vmatmul.mubr.bf16.gmra.mxu0 %v199
  %v341 = vpop.f32.mrf.mxu0
  %v342 = vadd.f32 0.0, %v341
  %v343 = vpop.f32.mrf.mxu0
  %v344 = vpop.f32.mrf.mxu0
  %v345 = vadd.f32 0.0, %v344
  %v346 = vpop.f32.mrf.mxu0
  %347 = vmatprep.mubr.bf16.mxu0 0
  %348 = vmatmul.mubr.bf16.gmra.mxu0 %v200
  %v349 = vpop.f32.mrf.mxu0
  %v350 = vadd.f32 0.0, %v349
  %v351 = vpop.f32.mrf.mxu0
  %v352 = vpop.f32.mrf.mxu0
  %v353 = vadd.f32 0.0, %v352
  %v354 = vpop.f32.mrf.mxu0
  %355 = vmatprep.mubr.bf16.mxu0 0
  %356 = vmatmul.mubr.bf16.gmra.mxu0 %v201
  %v357 = vpop.f32.mrf.mxu0
  %v358 = vadd.f32 0.0, %v357
  %v359 = vpop.f32.mrf.mxu0
  %v360 = vpop.f32.mrf.mxu0
  %v361 = vadd.f32 0.0, %v360
  %v362 = vpop.f32.mrf.mxu0
  %363 = vmatprep.mubr.bf16.mxu0 0
  %364 = vmatmul.mubr.bf16.gmra.mxu0 %v202
  %v365 = vpop.f32.mrf.mxu0
  %v366 = vadd.f32 0.0, %v365
  %v367 = vpop.f32.mrf.mxu0
  %v368 = vpop.f32.mrf.mxu0
  %v369 = vadd.f32 0.0, %v368
  %v370 = vpop.f32.mrf.mxu0
  %371 = vmatprep.mubr.bf16.mxu0 0
  %372 = vmatmul.mubr.bf16.gmra.mxu0 %v203
  %v373 = vpop.f32.mrf.mxu0
  %v374 = vadd.f32 0.0, %v373
  %v375 = vpop.f32.mrf.mxu0
  %v376 = vpop.f32.mrf.mxu0
  %v377 = vadd.f32 0.0, %v376
  %v378 = vpop.f32.mrf.mxu0
  %379 = vmatprep.mubr.bf16.mxu0 0
  %380 = vmatmul.mubr.bf16.gmra.mxu0 %v204
  %v381 = vpop.f32.mrf.mxu0
  %v382 = vadd.f32 0.0, %v381
  %v383 = vpop.f32.mrf.mxu0
  %v384 = vpop.f32.mrf.mxu0
  %v385 = vadd.f32 0.0, %v384
  %v386 = vpop.f32.mrf.mxu0
  %387 = vmatprep.mubr.bf16.mxu0 0
  %388 = vmatmul.mubr.bf16.gmra.mxu0 %v205
  %v389 = vpop.f32.mrf.mxu0
  %v390 = vadd.f32 0.0, %v389
  %v391 = vpop.f32.mrf.mxu0
  %v392 = vpop.f32.mrf.mxu0
  %v393 = vadd.f32 0.0, %v392
  %v394 = vpop.f32.mrf.mxu0
  %395 = vmatprep.mubr.bf16.mxu0 0
  %396 = vmatmul.mubr.bf16.gmra.mxu0 %v206
  %v397 = vpop.f32.mrf.mxu0
  %v398 = vadd.f32 0.0, %v397
  %v399 = vpop.f32.mrf.mxu0
  %v400 = vpop.f32.mrf.mxu0
  %v401 = vadd.f32 0.0, %v400
  %v402 = vpop.f32.mrf.mxu0
  %403 = vmatprep.mubr.bf16.mxu0 0
  %404 = vmatmul.mubr.bf16.gmra.mxu0 %v207
  %v405 = vpop.f32.mrf.mxu0
  %v406 = vadd.f32 0.0, %v405
  %v407 = vpop.f32.mrf.mxu0
  %v408 = vpop.f32.mrf.mxu0
  %v409 = vadd.f32 0.0, %v408
  %v410 = vpop.f32.mrf.mxu0
  %411 = vmatprep.mubr.bf16.mxu0 0
  %412 = vmatmul.mubr.bf16.gmra.mxu0 %v208
  %v413 = vpop.f32.mrf.mxu0
  %v414 = vadd.f32 0.0, %v413
  %v415 = vpop.f32.mrf.mxu0
  %v416 = vpop.f32.mrf.mxu0
  %v417 = vadd.f32 0.0, %v416
  %v418 = vpop.f32.mrf.mxu0
  %419 = vmatprep.mubr.bf16.mxu0 0
  %420 = vmatmul.mubr.bf16.gmra.mxu0 %v209
  %v421 = vpop.f32.mrf.mxu0
  %v422 = vadd.f32 0.0, %v421
  %v423 = vpop.f32.mrf.mxu0
  %v424 = vpop.f32.mrf.mxu0
  %v425 = vadd.f32 0.0, %v424
  %v426 = vpop.f32.mrf.mxu0
  %427 = vmatprep.mubr.bf16.mxu0 0
  %428 = vmatmul.mubr.bf16.gmra.mxu0 %v210
  %v429 = vpop.f32.mrf.mxu0
  %v430 = vadd.f32 0.0, %v429
  %v431 = vpop.f32.mrf.mxu0
  %v432 = vpop.f32.mrf.mxu0
  %v433 = vadd.f32 0.0, %v432
  %v434 = vpop.f32.mrf.mxu0
  %435 = vdwg.mxu0
  %v436 = vadd.f32 %v51, %v310
  %v437 = vadd.f32 %v52, %v313
  %v438 = vadd.f32 %v53, %v318
  %v439 = vadd.f32 %v54, %v321
  %v440 = vadd.f32 %v55, %v326
  %v441 = vadd.f32 %v56, %v329
  %v442 = vadd.f32 %v57, %v334
  %v443 = vadd.f32 %v58, %v337
  %v444 = vadd.f32 %v59, %v342
  %v445 = vadd.f32 %v60, %v345
  %v446 = vadd.f32 %v61, %v350
  %v447 = vadd.f32 %v62, %v353
  %v448 = vadd.f32 %v63, %v358
  %v449 = vadd.f32 %v64, %v361
  %v450 = vadd.f32 %v65, %v366
  %v451 = vadd.f32 %v66, %v369
  %v452 = vadd.f32 %v67, %v374
  %v453 = vadd.f32 %v68, %v377
  %v454 = vadd.f32 %v69, %v382
  %v455 = vadd.f32 %v70, %v385
  %v456 = vadd.f32 %v71, %v390
  %v457 = vadd.f32 %v72, %v393
  %v458 = vadd.f32 %v73, %v398
  %v459 = vadd.f32 %v74, %v401
  %v460 = vadd.f32 %v75, %v406
  %v461 = vadd.f32 %v76, %v409
  %v462 = vadd.f32 %v77, %v414
  %v463 = vadd.f32 %v78, %v417
  %v464 = vadd.f32 %v79, %v422
  %v465 = vadd.f32 %v80, %v425
  %v466 = vadd.f32 %v81, %v430
  %v467 = vadd.f32 %v82, %v433
  %468 = vst [vmem:[%s3] sm:$0xff] %v436
  %469 = vst [vmem:[%s3 + $0x8] sm:$0xff] %v437
  %470 = vst [vmem:[%s3 + $0x10] sm:$0xff] %v438
  %471 = vst [vmem:[%s3 + $0x18] sm:$0xff] %v439
  %472 = vst [vmem:[%s3 + $0x20] sm:$0xff] %v440
  %473 = vst [vmem:[%s3 + $0x28] sm:$0xff] %v441
  %474 = vst [vmem:[%s3 + $0x30] sm:$0xff] %v442
  %475 = vst [vmem:[%s3 + $0x38] sm:$0xff] %v443
  %476 = vst [vmem:[%s3 + $0x40] sm:$0xff] %v444
  %477 = vst [vmem:[%s3 + $0x48] sm:$0xff] %v445
  %478 = vst [vmem:[%s3 + $0x50] sm:$0xff] %v446
  %479 = vst [vmem:[%s3 + $0x58] sm:$0xff] %v447
  %480 = vst [vmem:[%s3 + $0x60] sm:$0xff] %v448
  %481 = vst [vmem:[%s3 + $0x68] sm:$0xff] %v449
  %482 = vst [vmem:[%s3 + $0x70] sm:$0xff] %v450
  %483 = vst [vmem:[%s3 + $0x78] sm:$0xff] %v451
  %484 = vst [vmem:[%s3 + $0x80] sm:$0xff] %v452
  %485 = vst [vmem:[%s3 + $0x88] sm:$0xff] %v453
  %486 = vst [vmem:[%s3 + $0x90] sm:$0xff] %v454
  %487 = vst [vmem:[%s3 + $0x98] sm:$0xff] %v455
  %488 = vst [vmem:[%s3 + $0xa0] sm:$0xff] %v456
  %489 = vst [vmem:[%s3 + $0xa8] sm:$0xff] %v457
  %490 = vst [vmem:[%s3 + $0xb0] sm:$0xff] %v458
  %491 = vst [vmem:[%s3 + $0xb8] sm:$0xff] %v459
  %492 = vst [vmem:[%s3 + $0xc0] sm:$0xff] %v460
  %493 = vst [vmem:[%s3 + $0xc8] sm:$0xff] %v461
  %494 = vst [vmem:[%s3 + $0xd0] sm:$0xff] %v462
  %495 = vst [vmem:[%s3 + $0xd8] sm:$0xff] %v463
  %496 = vst [vmem:[%s3 + $0xe0] sm:$0xff] %v464
  %497 = vst [vmem:[%s3 + $0xe8] sm:$0xff] %v465
  %498 = vst [vmem:[%s3 + $0xf0] sm:$0xff] %v466
  %499 = vst [vmem:[%s3 + $0xf8] sm:$0xff] %v467
  // Predicated region
  $region18: #{lipnet_forward.9} parent=0 // pred_check
    %p500 = pneg %p15
  $region19: #{lipnet_forward.9} parent=0 // pred_check_branch
    %502 = sbr.rel (%p500) target = $region21
  $region20: #{lipnet_forward.9} parent=0 // pred_region
    %v503 = vld [vmem:[%s3] sm:$0xff]
    %v504 = vld [vmem:[%s3 + $0x8] sm:$0xff]
    %v505 = vld [vmem:[%s3 + $0x10] sm:$0xff]
    %v506 = vld [vmem:[%s3 + $0x18] sm:$0xff]
    %v507 = vld [vmem:[%s3 + $0x20] sm:$0xff]
    %v508 = vld [vmem:[%s3 + $0x28] sm:$0xff]
    %v509 = vld [vmem:[%s3 + $0x30] sm:$0xff]
    %v510 = vld [vmem:[%s3 + $0x38] sm:$0xff]
    %v511 = vld [vmem:[%s3 + $0x40] sm:$0xff]
    %v512 = vld [vmem:[%s3 + $0x48] sm:$0xff]
    %v513 = vld [vmem:[%s3 + $0x50] sm:$0xff]
    %v514 = vld [vmem:[%s3 + $0x58] sm:$0xff]
    %v515 = vld [vmem:[%s3 + $0x60] sm:$0xff]
    %v516 = vld [vmem:[%s3 + $0x68] sm:$0xff]
    %v517 = vld [vmem:[%s3 + $0x70] sm:$0xff]
    %v518 = vld [vmem:[%s3 + $0x78] sm:$0xff]
    %v519 = vld [vmem:[%s3 + $0x80] sm:$0xff]
    %v520 = vld [vmem:[%s3 + $0x88] sm:$0xff]
    %v521 = vld [vmem:[%s3 + $0x90] sm:$0xff]
    %v522 = vld [vmem:[%s3 + $0x98] sm:$0xff]
    %v523 = vld [vmem:[%s3 + $0xa0] sm:$0xff]
    %v524 = vld [vmem:[%s3 + $0xa8] sm:$0xff]
    %v525 = vld [vmem:[%s3 + $0xb0] sm:$0xff]
    %v526 = vld [vmem:[%s3 + $0xb8] sm:$0xff]
    %v527 = vld [vmem:[%s3 + $0xc0] sm:$0xff]
    %v528 = vld [vmem:[%s3 + $0xc8] sm:$0xff]
    %v529 = vld [vmem:[%s3 + $0xd0] sm:$0xff]
    %v530 = vld [vmem:[%s3 + $0xd8] sm:$0xff]
    %v531 = vld [vmem:[%s3 + $0xe0] sm:$0xff]
    %v532 = vld [vmem:[%s3 + $0xe8] sm:$0xff]
    %v533 = vld [vmem:[%s3 + $0xf0] sm:$0xff]
    %v534 = vld [vmem:[%s3 + $0xf8] sm:$0xff]
    %v535 = vld [vmem:[%s2] sm:$0x1]
    %v537 = vlaneseq
    %v538 = vshrl.u32 %v537, 7
    %v539 = vsub.s32 0, %v538
    %v540 = vrot.slane %v535, %v539
    %v542 = vadd.f32 %v503, %v540
    %v543 = vadd.f32 %v504, %v540
    %v544 = vadd.f32 %v505, %v540
    %v545 = vadd.f32 %v506, %v540
    %v546 = vadd.f32 %v507, %v540
    %v547 = vadd.f32 %v508, %v540
    %v548 = vadd.f32 %v509, %v540
    %v549 = vadd.f32 %v510, %v540
    %v550 = vadd.f32 %v511, %v540
    %v551 = vadd.f32 %v512, %v540
    %v552 = vadd.f32 %v513, %v540
    %v553 = vadd.f32 %v514, %v540
    %v554 = vadd.f32 %v515, %v540
    %v555 = vadd.f32 %v516, %v540
    %v556 = vadd.f32 %v517, %v540
    %v557 = vadd.f32 %v518, %v540
    %v558 = vadd.f32 %v519, %v540
    %v559 = vadd.f32 %v520, %v540
    %v560 = vadd.f32 %v521, %v540
    %v561 = vadd.f32 %v522, %v540
    %v562 = vadd.f32 %v523, %v540
    %v563 = vadd.f32 %v524, %v540
    %v564 = vadd.f32 %v525, %v540
    %v565 = vadd.f32 %v526, %v540
    %v566 = vadd.f32 %v527, %v540
    %v567 = vadd.f32 %v528, %v540
    %v568 = vadd.f32 %v529, %v540
    %v569 = vadd.f32 %v530, %v540
    %v570 = vadd.f32 %v531, %v540
    %v571 = vadd.f32 %v532, %v540
    %v572 = vadd.f32 %v533, %v540
    %v573 = vadd.f32 %v534, %v540
    %v574 = vmax.f32 %v542, 0.0
    %v575 = vmax.f32 %v543, 0.0
    %v576 = vmax.f32 %v544, 0.0
    %v577 = vmax.f32 %v545, 0.0
    %v578 = vmax.f32 %v546, 0.0
    %v579 = vmax.f32 %v547, 0.0
    %v580 = vmax.f32 %v548, 0.0
    %v581 = vmax.f32 %v549, 0.0
    %v582 = vmax.f32 %v550, 0.0
    %v583 = vmax.f32 %v551, 0.0
    %v584 = vmax.f32 %v552, 0.0
    %v585 = vmax.f32 %v553, 0.0
    %v586 = vmax.f32 %v554, 0.0
    %v587 = vmax.f32 %v555, 0.0
    %v588 = vmax.f32 %v556, 0.0
    %v589 = vmax.f32 %v557, 0.0
    %v590 = vmax.f32 %v558, 0.0
    %v591 = vmax.f32 %v559, 0.0
    %v592 = vmax.f32 %v560, 0.0
    %v593 = vmax.f32 %v561, 0.0
    %v594 = vmax.f32 %v562, 0.0
    %v595 = vmax.f32 %v563, 0.0
    %v596 = vmax.f32 %v564, 0.0
    %v597 = vmax.f32 %v565, 0.0
    %v598 = vmax.f32 %v566, 0.0
    %v599 = vmax.f32 %v567, 0.0
    %v600 = vmax.f32 %v568, 0.0
    %v601 = vmax.f32 %v569, 0.0
    %v602 = vmax.f32 %v570, 0.0
    %v603 = vmax.f32 %v571, 0.0
    %v604 = vmax.f32 %v572, 0.0
    %v605 = vmax.f32 %v573, 0.0
    %606 = vst [vmem:[%s3] sm:$0xff] %v574
    %607 = vst [vmem:[%s3 + $0x8] sm:$0xff] %v575
    %608 = vst [vmem:[%s3 + $0x10] sm:$0xff] %v576
    %609 = vst [vmem:[%s3 + $0x18] sm:$0xff] %v577
    %610 = vst [vmem:[%s3 + $0x20] sm:$0xff] %v578
    %611 = vst [vmem:[%s3 + $0x28] sm:$0xff] %v579
    %612 = vst [vmem:[%s3 + $0x30] sm:$0xff] %v580
    %613 = vst [vmem:[%s3 + $0x38] sm:$0xff] %v581
    %614 = vst [vmem:[%s3 + $0x40] sm:$0xff] %v582
    %615 = vst [vmem:[%s3 + $0x48] sm:$0xff] %v583
    %616 = vst [vmem:[%s3 + $0x50] sm:$0xff] %v584
    %617 = vst [vmem:[%s3 + $0x58] sm:$0xff] %v585
    %618 = vst [vmem:[%s3 + $0x60] sm:$0xff] %v586
    %619 = vst [vmem:[%s3 + $0x68] sm:$0xff] %v587
    %620 = vst [vmem:[%s3 + $0x70] sm:$0xff] %v588
    %621 = vst [vmem:[%s3 + $0x78] sm:$0xff] %v589
    %622 = vst [vmem:[%s3 + $0x80] sm:$0xff] %v590
    %623 = vst [vmem:[%s3 + $0x88] sm:$0xff] %v591
    %624 = vst [vmem:[%s3 + $0x90] sm:$0xff] %v592
    %625 = vst [vmem:[%s3 + $0x98] sm:$0xff] %v593
    %626 = vst [vmem:[%s3 + $0xa0] sm:$0xff] %v594
    %627 = vst [vmem:[%s3 + $0xa8] sm:$0xff] %v595
    %628 = vst [vmem:[%s3 + $0xb0] sm:$0xff] %v596
    %629 = vst [vmem:[%s3 + $0xb8] sm:$0xff] %v597
    %630 = vst [vmem:[%s3 + $0xc0] sm:$0xff] %v598
    %631 = vst [vmem:[%s3 + $0xc8] sm:$0xff] %v599
    %632 = vst [vmem:[%s3 + $0xd0] sm:$0xff] %v600
    %633 = vst [vmem:[%s3 + $0xd8] sm:$0xff] %v601
    %634 = vst [vmem:[%s3 + $0xe0] sm:$0xff] %v602
    %635 = vst [vmem:[%s3 + $0xe8] sm:$0xff] %v603
    %636 = vst [vmem:[%s3 + $0xf0] sm:$0xff] %v604
    %637 = vst [vmem:[%s3 + $0xf8] sm:$0xff] %v605
  $region21: #{lipnet_forward.9} parent=0 // pred_fallthru
    _
  // Predicated region
  $region22: #{lipnet_forward.9} parent=0 // pred_check
    _
  $region23: #{lipnet_forward.9} parent=0 // pred_check_branch
    %639 = sbr.rel (0) target = $region25
  $region24: #{lipnet_forward.9} parent=0 // pred_region
    _
  $region25: #{lipnet_forward.9} parent=0 // pred_fallthru
    _
  // Predicated region
  $region26: #{lipnet_forward.9} parent=0 // pred_check
    _
  $region27: #{lipnet_forward.9} parent=0 // pred_check_branch
    %641 = sbr.rel (0) target = $region29
  $region28: #{lipnet_forward.9} parent=0 // pred_region
    _
  $region29: #{lipnet_forward.9} parent=0 // pred_fallthru
    _

// kernel: lipnet_forward.10
$region0: #{lipnet_forward.10}
  #allocation0 [shape = 'u32[]', space=smem, size = 0x4, offset = 0x4, fixed_abs, tag = 'smem constant byte address 0x4 - core index']
  #allocation1 [shape = 'u32[144,128]{1,0:T(1,128)}', space=vmem, size = 0x12000, scoped, tag = 'internal scratch']
  %s0 = inlined_call_operand.vmem [shape: bf16[256,896], index: 0, kind: input, shape index: {}]
  %s1 = inlined_call_operand.vmem [shape: bf16[896,128], index: 1, kind: input, shape index: {}]
  %s2 = inlined_call_operand.vmem [shape: f32[1,128], index: 2, kind: input, shape index: {}]
  %s3 = inlined_call_operand.vmem [shape: f32[256,128], index: 3, kind: output, shape index: {}]
  %s4 = sld [smem:[#allocation0]]
  $region30: #{lipnet_forward.10} parent=0
    _
  %s6 = ssub.s32 1, %s4
  %s7 = scalar_select 0, %s6, %s4
  // Predicated region
  $region2: #{lipnet_forward.10} parent=0 // pred_check
    _
  $region3: #{lipnet_forward.10} parent=0 // pred_check_branch
    %9 = sbr.rel (0) target = $region5
  $region4: #{lipnet_forward.10} parent=0 // pred_region
    _
  $region5: #{lipnet_forward.10} parent=0 // pred_fallthru
    _
  // Predicated region
  $region6: #{lipnet_forward.10} parent=0 // pred_check
    _
  $region7: #{lipnet_forward.10} parent=0 // pred_check_branch
    %11 = sbr.rel (0) target = $region9
  $region8: #{lipnet_forward.10} parent=0 // pred_region
    _
  $region9: #{lipnet_forward.10} parent=0 // pred_fallthru
    _
  // Predicated region
  $region10: #{lipnet_forward.10} parent=0 // pred_check
    _
  $region11: #{lipnet_forward.10} parent=0 // pred_check_branch
    %13 = sbr.rel (0) target = $region13
  $region12: #{lipnet_forward.10} parent=0 // pred_region
    _
  $region13: #{lipnet_forward.10} parent=0 // pred_fallthru
    _
  %p15 = scmp.eq.s32.totalorder 0, 0
  // Predicated region
  $region14: #{lipnet_forward.10} parent=0 // pred_check
    %p16 = pneg %p15
  $region15: #{lipnet_forward.10} parent=0 // pred_check_branch
    %18 = sbr.rel (%p16) target = $region17
  $region16: #{lipnet_forward.10} parent=0 // pred_region
    %19 = vst [vmem:[%s3] sm:$0xff] 0.0
    %20 = vst [vmem:[%s3 + $0x8] sm:$0xff] 0.0
    %21 = vst [vmem:[%s3 + $0x10] sm:$0xff] 0.0
    %22 = vst [vmem:[%s3 + $0x18] sm:$0xff] 0.0
    %23 = vst [vmem:[%s3 + $0x20] sm:$0xff] 0.0
    %24 = vst [vmem:[%s3 + $0x28] sm:$0xff] 0.0
    %25 = vst [vmem:[%s3 + $0x30] sm:$0xff] 0.0
    %26 = vst [vmem:[%s3 + $0x38] sm:$0xff] 0.0
    %27 = vst [vmem:[%s3 + $0x40] sm:$0xff] 0.0
    %28 = vst [vmem:[%s3 + $0x48] sm:$0xff] 0.0
    %29 = vst [vmem:[%s3 + $0x50] sm:$0xff] 0.0
    %30 = vst [vmem:[%s3 + $0x58] sm:$0xff] 0.0
    %31 = vst [vmem:[%s3 + $0x60] sm:$0xff] 0.0
    %32 = vst [vmem:[%s3 + $0x68] sm:$0xff] 0.0
    %33 = vst [vmem:[%s3 + $0x70] sm:$0xff] 0.0
    %34 = vst [vmem:[%s3 + $0x78] sm:$0xff] 0.0
    %35 = vst [vmem:[%s3 + $0x80] sm:$0xff] 0.0
    %36 = vst [vmem:[%s3 + $0x88] sm:$0xff] 0.0
    %37 = vst [vmem:[%s3 + $0x90] sm:$0xff] 0.0
    %38 = vst [vmem:[%s3 + $0x98] sm:$0xff] 0.0
    %39 = vst [vmem:[%s3 + $0xa0] sm:$0xff] 0.0
    %40 = vst [vmem:[%s3 + $0xa8] sm:$0xff] 0.0
    %41 = vst [vmem:[%s3 + $0xb0] sm:$0xff] 0.0
    %42 = vst [vmem:[%s3 + $0xb8] sm:$0xff] 0.0
    %43 = vst [vmem:[%s3 + $0xc0] sm:$0xff] 0.0
    %44 = vst [vmem:[%s3 + $0xc8] sm:$0xff] 0.0
    %45 = vst [vmem:[%s3 + $0xd0] sm:$0xff] 0.0
    %46 = vst [vmem:[%s3 + $0xd8] sm:$0xff] 0.0
    %47 = vst [vmem:[%s3 + $0xe0] sm:$0xff] 0.0
    %48 = vst [vmem:[%s3 + $0xe8] sm:$0xff] 0.0
    %49 = vst [vmem:[%s3 + $0xf0] sm:$0xff] 0.0
    %50 = vst [vmem:[%s3 + $0xf8] sm:$0xff] 0.0
  $region17: #{lipnet_forward.10} parent=0 // pred_fallthru
    _
  %v51 = vld [vmem:[%s3] sm:$0xff]
  %v52 = vld [vmem:[%s3 + $0x8] sm:$0xff]
  %v53 = vld [vmem:[%s3 + $0x10] sm:$0xff]
  %v54 = vld [vmem:[%s3 + $0x18] sm:$0xff]
  %v55 = vld [vmem:[%s3 + $0x20] sm:$0xff]
  %v56 = vld [vmem:[%s3 + $0x28] sm:$0xff]
  %v57 = vld [vmem:[%s3 + $0x30] sm:$0xff]
  %v58 = vld [vmem:[%s3 + $0x38] sm:$0xff]
  %v59 = vld [vmem:[%s3 + $0x40] sm:$0xff]
  %v60 = vld [vmem:[%s3 + $0x48] sm:$0xff]
  %v61 = vld [vmem:[%s3 + $0x50] sm:$0xff]
  %v62 = vld [vmem:[%s3 + $0x58] sm:$0xff]
  %v63 = vld [vmem:[%s3 + $0x60] sm:$0xff]
  %v64 = vld [vmem:[%s3 + $0x68] sm:$0xff]
  %v65 = vld [vmem:[%s3 + $0x70] sm:$0xff]
  %v66 = vld [vmem:[%s3 + $0x78] sm:$0xff]
  %v67 = vld [vmem:[%s3 + $0x80] sm:$0xff]
  %v68 = vld [vmem:[%s3 + $0x88] sm:$0xff]
  %v69 = vld [vmem:[%s3 + $0x90] sm:$0xff]
  %v70 = vld [vmem:[%s3 + $0x98] sm:$0xff]
  %v71 = vld [vmem:[%s3 + $0xa0] sm:$0xff]
  %v72 = vld [vmem:[%s3 + $0xa8] sm:$0xff]
  %v73 = vld [vmem:[%s3 + $0xb0] sm:$0xff]
  %v74 = vld [vmem:[%s3 + $0xb8] sm:$0xff]
  %v75 = vld [vmem:[%s3 + $0xc0] sm:$0xff]
  %v76 = vld [vmem:[%s3 + $0xc8] sm:$0xff]
  %v77 = vld [vmem:[%s3 + $0xd0] sm:$0xff]
  %v78 = vld [vmem:[%s3 + $0xd8] sm:$0xff]
  %v79 = vld [vmem:[%s3 + $0xe0] sm:$0xff]
  %v80 = vld [vmem:[%s3 + $0xe8] sm:$0xff]
  %v81 = vld [vmem:[%s3 + $0xf0] sm:$0xff]
  %v82 = vld [vmem:[%s3 + $0xf8] sm:$0xff]
  %v83 = vld [vmem:[%s0] sm:$0xff]
  %v84 = vld [vmem:[%s0 + $0x8] sm:$0xff]
  %v85 = vld [vmem:[%s0 + $0x10] sm:$0xff]
  %v86 = vld [vmem:[%s0 + $0x18] sm:$0xf]
  %v87 = vld [vmem:[%s0 + $0x1c] sm:$0xff]
  %v88 = vld [vmem:[%s0 + $0x24] sm:$0xff]
  %v89 = vld [vmem:[%s0 + $0x2c] sm:$0xff]
  %v90 = vld [vmem:[%s0 + $0x34] sm:$0xf]
  %v91 = vld [vmem:[%s0 + $0x38] sm:$0xff]
  %v92 = vld [vmem:[%s0 + $0x40] sm:$0xff]
  %v93 = vld [vmem:[%s0 + $0x48] sm:$0xff]
  %v94 = vld [vmem:[%s0 + $0x50] sm:$0xf]
  %v95 = vld [vmem:[%s0 + $0x54] sm:$0xff]
  %v96 = vld [vmem:[%s0 + $0x5c] sm:$0xff]
  %v97 = vld [vmem:[%s0 + $0x64] sm:$0xff]
  %v98 = vld [vmem:[%s0 + $0x6c] sm:$0xf]
  %v99 = vld [vmem:[%s0 + $0x70] sm:$0xff]
  %v100 = vld [vmem:[%s0 + $0x78] sm:$0xff]
  %v101 = vld [vmem:[%s0 + $0x80] sm:$0xff]
  %v102 = vld [vmem:[%s0 + $0x88] sm:$0xf]
  %v103 = vld [vmem:[%s0 + $0x8c] sm:$0xff]
  %v104 = vld [vmem:[%s0 + $0x94] sm:$0xff]
  %v105 = vld [vmem:[%s0 + $0x9c] sm:$0xff]
  %v106 = vld [vmem:[%s0 + $0xa4] sm:$0xf]
  %v107 = vld [vmem:[%s0 + $0xa8] sm:$0xff]
  %v108 = vld [vmem:[%s0 + $0xb0] sm:$0xff]
  %v109 = vld [vmem:[%s0 + $0xb8] sm:$0xff]
  %v110 = vld [vmem:[%s0 + $0xc0] sm:$0xf]
  %v111 = vld [vmem:[%s0 + $0xc4] sm:$0xff]
  %v112 = vld [vmem:[%s0 + $0xcc] sm:$0xff]
  %v113 = vld [vmem:[%s0 + $0xd4] sm:$0xff]
  %v114 = vld [vmem:[%s0 + $0xdc] sm:$0xf]
  %v115 = vld [vmem:[%s0 + $0xe0] sm:$0xff]
  %v116 = vld [vmem:[%s0 + $0xe8] sm:$0xff]
  %v117 = vld [vmem:[%s0 + $0xf0] sm:$0xff]
  %v118 = vld [vmem:[%s0 + $0xf8] sm:$0xf]
  %v119 = vld [vmem:[%s0 + $0xfc] sm:$0xff]
  %v120 = vld [vmem:[%s0 + $0x104] sm:$0xff]
  %v121 = vld [vmem:[%s0 + $0x10c] sm:$0xff]
  %v122 = vld [vmem:[%s0 + $0x114] sm:$0xf]
  %v123 = vld [vmem:[%s0 + $0x118] sm:$0xff]
  %v124 = vld [vmem:[%s0 + $0x120] sm:$0xff]
  %v125 = vld [vmem:[%s0 + $0x128] sm:$0xff]
  %v126 = vld [vmem:[%s0 + $0x130] sm:$0xf]
  %v127 = vld [vmem:[%s0 + $0x134] sm:$0xff]
  %v128 = vld [vmem:[%s0 + $0x13c] sm:$0xff]
  %v129 = vld [vmem:[%s0 + $0x144] sm:$0xff]
  %v130 = vld [vmem:[%s0 + $0x14c] sm:$0xf]
  %v131 = vld [vmem:[%s0 + $0x150] sm:$0xff]
  %v132 = vld [vmem:[%s0 + $0x158] sm:$0xff]
  %v133 = vld [vmem:[%s0 + $0x160] sm:$0xff]
  %v134 = vld [vmem:[%s0 + $0x168] sm:$0xf]
  %v135 = vld [vmem:[%s0 + $0x16c] sm:$0xff]
  %v136 = vld [vmem:[%s0 + $0x174] sm:$0xff]
  %v137 = vld [vmem:[%s0 + $0x17c] sm:$0xff]
  %v138 = vld [vmem:[%s0 + $0x184] sm:$0xf]
  %v139 = vld [vmem:[%s0 + $0x188] sm:$0xff]
  %v140 = vld [vmem:[%s0 + $0x190] sm:$0xff]
  %v141 = vld [vmem:[%s0 + $0x198] sm:$0xff]
  %v142 = vld [vmem:[%s0 + $0x1a0] sm:$0xf]
  %v143 = vld [vmem:[%s0 + $0x1a4] sm:$0xff]
  %v144 = vld [vmem:[%s0 + $0x1ac] sm:$0xff]
  %v145 = vld [vmem:[%s0 + $0x1b4] sm:$0xff]
  %v146 = vld [vmem:[%s0 + $0x1bc] sm:$0xf]
  %v147 = vld [vmem:[%s0 + $0x1c0] sm:$0xff]
  %v148 = vld [vmem:[%s0 + $0x1c8] sm:$0xff]
  %v149 = vld [vmem:[%s0 + $0x1d0] sm:$0xff]
  %v150 = vld [vmem:[%s0 + $0x1d8] sm:$0xf]
  %v151 = vld [vmem:[%s0 + $0x1dc] sm:$0xff]
  %v152 = vld [vmem:[%s0 + $0x1e4] sm:$0xff]
  %v153 = vld [vmem:[%s0 + $0x1ec] sm:$0xff]
  %v154 = vld [vmem:[%s0 + $0x1f4] sm:$0xf]
  %v155 = vld [vmem:[%s0 + $0x1f8] sm:$0xff]
  %v156 = vld [vmem:[%s0 + $0x200] sm:$0xff]
  %v157 = vld [vmem:[%s0 + $0x208] sm:$0xff]
  %v158 = vld [vmem:[%s0 + $0x210] sm:$0xf]
  %v159 = vld [vmem:[%s0 + $0x214] sm:$0xff]
  %v160 = vld [vmem:[%s0 + $0x21c] sm:$0xff]
  %v161 = vld [vmem:[%s0 + $0x224] sm:$0xff]
  %v162 = vld [vmem:[%s0 + $0x22c] sm:$0xf]
  %v163 = vld [vmem:[%s0 + $0x230] sm:$0xff]
  %v164 = vld [vmem:[%s0 + $0x238] sm:$0xff]
  %v165 = vld [vmem:[%s0 + $0x240] sm:$0xff]
  %v166 = vld [vmem:[%s0 + $0x248] sm:$0xf]
  %v167 = vld [vmem:[%s0 + $0x24c] sm:$0xff]
  %v168 = vld [vmem:[%s0 + $0x254] sm:$0xff]
  %v169 = vld [vmem:[%s0 + $0x25c] sm:$0xff]
  %v170 = vld [vmem:[%s0 + $0x264] sm:$0xf]
  %v171 = vld [vmem:[%s0 + $0x268] sm:$0xff]
  %v172 = vld [vmem:[%s0 + $0x270] sm:$0xff]
  %v173 = vld [vmem:[%s0 + $0x278] sm:$0xff]
  %v174 = vld [vmem:[%s0 + $0x280] sm:$0xf]
  %v175 = vld [vmem:[%s0 + $0x284] sm:$0xff]
  %v176 = vld [vmem:[%s0 + $0x28c] sm:$0xff]
  %v177 = vld [vmem:[%s0 + $0x294] sm:$0xff]
  %v178 = vld [vmem:[%s0 + $0x29c] sm:$0xf]
  %v179 = vld [vmem:[%s0 + $0x2a0] sm:$0xff]
  %v180 = vld [vmem:[%s0 + $0x2a8] sm:$0xff]
  %v181 = vld [vmem:[%s0 + $0x2b0] sm:$0xff]
  %v182 = vld [vmem:[%s0 + $0x2b8] sm:$0xf]
  %v183 = vld [vmem:[%s0 + $0x2bc] sm:$0xff]
  %v184 = vld [vmem:[%s0 + $0x2c4] sm:$0xff]
  %v185 = vld [vmem:[%s0 + $0x2cc] sm:$0xff]
  %v186 = vld [vmem:[%s0 + $0x2d4] sm:$0xf]
  %v187 = vld [vmem:[%s0 + $0x2d8] sm:$0xff]
  %v188 = vld [vmem:[%s0 + $0x2e0] sm:$0xff]
  %v189 = vld [vmem:[%s0 + $0x2e8] sm:$0xff]
  %v190 = vld [vmem:[%s0 + $0x2f0] sm:$0xf]
  %v191 = vld [vmem:[%s0 + $0x2f4] sm:$0xff]
  %v192 = vld [vmem:[%s0 + $0x2fc] sm:$0xff]
  %v193 = vld [vmem:[%s0 + $0x304] sm:$0xff]
  %v194 = vld [vmem:[%s0 + $0x30c] sm:$0xf]
  %v195 = vld [vmem:[%s0 + $0x310] sm:$0xff]
  %v196 = vld [vmem:[%s0 + $0x318] sm:$0xff]
  %v197 = vld [vmem:[%s0 + $0x320] sm:$0xff]
  %v198 = vld [vmem:[%s0 + $0x328] sm:$0xf]
  %v199 = vld [vmem:[%s0 + $0x32c] sm:$0xff]
  %v200 = vld [vmem:[%s0 + $0x334] sm:$0xff]
  %v201 = vld [vmem:[%s0 + $0x33c] sm:$0xff]
  %v202 = vld [vmem:[%s0 + $0x344] sm:$0xf]
  %v203 = vld [vmem:[%s0 + $0x348] sm:$0xff]
  %v204 = vld [vmem:[%s0 + $0x350] sm:$0xff]
  %v205 = vld [vmem:[%s0 + $0x358] sm:$0xff]
  %v206 = vld [vmem:[%s0 + $0x360] sm:$0xf]
  %v207 = vld [vmem:[%s0 + $0x364] sm:$0xff]
  %v208 = vld [vmem:[%s0 + $0x36c] sm:$0xff]
  %v209 = vld [vmem:[%s0 + $0x374] sm:$0xff]
  %v210 = vld [vmem:[%s0 + $0x37c] sm:$0xf]
  %v211 = vld [vmem:[%s1] sm:$0xf]
  %v212 = vld [vmem:[%s1 + $0x4] sm:$0xf]
  %v213 = vld [vmem:[%s1 + $0x8] sm:$0xf]
  %v214 = vld [vmem:[%s1 + $0xc] sm:$0xf]
  %v215 = vld [vmem:[%s1 + $0x10] sm:$0xf]
  %v216 = vld [vmem:[%s1 + $0x14] sm:$0xf]
  %v217 = vld [vmem:[%s1 + $0x18] sm:$0xf]
  %v218 = vld [vmem:[%s1 + $0x1c] sm:$0xf]
  %v219 = vld [vmem:[%s1 + $0x20] sm:$0xf]
  %v220 = vld [vmem:[%s1 + $0x24] sm:$0xf]
  %v221 = vld [vmem:[%s1 + $0x28] sm:$0xf]
  %v222 = vld [vmem:[%s1 + $0x2c] sm:$0xf]
  %v223 = vld [vmem:[%s1 + $0x30] sm:$0xf]
  %v224 = vld [vmem:[%s1 + $0x34] sm:$0xf]
  %v225 = vld [vmem:[%s1 + $0x38] sm:$0xf]
  %v226 = vld [vmem:[%s1 + $0x3c] sm:$0xf]
  %v227 = vld [vmem:[%s1 + $0x40] sm:$0xf]
  %v228 = vld [vmem:[%s1 + $0x44] sm:$0xf]
  %v229 = vld [vmem:[%s1 + $0x48] sm:$0xf]
  %v230 = vld [vmem:[%s1 + $0x4c] sm:$0xf]
  %v231 = vld [vmem:[%s1 + $0x50] sm:$0xf]
  %v232 = vld [vmem:[%s1 + $0x54] sm:$0xf]
  %v233 = vld [vmem:[%s1 + $0x58] sm:$0xf]
  %v234 = vld [vmem:[%s1 + $0x5c] sm:$0xf]
  %v235 = vld [vmem:[%s1 + $0x60] sm:$0xf]
  %v236 = vld [vmem:[%s1 + $0x64] sm:$0xf]
  %v237 = vld [vmem:[%s1 + $0x68] sm:$0xf]
  %v238 = vld [vmem:[%s1 + $0x6c] sm:$0xf]
  %v239 = vld [vmem:[%s1 + $0x70] sm:$0xf]
  %v240 = vld [vmem:[%s1 + $0x74] sm:$0xf]
  %v241 = vld [vmem:[%s1 + $0x78] sm:$0xf]
  %v242 = vld [vmem:[%s1 + $0x7c] sm:$0xf]
  %v243 = vld [vmem:[%s1 + $0x80] sm:$0xf]
  %v244 = vld [vmem:[%s1 + $0x84] sm:$0xf]
  %v245 = vld [vmem:[%s1 + $0x88] sm:$0xf]
  %v246 = vld [vmem:[%s1 + $0x8c] sm:$0xf]
  %v247 = vld [vmem:[%s1 + $0x90] sm:$0xf]
  %v248 = vld [vmem:[%s1 + $0x94] sm:$0xf]
  %v249 = vld [vmem:[%s1 + $0x98] sm:$0xf]
  %v250 = vld [vmem:[%s1 + $0x9c] sm:$0xf]
  %v251 = vld [vmem:[%s1 + $0xa0] sm:$0xf]
  %v252 = vld [vmem:[%s1 + $0xa4] sm:$0xf]
  %v253 = vld [vmem:[%s1 + $0xa8] sm:$0xf]
  %v254 = vld [vmem:[%s1 + $0xac] sm:$0xf]
  %v255 = vld [vmem:[%s1 + $0xb0] sm:$0xf]
  %v256 = vld [vmem:[%s1 + $0xb4] sm:$0xf]
  %v257 = vld [vmem:[%s1 + $0xb8] sm:$0xf]
  %v258 = vld [vmem:[%s1 + $0xbc] sm:$0xf]
  %v259 = vld [vmem:[%s1 + $0xc0] sm:$0xf]
  %v260 = vld [vmem:[%s1 + $0xc4] sm:$0xf]
  %v261 = vld [vmem:[%s1 + $0xc8] sm:$0xf]
  %v262 = vld [vmem:[%s1 + $0xcc] sm:$0xf]
  %v263 = vld [vmem:[%s1 + $0xd0] sm:$0xf]
  %v264 = vld [vmem:[%s1 + $0xd4] sm:$0xf]
  %v265 = vld [vmem:[%s1 + $0xd8] sm:$0xf]
  %v266 = vld [vmem:[%s1 + $0xdc] sm:$0xf]
  %v267 = vld [vmem:[%s1 + $0xe0] sm:$0xf]
  %v268 = vld [vmem:[%s1 + $0xe4] sm:$0xf]
  %v269 = vld [vmem:[%s1 + $0xe8] sm:$0xf]
  %v270 = vld [vmem:[%s1 + $0xec] sm:$0xf]
  %v271 = vld [vmem:[%s1 + $0xf0] sm:$0xf]
  %v272 = vld [vmem:[%s1 + $0xf4] sm:$0xf]
  %v273 = vld [vmem:[%s1 + $0xf8] sm:$0xf]
  %v274 = vld [vmem:[%s1 + $0xfc] sm:$0xf]
  %v275 = vld [vmem:[%s1 + $0x100] sm:$0xf]
  %v276 = vld [vmem:[%s1 + $0x104] sm:$0xf]
  %v277 = vld [vmem:[%s1 + $0x108] sm:$0xf]
  %v278 = vld [vmem:[%s1 + $0x10c] sm:$0xf]
  %v279 = vld [vmem:[%s1 + $0x110] sm:$0xf]
  %v280 = vld [vmem:[%s1 + $0x114] sm:$0xf]
  %v281 = vld [vmem:[%s1 + $0x118] sm:$0xf]
  %v282 = vld [vmem:[%s1 + $0x11c] sm:$0xf]
  %v283 = vld [vmem:[%s1 + $0x120] sm:$0xf]
  %v284 = vld [vmem:[%s1 + $0x124] sm:$0xf]
  %v285 = vld [vmem:[%s1 + $0x128] sm:$0xf]
  %v286 = vld [vmem:[%s1 + $0x12c] sm:$0xf]
  %v287 = vld [vmem:[%s1 + $0x130] sm:$0xf]
  %v288 = vld [vmem:[%s1 + $0x134] sm:$0xf]
  %v289 = vld [vmem:[%s1 + $0x138] sm:$0xf]
  %v290 = vld [vmem:[%s1 + $0x13c] sm:$0xf]
  %v291 = vld [vmem:[%s1 + $0x140] sm:$0xf]
  %v292 = vld [vmem:[%s1 + $0x144] sm:$0xf]
  %v293 = vld [vmem:[%s1 + $0x148] sm:$0xf]
  %v294 = vld [vmem:[%s1 + $0x14c] sm:$0xf]
  %v295 = vld [vmem:[%s1 + $0x150] sm:$0xf]
  %v296 = vld [vmem:[%s1 + $0x154] sm:$0xf]
  %v297 = vld [vmem:[%s1 + $0x158] sm:$0xf]
  %v298 = vld [vmem:[%s1 + $0x15c] sm:$0xf]
  %v299 = vld [vmem:[%s1 + $0x160] sm:$0xf]
  %v300 = vld [vmem:[%s1 + $0x164] sm:$0xf]
  %v301 = vld [vmem:[%s1 + $0x168] sm:$0xf]
  %v302 = vld [vmem:[%s1 + $0x16c] sm:$0xf]
  %v303 = vld [vmem:[%s1 + $0x170] sm:$0xf]
  %v304 = vld [vmem:[%s1 + $0x174] sm:$0xf]
  %v305 = vld [vmem:[%s1 + $0x178] sm:$0xf]
  %v306 = vld [vmem:[%s1 + $0x17c] sm:$0xf]
  %v307 = vld [vmem:[%s1 + $0x180] sm:$0xf]
  %v308 = vld [vmem:[%s1 + $0x184] sm:$0xf]
  %v309 = vld [vmem:[%s1 + $0x188] sm:$0xf]
  %v310 = vld [vmem:[%s1 + $0x18c] sm:$0xf]
  %v311 = vld [vmem:[%s1 + $0x190] sm:$0xf]
  %v312 = vld [vmem:[%s1 + $0x194] sm:$0xf]
  %v313 = vld [vmem:[%s1 + $0x198] sm:$0xf]
  %v314 = vld [vmem:[%s1 + $0x19c] sm:$0xf]
  %v315 = vld [vmem:[%s1 + $0x1a0] sm:$0xf]
  %v316 = vld [vmem:[%s1 + $0x1a4] sm:$0xf]
  %v317 = vld [vmem:[%s1 + $0x1a8] sm:$0xf]
  %v318 = vld [vmem:[%s1 + $0x1ac] sm:$0xf]
  %v319 = vld [vmem:[%s1 + $0x1b0] sm:$0xf]
  %v320 = vld [vmem:[%s1 + $0x1b4] sm:$0xf]
  %v321 = vld [vmem:[%s1 + $0x1b8] sm:$0xf]
  %v322 = vld [vmem:[%s1 + $0x1bc] sm:$0xf]
  %v451 = vunpack.c.l.b16 %v83
  %v452 = vunpack.c.h.b16 %v83
  %v453 = vunpack.c.l.b16 %v84
  %v454 = vunpack.c.h.b16 %v84
  %v455 = vunpack.c.l.b16 %v85
  %v456 = vunpack.c.h.b16 %v85
  %v457 = vunpack.c.l.b16 %v86
  %v458 = vunpack.c.l.b16 %v87
  %v459 = vunpack.c.h.b16 %v87
  %v460 = vunpack.c.l.b16 %v88
  %v461 = vunpack.c.h.b16 %v88
  %v462 = vunpack.c.l.b16 %v89
  %v463 = vunpack.c.h.b16 %v89
  %v464 = vunpack.c.l.b16 %v90
  %v465 = vunpack.c.l.b16 %v91
  %v466 = vunpack.c.h.b16 %v91
  %v467 = vunpack.c.l.b16 %v92
  %v468 = vunpack.c.h.b16 %v92
  %v469 = vunpack.c.l.b16 %v93
  %v470 = vunpack.c.h.b16 %v93
  %v471 = vunpack.c.l.b16 %v94
  %v472 = vunpack.c.l.b16 %v95
  %v473 = vunpack.c.h.b16 %v95
  %v474 = vunpack.c.l.b16 %v96
  %v475 = vunpack.c.h.b16 %v96
  %v476 = vunpack.c.l.b16 %v97
  %v477 = vunpack.c.h.b16 %v97
  %v478 = vunpack.c.l.b16 %v98
  %v479 = vunpack.c.l.b16 %v99
  %v480 = vunpack.c.h.b16 %v99
  %v481 = vunpack.c.l.b16 %v100
  %v482 = vunpack.c.h.b16 %v100
  %v483 = vunpack.c.l.b16 %v101
  %v484 = vunpack.c.h.b16 %v101
  %v485 = vunpack.c.l.b16 %v102
  %v486 = vunpack.c.l.b16 %v103
  %v487 = vunpack.c.h.b16 %v103
  %v488 = vunpack.c.l.b16 %v104
  %v489 = vunpack.c.h.b16 %v104
  %v490 = vunpack.c.l.b16 %v105
  %v491 = vunpack.c.h.b16 %v105
  %v492 = vunpack.c.l.b16 %v106
  %v493 = vunpack.c.l.b16 %v107
  %v494 = vunpack.c.h.b16 %v107
  %v495 = vunpack.c.l.b16 %v108
  %v496 = vunpack.c.h.b16 %v108
  %v497 = vunpack.c.l.b16 %v109
  %v498 = vunpack.c.h.b16 %v109
  %v499 = vunpack.c.l.b16 %v110
  %v500 = vunpack.c.l.b16 %v111
  %v501 = vunpack.c.h.b16 %v111
  %v502 = vunpack.c.l.b16 %v112
  %v503 = vunpack.c.h.b16 %v112
  %v504 = vunpack.c.l.b16 %v113
  %v505 = vunpack.c.h.b16 %v113
  %v506 = vunpack.c.l.b16 %v114
  %v507 = vunpack.c.l.b16 %v115
  %v508 = vunpack.c.h.b16 %v115
  %v509 = vunpack.c.l.b16 %v116
  %v510 = vunpack.c.h.b16 %v116
  %v511 = vunpack.c.l.b16 %v117
  %v512 = vunpack.c.h.b16 %v117
  %v513 = vunpack.c.l.b16 %v118
  %v514 = vunpack.c.l.b16 %v119
  %v515 = vunpack.c.h.b16 %v119
  %v516 = vunpack.c.l.b16 %v120
  %v517 = vunpack.c.h.b16 %v120
  %v518 = vunpack.c.l.b16 %v121
  %v519 = vunpack.c.h.b16 %v121
  %v520 = vunpack.c.l.b16 %v122
  %v521 = vunpack.c.l.b16 %v123
  %v522 = vunpack.c.h.b16 %v123
  %v523 = vunpack.c.l.b16 %v124
  %v524 = vunpack.c.h.b16 %v124
  %v525 = vunpack.c.l.b16 %v125
  %v526 = vunpack.c.h.b16 %v125
  %v527 = vunpack.c.l.b16 %v126
  %v528 = vunpack.c.l.b16 %v127
  %v529 = vunpack.c.h.b16 %v127
  %v530 = vunpack.c.l.b16 %v128
  %v531 = vunpack.c.h.b16 %v128
  %v532 = vunpack.c.l.b16 %v129
  %v533 = vunpack.c.h.b16 %v129
  %v534 = vunpack.c.l.b16 %v130
  %v535 = vunpack.c.l.b16 %v131
  %v536 = vunpack.c.h.b16 %v131
  %v537 = vunpack.c.l.b16 %v132
  %v538 = vunpack.c.h.b16 %v132
  %v539 = vunpack.c.l.b16 %v133
  %v540 = vunpack.c.h.b16 %v133
  %v541 = vunpack.c.l.b16 %v134
  %v542 = vunpack.c.l.b16 %v135
  %v543 = vunpack.c.h.b16 %v135
  %v544 = vunpack.c.l.b16 %v136
  %v545 = vunpack.c.h.b16 %v136
  %v546 = vunpack.c.l.b16 %v137
  %v547 = vunpack.c.h.b16 %v137
  %v548 = vunpack.c.l.b16 %v138
  %v549 = vunpack.c.l.b16 %v139
  %v550 = vunpack.c.h.b16 %v139
  %v551 = vunpack.c.l.b16 %v140
  %v552 = vunpack.c.h.b16 %v140
  %v553 = vunpack.c.l.b16 %v141
  %v554 = vunpack.c.h.b16 %v141
  %v555 = vunpack.c.l.b16 %v142
  %v556 = vunpack.c.l.b16 %v143
  %v557 = vunpack.c.h.b16 %v143
  %v558 = vunpack.c.l.b16 %v144
  %v559 = vunpack.c.h.b16 %v144
  %v560 = vunpack.c.l.b16 %v145
  %v561 = vunpack.c.h.b16 %v145
  %v562 = vunpack.c.l.b16 %v146
  %v563 = vunpack.c.l.b16 %v147
  %v564 = vunpack.c.h.b16 %v147
  %v565 = vunpack.c.l.b16 %v148
  %v566 = vunpack.c.h.b16 %v148
  %v567 = vunpack.c.l.b16 %v149
  %v568 = vunpack.c.h.b16 %v149
  %v569 = vunpack.c.l.b16 %v150
  %v570 = vunpack.c.l.b16 %v151
  %v571 = vunpack.c.h.b16 %v151
  %v572 = vunpack.c.l.b16 %v152
  %v573 = vunpack.c.h.b16 %v152
  %v574 = vunpack.c.l.b16 %v153
  %v575 = vunpack.c.h.b16 %v153
  %v576 = vunpack.c.l.b16 %v154
  %v577 = vunpack.c.l.b16 %v155
  %v578 = vunpack.c.h.b16 %v155
  %v579 = vunpack.c.l.b16 %v156
  %v580 = vunpack.c.h.b16 %v156
  %v581 = vunpack.c.l.b16 %v157
  %v582 = vunpack.c.h.b16 %v157
  %v583 = vunpack.c.l.b16 %v158
  %v584 = vunpack.c.l.b16 %v159
  %v585 = vunpack.c.h.b16 %v159
  %v586 = vunpack.c.l.b16 %v160
  %v587 = vunpack.c.h.b16 %v160
  %v588 = vunpack.c.l.b16 %v161
  %v589 = vunpack.c.h.b16 %v161
  %v590 = vunpack.c.l.b16 %v162
  %v591 = vunpack.c.l.b16 %v163
  %v592 = vunpack.c.h.b16 %v163
  %v593 = vunpack.c.l.b16 %v164
  %v594 = vunpack.c.h.b16 %v164
  %v595 = vunpack.c.l.b16 %v165
  %v596 = vunpack.c.h.b16 %v165
  %v597 = vunpack.c.l.b16 %v166
  %v598 = vunpack.c.l.b16 %v167
  %v599 = vunpack.c.h.b16 %v167
  %v600 = vunpack.c.l.b16 %v168
  %v601 = vunpack.c.h.b16 %v168
  %v602 = vunpack.c.l.b16 %v169
  %v603 = vunpack.c.h.b16 %v169
  %v604 = vunpack.c.l.b16 %v170
  %v605 = vunpack.c.l.b16 %v171
  %v606 = vunpack.c.h.b16 %v171
  %v607 = vunpack.c.l.b16 %v172
  %v608 = vunpack.c.h.b16 %v172
  %v609 = vunpack.c.l.b16 %v173
  %v610 = vunpack.c.h.b16 %v173
  %v611 = vunpack.c.l.b16 %v174
  %v612 = vunpack.c.l.b16 %v175
  %v613 = vunpack.c.h.b16 %v175
  %v614 = vunpack.c.l.b16 %v176
  %v615 = vunpack.c.h.b16 %v176
  %v616 = vunpack.c.l.b16 %v177
  %v617 = vunpack.c.h.b16 %v177
  %v618 = vunpack.c.l.b16 %v178
  %v619 = vunpack.c.l.b16 %v179
  %v620 = vunpack.c.h.b16 %v179
  %v621 = vunpack.c.l.b16 %v180
  %v622 = vunpack.c.h.b16 %v180
  %v623 = vunpack.c.l.b16 %v181
  %v624 = vunpack.c.h.b16 %v181
  %v625 = vunpack.c.l.b16 %v182
  %v626 = vunpack.c.l.b16 %v183
  %v627 = vunpack.c.h.b16 %v183
  %v628 = vunpack.c.l.b16 %v184
  %v629 = vunpack.c.h.b16 %v184
  %v630 = vunpack.c.l.b16 %v185
  %v631 = vunpack.c.h.b16 %v185
  %v632 = vunpack.c.l.b16 %v186
  %v633 = vunpack.c.l.b16 %v187
  %v634 = vunpack.c.h.b16 %v187
  %v635 = vunpack.c.l.b16 %v188
  %v636 = vunpack.c.h.b16 %v188
  %v637 = vunpack.c.l.b16 %v189
  %v638 = vunpack.c.h.b16 %v189
  %v639 = vunpack.c.l.b16 %v190
  %v640 = vunpack.c.l.b16 %v191
  %v641 = vunpack.c.h.b16 %v191
  %v642 = vunpack.c.l.b16 %v192
  %v643 = vunpack.c.h.b16 %v192
  %v644 = vunpack.c.l.b16 %v193
  %v645 = vunpack.c.h.b16 %v193
  %v646 = vunpack.c.l.b16 %v194
  %v647 = vunpack.c.l.b16 %v195
  %v648 = vunpack.c.h.b16 %v195
  %v649 = vunpack.c.l.b16 %v196
  %v650 = vunpack.c.h.b16 %v196
  %v651 = vunpack.c.l.b16 %v197
  %v652 = vunpack.c.h.b16 %v197
  %v653 = vunpack.c.l.b16 %v198
  %v654 = vunpack.c.l.b16 %v199
  %v655 = vunpack.c.h.b16 %v199
  %v656 = vunpack.c.l.b16 %v200
  %v657 = vunpack.c.h.b16 %v200
  %v658 = vunpack.c.l.b16 %v201
  %v659 = vunpack.c.h.b16 %v201
  %v660 = vunpack.c.l.b16 %v202
  %v661 = vunpack.c.l.b16 %v203
  %v662 = vunpack.c.h.b16 %v203
  %v663 = vunpack.c.l.b16 %v204
  %v664 = vunpack.c.h.b16 %v204
  %v665 = vunpack.c.l.b16 %v205
  %v666 = vunpack.c.h.b16 %v205
  %v667 = vunpack.c.l.b16 %v206
  %v668 = vunpack.c.l.b16 %v207
  %v669 = vunpack.c.h.b16 %v207
  %v670 = vunpack.c.l.b16 %v208
  %v671 = vunpack.c.h.b16 %v208
  %v672 = vunpack.c.l.b16 %v209
  %v673 = vunpack.c.h.b16 %v209
  %v674 = vunpack.c.l.b16 %v210
  %v675 = vpack.c.b16 %v458, %v451
  %v676 = vpack.c.b16 %v459, %v452
  %v677 = vpack.c.b16 %v460, %v453
  %v678 = vpack.c.b16 %v461, %v454
  %v679 = vpack.c.b16 %v462, %v455
  %v680 = vpack.c.b16 %v463, %v456
  %v681 = vpack.c.b16 %v464, %v457
  %v682 = vpack.c.b16 %v472, %v465
  %v683 = vpack.c.b16 %v473, %v466
  %v684 = vpack.c.b16 %v474, %v467
  %v685 = vpack.c.b16 %v475, %v468
  %v686 = vpack.c.b16 %v476, %v469
  %v687 = vpack.c.b16 %v477, %v470
  %v688 = vpack.c.b16 %v478, %v471
  %v689 = vpack.c.b16 %v486, %v479
  %v690 = vpack.c.b16 %v487, %v480
  %v691 = vpack.c.b16 %v488, %v481
  %v692 = vpack.c.b16 %v489, %v482
  %v693 = vpack.c.b16 %v490, %v483
  %v694 = vpack.c.b16 %v491, %v484
  %v695 = vpack.c.b16 %v492, %v485
  %v696 = vpack.c.b16 %v500, %v493
  %v697 = vpack.c.b16 %v501, %v494
  %v698 = vpack.c.b16 %v502, %v495
  %v699 = vpack.c.b16 %v503, %v496
  %v700 = vpack.c.b16 %v504, %v497
  %v701 = vpack.c.b16 %v505, %v498
  %v702 = vpack.c.b16 %v506, %v499
  %v703 = vpack.c.b16 %v514, %v507
  %v704 = vpack.c.b16 %v515, %v508
  %v705 = vpack.c.b16 %v516, %v509
  %v706 = vpack.c.b16 %v517, %v510
  %v707 = vpack.c.b16 %v518, %v511
  %v708 = vpack.c.b16 %v519, %v512
  %v709 = vpack.c.b16 %v520, %v513
  %v710 = vpack.c.b16 %v528, %v521
  %v711 = vpack.c.b16 %v529, %v522
  %v712 = vpack.c.b16 %v530, %v523
  %v713 = vpack.c.b16 %v531, %v524
  %v714 = vpack.c.b16 %v532, %v525
  %v715 = vpack.c.b16 %v533, %v526
  %v716 = vpack.c.b16 %v534, %v527
  %v717 = vpack.c.b16 %v542, %v535
  %v718 = vpack.c.b16 %v543, %v536
  %v719 = vpack.c.b16 %v544, %v537
  %v720 = vpack.c.b16 %v545, %v538
  %v721 = vpack.c.b16 %v546, %v539
  %v722 = vpack.c.b16 %v547, %v540
  %v723 = vpack.c.b16 %v548, %v541
  %v724 = vpack.c.b16 %v556, %v549
  %v725 = vpack.c.b16 %v557, %v550
  %v726 = vpack.c.b16 %v558, %v551
  %v727 = vpack.c.b16 %v559, %v552
  %v728 = vpack.c.b16 %v560, %v553
  %v729 = vpack.c.b16 %v561, %v554
  %v730 = vpack.c.b16 %v562, %v555
  %v731 = vpack.c.b16 %v570, %v563
  %v732 = vpack.c.b16 %v571, %v564
  %v733 = vpack.c.b16 %v572, %v565
  %v734 = vpack.c.b16 %v573, %v566
  %v735 = vpack.c.b16 %v574, %v567
  %v736 = vpack.c.b16 %v575, %v568
  %v737 = vpack.c.b16 %v576, %v569
  %v738 = vpack.c.b16 %v584, %v577
  %v739 = vpack.c.b16 %v585, %v578
  %v740 = vpack.c.b16 %v586, %v579
  %v741 = vpack.c.b16 %v587, %v580
  %v742 = vpack.c.b16 %v588, %v581
  %v743 = vpack.c.b16 %v589, %v582
  %v744 = vpack.c.b16 %v590, %v583
  %v745 = vpack.c.b16 %v598, %v591
  %v746 = vpack.c.b16 %v599, %v592
  %v747 = vpack.c.b16 %v600, %v593
  %v748 = vpack.c.b16 %v601, %v594
  %v749 = vpack.c.b16 %v602, %v595
  %v750 = vpack.c.b16 %v603, %v596
  %v751 = vpack.c.b16 %v604, %v597
  %v752 = vpack.c.b16 %v612, %v605
  %v753 = vpack.c.b16 %v613, %v606
  %v754 = vpack.c.b16 %v614, %v607
  %v755 = vpack.c.b16 %v615, %v608
  %v756 = vpack.c.b16 %v616, %v609
  %v757 = vpack.c.b16 %v617, %v610
  %v758 = vpack.c.b16 %v618, %v611
  %v759 = vpack.c.b16 %v626, %v619
  %v760 = vpack.c.b16 %v627, %v620
  %v761 = vpack.c.b16 %v628, %v621
  %v762 = vpack.c.b16 %v629, %v622
  %v763 = vpack.c.b16 %v630, %v623
  %v764 = vpack.c.b16 %v631, %v624
  %v765 = vpack.c.b16 %v632, %v625
  %v766 = vpack.c.b16 %v640, %v633
  %v767 = vpack.c.b16 %v641, %v634
  %v768 = vpack.c.b16 %v642, %v635
  %v769 = vpack.c.b16 %v643, %v636
  %v770 = vpack.c.b16 %v644, %v637
  %v771 = vpack.c.b16 %v645, %v638
  %v772 = vpack.c.b16 %v646, %v639
  %v773 = vpack.c.b16 %v654, %v647
  %v774 = vpack.c.b16 %v655, %v648
  %v775 = vpack.c.b16 %v656, %v649
  %v776 = vpack.c.b16 %v657, %v650
  %v777 = vpack.c.b16 %v658, %v651
  %v778 = vpack.c.b16 %v659, %v652
  %v779 = vpack.c.b16 %v660, %v653
  %v780 = vpack.c.b16 %v668, %v661
  %v781 = vpack.c.b16 %v669, %v662
  %v782 = vpack.c.b16 %v670, %v663
  %v783 = vpack.c.b16 %v671, %v664
  %v784 = vpack.c.b16 %v672, %v665
  %v785 = vpack.c.b16 %v673, %v666
  %v786 = vpack.c.b16 %v674, %v667
  %v1011 = vunpack.c.l.b16 %v211
  %v1012 = vunpack.c.l.b16 %v212
  %v1013 = vunpack.c.l.b16 %v213
  %v1014 = vunpack.c.l.b16 %v214
  %v1015 = vunpack.c.l.b16 %v215
  %v1016 = vunpack.c.l.b16 %v216
  %v1017 = vunpack.c.l.b16 %v217
  %v1018 = vunpack.c.l.b16 %v218
  %v1019 = vunpack.c.l.b16 %v219
  %v1020 = vunpack.c.l.b16 %v220
  %v1021 = vunpack.c.l.b16 %v221
  %v1022 = vunpack.c.l.b16 %v222
  %v1023 = vunpack.c.l.b16 %v223
  %v1024 = vunpack.c.l.b16 %v224
  %v1025 = vunpack.c.l.b16 %v225
  %v1026 = vunpack.c.l.b16 %v226
  %v1027 = vunpack.c.l.b16 %v227
  %v1028 = vunpack.c.l.b16 %v228
  %v1029 = vunpack.c.l.b16 %v229
  %v1030 = vunpack.c.l.b16 %v230
  %v1031 = vunpack.c.l.b16 %v231
  %v1032 = vunpack.c.l.b16 %v232
  %v1033 = vunpack.c.l.b16 %v233
  %v1034 = vunpack.c.l.b16 %v234
  %v1035 = vunpack.c.l.b16 %v235
  %v1036 = vunpack.c.l.b16 %v236
  %v1037 = vunpack.c.l.b16 %v237
  %v1038 = vunpack.c.l.b16 %v238
  %v1039 = vunpack.c.l.b16 %v239
  %v1040 = vunpack.c.l.b16 %v240
  %v1041 = vunpack.c.l.b16 %v241
  %v1042 = vunpack.c.l.b16 %v242
  %v1043 = vunpack.c.l.b16 %v243
  %v1044 = vunpack.c.l.b16 %v244
  %v1045 = vunpack.c.l.b16 %v245
  %v1046 = vunpack.c.l.b16 %v246
  %v1047 = vunpack.c.l.b16 %v247
  %v1048 = vunpack.c.l.b16 %v248
  %v1049 = vunpack.c.l.b16 %v249
  %v1050 = vunpack.c.l.b16 %v250
  %v1051 = vunpack.c.l.b16 %v251
  %v1052 = vunpack.c.l.b16 %v252
  %v1053 = vunpack.c.l.b16 %v253
  %v1054 = vunpack.c.l.b16 %v254
  %v1055 = vunpack.c.l.b16 %v255
  %v1056 = vunpack.c.l.b16 %v256
  %v1057 = vunpack.c.l.b16 %v257
  %v1058 = vunpack.c.l.b16 %v258
  %v1059 = vunpack.c.l.b16 %v259
  %v1060 = vunpack.c.l.b16 %v260
  %v1061 = vunpack.c.l.b16 %v261
  %v1062 = vunpack.c.l.b16 %v262
  %v1063 = vunpack.c.l.b16 %v263
  %v1064 = vunpack.c.l.b16 %v264
  %v1065 = vunpack.c.l.b16 %v265
  %v1066 = vunpack.c.l.b16 %v266
  %v1067 = vunpack.c.l.b16 %v267
  %v1068 = vunpack.c.l.b16 %v268
  %v1069 = vunpack.c.l.b16 %v269
  %v1070 = vunpack.c.l.b16 %v270
  %v1071 = vunpack.c.l.b16 %v271
  %v1072 = vunpack.c.l.b16 %v272
  %v1073 = vunpack.c.l.b16 %v273
  %v1074 = vunpack.c.l.b16 %v274
  %v1075 = vunpack.c.l.b16 %v275
  %v1076 = vunpack.c.l.b16 %v276
  %v1077 = vunpack.c.l.b16 %v277
  %v1078 = vunpack.c.l.b16 %v278
  %v1079 = vunpack.c.l.b16 %v279
  %v1080 = vunpack.c.l.b16 %v280
  %v1081 = vunpack.c.l.b16 %v281
  %v1082 = vunpack.c.l.b16 %v282
  %v1083 = vunpack.c.l.b16 %v283
  %v1084 = vunpack.c.l.b16 %v284
  %v1085 = vunpack.c.l.b16 %v285
  %v1086 = vunpack.c.l.b16 %v286
  %v1087 = vunpack.c.l.b16 %v287
  %v1088 = vunpack.c.l.b16 %v288
  %v1089 = vunpack.c.l.b16 %v289
  %v1090 = vunpack.c.l.b16 %v290
  %v1091 = vunpack.c.l.b16 %v291
  %v1092 = vunpack.c.l.b16 %v292
  %v1093 = vunpack.c.l.b16 %v293
  %v1094 = vunpack.c.l.b16 %v294
  %v1095 = vunpack.c.l.b16 %v295
  %v1096 = vunpack.c.l.b16 %v296
  %v1097 = vunpack.c.l.b16 %v297
  %v1098 = vunpack.c.l.b16 %v298
  %v1099 = vunpack.c.l.b16 %v299
  %v1100 = vunpack.c.l.b16 %v300
  %v1101 = vunpack.c.l.b16 %v301
  %v1102 = vunpack.c.l.b16 %v302
  %v1103 = vunpack.c.l.b16 %v303
  %v1104 = vunpack.c.l.b16 %v304
  %v1105 = vunpack.c.l.b16 %v305
  %v1106 = vunpack.c.l.b16 %v306
  %v1107 = vunpack.c.l.b16 %v307
  %v1108 = vunpack.c.l.b16 %v308
  %v1109 = vunpack.c.l.b16 %v309
  %v1110 = vunpack.c.l.b16 %v310
  %v1111 = vunpack.c.l.b16 %v311
  %v1112 = vunpack.c.l.b16 %v312
  %v1113 = vunpack.c.l.b16 %v313
  %v1114 = vunpack.c.l.b16 %v314
  %v1115 = vunpack.c.l.b16 %v315
  %v1116 = vunpack.c.l.b16 %v316
  %v1117 = vunpack.c.l.b16 %v317
  %v1118 = vunpack.c.l.b16 %v318
  %v1119 = vunpack.c.l.b16 %v319
  %v1120 = vunpack.c.l.b16 %v320
  %v1121 = vunpack.c.l.b16 %v321
  %v1122 = vunpack.c.l.b16 %v322
  %v1123 = vpack.c.b16 %v1012, %v1011
  %v1124 = vpack.c.b16 %v1014, %v1013
  %v1125 = vpack.c.b16 %v1016, %v1015
  %v1126 = vpack.c.b16 %v1018, %v1017
  %v1127 = vpack.c.b16 %v1020, %v1019
  %v1128 = vpack.c.b16 %v1022, %v1021
  %v1129 = vpack.c.b16 %v1024, %v1023
  %v1130 = vpack.c.b16 %v1026, %v1025
  %v1131 = vpack.c.b16 %v1028, %v1027
  %v1132 = vpack.c.b16 %v1030, %v1029
  %v1133 = vpack.c.b16 %v1032, %v1031
  %v1134 = vpack.c.b16 %v1034, %v1033
  %v1135 = vpack.c.b16 %v1036, %v1035
  %v1136 = vpack.c.b16 %v1038, %v1037
  %v1137 = vpack.c.b16 %v1040, %v1039
  %v1138 = vpack.c.b16 %v1042, %v1041
  %v1139 = vpack.c.b16 %v1044, %v1043
  %v1140 = vpack.c.b16 %v1046, %v1045
  %v1141 = vpack.c.b16 %v1048, %v1047
  %v1142 = vpack.c.b16 %v1050, %v1049
  %v1143 = vpack.c.b16 %v1052, %v1051
  %v1144 = vpack.c.b16 %v1054, %v1053
  %v1145 = vpack.c.b16 %v1056, %v1055
  %v1146 = vpack.c.b16 %v1058, %v1057
  %v1147 = vpack.c.b16 %v1060, %v1059
  %v1148 = vpack.c.b16 %v1062, %v1061
  %v1149 = vpack.c.b16 %v1064, %v1063
  %v1150 = vpack.c.b16 %v1066, %v1065
  %v1151 = vpack.c.b16 %v1068, %v1067
  %v1152 = vpack.c.b16 %v1070, %v1069
  %v1153 = vpack.c.b16 %v1072, %v1071
  %v1154 = vpack.c.b16 %v1074, %v1073
  %v1155 = vpack.c.b16 %v1076, %v1075
  %v1156 = vpack.c.b16 %v1078, %v1077
  %v1157 = vpack.c.b16 %v1080, %v1079
  %v1158 = vpack.c.b16 %v1082, %v1081
  %v1159 = vpack.c.b16 %v1084, %v1083
  %v1160 = vpack.c.b16 %v1086, %v1085
  %v1161 = vpack.c.b16 %v1088, %v1087
  %v1162 = vpack.c.b16 %v1090, %v1089
  %v1163 = vpack.c.b16 %v1092, %v1091
  %v1164 = vpack.c.b16 %v1094, %v1093
  %v1165 = vpack.c.b16 %v1096, %v1095
  %v1166 = vpack.c.b16 %v1098, %v1097
  %v1167 = vpack.c.b16 %v1100, %v1099
  %v1168 = vpack.c.b16 %v1102, %v1101
  %v1169 = vpack.c.b16 %v1104, %v1103
  %v1170 = vpack.c.b16 %v1106, %v1105
  %v1171 = vpack.c.b16 %v1108, %v1107
  %v1172 = vpack.c.b16 %v1110, %v1109
  %v1173 = vpack.c.b16 %v1112, %v1111
  %v1174 = vpack.c.b16 %v1114, %v1113
  %v1175 = vpack.c.b16 %v1116, %v1115
  %v1176 = vpack.c.b16 %v1118, %v1117
  %v1177 = vpack.c.b16 %v1120, %v1119
  %v1178 = vpack.c.b16 %v1122, %v1121
  %1235 = vmatprep.subr.bf16.mxu0 0
  %1236 = vmatpush1.bf16.msra.mxu0 %v1130
  %1237 = vmatprep.subr.bf16.mxu0 0
  %1238 = vmatpush1.bf16.msra.mxu0 %v1129
  %1239 = vmatprep.subr.bf16.mxu0 0
  %1240 = vmatpush1.bf16.msra.mxu0 %v1128
  %1241 = vmatprep.subr.bf16.mxu0 0
  %1242 = vmatpush1.bf16.msra.mxu0 %v1127
  %1243 = vmatprep.subr.bf16.mxu0 0
  %1244 = vmatpush1.bf16.msra.mxu0 %v1126
  %1245 = vmatprep.subr.bf16.mxu0 0
  %1246 = vmatpush1.bf16.msra.mxu0 %v1125
  %1247 = vmatprep.subr.bf16.mxu0 0
  %1248 = vmatpush1.bf16.msra.mxu0 %v1124
  %1249 = vmatprep.subr.bf16.mxu0 0
  %1250 = vmatpush1.bf16.msra.mxu0 %v1123
  %1251 = vmatprep.subr.bf16.mxu0 0
  %1252 = vmatpush2.bf16.msra.mxu0 %v1138
  %1253 = vmatprep.subr.bf16.mxu0 0
  %1254 = vmatpush2.bf16.msra.mxu0 %v1137
  %1255 = vmatprep.subr.bf16.mxu0 0
  %1256 = vmatpush2.bf16.msra.mxu0 %v1136
  %1257 = vmatprep.subr.bf16.mxu0 0
  %1258 = vmatpush2.bf16.msra.mxu0 %v1135
  %1259 = vmatprep.subr.bf16.mxu0 0
  %1260 = vmatpush2.bf16.msra.mxu0 %v1134
  %1261 = vmatprep.subr.bf16.mxu0 0
  %1262 = vmatpush2.bf16.msra.mxu0 %v1133
  %1263 = vmatprep.subr.bf16.mxu0 0
  %1264 = vmatpush2.bf16.msra.mxu0 %v1132
  %1265 = vmatprep.subr.bf16.mxu0 0
  %1266 = vmatpush2.bf16.msra.mxu0 %v1131
  %1267 = vmatprep.mubr.bf16.mxu0 %v676
  %1268 = vmatmul.mubr.bf16.gmra.mxu0 %v675
  %v1269 = vpop.f32.mrf.mxu0
  %v1270 = vadd.f32 0.0, %v1269
  %v1271 = vpop.f32.mrf.mxu0
  %v1272 = vpop.f32.mrf.mxu0
  %v1273 = vadd.f32 0.0, %v1272
  %v1274 = vpop.f32.mrf.mxu0
  %1275 = vmatprep.mubr.bf16.mxu0 %v683
  %1276 = vmatmul.mubr.bf16.gmra.mxu0 %v682
  %v1277 = vpop.f32.mrf.mxu0
  %v1278 = vadd.f32 0.0, %v1277
  %v1279 = vpop.f32.mrf.mxu0
  %v1280 = vpop.f32.mrf.mxu0
  %v1281 = vadd.f32 0.0, %v1280
  %v1282 = vpop.f32.mrf.mxu0
  %1283 = vmatprep.mubr.bf16.mxu0 %v690
  %1284 = vmatmul.mubr.bf16.gmra.mxu0 %v689
  %v1285 = vpop.f32.mrf.mxu0
  %v1286 = vadd.f32 0.0, %v1285
  %v1287 = vpop.f32.mrf.mxu0
  %v1288 = vpop.f32.mrf.mxu0
  %v1289 = vadd.f32 0.0, %v1288
  %v1290 = vpop.f32.mrf.mxu0
  %1291 = vmatprep.mubr.bf16.mxu0 %v697
  %1292 = vmatmul.mubr.bf16.gmra.mxu0 %v696
  %v1293 = vpop.f32.mrf.mxu0
  %v1294 = vadd.f32 0.0, %v1293
  %v1295 = vpop.f32.mrf.mxu0
  %v1296 = vpop.f32.mrf.mxu0
  %v1297 = vadd.f32 0.0, %v1296
  %v1298 = vpop.f32.mrf.mxu0
  %1299 = vmatprep.mubr.bf16.mxu0 %v704
  %1300 = vmatmul.mubr.bf16.gmra.mxu0 %v703
  %v1301 = vpop.f32.mrf.mxu0
  %v1302 = vadd.f32 0.0, %v1301
  %v1303 = vpop.f32.mrf.mxu0
  %v1304 = vpop.f32.mrf.mxu0
  %v1305 = vadd.f32 0.0, %v1304
  %v1306 = vpop.f32.mrf.mxu0
  %1307 = vmatprep.mubr.bf16.mxu0 %v711
  %1308 = vmatmul.mubr.bf16.gmra.mxu0 %v710
  %v1309 = vpop.f32.mrf.mxu0
  %v1310 = vadd.f32 0.0, %v1309
  %v1311 = vpop.f32.mrf.mxu0
  %v1312 = vpop.f32.mrf.mxu0
  %v1313 = vadd.f32 0.0, %v1312
  %v1314 = vpop.f32.mrf.mxu0
  %1315 = vmatprep.mubr.bf16.mxu0 %v718
  %1316 = vmatmul.mubr.bf16.gmra.mxu0 %v717
  %v1317 = vpop.f32.mrf.mxu0
  %v1318 = vadd.f32 0.0, %v1317
  %v1319 = vpop.f32.mrf.mxu0
  %v1320 = vpop.f32.mrf.mxu0
  %v1321 = vadd.f32 0.0, %v1320
  %v1322 = vpop.f32.mrf.mxu0
  %1323 = vmatprep.mubr.bf16.mxu0 %v725
  %1324 = vmatmul.mubr.bf16.gmra.mxu0 %v724
  %v1325 = vpop.f32.mrf.mxu0
  %v1326 = vadd.f32 0.0, %v1325
  %v1327 = vpop.f32.mrf.mxu0
  %v1328 = vpop.f32.mrf.mxu0
  %v1329 = vadd.f32 0.0, %v1328
  %v1330 = vpop.f32.mrf.mxu0
  %1331 = vmatprep.mubr.bf16.mxu0 %v732
  %1332 = vmatmul.mubr.bf16.gmra.mxu0 %v731
  %v1333 = vpop.f32.mrf.mxu0
  %v1334 = vadd.f32 0.0, %v1333
  %v1335 = vpop.f32.mrf.mxu0
  %v1336 = vpop.f32.mrf.mxu0
  %v1337 = vadd.f32 0.0, %v1336
  %v1338 = vpop.f32.mrf.mxu0
  %1339 = vmatprep.mubr.bf16.mxu0 %v739
  %1340 = vmatmul.mubr.bf16.gmra.mxu0 %v738
  %v1341 = vpop.f32.mrf.mxu0
  %v1342 = vadd.f32 0.0, %v1341
  %v1343 = vpop.f32.mrf.mxu0
  %v1344 = vpop.f32.mrf.mxu0
  %v1345 = vadd.f32 0.0, %v1344
  %v1346 = vpop.f32.mrf.mxu0
  %1347 = vmatprep.mubr.bf16.mxu0 %v746
  %1348 = vmatmul.mubr.bf16.gmra.mxu0 %v745
  %v1349 = vpop.f32.mrf.mxu0
  %v1350 = vadd.f32 0.0, %v1349
  %v1351 = vpop.f32.mrf.mxu0
  %v1352 = vpop.f32.mrf.mxu0
  %v1353 = vadd.f32 0.0, %v1352
  %v1354 = vpop.f32.mrf.mxu0
  %1355 = vmatprep.mubr.bf16.mxu0 %v753
  %1356 = vmatmul.mubr.bf16.gmra.mxu0 %v752
  %v1357 = vpop.f32.mrf.mxu0
  %v1358 = vadd.f32 0.0, %v1357
  %v1359 = vpop.f32.mrf.mxu0
  %v1360 = vpop.f32.mrf.mxu0
  %v1361 = vadd.f32 0.0, %v1360
  %v1362 = vpop.f32.mrf.mxu0
  %1363 = vmatprep.mubr.bf16.mxu0 %v760
  %1364 = vmatmul.mubr.bf16.gmra.mxu0 %v759
  %v1365 = vpop.f32.mrf.mxu0
  %v1366 = vadd.f32 0.0, %v1365
  %v1367 = vpop.f32.mrf.mxu0
  %v1368 = vpop.f32.mrf.mxu0
  %v1369 = vadd.f32 0.0, %v1368
  %v1370 = vpop.f32.mrf.mxu0
  %1371 = vmatprep.mubr.bf16.mxu0 %v767
  %1372 = vmatmul.mubr.bf16.gmra.mxu0 %v766
  %v1373 = vpop.f32.mrf.mxu0
  %v1374 = vadd.f32 0.0, %v1373
  %v1375 = vpop.f32.mrf.mxu0
  %v1376 = vpop.f32.mrf.mxu0
  %v1377 = vadd.f32 0.0, %v1376
  %v1378 = vpop.f32.mrf.mxu0
  %1379 = vmatprep.mubr.bf16.mxu0 %v774
  %1380 = vmatmul.mubr.bf16.gmra.mxu0 %v773
  %v1381 = vpop.f32.mrf.mxu0
  %v1382 = vadd.f32 0.0, %v1381
  %v1383 = vpop.f32.mrf.mxu0
  %v1384 = vpop.f32.mrf.mxu0
  %v1385 = vadd.f32 0.0, %v1384
  %v1386 = vpop.f32.mrf.mxu0
  %1387 = vmatprep.mubr.bf16.mxu0 %v781
  %1388 = vmatmul.mubr.bf16.gmra.mxu0 %v780
  %v1389 = vpop.f32.mrf.mxu0
  %v1390 = vadd.f32 0.0, %v1389
  %v1391 = vpop.f32.mrf.mxu0
  %v1392 = vpop.f32.mrf.mxu0
  %v1393 = vadd.f32 0.0, %v1392
  %v1394 = vpop.f32.mrf.mxu0
  %1395 = vdwg.mxu0
  %1396 = vmatprep.subr.bf16.mxu0 0
  %1397 = vmatpush1.bf16.msra.mxu0 %v1146
  %1398 = vmatprep.subr.bf16.mxu0 0
  %1399 = vmatpush1.bf16.msra.mxu0 %v1145
  %1400 = vmatprep.subr.bf16.mxu0 0
  %1401 = vmatpush1.bf16.msra.mxu0 %v1144
  %1402 = vmatprep.subr.bf16.mxu0 0
  %1403 = vmatpush1.bf16.msra.mxu0 %v1143
  %1404 = vmatprep.subr.bf16.mxu0 0
  %1405 = vmatpush1.bf16.msra.mxu0 %v1142
  %1406 = vmatprep.subr.bf16.mxu0 0
  %1407 = vmatpush1.bf16.msra.mxu0 %v1141
  %1408 = vmatprep.subr.bf16.mxu0 0
  %1409 = vmatpush1.bf16.msra.mxu0 %v1140
  %1410 = vmatprep.subr.bf16.mxu0 0
  %1411 = vmatpush1.bf16.msra.mxu0 %v1139
  %1412 = vmatprep.subr.bf16.mxu0 0
  %1413 = vmatpush2.bf16.msra.mxu0 %v1154
  %1414 = vmatprep.subr.bf16.mxu0 0
  %1415 = vmatpush2.bf16.msra.mxu0 %v1153
  %1416 = vmatprep.subr.bf16.mxu0 0
  %1417 = vmatpush2.bf16.msra.mxu0 %v1152
  %1418 = vmatprep.subr.bf16.mxu0 0
  %1419 = vmatpush2.bf16.msra.mxu0 %v1151
  %1420 = vmatprep.subr.bf16.mxu0 0
  %1421 = vmatpush2.bf16.msra.mxu0 %v1150
  %1422 = vmatprep.subr.bf16.mxu0 0
  %1423 = vmatpush2.bf16.msra.mxu0 %v1149
  %1424 = vmatprep.subr.bf16.mxu0 0
  %1425 = vmatpush2.bf16.msra.mxu0 %v1148
  %1426 = vmatprep.subr.bf16.mxu0 0
  %1427 = vmatpush2.bf16.msra.mxu0 %v1147
  %1428 = vmatprep.mubr.bf16.mxu0 %v678
  %1429 = vmatmul.mubr.bf16.gmra.mxu0 %v677
  %v1430 = vpop.f32.mrf.mxu0
  %v1431 = vadd.f32 %v1270, %v1430
  %v1432 = vpop.f32.mrf.mxu0
  %v1433 = vpop.f32.mrf.mxu0
  %v1434 = vadd.f32 %v1273, %v1433
  %v1435 = vpop.f32.mrf.mxu0
  %1436 = vmatprep.mubr.bf16.mxu0 %v685
  %1437 = vmatmul.mubr.bf16.gmra.mxu0 %v684
  %v1438 = vpop.f32.mrf.mxu0
  %v1439 = vadd.f32 %v1278, %v1438
  %v1440 = vpop.f32.mrf.mxu0
  %v1441 = vpop.f32.mrf.mxu0
  %v1442 = vadd.f32 %v1281, %v1441
  %v1443 = vpop.f32.mrf.mxu0
  %1444 = vmatprep.mubr.bf16.mxu0 %v692
  %1445 = vmatmul.mubr.bf16.gmra.mxu0 %v691
  %v1446 = vpop.f32.mrf.mxu0
  %v1447 = vadd.f32 %v1286, %v1446
  %v1448 = vpop.f32.mrf.mxu0
  %v1449 = vpop.f32.mrf.mxu0
  %v1450 = vadd.f32 %v1289, %v1449
  %v1451 = vpop.f32.mrf.mxu0
  %1452 = vmatprep.mubr.bf16.mxu0 %v699
  %1453 = vmatmul.mubr.bf16.gmra.mxu0 %v698
  %v1454 = vpop.f32.mrf.mxu0
  %v1455 = vadd.f32 %v1294, %v1454
  %v1456 = vpop.f32.mrf.mxu0
  %v1457 = vpop.f32.mrf.mxu0
  %v1458 = vadd.f32 %v1297, %v1457
  %v1459 = vpop.f32.mrf.mxu0
  %1460 = vmatprep.mubr.bf16.mxu0 %v706
  %1461 = vmatmul.mubr.bf16.gmra.mxu0 %v705
  %v1462 = vpop.f32.mrf.mxu0
  %v1463 = vadd.f32 %v1302, %v1462
  %v1464 = vpop.f32.mrf.mxu0
  %v1465 = vpop.f32.mrf.mxu0
  %v1466 = vadd.f32 %v1305, %v1465
  %v1467 = vpop.f32.mrf.mxu0
  %1468 = vmatprep.mubr.bf16.mxu0 %v713
  %1469 = vmatmul.mubr.bf16.gmra.mxu0 %v712
  %v1470 = vpop.f32.mrf.mxu0
  %v1471 = vadd.f32 %v1310, %v1470
  %v1472 = vpop.f32.mrf.mxu0
  %v1473 = vpop.f32.mrf.mxu0
  %v1474 = vadd.f32 %v1313, %v1473
  %v1475 = vpop.f32.mrf.mxu0
  %1476 = vmatprep.mubr.bf16.mxu0 %v720
  %1477 = vmatmul.mubr.bf16.gmra.mxu0 %v719
  %v1478 = vpop.f32.mrf.mxu0
  %v1479 = vadd.f32 %v1318, %v1478
  %v1480 = vpop.f32.mrf.mxu0
  %v1481 = vpop.f32.mrf.mxu0
  %v1482 = vadd.f32 %v1321, %v1481
  %v1483 = vpop.f32.mrf.mxu0
  %1484 = vmatprep.mubr.bf16.mxu0 %v727
  %1485 = vmatmul.mubr.bf16.gmra.mxu0 %v726
  %v1486 = vpop.f32.mrf.mxu0
  %v1487 = vadd.f32 %v1326, %v1486
  %v1488 = vpop.f32.mrf.mxu0
  %v1489 = vpop.f32.mrf.mxu0
  %v1490 = vadd.f32 %v1329, %v1489
  %v1491 = vpop.f32.mrf.mxu0
  %1492 = vmatprep.mubr.bf16.mxu0 %v734
  %1493 = vmatmul.mubr.bf16.gmra.mxu0 %v733
  %v1494 = vpop.f32.mrf.mxu0
  %v1495 = vadd.f32 %v1334, %v1494
  %v1496 = vpop.f32.mrf.mxu0
  %v1497 = vpop.f32.mrf.mxu0
  %v1498 = vadd.f32 %v1337, %v1497
  %v1499 = vpop.f32.mrf.mxu0
  %1500 = vmatprep.mubr.bf16.mxu0 %v741
  %1501 = vmatmul.mubr.bf16.gmra.mxu0 %v740
  %v1502 = vpop.f32.mrf.mxu0
  %v1503 = vadd.f32 %v1342, %v1502
  %v1504 = vpop.f32.mrf.mxu0
  %v1505 = vpop.f32.mrf.mxu0
  %v1506 = vadd.f32 %v1345, %v1505
  %v1507 = vpop.f32.mrf.mxu0
  %1508 = vmatprep.mubr.bf16.mxu0 %v748
  %1509 = vmatmul.mubr.bf16.gmra.mxu0 %v747
  %v1510 = vpop.f32.mrf.mxu0
  %v1511 = vadd.f32 %v1350, %v1510
  %v1512 = vpop.f32.mrf.mxu0
  %v1513 = vpop.f32.mrf.mxu0
  %v1514 = vadd.f32 %v1353, %v1513
  %v1515 = vpop.f32.mrf.mxu0
  %1516 = vmatprep.mubr.bf16.mxu0 %v755
  %1517 = vmatmul.mubr.bf16.gmra.mxu0 %v754
  %v1518 = vpop.f32.mrf.mxu0
  %v1519 = vadd.f32 %v1358, %v1518
  %v1520 = vpop.f32.mrf.mxu0
  %v1521 = vpop.f32.mrf.mxu0
  %v1522 = vadd.f32 %v1361, %v1521
  %v1523 = vpop.f32.mrf.mxu0
  %1524 = vmatprep.mubr.bf16.mxu0 %v762
  %1525 = vmatmul.mubr.bf16.gmra.mxu0 %v761
  %v1526 = vpop.f32.mrf.mxu0
  %v1527 = vadd.f32 %v1366, %v1526
  %v1528 = vpop.f32.mrf.mxu0
  %v1529 = vpop.f32.mrf.mxu0
  %v1530 = vadd.f32 %v1369, %v1529
  %v1531 = vpop.f32.mrf.mxu0
  %1532 = vmatprep.mubr.bf16.mxu0 %v769
  %1533 = vmatmul.mubr.bf16.gmra.mxu0 %v768
  %v1534 = vpop.f32.mrf.mxu0
  %v1535 = vadd.f32 %v1374, %v1534
  %v1536 = vpop.f32.mrf.mxu0
  %v1537 = vpop.f32.mrf.mxu0
  %v1538 = vadd.f32 %v1377, %v1537
  %v1539 = vpop.f32.mrf.mxu0
  %1540 = vmatprep.mubr.bf16.mxu0 %v776
  %1541 = vmatmul.mubr.bf16.gmra.mxu0 %v775
  %v1542 = vpop.f32.mrf.mxu0
  %v1543 = vadd.f32 %v1382, %v1542
  %v1544 = vpop.f32.mrf.mxu0
  %v1545 = vpop.f32.mrf.mxu0
  %v1546 = vadd.f32 %v1385, %v1545
  %v1547 = vpop.f32.mrf.mxu0
  %1548 = vmatprep.mubr.bf16.mxu0 %v783
  %1549 = vmatmul.mubr.bf16.gmra.mxu0 %v782
  %v1550 = vpop.f32.mrf.mxu0
  %v1551 = vadd.f32 %v1390, %v1550
  %v1552 = vpop.f32.mrf.mxu0
  %v1553 = vpop.f32.mrf.mxu0
  %v1554 = vadd.f32 %v1393, %v1553
  %v1555 = vpop.f32.mrf.mxu0
  %1556 = vdwg.mxu0
  %1557 = vmatprep.subr.bf16.mxu0 0
  %1558 = vmatpush1.bf16.msra.mxu0 %v1162
  %1559 = vmatprep.subr.bf16.mxu0 0
  %1560 = vmatpush1.bf16.msra.mxu0 %v1161
  %1561 = vmatprep.subr.bf16.mxu0 0
  %1562 = vmatpush1.bf16.msra.mxu0 %v1160
  %1563 = vmatprep.subr.bf16.mxu0 0
  %1564 = vmatpush1.bf16.msra.mxu0 %v1159
  %1565 = vmatprep.subr.bf16.mxu0 0
  %1566 = vmatpush1.bf16.msra.mxu0 %v1158
  %1567 = vmatprep.subr.bf16.mxu0 0
  %1568 = vmatpush1.bf16.msra.mxu0 %v1157
  %1569 = vmatprep.subr.bf16.mxu0 0
  %1570 = vmatpush1.bf16.msra.mxu0 %v1156
  %1571 = vmatprep.subr.bf16.mxu0 0
  %1572 = vmatpush1.bf16.msra.mxu0 %v1155
  %1573 = vmatprep.subr.bf16.mxu0 0
  %1574 = vmatpush2.bf16.msra.mxu0 %v1170
  %1575 = vmatprep.subr.bf16.mxu0 0
  %1576 = vmatpush2.bf16.msra.mxu0 %v1169
  %1577 = vmatprep.subr.bf16.mxu0 0
  %1578 = vmatpush2.bf16.msra.mxu0 %v1168
  %1579 = vmatprep.subr.bf16.mxu0 0
  %1580 = vmatpush2.bf16.msra.mxu0 %v1167
  %1581 = vmatprep.subr.bf16.mxu0 0
  %1582 = vmatpush2.bf16.msra.mxu0 %v1166
  %1583 = vmatprep.subr.bf16.mxu0 0
  %1584 = vmatpush2.bf16.msra.mxu0 %v1165
  %1585 = vmatprep.subr.bf16.mxu0 0
  %1586 = vmatpush2.bf16.msra.mxu0 %v1164
  %1587 = vmatprep.subr.bf16.mxu0 0
  %1588 = vmatpush2.bf16.msra.mxu0 %v1163
  %1589 = vmatprep.mubr.bf16.mxu0 %v680
  %1590 = vmatmul.mubr.bf16.gmra.mxu0 %v679
  %v1591 = vpop.f32.mrf.mxu0
  %v1592 = vadd.f32 %v1431, %v1591
  %v1593 = vpop.f32.mrf.mxu0
  %v1594 = vpop.f32.mrf.mxu0
  %v1595 = vadd.f32 %v1434, %v1594
  %v1596 = vpop.f32.mrf.mxu0
  %1597 = vmatprep.mubr.bf16.mxu0 %v687
  %1598 = vmatmul.mubr.bf16.gmra.mxu0 %v686
  %v1599 = vpop.f32.mrf.mxu0
  %v1600 = vadd.f32 %v1439, %v1599
  %v1601 = vpop.f32.mrf.mxu0
  %v1602 = vpop.f32.mrf.mxu0
  %v1603 = vadd.f32 %v1442, %v1602
  %v1604 = vpop.f32.mrf.mxu0
  %1605 = vmatprep.mubr.bf16.mxu0 %v694
  %1606 = vmatmul.mubr.bf16.gmra.mxu0 %v693
  %v1607 = vpop.f32.mrf.mxu0
  %v1608 = vadd.f32 %v1447, %v1607
  %v1609 = vpop.f32.mrf.mxu0
  %v1610 = vpop.f32.mrf.mxu0
  %v1611 = vadd.f32 %v1450, %v1610
  %v1612 = vpop.f32.mrf.mxu0
  %1613 = vmatprep.mubr.bf16.mxu0 %v701
  %1614 = vmatmul.mubr.bf16.gmra.mxu0 %v700
  %v1615 = vpop.f32.mrf.mxu0
  %v1616 = vadd.f32 %v1455, %v1615
  %v1617 = vpop.f32.mrf.mxu0
  %v1618 = vpop.f32.mrf.mxu0
  %v1619 = vadd.f32 %v1458, %v1618
  %v1620 = vpop.f32.mrf.mxu0
  %1621 = vmatprep.mubr.bf16.mxu0 %v708
  %1622 = vmatmul.mubr.bf16.gmra.mxu0 %v707
  %v1623 = vpop.f32.mrf.mxu0
  %v1624 = vadd.f32 %v1463, %v1623
  %v1625 = vpop.f32.mrf.mxu0
  %v1626 = vpop.f32.mrf.mxu0
  %v1627 = vadd.f32 %v1466, %v1626
  %v1628 = vpop.f32.mrf.mxu0
  %1629 = vmatprep.mubr.bf16.mxu0 %v715
  %1630 = vmatmul.mubr.bf16.gmra.mxu0 %v714
  %v1631 = vpop.f32.mrf.mxu0
  %v1632 = vadd.f32 %v1471, %v1631
  %v1633 = vpop.f32.mrf.mxu0
  %v1634 = vpop.f32.mrf.mxu0
  %v1635 = vadd.f32 %v1474, %v1634
  %v1636 = vpop.f32.mrf.mxu0
  %1637 = vmatprep.mubr.bf16.mxu0 %v722
  %1638 = vmatmul.mubr.bf16.gmra.mxu0 %v721
  %v1639 = vpop.f32.mrf.mxu0
  %v1640 = vadd.f32 %v1479, %v1639
  %v1641 = vpop.f32.mrf.mxu0
  %v1642 = vpop.f32.mrf.mxu0
  %v1643 = vadd.f32 %v1482, %v1642
  %v1644 = vpop.f32.mrf.mxu0
  %1645 = vmatprep.mubr.bf16.mxu0 %v729
  %1646 = vmatmul.mubr.bf16.gmra.mxu0 %v728
  %v1647 = vpop.f32.mrf.mxu0
  %v1648 = vadd.f32 %v1487, %v1647
  %v1649 = vpop.f32.mrf.mxu0
  %v1650 = vpop.f32.mrf.mxu0
  %v1651 = vadd.f32 %v1490, %v1650
  %v1652 = vpop.f32.mrf.mxu0
  %1653 = vmatprep.mubr.bf16.mxu0 %v736
  %1654 = vmatmul.mubr.bf16.gmra.mxu0 %v735
  %v1655 = vpop.f32.mrf.mxu0
  %v1656 = vadd.f32 %v1495, %v1655
  %v1657 = vpop.f32.mrf.mxu0
  %v1658 = vpop.f32.mrf.mxu0
  %v1659 = vadd.f32 %v1498, %v1658
  %v1660 = vpop.f32.mrf.mxu0
  %1661 = vmatprep.mubr.bf16.mxu0 %v743
  %1662 = vmatmul.mubr.bf16.gmra.mxu0 %v742
  %v1663 = vpop.f32.mrf.mxu0
  %v1664 = vadd.f32 %v1503, %v1663
  %v1665 = vpop.f32.mrf.mxu0
  %v1666 = vpop.f32.mrf.mxu0
  %v1667 = vadd.f32 %v1506, %v1666
  %v1668 = vpop.f32.mrf.mxu0
  %1669 = vmatprep.mubr.bf16.mxu0 %v750
  %1670 = vmatmul.mubr.bf16.gmra.mxu0 %v749
  %v1671 = vpop.f32.mrf.mxu0
  %v1672 = vadd.f32 %v1511, %v1671
  %v1673 = vpop.f32.mrf.mxu0
  %v1674 = vpop.f32.mrf.mxu0
  %v1675 = vadd.f32 %v1514, %v1674
  %v1676 = vpop.f32.mrf.mxu0
  %1677 = vmatprep.mubr.bf16.mxu0 %v757
  %1678 = vmatmul.mubr.bf16.gmra.mxu0 %v756
  %v1679 = vpop.f32.mrf.mxu0
  %v1680 = vadd.f32 %v1519, %v1679
  %v1681 = vpop.f32.mrf.mxu0
  %v1682 = vpop.f32.mrf.mxu0
  %v1683 = vadd.f32 %v1522, %v1682
  %v1684 = vpop.f32.mrf.mxu0
  %1685 = vmatprep.mubr.bf16.mxu0 %v764
  %1686 = vmatmul.mubr.bf16.gmra.mxu0 %v763
  %v1687 = vpop.f32.mrf.mxu0
  %v1688 = vadd.f32 %v1527, %v1687
  %v1689 = vpop.f32.mrf.mxu0
  %v1690 = vpop.f32.mrf.mxu0
  %v1691 = vadd.f32 %v1530, %v1690
  %v1692 = vpop.f32.mrf.mxu0
  %1693 = vmatprep.mubr.bf16.mxu0 %v771
  %1694 = vmatmul.mubr.bf16.gmra.mxu0 %v770
  %v1695 = vpop.f32.mrf.mxu0
  %v1696 = vadd.f32 %v1535, %v1695
  %v1697 = vpop.f32.mrf.mxu0
  %v1698 = vpop.f32.mrf.mxu0
  %v1699 = vadd.f32 %v1538, %v1698
  %v1700 = vpop.f32.mrf.mxu0
  %1701 = vmatprep.mubr.bf16.mxu0 %v778
  %1702 = vmatmul.mubr.bf16.gmra.mxu0 %v777
  %v1703 = vpop.f32.mrf.mxu0
  %v1704 = vadd.f32 %v1543, %v1703
  %v1705 = vpop.f32.mrf.mxu0
  %v1706 = vpop.f32.mrf.mxu0
  %v1707 = vadd.f32 %v1546, %v1706
  %v1708 = vpop.f32.mrf.mxu0
  %1709 = vmatprep.mubr.bf16.mxu0 %v785
  %1710 = vmatmul.mubr.bf16.gmra.mxu0 %v784
  %v1711 = vpop.f32.mrf.mxu0
  %v1712 = vadd.f32 %v1551, %v1711
  %v1713 = vpop.f32.mrf.mxu0
  %v1714 = vpop.f32.mrf.mxu0
  %v1715 = vadd.f32 %v1554, %v1714
  %v1716 = vpop.f32.mrf.mxu0
  %1717 = vdwg.mxu0
  %1718 = vmatprep.subr.bf16.mxu0 0
  %1719 = vmatpush1.bf16.msra.mxu0 %v1178
  %1720 = vmatprep.subr.bf16.mxu0 0
  %1721 = vmatpush1.bf16.msra.mxu0 %v1177
  %1722 = vmatprep.subr.bf16.mxu0 0
  %1723 = vmatpush1.bf16.msra.mxu0 %v1176
  %1724 = vmatprep.subr.bf16.mxu0 0
  %1725 = vmatpush1.bf16.msra.mxu0 %v1175
  %1726 = vmatprep.subr.bf16.mxu0 0
  %1727 = vmatpush1.bf16.msra.mxu0 %v1174
  %1728 = vmatprep.subr.bf16.mxu0 0
  %1729 = vmatpush1.bf16.msra.mxu0 %v1173
  %1730 = vmatprep.subr.bf16.mxu0 0
  %1731 = vmatpush1.bf16.msra.mxu0 %v1172
  %1732 = vmatprep.subr.bf16.mxu0 0
  %1733 = vmatpush1.bf16.msra.mxu0 %v1171
  %1734 = vmatprep.subr.bf16.mxu0 0
  %1735 = vmatpush2.bf16.msra.mxu0 0
  %1736 = vmatprep.subr.bf16.mxu0 0
  %1737 = vmatpush2.bf16.msra.mxu0 0
  %1738 = vmatprep.subr.bf16.mxu0 0
  %1739 = vmatpush2.bf16.msra.mxu0 0
  %1740 = vmatprep.subr.bf16.mxu0 0
  %1741 = vmatpush2.bf16.msra.mxu0 0
  %1742 = vmatprep.subr.bf16.mxu0 0
  %1743 = vmatpush2.bf16.msra.mxu0 0
  %1744 = vmatprep.subr.bf16.mxu0 0
  %1745 = vmatpush2.bf16.msra.mxu0 0
  %1746 = vmatprep.subr.bf16.mxu0 0
  %1747 = vmatpush2.bf16.msra.mxu0 0
  %1748 = vmatprep.subr.bf16.mxu0 0
  %1749 = vmatpush2.bf16.msra.mxu0 0
  %1750 = vmatprep.mubr.bf16.mxu0 0
  %1751 = vmatmul.mubr.bf16.gmra.mxu0 %v681
  %v1752 = vpop.f32.mrf.mxu0
  %v1753 = vadd.f32 %v1592, %v1752
  %v1754 = vpop.f32.mrf.mxu0
  %v1755 = vpop.f32.mrf.mxu0
  %v1756 = vadd.f32 %v1595, %v1755
  %v1757 = vpop.f32.mrf.mxu0
  %1758 = vmatprep.mubr.bf16.mxu0 0
  %1759 = vmatmul.mubr.bf16.gmra.mxu0 %v688
  %v1760 = vpop.f32.mrf.mxu0
  %v1761 = vadd.f32 %v1600, %v1760
  %v1762 = vpop.f32.mrf.mxu0
  %v1763 = vpop.f32.mrf.mxu0
  %v1764 = vadd.f32 %v1603, %v1763
  %v1765 = vpop.f32.mrf.mxu0
  %1766 = vmatprep.mubr.bf16.mxu0 0
  %1767 = vmatmul.mubr.bf16.gmra.mxu0 %v695
  %v1768 = vpop.f32.mrf.mxu0
  %v1769 = vadd.f32 %v1608, %v1768
  %v1770 = vpop.f32.mrf.mxu0
  %v1771 = vpop.f32.mrf.mxu0
  %v1772 = vadd.f32 %v1611, %v1771
  %v1773 = vpop.f32.mrf.mxu0
  %1774 = vmatprep.mubr.bf16.mxu0 0
  %1775 = vmatmul.mubr.bf16.gmra.mxu0 %v702
  %v1776 = vpop.f32.mrf.mxu0
  %v1777 = vadd.f32 %v1616, %v1776
  %v1778 = vpop.f32.mrf.mxu0
  %v1779 = vpop.f32.mrf.mxu0
  %v1780 = vadd.f32 %v1619, %v1779
  %v1781 = vpop.f32.mrf.mxu0
  %1782 = vmatprep.mubr.bf16.mxu0 0
  %1783 = vmatmul.mubr.bf16.gmra.mxu0 %v709
  %v1784 = vpop.f32.mrf.mxu0
  %v1785 = vadd.f32 %v1624, %v1784
  %v1786 = vpop.f32.mrf.mxu0
  %v1787 = vpop.f32.mrf.mxu0
  %v1788 = vadd.f32 %v1627, %v1787
  %v1789 = vpop.f32.mrf.mxu0
  %1790 = vmatprep.mubr.bf16.mxu0 0
  %1791 = vmatmul.mubr.bf16.gmra.mxu0 %v716
  %v1792 = vpop.f32.mrf.mxu0
  %v1793 = vadd.f32 %v1632, %v1792
  %v1794 = vpop.f32.mrf.mxu0
  %v1795 = vpop.f32.mrf.mxu0
  %v1796 = vadd.f32 %v1635, %v1795
  %v1797 = vpop.f32.mrf.mxu0
  %1798 = vmatprep.mubr.bf16.mxu0 0
  %1799 = vmatmul.mubr.bf16.gmra.mxu0 %v723
  %v1800 = vpop.f32.mrf.mxu0
  %v1801 = vadd.f32 %v1640, %v1800
  %v1802 = vpop.f32.mrf.mxu0
  %v1803 = vpop.f32.mrf.mxu0
  %v1804 = vadd.f32 %v1643, %v1803
  %v1805 = vpop.f32.mrf.mxu0
  %1806 = vmatprep.mubr.bf16.mxu0 0
  %1807 = vmatmul.mubr.bf16.gmra.mxu0 %v730
  %v1808 = vpop.f32.mrf.mxu0
  %v1809 = vadd.f32 %v1648, %v1808
  %v1810 = vpop.f32.mrf.mxu0
  %v1811 = vpop.f32.mrf.mxu0
  %v1812 = vadd.f32 %v1651, %v1811
  %v1813 = vpop.f32.mrf.mxu0
  %1814 = vmatprep.mubr.bf16.mxu0 0
  %1815 = vmatmul.mubr.bf16.gmra.mxu0 %v737
  %v1816 = vpop.f32.mrf.mxu0
  %v1817 = vadd.f32 %v1656, %v1816
  %v1818 = vpop.f32.mrf.mxu0
  %v1819 = vpop.f32.mrf.mxu0
  %v1820 = vadd.f32 %v1659, %v1819
  %v1821 = vpop.f32.mrf.mxu0
  %1822 = vmatprep.mubr.bf16.mxu0 0
  %1823 = vmatmul.mubr.bf16.gmra.mxu0 %v744
  %v1824 = vpop.f32.mrf.mxu0
  %v1825 = vadd.f32 %v1664, %v1824
  %v1826 = vpop.f32.mrf.mxu0
  %v1827 = vpop.f32.mrf.mxu0
  %v1828 = vadd.f32 %v1667, %v1827
  %v1829 = vpop.f32.mrf.mxu0
  %1830 = vmatprep.mubr.bf16.mxu0 0
  %1831 = vmatmul.mubr.bf16.gmra.mxu0 %v751
  %v1832 = vpop.f32.mrf.mxu0
  %v1833 = vadd.f32 %v1672, %v1832
  %v1834 = vpop.f32.mrf.mxu0
  %v1835 = vpop.f32.mrf.mxu0
  %v1836 = vadd.f32 %v1675, %v1835
  %v1837 = vpop.f32.mrf.mxu0
  %1838 = vmatprep.mubr.bf16.mxu0 0
  %1839 = vmatmul.mubr.bf16.gmra.mxu0 %v758
  %v1840 = vpop.f32.mrf.mxu0
  %v1841 = vadd.f32 %v1680, %v1840
  %v1842 = vpop.f32.mrf.mxu0
  %v1843 = vpop.f32.mrf.mxu0
  %v1844 = vadd.f32 %v1683, %v1843
  %v1845 = vpop.f32.mrf.mxu0
  %1846 = vmatprep.mubr.bf16.mxu0 0
  %1847 = vmatmul.mubr.bf16.gmra.mxu0 %v765
  %v1848 = vpop.f32.mrf.mxu0
  %v1849 = vadd.f32 %v1688, %v1848
  %v1850 = vpop.f32.mrf.mxu0
  %v1851 = vpop.f32.mrf.mxu0
  %v1852 = vadd.f32 %v1691, %v1851
  %v1853 = vpop.f32.mrf.mxu0
  %1854 = vmatprep.mubr.bf16.mxu0 0
  %1855 = vmatmul.mubr.bf16.gmra.mxu0 %v772
  %v1856 = vpop.f32.mrf.mxu0
  %v1857 = vadd.f32 %v1696, %v1856
  %v1858 = vpop.f32.mrf.mxu0
  %v1859 = vpop.f32.mrf.mxu0
  %v1860 = vadd.f32 %v1699, %v1859
  %v1861 = vpop.f32.mrf.mxu0
  %1862 = vmatprep.mubr.bf16.mxu0 0
  %1863 = vmatmul.mubr.bf16.gmra.mxu0 %v779
  %v1864 = vpop.f32.mrf.mxu0
  %v1865 = vadd.f32 %v1704, %v1864
  %v1866 = vpop.f32.mrf.mxu0
  %v1867 = vpop.f32.mrf.mxu0
  %v1868 = vadd.f32 %v1707, %v1867
  %v1869 = vpop.f32.mrf.mxu0
  %1870 = vmatprep.mubr.bf16.mxu0 0
  %1871 = vmatmul.mubr.bf16.gmra.mxu0 %v786
  %v1872 = vpop.f32.mrf.mxu0
  %v1873 = vadd.f32 %v1712, %v1872
  %v1874 = vpop.f32.mrf.mxu0
  %v1875 = vpop.f32.mrf.mxu0
  %v1876 = vadd.f32 %v1715, %v1875
  %v1877 = vpop.f32.mrf.mxu0
  %1878 = vdwg.mxu0
  %v1879 = vadd.f32 %v51, %v1753
  %v1880 = vadd.f32 %v52, %v1756
  %v1881 = vadd.f32 %v53, %v1761
  %v1882 = vadd.f32 %v54, %v1764
  %v1883 = vadd.f32 %v55, %v1769
  %v1884 = vadd.f32 %v56, %v1772
  %v1885 = vadd.f32 %v57, %v1777
  %v1886 = vadd.f32 %v58, %v1780
  %v1887 = vadd.f32 %v59, %v1785
  %v1888 = vadd.f32 %v60, %v1788
  %v1889 = vadd.f32 %v61, %v1793
  %v1890 = vadd.f32 %v62, %v1796
  %v1891 = vadd.f32 %v63, %v1801
  %v1892 = vadd.f32 %v64, %v1804
  %v1893 = vadd.f32 %v65, %v1809
  %v1894 = vadd.f32 %v66, %v1812
  %v1895 = vadd.f32 %v67, %v1817
  %v1896 = vadd.f32 %v68, %v1820
  %v1897 = vadd.f32 %v69, %v1825
  %v1898 = vadd.f32 %v70, %v1828
  %v1899 = vadd.f32 %v71, %v1833
  %v1900 = vadd.f32 %v72, %v1836
  %v1901 = vadd.f32 %v73, %v1841
  %v1902 = vadd.f32 %v74, %v1844
  %v1903 = vadd.f32 %v75, %v1849
  %v1904 = vadd.f32 %v76, %v1852
  %v1905 = vadd.f32 %v77, %v1857
  %v1906 = vadd.f32 %v78, %v1860
  %v1907 = vadd.f32 %v79, %v1865
  %v1908 = vadd.f32 %v80, %v1868
  %v1909 = vadd.f32 %v81, %v1873
  %v1910 = vadd.f32 %v82, %v1876
  %1911 = vst [vmem:[%s3] sm:$0xff] %v1879
  %1912 = vst [vmem:[%s3 + $0x8] sm:$0xff] %v1880
  %1913 = vst [vmem:[%s3 + $0x10] sm:$0xff] %v1881
  %1914 = vst [vmem:[%s3 + $0x18] sm:$0xff] %v1882
  %1915 = vst [vmem:[%s3 + $0x20] sm:$0xff] %v1883
  %1916 = vst [vmem:[%s3 + $0x28] sm:$0xff] %v1884
  %1917 = vst [vmem:[%s3 + $0x30] sm:$0xff] %v1885
  %1918 = vst [vmem:[%s3 + $0x38] sm:$0xff] %v1886
  %1919 = vst [vmem:[%s3 + $0x40] sm:$0xff] %v1887
  %1920 = vst [vmem:[%s3 + $0x48] sm:$0xff] %v1888
  %1921 = vst [vmem:[%s3 + $0x50] sm:$0xff] %v1889
  %1922 = vst [vmem:[%s3 + $0x58] sm:$0xff] %v1890
  %1923 = vst [vmem:[%s3 + $0x60] sm:$0xff] %v1891
  %1924 = vst [vmem:[%s3 + $0x68] sm:$0xff] %v1892
  %1925 = vst [vmem:[%s3 + $0x70] sm:$0xff] %v1893
  %1926 = vst [vmem:[%s3 + $0x78] sm:$0xff] %v1894
  %1927 = vst [vmem:[%s3 + $0x80] sm:$0xff] %v1895
  %1928 = vst [vmem:[%s3 + $0x88] sm:$0xff] %v1896
  %1929 = vst [vmem:[%s3 + $0x90] sm:$0xff] %v1897
  %1930 = vst [vmem:[%s3 + $0x98] sm:$0xff] %v1898
  %1931 = vst [vmem:[%s3 + $0xa0] sm:$0xff] %v1899
  %1932 = vst [vmem:[%s3 + $0xa8] sm:$0xff] %v1900
  %1933 = vst [vmem:[%s3 + $0xb0] sm:$0xff] %v1901
  %1934 = vst [vmem:[%s3 + $0xb8] sm:$0xff] %v1902
  %1935 = vst [vmem:[%s3 + $0xc0] sm:$0xff] %v1903
  %1936 = vst [vmem:[%s3 + $0xc8] sm:$0xff] %v1904
  %1937 = vst [vmem:[%s3 + $0xd0] sm:$0xff] %v1905
  %1938 = vst [vmem:[%s3 + $0xd8] sm:$0xff] %v1906
  %1939 = vst [vmem:[%s3 + $0xe0] sm:$0xff] %v1907
  %1940 = vst [vmem:[%s3 + $0xe8] sm:$0xff] %v1908
  %1941 = vst [vmem:[%s3 + $0xf0] sm:$0xff] %v1909
  %1942 = vst [vmem:[%s3 + $0xf8] sm:$0xff] %v1910
  // Predicated region
  $region18: #{lipnet_forward.10} parent=0 // pred_check
    %p1943 = pneg %p15
  $region19: #{lipnet_forward.10} parent=0 // pred_check_branch
    %1945 = sbr.rel (%p1943) target = $region21
  $region20: #{lipnet_forward.10} parent=0 // pred_region
    %v1946 = vld [vmem:[%s3] sm:$0xff]
    %v1947 = vld [vmem:[%s3 + $0x8] sm:$0xff]
    %v1948 = vld [vmem:[%s3 + $0x10] sm:$0xff]
    %v1949 = vld [vmem:[%s3 + $0x18] sm:$0xff]
    %v1950 = vld [vmem:[%s3 + $0x20] sm:$0xff]
    %v1951 = vld [vmem:[%s3 + $0x28] sm:$0xff]
    %v1952 = vld [vmem:[%s3 + $0x30] sm:$0xff]
    %v1953 = vld [vmem:[%s3 + $0x38] sm:$0xff]
    %v1954 = vld [vmem:[%s3 + $0x40] sm:$0xff]
    %v1955 = vld [vmem:[%s3 + $0x48] sm:$0xff]
    %v1956 = vld [vmem:[%s3 + $0x50] sm:$0xff]
    %v1957 = vld [vmem:[%s3 + $0x58] sm:$0xff]
    %v1958 = vld [vmem:[%s3 + $0x60] sm:$0xff]
    %v1959 = vld [vmem:[%s3 + $0x68] sm:$0xff]
    %v1960 = vld [vmem:[%s3 + $0x70] sm:$0xff]
    %v1961 = vld [vmem:[%s3 + $0x78] sm:$0xff]
    %v1962 = vld [vmem:[%s3 + $0x80] sm:$0xff]
    %v1963 = vld [vmem:[%s3 + $0x88] sm:$0xff]
    %v1964 = vld [vmem:[%s3 + $0x90] sm:$0xff]
    %v1965 = vld [vmem:[%s3 + $0x98] sm:$0xff]
    %v1966 = vld [vmem:[%s3 + $0xa0] sm:$0xff]
    %v1967 = vld [vmem:[%s3 + $0xa8] sm:$0xff]
    %v1968 = vld [vmem:[%s3 + $0xb0] sm:$0xff]
    %v1969 = vld [vmem:[%s3 + $0xb8] sm:$0xff]
    %v1970 = vld [vmem:[%s3 + $0xc0] sm:$0xff]
    %v1971 = vld [vmem:[%s3 + $0xc8] sm:$0xff]
    %v1972 = vld [vmem:[%s3 + $0xd0] sm:$0xff]
    %v1973 = vld [vmem:[%s3 + $0xd8] sm:$0xff]
    %v1974 = vld [vmem:[%s3 + $0xe0] sm:$0xff]
    %v1975 = vld [vmem:[%s3 + $0xe8] sm:$0xff]
    %v1976 = vld [vmem:[%s3 + $0xf0] sm:$0xff]
    %v1977 = vld [vmem:[%s3 + $0xf8] sm:$0xff]
    %v1978 = vld [vmem:[%s2] sm:$0x1]
    %v1980 = vlaneseq
    %v1981 = vshrl.u32 %v1980, 7
    %v1982 = vsub.s32 0, %v1981
    %v1983 = vrot.slane %v1978, %v1982
    %v1985 = vadd.f32 %v1946, %v1983
    %v1986 = vadd.f32 %v1947, %v1983
    %v1987 = vadd.f32 %v1948, %v1983
    %v1988 = vadd.f32 %v1949, %v1983
    %v1989 = vadd.f32 %v1950, %v1983
    %v1990 = vadd.f32 %v1951, %v1983
    %v1991 = vadd.f32 %v1952, %v1983
    %v1992 = vadd.f32 %v1953, %v1983
    %v1993 = vadd.f32 %v1954, %v1983
    %v1994 = vadd.f32 %v1955, %v1983
    %v1995 = vadd.f32 %v1956, %v1983
    %v1996 = vadd.f32 %v1957, %v1983
    %v1997 = vadd.f32 %v1958, %v1983
    %v1998 = vadd.f32 %v1959, %v1983
    %v1999 = vadd.f32 %v1960, %v1983
    %v2000 = vadd.f32 %v1961, %v1983
    %v2001 = vadd.f32 %v1962, %v1983
    %v2002 = vadd.f32 %v1963, %v1983
    %v2003 = vadd.f32 %v1964, %v1983
    %v2004 = vadd.f32 %v1965, %v1983
    %v2005 = vadd.f32 %v1966, %v1983
    %v2006 = vadd.f32 %v1967, %v1983
    %v2007 = vadd.f32 %v1968, %v1983
    %v2008 = vadd.f32 %v1969, %v1983
    %v2009 = vadd.f32 %v1970, %v1983
    %v2010 = vadd.f32 %v1971, %v1983
    %v2011 = vadd.f32 %v1972, %v1983
    %v2012 = vadd.f32 %v1973, %v1983
    %v2013 = vadd.f32 %v1974, %v1983
    %v2014 = vadd.f32 %v1975, %v1983
    %v2015 = vadd.f32 %v1976, %v1983
    %v2016 = vadd.f32 %v1977, %v1983
    %v2017 = vmax.f32 %v1985, 0.0
    %v2018 = vmax.f32 %v1986, 0.0
    %v2019 = vmax.f32 %v1987, 0.0
    %v2020 = vmax.f32 %v1988, 0.0
    %v2021 = vmax.f32 %v1989, 0.0
    %v2022 = vmax.f32 %v1990, 0.0
    %v2023 = vmax.f32 %v1991, 0.0
    %v2024 = vmax.f32 %v1992, 0.0
    %v2025 = vmax.f32 %v1993, 0.0
    %v2026 = vmax.f32 %v1994, 0.0
    %v2027 = vmax.f32 %v1995, 0.0
    %v2028 = vmax.f32 %v1996, 0.0
    %v2029 = vmax.f32 %v1997, 0.0
    %v2030 = vmax.f32 %v1998, 0.0
    %v2031 = vmax.f32 %v1999, 0.0
    %v2032 = vmax.f32 %v2000, 0.0
    %v2033 = vmax.f32 %v2001, 0.0
    %v2034 = vmax.f32 %v2002, 0.0
    %v2035 = vmax.f32 %v2003, 0.0
    %v2036 = vmax.f32 %v2004, 0.0
    %v2037 = vmax.f32 %v2005, 0.0
    %v2038 = vmax.f32 %v2006, 0.0
    %v2039 = vmax.f32 %v2007, 0.0
    %v2040 = vmax.f32 %v2008, 0.0
    %v2041 = vmax.f32 %v2009, 0.0
    %v2042 = vmax.f32 %v2010, 0.0
    %v2043 = vmax.f32 %v2011, 0.0
    %v2044 = vmax.f32 %v2012, 0.0
    %v2045 = vmax.f32 %v2013, 0.0
    %v2046 = vmax.f32 %v2014, 0.0
    %v2047 = vmax.f32 %v2015, 0.0
    %v2048 = vmax.f32 %v2016, 0.0
    %2049 = vst [vmem:[%s3] sm:$0xff] %v2017
    %2050 = vst [vmem:[%s3 + $0x8] sm:$0xff] %v2018
    %2051 = vst [vmem:[%s3 + $0x10] sm:$0xff] %v2019
    %2052 = vst [vmem:[%s3 + $0x18] sm:$0xff] %v2020
    %2053 = vst [vmem:[%s3 + $0x20] sm:$0xff] %v2021
    %2054 = vst [vmem:[%s3 + $0x28] sm:$0xff] %v2022
    %2055 = vst [vmem:[%s3 + $0x30] sm:$0xff] %v2023
    %2056 = vst [vmem:[%s3 + $0x38] sm:$0xff] %v2024
    %2057 = vst [vmem:[%s3 + $0x40] sm:$0xff] %v2025
    %2058 = vst [vmem:[%s3 + $0x48] sm:$0xff] %v2026
    %2059 = vst [vmem:[%s3 + $0x50] sm:$0xff] %v2027
    %2060 = vst [vmem:[%s3 + $0x58] sm:$0xff] %v2028
    %2061 = vst [vmem:[%s3 + $0x60] sm:$0xff] %v2029
    %2062 = vst [vmem:[%s3 + $0x68] sm:$0xff] %v2030
    %2063 = vst [vmem:[%s3 + $0x70] sm:$0xff] %v2031
    %2064 = vst [vmem:[%s3 + $0x78] sm:$0xff] %v2032
    %2065 = vst [vmem:[%s3 + $0x80] sm:$0xff] %v2033
    %2066 = vst [vmem:[%s3 + $0x88] sm:$0xff] %v2034
    %2067 = vst [vmem:[%s3 + $0x90] sm:$0xff] %v2035
    %2068 = vst [vmem:[%s3 + $0x98] sm:$0xff] %v2036
    %2069 = vst [vmem:[%s3 + $0xa0] sm:$0xff] %v2037
    %2070 = vst [vmem:[%s3 + $0xa8] sm:$0xff] %v2038
    %2071 = vst [vmem:[%s3 + $0xb0] sm:$0xff] %v2039
    %2072 = vst [vmem:[%s3 + $0xb8] sm:$0xff] %v2040
    %2073 = vst [vmem:[%s3 + $0xc0] sm:$0xff] %v2041
    %2074 = vst [vmem:[%s3 + $0xc8] sm:$0xff] %v2042
    %2075 = vst [vmem:[%s3 + $0xd0] sm:$0xff] %v2043
    %2076 = vst [vmem:[%s3 + $0xd8] sm:$0xff] %v2044
    %2077 = vst [vmem:[%s3 + $0xe0] sm:$0xff] %v2045
    %2078 = vst [vmem:[%s3 + $0xe8] sm:$0xff] %v2046
    %2079 = vst [vmem:[%s3 + $0xf0] sm:$0xff] %v2047
    %2080 = vst [vmem:[%s3 + $0xf8] sm:$0xff] %v2048
  $region21: #{lipnet_forward.10} parent=0 // pred_fallthru
    _
  // Predicated region
  $region22: #{lipnet_forward.10} parent=0 // pred_check
    _
  $region23: #{lipnet_forward.10} parent=0 // pred_check_branch
    %2082 = sbr.rel (0) target = $region25
  $region24: #{lipnet_forward.10} parent=0 // pred_region
    _
  $region25: #{lipnet_forward.10} parent=0 // pred_fallthru
    _
  // Predicated region
  $region26: #{lipnet_forward.10} parent=0 // pred_check
    _
  $region27: #{lipnet_forward.10} parent=0 // pred_check_branch
    %2084 = sbr.rel (0) target = $region29
  $region28: #{lipnet_forward.10} parent=0 // pred_region
    _
  $region29: #{lipnet_forward.10} parent=0 // pred_fallthru
    _

// kernel: lipnet_forward.13
$region0: #{lipnet_forward.13}
  #allocation0 [shape = 'u32[]', space=smem, size = 0x4, offset = 0x4, fixed_abs, tag = 'smem constant byte address 0x4 - core index']
  #allocation1 [shape = 'u32[144,128]{1,0:T(1,128)}', space=vmem, size = 0x12000, scoped, tag = 'internal scratch']
  %s0 = inlined_call_operand.vmem [shape: bf16[16,3072], index: 0, kind: input, shape index: {}]
  %s1 = inlined_call_operand.vmem [shape: bf16[3072,1536], index: 1, kind: input, shape index: {}]
  %s2 = inlined_call_operand.vmem [shape: f32[1,1536], index: 2, kind: input, shape index: {}]
  %s3 = inlined_call_operand.vmem [shape: f32[16,1536], index: 3, kind: output, shape index: {}]
  %s4 = sld [smem:[#allocation0]]
  $region118: #{lipnet_forward.13} parent=0
    _
  %s6 = ssub.s32 1, %s4
  %s7 = scalar_select 0, %s6, %s4
  $region1: #{lipnet_forward.13} parent=0
    #allocation2 [shape = 'u8[65536]{0}', space=vmem, size = 0x10000, scoped, tag = 'input window, operand 0']
    #allocation3 [shape = 'u8[2097152]{0}', space=vmem, size = 0x200000, scoped, tag = 'input window, operand 1']
    #allocation4 [shape = 'u8[65536]{0}', space=vmem, size = 0x10000, scoped, tag = 'output window, operand 0']
    loop: start=0, step=1, limit=11
    $region2: #{lipnet_forward.13} parent=1 // loop_pre_header
      _
    $region3: #{lipnet_forward.13} parent=1 // loop_header
      %s9 = sphi 0, %s13
      %p10 = scmp.ge.s32.totalorder %s9, 11
      %s16 = sphi 0, %s35
      %s17 = sphi 0, %s31
      %s18 = sphi 0, %s27
      %s19 = sphi 0, %s16
      %s20 = sphi 0, %s17
      %s21 = sphi 0, %s18
      %s22 = sphi 0, %s19
      %s23 = sphi 0, %s20
      %s24 = sphi 0, %s21
      %s40 = sphi 0, %s42
      %s43 = sphi 0, %s40
      %s44 = sphi 0, %s43
      %s60 = sphi 0, %s44
      %s68 = sphi 0, %s70
      %s71 = sphi 0, %s68
      %s72 = sphi 0, %s71
      %s88 = sphi 0, %s72
      %s94 = sphi 0, %s96
      %s97 = sphi 0, %s94
      %s98 = sphi 0, %s97
      %s114 = sphi 0, %s98
      %s122 = sphi 0, %s124
      %s125 = sphi 0, %s122
      %s126 = sphi 0, %s125
      %s142 = sphi 0, %s126
    $region4: #{lipnet_forward.13} parent=1 // loop_header_branch
      %12 = sbr.rel (%p10) target = $region8
    $region5: #{lipnet_forward.13} parent=1 // loop_body
      %s14 = ssub.s32 %s9, 1
      %s15 = ssub.s32 %s9, 2
      %s25 = sadd.s32 1, %s18
      %p26 = scmp.ge.s32.totalorder %s25, 3
      %s27 = scalar_select %p26, 0, %s25
      %s28 = sadd.s32 1, %s17
      %s29 = scalar_select %p26, %s28, %s17
      %p30 = scmp.ge.s32.totalorder %s29, 3
      %s31 = scalar_select %p30, 0, %s29
      %s32 = sadd.s32 1, %s16
      %s33 = scalar_select %p30, %s32, %s16
      %p34 = scmp.ge.s32.totalorder %s33, 1
      %s35 = scalar_select %p34, 0, %s33
      %s36 = ssub.s32 %s16, %s35
      %s37 = ssub.s32 %s18, %s27
      %s38 = sor.u32 %s36, %s37
      %p39 = scmp.eq.s32.totalorder %s38, 0
      %s41 = sadd.s32 %s40, 1
      %s42 = scalar_select %p39, %s40, %s41
      %p45 = pneg %p39
      %p46 = scmp.eq.s32.totalorder %s9, 8
      %p47 = por %p45, %p46
      %p48 = scmp.ne.s32.totalorder %s40, %s43
      %p49 = scmp.eq.s32.totalorder %s9, 0
      %p50 = por %p48, %p49
      %p51 = scmp.ne.s32.totalorder %s40, %s43
      %p52 = scmp.eq.s32.totalorder %s14, 8
      %p53 = por %p51, %p52
      %p54 = scmp.ne.s32.totalorder %s43, %s44
      %p55 = scmp.eq.s32.totalorder %s14, 0
      %p56 = por %p54, %p55
      %p57 = scmp.ne.s32.totalorder %s43, %s44
      %p58 = scmp.eq.s32.totalorder %s15, 8
      %p59 = por %p57, %p58
      %p61 = scmp.ne.s32.totalorder %s44, %s60
      %p62 = scmp.eq.s32.totalorder %s15, 0
      %p63 = por %p61, %p62
      %s64 = ssub.s32 %s18, %s27
      %s65 = ssub.s32 %s17, %s31
      %s66 = sor.u32 %s64, %s65
      %p67 = scmp.eq.s32.totalorder %s66, 0
      %s69 = sadd.s32 %s68, 1
      %s70 = scalar_select %p67, %s68, %s69
      %p73 = pneg %p67
      %p74 = scmp.eq.s32.totalorder %s9, 8
      %p75 = por %p73, %p74
      %p76 = scmp.ne.s32.totalorder %s68, %s71
      %p77 = scmp.eq.s32.totalorder %s9, 0
      %p78 = por %p76, %p77
      %p79 = scmp.ne.s32.totalorder %s68, %s71
      %p80 = scmp.eq.s32.totalorder %s14, 8
      %p81 = por %p79, %p80
      %p82 = scmp.ne.s32.totalorder %s71, %s72
      %p83 = scmp.eq.s32.totalorder %s14, 0
      %p84 = por %p82, %p83
      %p85 = scmp.ne.s32.totalorder %s71, %s72
      %p86 = scmp.eq.s32.totalorder %s15, 8
      %p87 = por %p85, %p86
      %p89 = scmp.ne.s32.totalorder %s72, %s88
      %p90 = scmp.eq.s32.totalorder %s15, 0
      %p91 = por %p89, %p90
      %s92 = ssub.s32 %s17, %s31
      %p93 = scmp.eq.s32.totalorder %s92, 0
      %s95 = sadd.s32 %s94, 1
      %s96 = scalar_select %p93, %s94, %s95
      %p99 = pneg %p93
      %p100 = scmp.eq.s32.totalorder %s9, 8
      %p101 = por %p99, %p100
      %p102 = scmp.ne.s32.totalorder %s94, %s97
      %p103 = scmp.eq.s32.totalorder %s9, 0
      %p104 = por %p102, %p103
      %p105 = scmp.ne.s32.totalorder %s94, %s97
      %p106 = scmp.eq.s32.totalorder %s14, 8
      %p107 = por %p105, %p106
      %p108 = scmp.ne.s32.totalorder %s97, %s98
      %p109 = scmp.eq.s32.totalorder %s14, 0
      %p110 = por %p108, %p109
      %p111 = scmp.ne.s32.totalorder %s97, %s98
      %p112 = scmp.eq.s32.totalorder %s15, 8
      %p113 = por %p111, %p112
      %p115 = scmp.ne.s32.totalorder %s98, %s114
      %p116 = scmp.eq.s32.totalorder %s15, 0
      %p117 = por %p115, %p116
      %s118 = ssub.s32 %s16, %s35
      %s119 = ssub.s32 %s17, %s31
      %s120 = sor.u32 %s118, %s119
      %p121 = scmp.eq.s32.totalorder %s120, 0
      %s123 = sadd.s32 %s122, 1
      %s124 = scalar_select %p121, %s122, %s123
      %p127 = pneg %p121
      %p128 = scmp.eq.s32.totalorder %s9, 8
      %p129 = por %p127, %p128
      %p130 = scmp.ne.s32.totalorder %s122, %s125
      %p131 = scmp.eq.s32.totalorder %s9, 0
      %p132 = por %p130, %p131
      %p133 = scmp.ne.s32.totalorder %s122, %s125
      %p134 = scmp.eq.s32.totalorder %s14, 8
      %p135 = por %p133, %p134
      %p136 = scmp.ne.s32.totalorder %s125, %s126
      %p137 = scmp.eq.s32.totalorder %s14, 0
      %p138 = por %p136, %p137
      %p139 = scmp.ne.s32.totalorder %s125, %s126
      %p140 = scmp.eq.s32.totalorder %s15, 8
      %p141 = por %p139, %p140
      %p143 = scmp.ne.s32.totalorder %s126, %s142
      %p144 = scmp.eq.s32.totalorder %s15, 0
      %p145 = por %p143, %p144
      %p146 = scmp.le.s32.totalorder 1, %s9
      %p147 = scmp.lt.s32.totalorder %s9, 10
      %p148 = pnand %p146, %p147
      %p149 = pneg %p148
      // Predicated region
      $region9: #{lipnet_forward.13} parent=5 // pred_check
        _
      $region10: #{lipnet_forward.13} parent=5 // pred_check_branch
        %151 = sbr.rel (%p148) target = $region12
      $region11: #{lipnet_forward.13} parent=5 // pred_region
        %s152 = ssub.s32 %s9, 1
      $region12: #{lipnet_forward.13} parent=5 // pred_fallthru
        _
      %p153 = scmp.lt.s32.totalorder %s9, 9
      // Predicated region
      $region13: #{lipnet_forward.13} parent=5 // pred_check
        %p154 = pneg %p153
      $region14: #{lipnet_forward.13} parent=5 // pred_check_branch
        %156 = sbr.rel (%p154) target = $region16
      $region15: #{lipnet_forward.13} parent=5 // pred_region
        // Predicated region
        $region17: #{lipnet_forward.13} parent=15 // pred_check
          %p157 = pneg %p50
        $region18: #{lipnet_forward.13} parent=15 // pred_check_branch
          %159 = sbr.rel (%p157) target = $region20
        $region19: #{lipnet_forward.13} parent=15 // pred_region
          %s160 = sand.u32 %s40, 1
          %s161 = sand.u32 %s40, 1
          %s162 = smul.addr %s161, 64
          %s163 = scalar_lea.vmem [#allocation2], %s162
          %s164 = smul.u32 2, %s16
          %s165 = smul.u32 8, %s18
          %s166 = smul.addr %s164, 24
          %s167 = sadd.s32 %s165, %s166
          %s168 = smul.addr %s167, 4
          %s169 = scalar_lea.vmem %s0, %s168
          // Predicated region
          $region21: #{lipnet_forward.13} parent=19 // pred_check
            _
          $region22: #{lipnet_forward.13} parent=19 // pred_check_branch
            %171 = sbr.rel (0) target = $region24
          $region23: #{lipnet_forward.13} parent=19 // pred_region
            // Predicated region
            $region25: #{lipnet_forward.13} parent=23 // pred_check
              _
            $region26: #{lipnet_forward.13} parent=23 // pred_check_branch
              %173 = sbr.rel (0) target = $region28
            $region27: #{lipnet_forward.13} parent=23 // pred_region
              loop: start=0, step=1, limit=1
              $region29: #{lipnet_forward.13} parent=27 // loop_pre_header
                _
              $region30: #{lipnet_forward.13} parent=27 // loop_header
                %s175 = sphi 0, %s179
                %p176 = scmp.ge.s32.totalorder %s175, 1
                %s180 = sphi %s169, %s169
                %s181 = sphi %s163, %s163
              $region31: #{lipnet_forward.13} parent=27 // loop_header_branch
                %178 = sbr.rel (%p176) target = $region35
              $region32: #{lipnet_forward.13} parent=27 // loop_body
                %v182 = vld [vmem:[%s180] sm:$0xff]
                %183 = vst [vmem:[%s181] sm:$0xff] %v182
                %v184 = vld [vmem:[%s180 + $0x8] sm:$0xff]
                %185 = vst [vmem:[%s181 + $0x8] sm:$0xff] %v184
                %v186 = vld [vmem:[%s180 + $0x10] sm:$0xff]
                %187 = vst [vmem:[%s181 + $0x10] sm:$0xff] %v186
                %v188 = vld [vmem:[%s180 + $0x18] sm:$0xff]
                %189 = vst [vmem:[%s181 + $0x18] sm:$0xff] %v188
                %v190 = vld [vmem:[%s180 + $0x60] sm:$0xff]
                %191 = vst [vmem:[%s181 + $0x20] sm:$0xff] %v190
                %v192 = vld [vmem:[%s180 + $0x68] sm:$0xff]
                %193 = vst [vmem:[%s181 + $0x28] sm:$0xff] %v192
                %v194 = vld [vmem:[%s180 + $0x70] sm:$0xff]
                %195 = vst [vmem:[%s181 + $0x30] sm:$0xff] %v194
                %v196 = vld [vmem:[%s180 + $0x78] sm:$0xff]
                %197 = vst [vmem:[%s181 + $0x38] sm:$0xff] %v196
              $region33: #{lipnet_forward.13} parent=27 // loop_footer
                %s179 = sadd.s32 1, %s175
              $region34: #{lipnet_forward.13} parent=27 // loop_footer_branch
                %174 = sbr.rel target = $region30
              $region35: #{lipnet_forward.13} parent=27 // loop_exit
                _
            $region28: #{lipnet_forward.13} parent=23 // pred_fallthru
              _
            // Predicated region
            $region36: #{lipnet_forward.13} parent=23 // pred_check
              _
            $region37: #{lipnet_forward.13} parent=23 // pred_check_branch
              %199 = sbr.rel target = $region39
            $region38: #{lipnet_forward.13} parent=23 // pred_region
              _
            $region39: #{lipnet_forward.13} parent=23 // pred_fallthru
              _
          $region24: #{lipnet_forward.13} parent=19 // pred_fallthru
            _
          %200 = vnop
        $region20: #{lipnet_forward.13} parent=15 // pred_fallthru
          _
        // Predicated region
        $region40: #{lipnet_forward.13} parent=15 // pred_check
          %p201 = pneg %p78
        $region41: #{lipnet_forward.13} parent=15 // pred_check_branch
          %203 = sbr.rel (%p201) target = $region43
        $region42: #{lipnet_forward.13} parent=15 // pred_region
          %s204 = sand.u32 %s68, 1
          %s205 = sand.u32 %s68, 1
          %s206 = smul.addr %s205, 2048
          %s207 = scalar_lea.vmem [#allocation3], %s206
          %s208 = smul.u32 128, %s18
          %s209 = smul.u32 4, %s17
          %s210 = smul.addr %s208, 12
          %s211 = sadd.s32 %s209, %s210
          %s212 = smul.addr %s211, 4
          %s213 = scalar_lea.vmem %s1, %s212
          // Predicated region
          $region44: #{lipnet_forward.13} parent=42 // pred_check
            _
          $region45: #{lipnet_forward.13} parent=42 // pred_check_branch
            %215 = sbr.rel (0) target = $region47
          $region46: #{lipnet_forward.13} parent=42 // pred_region
            // Predicated region
            $region48: #{lipnet_forward.13} parent=46 // pred_check
              _
            $region49: #{lipnet_forward.13} parent=46 // pred_check_branch
              %217 = sbr.rel (0) target = $region51
            $region50: #{lipnet_forward.13} parent=46 // pred_region
              loop: start=0, step=1, limit=1
              $region52: #{lipnet_forward.13} parent=50 // loop_pre_header
                _
              $region53: #{lipnet_forward.13} parent=50 // loop_header
                %s219 = sphi 0, %s223
                %p220 = scmp.ge.s32.totalorder %s219, 1
                %s224 = sphi %s213, %s213
                %s225 = sphi %s207, %s207
              $region54: #{lipnet_forward.13} parent=50 // loop_header_branch
                %222 = sbr.rel (%p220) target = $region58
              $region55: #{lipnet_forward.13} parent=50 // loop_body
                %v226 = vld [vmem:[%s224] sm:$0xff]
                %227 = vst [vmem:[%s225] sm:$0xff] %v226
                %v228 = vld [vmem:[%s224 + $0x8] sm:$0xff]
                %229 = vst [vmem:[%s225 + $0x8] sm:$0xff] %v228
                %v230 = vld [vmem:[%s224 + $0x30] sm:$0xff]
                %231 = vst [vmem:[%s225 + $0x10] sm:$0xff] %v230
                %v232 = vld [vmem:[%s224 + $0x38] sm:$0xff]
                %233 = vst [vmem:[%s225 + $0x18] sm:$0xff] %v232
                %v234 = vld [vmem:[%s224 + $0x60] sm:$0xff]
                %235 = vst [vmem:[%s225 + $0x20] sm:$0xff] %v234
                %v236 = vld [vmem:[%s224 + $0x68] sm:$0xff]
                %237 = vst [vmem:[%s225 + $0x28] sm:$0xff] %v236
                %v238 = vld [vmem:[%s224 + $0x90] sm:$0xff]
                %239 = vst [vmem:[%s225 + $0x30] sm:$0xff] %v238
                %v240 = vld [vmem:[%s224 + $0x98] sm:$0xff]
                %241 = vst [vmem:[%s225 + $0x38] sm:$0xff] %v240
                %v242 = vld [vmem:[%s224 + $0xc0] sm:$0xff]
                %243 = vst [vmem:[%s225 + $0x40] sm:$0xff] %v242
                %v244 = vld [vmem:[%s224 + $0xc8] sm:$0xff]
                %245 = vst [vmem:[%s225 + $0x48] sm:$0xff] %v244
                %v246 = vld [vmem:[%s224 + $0xf0] sm:$0xff]
                %247 = vst [vmem:[%s225 + $0x50] sm:$0xff] %v246
                %v248 = vld [vmem:[%s224 + $0xf8] sm:$0xff]
                %249 = vst [vmem:[%s225 + $0x58] sm:$0xff] %v248
                %v250 = vld [vmem:[%s224 + $0x120] sm:$0xff]
                %251 = vst [vmem:[%s225 + $0x60] sm:$0xff] %v250
                %v252 = vld [vmem:[%s224 + $0x128] sm:$0xff]
                %253 = vst [vmem:[%s225 + $0x68] sm:$0xff] %v252
                %v254 = vld [vmem:[%s224 + $0x150] sm:$0xff]
                %255 = vst [vmem:[%s225 + $0x70] sm:$0xff] %v254
                %v256 = vld [vmem:[%s224 + $0x158] sm:$0xff]
                %257 = vst [vmem:[%s225 + $0x78] sm:$0xff] %v256
                %v258 = vld [vmem:[%s224 + $0x180] sm:$0xff]
                %259 = vst [vmem:[%s225 + $0x80] sm:$0xff] %v258
                %v260 = vld [vmem:[%s224 + $0x188] sm:$0xff]
                %261 = vst [vmem:[%s225 + $0x88] sm:$0xff] %v260
                %v262 = vld [vmem:[%s224 + $0x1b0] sm:$0xff]
                %263 = vst [vmem:[%s225 + $0x90] sm:$0xff] %v262
                %v264 = vld [vmem:[%s224 + $0x1b8] sm:$0xff]
                %265 = vst [vmem:[%s225 + $0x98] sm:$0xff] %v264
                %v266 = vld [vmem:[%s224 + $0x1e0] sm:$0xff]
                %267 = vst [vmem:[%s225 + $0xa0] sm:$0xff] %v266
                %v268 = vld [vmem:[%s224 + $0x1e8] sm:$0xff]
                %269 = vst [vmem:[%s225 + $0xa8] sm:$0xff] %v268
                %v270 = vld [vmem:[%s224 + $0x210] sm:$0xff]
                %271 = vst [vmem:[%s225 + $0xb0] sm:$0xff] %v270
                %v272 = vld [vmem:[%s224 + $0x218] sm:$0xff]
                %273 = vst [vmem:[%s225 + $0xb8] sm:$0xff] %v272
                %v274 = vld [vmem:[%s224 + $0x240] sm:$0xff]
                %275 = vst [vmem:[%s225 + $0xc0] sm:$0xff] %v274
                %v276 = vld [vmem:[%s224 + $0x248] sm:$0xff]
                %277 = vst [vmem:[%s225 + $0xc8] sm:$0xff] %v276
                %v278 = vld [vmem:[%s224 + $0x270] sm:$0xff]
                %279 = vst [vmem:[%s225 + $0xd0] sm:$0xff] %v278
                %v280 = vld [vmem:[%s224 + $0x278] sm:$0xff]
                %281 = vst [vmem:[%s225 + $0xd8] sm:$0xff] %v280
                %v282 = vld [vmem:[%s224 + $0x2a0] sm:$0xff]
                %283 = vst [vmem:[%s225 + $0xe0] sm:$0xff] %v282
                %v284 = vld [vmem:[%s224 + $0x2a8] sm:$0xff]
                %285 = vst [vmem:[%s225 + $0xe8] sm:$0xff] %v284
                %v286 = vld [vmem:[%s224 + $0x2d0] sm:$0xff]
                %287 = vst [vmem:[%s225 + $0xf0] sm:$0xff] %v286
                %v288 = vld [vmem:[%s224 + $0x2d8] sm:$0xff]
                %289 = vst [vmem:[%s225 + $0xf8] sm:$0xff] %v288
                %v290 = vld [vmem:[%s224 + $0x300] sm:$0xff]
                %291 = vst [vmem:[%s225 + $0x100] sm:$0xff] %v290
                %v292 = vld [vmem:[%s224 + $0x308] sm:$0xff]
                %293 = vst [vmem:[%s225 + $0x108] sm:$0xff] %v292
                %v294 = vld [vmem:[%s224 + $0x330] sm:$0xff]
                %295 = vst [vmem:[%s225 + $0x110] sm:$0xff] %v294
                %v296 = vld [vmem:[%s224 + $0x338] sm:$0xff]
                %297 = vst [vmem:[%s225 + $0x118] sm:$0xff] %v296
                %v298 = vld [vmem:[%s224 + $0x360] sm:$0xff]
                %299 = vst [vmem:[%s225 + $0x120] sm:$0xff] %v298
                %v300 = vld [vmem:[%s224 + $0x368] sm:$0xff]
                %301 = vst [vmem:[%s225 + $0x128] sm:$0xff] %v300
                %v302 = vld [vmem:[%s224 + $0x390] sm:$0xff]
                %303 = vst [vmem:[%s225 + $0x130] sm:$0xff] %v302
                %v304 = vld [vmem:[%s224 + $0x398] sm:$0xff]
                %305 = vst [vmem:[%s225 + $0x138] sm:$0xff] %v304
                %v306 = vld [vmem:[%s224 + $0x3c0] sm:$0xff]
                %307 = vst [vmem:[%s225 + $0x140] sm:$0xff] %v306
                %v308 = vld [vmem:[%s224 + $0x3c8] sm:$0xff]
                %309 = vst [vmem:[%s225 + $0x148] sm:$0xff] %v308
                %v310 = vld [vmem:[%s224 + $0x3f0] sm:$0xff]
                %311 = vst [vmem:[%s225 + $0x150] sm:$0xff] %v310
                %v312 = vld [vmem:[%s224 + $0x3f8] sm:$0xff]
                %313 = vst [vmem:[%s225 + $0x158] sm:$0xff] %v312
                %v314 = vld [vmem:[%s224 + $0x420] sm:$0xff]
                %315 = vst [vmem:[%s225 + $0x160] sm:$0xff] %v314
                %v316 = vld [vmem:[%s224 + $0x428] sm:$0xff]
                %317 = vst [vmem:[%s225 + $0x168] sm:$0xff] %v316
                %v318 = vld [vmem:[%s224 + $0x450] sm:$0xff]
                %319 = vst [vmem:[%s225 + $0x170] sm:$0xff] %v318
                %v320 = vld [vmem:[%s224 + $0x458] sm:$0xff]
                %321 = vst [vmem:[%s225 + $0x178] sm:$0xff] %v320
                %v322 = vld [vmem:[%s224 + $0x480] sm:$0xff]
                %323 = vst [vmem:[%s225 + $0x180] sm:$0xff] %v322
                %v324 = vld [vmem:[%s224 + $0x488] sm:$0xff]
                %325 = vst [vmem:[%s225 + $0x188] sm:$0xff] %v324
                %v326 = vld [vmem:[%s224 + $0x4b0] sm:$0xff]
                %327 = vst [vmem:[%s225 + $0x190] sm:$0xff] %v326
                %v328 = vld [vmem:[%s224 + $0x4b8] sm:$0xff]
                %329 = vst [vmem:[%s225 + $0x198] sm:$0xff] %v328
                %v330 = vld [vmem:[%s224 + $0x4e0] sm:$0xff]
                %331 = vst [vmem:[%s225 + $0x1a0] sm:$0xff] %v330
                %v332 = vld [vmem:[%s224 + $0x4e8] sm:$0xff]
                %333 = vst [vmem:[%s225 + $0x1a8] sm:$0xff] %v332
                %v334 = vld [vmem:[%s224 + $0x510] sm:$0xff]
                %335 = vst [vmem:[%s225 + $0x1b0] sm:$0xff] %v334
                %v336 = vld [vmem:[%s224 + $0x518] sm:$0xff]
                %337 = vst [vmem:[%s225 + $0x1b8] sm:$0xff] %v336
                %v338 = vld [vmem:[%s224 + $0x540] sm:$0xff]
                %339 = vst [vmem:[%s225 + $0x1c0] sm:$0xff] %v338
                %v340 = vld [vmem:[%s224 + $0x548] sm:$0xff]
                %341 = vst [vmem:[%s225 + $0x1c8] sm:$0xff] %v340
                %v342 = vld [vmem:[%s224 + $0x570] sm:$0xff]
                %343 = vst [vmem:[%s225 + $0x1d0] sm:$0xff] %v342
                %v344 = vld [vmem:[%s224 + $0x578] sm:$0xff]
                %345 = vst [vmem:[%s225 + $0x1d8] sm:$0xff] %v344
                %v346 = vld [vmem:[%s224 + $0x5a0] sm:$0xff]
                %347 = vst [vmem:[%s225 + $0x1e0] sm:$0xff] %v346
                %v348 = vld [vmem:[%s224 + $0x5a8] sm:$0xff]
                %349 = vst [vmem:[%s225 + $0x1e8] sm:$0xff] %v348
                %v350 = vld [vmem:[%s224 + $0x5d0] sm:$0xff]
                %351 = vst [vmem:[%s225 + $0x1f0] sm:$0xff] %v350
                %v352 = vld [vmem:[%s224 + $0x5d8] sm:$0xff]
                %353 = vst [vmem:[%s225 + $0x1f8] sm:$0xff] %v352
                %v354 = vld [vmem:[%s224 + $0x600] sm:$0xff]
                %355 = vst [vmem:[%s225 + $0x200] sm:$0xff] %v354
                %v356 = vld [vmem:[%s224 + $0x608] sm:$0xff]
                %357 = vst [vmem:[%s225 + $0x208] sm:$0xff] %v356
                %v358 = vld [vmem:[%s224 + $0x630] sm:$0xff]
                %359 = vst [vmem:[%s225 + $0x210] sm:$0xff] %v358
                %v360 = vld [vmem:[%s224 + $0x638] sm:$0xff]
                %361 = vst [vmem:[%s225 + $0x218] sm:$0xff] %v360
                %v362 = vld [vmem:[%s224 + $0x660] sm:$0xff]
                %363 = vst [vmem:[%s225 + $0x220] sm:$0xff] %v362
                %v364 = vld [vmem:[%s224 + $0x668] sm:$0xff]
                %365 = vst [vmem:[%s225 + $0x228] sm:$0xff] %v364
                %v366 = vld [vmem:[%s224 + $0x690] sm:$0xff]
                %367 = vst [vmem:[%s225 + $0x230] sm:$0xff] %v366
                %v368 = vld [vmem:[%s224 + $0x698] sm:$0xff]
                %369 = vst [vmem:[%s225 + $0x238] sm:$0xff] %v368
                %v370 = vld [vmem:[%s224 + $0x6c0] sm:$0xff]
                %371 = vst [vmem:[%s225 + $0x240] sm:$0xff] %v370
                %v372 = vld [vmem:[%s224 + $0x6c8] sm:$0xff]
                %373 = vst [vmem:[%s225 + $0x248] sm:$0xff] %v372
                %v374 = vld [vmem:[%s224 + $0x6f0] sm:$0xff]
                %375 = vst [vmem:[%s225 + $0x250] sm:$0xff] %v374
                %v376 = vld [vmem:[%s224 + $0x6f8] sm:$0xff]
                %377 = vst [vmem:[%s225 + $0x258] sm:$0xff] %v376
                %v378 = vld [vmem:[%s224 + $0x720] sm:$0xff]
                %379 = vst [vmem:[%s225 + $0x260] sm:$0xff] %v378
                %v380 = vld [vmem:[%s224 + $0x728] sm:$0xff]
                %381 = vst [vmem:[%s225 + $0x268] sm:$0xff] %v380
                %v382 = vld [vmem:[%s224 + $0x750] sm:$0xff]
                %383 = vst [vmem:[%s225 + $0x270] sm:$0xff] %v382
                %v384 = vld [vmem:[%s224 + $0x758] sm:$0xff]
                %385 = vst [vmem:[%s225 + $0x278] sm:$0xff] %v384
                %v386 = vld [vmem:[%s224 + $0x780] sm:$0xff]
                %387 = vst [vmem:[%s225 + $0x280] sm:$0xff] %v386
                %v388 = vld [vmem:[%s224 + $0x788] sm:$0xff]
                %389 = vst [vmem:[%s225 + $0x288] sm:$0xff] %v388
                %v390 = vld [vmem:[%s224 + $0x7b0] sm:$0xff]
                %391 = vst [vmem:[%s225 + $0x290] sm:$0xff] %v390
                %v392 = vld [vmem:[%s224 + $0x7b8] sm:$0xff]
                %393 = vst [vmem:[%s225 + $0x298] sm:$0xff] %v392
                %v394 = vld [vmem:[%s224 + $0x7e0] sm:$0xff]
                %395 = vst [vmem:[%s225 + $0x2a0] sm:$0xff] %v394
                %v396 = vld [vmem:[%s224 + $0x7e8] sm:$0xff]
                %397 = vst [vmem:[%s225 + $0x2a8] sm:$0xff] %v396
                %v398 = vld [vmem:[%s224 + $0x810] sm:$0xff]
                %399 = vst [vmem:[%s225 + $0x2b0] sm:$0xff] %v398
                %v400 = vld [vmem:[%s224 + $0x818] sm:$0xff]
                %401 = vst [vmem:[%s225 + $0x2b8] sm:$0xff] %v400
                %v402 = vld [vmem:[%s224 + $0x840] sm:$0xff]
                %403 = vst [vmem:[%s225 + $0x2c0] sm:$0xff] %v402
                %v404 = vld [vmem:[%s224 + $0x848] sm:$0xff]
                %405 = vst [vmem:[%s225 + $0x2c8] sm:$0xff] %v404
                %v406 = vld [vmem:[%s224 + $0x870] sm:$0xff]
                %407 = vst [vmem:[%s225 + $0x2d0] sm:$0xff] %v406
                %v408 = vld [vmem:[%s224 + $0x878] sm:$0xff]
                %409 = vst [vmem:[%s225 + $0x2d8] sm:$0xff] %v408
                %v410 = vld [vmem:[%s224 + $0x8a0] sm:$0xff]
                %411 = vst [vmem:[%s225 + $0x2e0] sm:$0xff] %v410
                %v412 = vld [vmem:[%s224 + $0x8a8] sm:$0xff]
                %413 = vst [vmem:[%s225 + $0x2e8] sm:$0xff] %v412
                %v414 = vld [vmem:[%s224 + $0x8d0] sm:$0xff]
                %415 = vst [vmem:[%s225 + $0x2f0] sm:$0xff] %v414
                %v416 = vld [vmem:[%s224 + $0x8d8] sm:$0xff]
                %417 = vst [vmem:[%s225 + $0x2f8] sm:$0xff] %v416
                %v418 = vld [vmem:[%s224 + $0x900] sm:$0xff]
                %419 = vst [vmem:[%s225 + $0x300] sm:$0xff] %v418
                %v420 = vld [vmem:[%s224 + $0x908] sm:$0xff]
                %421 = vst [vmem:[%s225 + $0x308] sm:$0xff] %v420
                %v422 = vld [vmem:[%s224 + $0x930] sm:$0xff]
                %423 = vst [vmem:[%s225 + $0x310] sm:$0xff] %v422
                %v424 = vld [vmem:[%s224 + $0x938] sm:$0xff]
                %425 = vst [vmem:[%s225 + $0x318] sm:$0xff] %v424
                %v426 = vld [vmem:[%s224 + $0x960] sm:$0xff]
                %427 = vst [vmem:[%s225 + $0x320] sm:$0xff] %v426
                %v428 = vld [vmem:[%s224 + $0x968] sm:$0xff]
                %429 = vst [vmem:[%s225 + $0x328] sm:$0xff] %v428
                %v430 = vld [vmem:[%s224 + $0x990] sm:$0xff]
                %431 = vst [vmem:[%s225 + $0x330] sm:$0xff] %v430
                %v432 = vld [vmem:[%s224 + $0x998] sm:$0xff]
                %433 = vst [vmem:[%s225 + $0x338] sm:$0xff] %v432
                %v434 = vld [vmem:[%s224 + $0x9c0] sm:$0xff]
                %435 = vst [vmem:[%s225 + $0x340] sm:$0xff] %v434
                %v436 = vld [vmem:[%s224 + $0x9c8] sm:$0xff]
                %437 = vst [vmem:[%s225 + $0x348] sm:$0xff] %v436
                %v438 = vld [vmem:[%s224 + $0x9f0] sm:$0xff]
                %439 = vst [vmem:[%s225 + $0x350] sm:$0xff] %v438
                %v440 = vld [vmem:[%s224 + $0x9f8] sm:$0xff]
                %441 = vst [vmem:[%s225 + $0x358] sm:$0xff] %v440
                %v442 = vld [vmem:[%s224 + $0xa20] sm:$0xff]
                %443 = vst [vmem:[%s225 + $0x360] sm:$0xff] %v442
                %v444 = vld [vmem:[%s224 + $0xa28] sm:$0xff]
                %445 = vst [vmem:[%s225 + $0x368] sm:$0xff] %v444
                %v446 = vld [vmem:[%s224 + $0xa50] sm:$0xff]
                %447 = vst [vmem:[%s225 + $0x370] sm:$0xff] %v446
                %v448 = vld [vmem:[%s224 + $0xa58] sm:$0xff]
                %449 = vst [vmem:[%s225 + $0x378] sm:$0xff] %v448
                %v450 = vld [vmem:[%s224 + $0xa80] sm:$0xff]
                %451 = vst [vmem:[%s225 + $0x380] sm:$0xff] %v450
                %v452 = vld [vmem:[%s224 + $0xa88] sm:$0xff]
                %453 = vst [vmem:[%s225 + $0x388] sm:$0xff] %v452
                %v454 = vld [vmem:[%s224 + $0xab0] sm:$0xff]
                %455 = vst [vmem:[%s225 + $0x390] sm:$0xff] %v454
                %v456 = vld [vmem:[%s224 + $0xab8] sm:$0xff]
                %457 = vst [vmem:[%s225 + $0x398] sm:$0xff] %v456
                %v458 = vld [vmem:[%s224 + $0xae0] sm:$0xff]
                %459 = vst [vmem:[%s225 + $0x3a0] sm:$0xff] %v458
                %v460 = vld [vmem:[%s224 + $0xae8] sm:$0xff]
                %461 = vst [vmem:[%s225 + $0x3a8] sm:$0xff] %v460
                %v462 = vld [vmem:[%s224 + $0xb10] sm:$0xff]
                %463 = vst [vmem:[%s225 + $0x3b0] sm:$0xff] %v462
                %v464 = vld [vmem:[%s224 + $0xb18] sm:$0xff]
                %465 = vst [vmem:[%s225 + $0x3b8] sm:$0xff] %v464
                %v466 = vld [vmem:[%s224 + $0xb40] sm:$0xff]
                %467 = vst [vmem:[%s225 + $0x3c0] sm:$0xff] %v466
                %v468 = vld [vmem:[%s224 + $0xb48] sm:$0xff]
                %469 = vst [vmem:[%s225 + $0x3c8] sm:$0xff] %v468
                %v470 = vld [vmem:[%s224 + $0xb70] sm:$0xff]
                %471 = vst [vmem:[%s225 + $0x3d0] sm:$0xff] %v470
                %v472 = vld [vmem:[%s224 + $0xb78] sm:$0xff]
                %473 = vst [vmem:[%s225 + $0x3d8] sm:$0xff] %v472
                %v474 = vld [vmem:[%s224 + $0xba0] sm:$0xff]
                %475 = vst [vmem:[%s225 + $0x3e0] sm:$0xff] %v474
                %v476 = vld [vmem:[%s224 + $0xba8] sm:$0xff]
                %477 = vst [vmem:[%s225 + $0x3e8] sm:$0xff] %v476
                %v478 = vld [vmem:[%s224 + $0xbd0] sm:$0xff]
                %479 = vst [vmem:[%s225 + $0x3f0] sm:$0xff] %v478
                %v480 = vld [vmem:[%s224 + $0xbd8] sm:$0xff]
                %481 = vst [vmem:[%s225 + $0x3f8] sm:$0xff] %v480
                %v482 = vld [vmem:[%s224 + $0xc00] sm:$0xff]
                %483 = vst [vmem:[%s225 + $0x400] sm:$0xff] %v482
                %v484 = vld [vmem:[%s224 + $0xc08] sm:$0xff]
                %485 = vst [vmem:[%s225 + $0x408] sm:$0xff] %v484
                %v486 = vld [vmem:[%s224 + $0xc30] sm:$0xff]
                %487 = vst [vmem:[%s225 + $0x410] sm:$0xff] %v486
                %v488 = vld [vmem:[%s224 + $0xc38] sm:$0xff]
                %489 = vst [vmem:[%s225 + $0x418] sm:$0xff] %v488
                %v490 = vld [vmem:[%s224 + $0xc60] sm:$0xff]
                %491 = vst [vmem:[%s225 + $0x420] sm:$0xff] %v490
                %v492 = vld [vmem:[%s224 + $0xc68] sm:$0xff]
                %493 = vst [vmem:[%s225 + $0x428] sm:$0xff] %v492
                %v494 = vld [vmem:[%s224 + $0xc90] sm:$0xff]
                %495 = vst [vmem:[%s225 + $0x430] sm:$0xff] %v494
                %v496 = vld [vmem:[%s224 + $0xc98] sm:$0xff]
                %497 = vst [vmem:[%s225 + $0x438] sm:$0xff] %v496
                %v498 = vld [vmem:[%s224 + $0xcc0] sm:$0xff]
                %499 = vst [vmem:[%s225 + $0x440] sm:$0xff] %v498
                %v500 = vld [vmem:[%s224 + $0xcc8] sm:$0xff]
                %501 = vst [vmem:[%s225 + $0x448] sm:$0xff] %v500
                %v502 = vld [vmem:[%s224 + $0xcf0] sm:$0xff]
                %503 = vst [vmem:[%s225 + $0x450] sm:$0xff] %v502
                %v504 = vld [vmem:[%s224 + $0xcf8] sm:$0xff]
                %505 = vst [vmem:[%s225 + $0x458] sm:$0xff] %v504
                %v506 = vld [vmem:[%s224 + $0xd20] sm:$0xff]
                %507 = vst [vmem:[%s225 + $0x460] sm:$0xff] %v506
                %v508 = vld [vmem:[%s224 + $0xd28] sm:$0xff]
                %509 = vst [vmem:[%s225 + $0x468] sm:$0xff] %v508
                %v510 = vld [vmem:[%s224 + $0xd50] sm:$0xff]
                %511 = vst [vmem:[%s225 + $0x470] sm:$0xff] %v510
                %v512 = vld [vmem:[%s224 + $0xd58] sm:$0xff]
                %513 = vst [vmem:[%s225 + $0x478] sm:$0xff] %v512
                %v514 = vld [vmem:[%s224 + $0xd80] sm:$0xff]
                %515 = vst [vmem:[%s225 + $0x480] sm:$0xff] %v514
                %v516 = vld [vmem:[%s224 + $0xd88] sm:$0xff]
                %517 = vst [vmem:[%s225 + $0x488] sm:$0xff] %v516
                %v518 = vld [vmem:[%s224 + $0xdb0] sm:$0xff]
                %519 = vst [vmem:[%s225 + $0x490] sm:$0xff] %v518
                %v520 = vld [vmem:[%s224 + $0xdb8] sm:$0xff]
                %521 = vst [vmem:[%s225 + $0x498] sm:$0xff] %v520
                %v522 = vld [vmem:[%s224 + $0xde0] sm:$0xff]
                %523 = vst [vmem:[%s225 + $0x4a0] sm:$0xff] %v522
                %v524 = vld [vmem:[%s224 + $0xde8] sm:$0xff]
                %525 = vst [vmem:[%s225 + $0x4a8] sm:$0xff] %v524
                %v526 = vld [vmem:[%s224 + $0xe10] sm:$0xff]
                %527 = vst [vmem:[%s225 + $0x4b0] sm:$0xff] %v526
                %v528 = vld [vmem:[%s224 + $0xe18] sm:$0xff]
                %529 = vst [vmem:[%s225 + $0x4b8] sm:$0xff] %v528
                %v530 = vld [vmem:[%s224 + $0xe40] sm:$0xff]
                %531 = vst [vmem:[%s225 + $0x4c0] sm:$0xff] %v530
                %v532 = vld [vmem:[%s224 + $0xe48] sm:$0xff]
                %533 = vst [vmem:[%s225 + $0x4c8] sm:$0xff] %v532
                %v534 = vld [vmem:[%s224 + $0xe70] sm:$0xff]
                %535 = vst [vmem:[%s225 + $0x4d0] sm:$0xff] %v534
                %v536 = vld [vmem:[%s224 + $0xe78] sm:$0xff]
                %537 = vst [vmem:[%s225 + $0x4d8] sm:$0xff] %v536
                %v538 = vld [vmem:[%s224 + $0xea0] sm:$0xff]
                %539 = vst [vmem:[%s225 + $0x4e0] sm:$0xff] %v538
                %v540 = vld [vmem:[%s224 + $0xea8] sm:$0xff]
                %541 = vst [vmem:[%s225 + $0x4e8] sm:$0xff] %v540
                %v542 = vld [vmem:[%s224 + $0xed0] sm:$0xff]
                %543 = vst [vmem:[%s225 + $0x4f0] sm:$0xff] %v542
                %v544 = vld [vmem:[%s224 + $0xed8] sm:$0xff]
                %545 = vst [vmem:[%s225 + $0x4f8] sm:$0xff] %v544
                %v546 = vld [vmem:[%s224 + $0xf00] sm:$0xff]
                %547 = vst [vmem:[%s225 + $0x500] sm:$0xff] %v546
                %v548 = vld [vmem:[%s224 + $0xf08] sm:$0xff]
                %549 = vst [vmem:[%s225 + $0x508] sm:$0xff] %v548
                %v550 = vld [vmem:[%s224 + $0xf30] sm:$0xff]
                %551 = vst [vmem:[%s225 + $0x510] sm:$0xff] %v550
                %v552 = vld [vmem:[%s224 + $0xf38] sm:$0xff]
                %553 = vst [vmem:[%s225 + $0x518] sm:$0xff] %v552
                %v554 = vld [vmem:[%s224 + $0xf60] sm:$0xff]
                %555 = vst [vmem:[%s225 + $0x520] sm:$0xff] %v554
                %v556 = vld [vmem:[%s224 + $0xf68] sm:$0xff]
                %557 = vst [vmem:[%s225 + $0x528] sm:$0xff] %v556
                %v558 = vld [vmem:[%s224 + $0xf90] sm:$0xff]
                %559 = vst [vmem:[%s225 + $0x530] sm:$0xff] %v558
                %v560 = vld [vmem:[%s224 + $0xf98] sm:$0xff]
                %561 = vst [vmem:[%s225 + $0x538] sm:$0xff] %v560
                %v562 = vld [vmem:[%s224 + $0xfc0] sm:$0xff]
                %563 = vst [vmem:[%s225 + $0x540] sm:$0xff] %v562
                %v564 = vld [vmem:[%s224 + $0xfc8] sm:$0xff]
                %565 = vst [vmem:[%s225 + $0x548] sm:$0xff] %v564
                %v566 = vld [vmem:[%s224 + $0xff0] sm:$0xff]
                %567 = vst [vmem:[%s225 + $0x550] sm:$0xff] %v566
                %v568 = vld [vmem:[%s224 + $0xff8] sm:$0xff]
                %569 = vst [vmem:[%s225 + $0x558] sm:$0xff] %v568
                %v570 = vld [vmem:[%s224 + $0x1020] sm:$0xff]
                %571 = vst [vmem:[%s225 + $0x560] sm:$0xff] %v570
                %v572 = vld [vmem:[%s224 + $0x1028] sm:$0xff]
                %573 = vst [vmem:[%s225 + $0x568] sm:$0xff] %v572
                %v574 = vld [vmem:[%s224 + $0x1050] sm:$0xff]
                %575 = vst [vmem:[%s225 + $0x570] sm:$0xff] %v574
                %v576 = vld [vmem:[%s224 + $0x1058] sm:$0xff]
                %577 = vst [vmem:[%s225 + $0x578] sm:$0xff] %v576
                %v578 = vld [vmem:[%s224 + $0x1080] sm:$0xff]
                %579 = vst [vmem:[%s225 + $0x580] sm:$0xff] %v578
                %v580 = vld [vmem:[%s224 + $0x1088] sm:$0xff]
                %581 = vst [vmem:[%s225 + $0x588] sm:$0xff] %v580
                %v582 = vld [vmem:[%s224 + $0x10b0] sm:$0xff]
                %583 = vst [vmem:[%s225 + $0x590] sm:$0xff] %v582
                %v584 = vld [vmem:[%s224 + $0x10b8] sm:$0xff]
                %585 = vst [vmem:[%s225 + $0x598] sm:$0xff] %v584
                %v586 = vld [vmem:[%s224 + $0x10e0] sm:$0xff]
                %587 = vst [vmem:[%s225 + $0x5a0] sm:$0xff] %v586
                %v588 = vld [vmem:[%s224 + $0x10e8] sm:$0xff]
                %589 = vst [vmem:[%s225 + $0x5a8] sm:$0xff] %v588
                %v590 = vld [vmem:[%s224 + $0x1110] sm:$0xff]
                %591 = vst [vmem:[%s225 + $0x5b0] sm:$0xff] %v590
                %v592 = vld [vmem:[%s224 + $0x1118] sm:$0xff]
                %593 = vst [vmem:[%s225 + $0x5b8] sm:$0xff] %v592
                %v594 = vld [vmem:[%s224 + $0x1140] sm:$0xff]
                %595 = vst [vmem:[%s225 + $0x5c0] sm:$0xff] %v594
                %v596 = vld [vmem:[%s224 + $0x1148] sm:$0xff]
                %597 = vst [vmem:[%s225 + $0x5c8] sm:$0xff] %v596
                %v598 = vld [vmem:[%s224 + $0x1170] sm:$0xff]
                %599 = vst [vmem:[%s225 + $0x5d0] sm:$0xff] %v598
                %v600 = vld [vmem:[%s224 + $0x1178] sm:$0xff]
                %601 = vst [vmem:[%s225 + $0x5d8] sm:$0xff] %v600
                %v602 = vld [vmem:[%s224 + $0x11a0] sm:$0xff]
                %603 = vst [vmem:[%s225 + $0x5e0] sm:$0xff] %v602
                %v604 = vld [vmem:[%s224 + $0x11a8] sm:$0xff]
                %605 = vst [vmem:[%s225 + $0x5e8] sm:$0xff] %v604
                %v606 = vld [vmem:[%s224 + $0x11d0] sm:$0xff]
                %607 = vst [vmem:[%s225 + $0x5f0] sm:$0xff] %v606
                %v608 = vld [vmem:[%s224 + $0x11d8] sm:$0xff]
                %609 = vst [vmem:[%s225 + $0x5f8] sm:$0xff] %v608
                %v610 = vld [vmem:[%s224 + $0x1200] sm:$0xff]
                %611 = vst [vmem:[%s225 + $0x600] sm:$0xff] %v610
                %v612 = vld [vmem:[%s224 + $0x1208] sm:$0xff]
                %613 = vst [vmem:[%s225 + $0x608] sm:$0xff] %v612
                %v614 = vld [vmem:[%s224 + $0x1230] sm:$0xff]
                %615 = vst [vmem:[%s225 + $0x610] sm:$0xff] %v614
                %v616 = vld [vmem:[%s224 + $0x1238] sm:$0xff]
                %617 = vst [vmem:[%s225 + $0x618] sm:$0xff] %v616
                %v618 = vld [vmem:[%s224 + $0x1260] sm:$0xff]
                %619 = vst [vmem:[%s225 + $0x620] sm:$0xff] %v618
                %v620 = vld [vmem:[%s224 + $0x1268] sm:$0xff]
                %621 = vst [vmem:[%s225 + $0x628] sm:$0xff] %v620
                %v622 = vld [vmem:[%s224 + $0x1290] sm:$0xff]
                %623 = vst [vmem:[%s225 + $0x630] sm:$0xff] %v622
                %v624 = vld [vmem:[%s224 + $0x1298] sm:$0xff]
                %625 = vst [vmem:[%s225 + $0x638] sm:$0xff] %v624
                %v626 = vld [vmem:[%s224 + $0x12c0] sm:$0xff]
                %627 = vst [vmem:[%s225 + $0x640] sm:$0xff] %v626
                %v628 = vld [vmem:[%s224 + $0x12c8] sm:$0xff]
                %629 = vst [vmem:[%s225 + $0x648] sm:$0xff] %v628
                %v630 = vld [vmem:[%s224 + $0x12f0] sm:$0xff]
                %631 = vst [vmem:[%s225 + $0x650] sm:$0xff] %v630
                %v632 = vld [vmem:[%s224 + $0x12f8] sm:$0xff]
                %633 = vst [vmem:[%s225 + $0x658] sm:$0xff] %v632
                %v634 = vld [vmem:[%s224 + $0x1320] sm:$0xff]
                %635 = vst [vmem:[%s225 + $0x660] sm:$0xff] %v634
                %v636 = vld [vmem:[%s224 + $0x1328] sm:$0xff]
                %637 = vst [vmem:[%s225 + $0x668] sm:$0xff] %v636
                %v638 = vld [vmem:[%s224 + $0x1350] sm:$0xff]
                %639 = vst [vmem:[%s225 + $0x670] sm:$0xff] %v638
                %v640 = vld [vmem:[%s224 + $0x1358] sm:$0xff]
                %641 = vst [vmem:[%s225 + $0x678] sm:$0xff] %v640
                %v642 = vld [vmem:[%s224 + $0x1380] sm:$0xff]
                %643 = vst [vmem:[%s225 + $0x680] sm:$0xff] %v642
                %v644 = vld [vmem:[%s224 + $0x1388] sm:$0xff]
                %645 = vst [vmem:[%s225 + $0x688] sm:$0xff] %v644
                %v646 = vld [vmem:[%s224 + $0x13b0] sm:$0xff]
                %647 = vst [vmem:[%s225 + $0x690] sm:$0xff] %v646
                %v648 = vld [vmem:[%s224 + $0x13b8] sm:$0xff]
                %649 = vst [vmem:[%s225 + $0x698] sm:$0xff] %v648
                %v650 = vld [vmem:[%s224 + $0x13e0] sm:$0xff]
                %651 = vst [vmem:[%s225 + $0x6a0] sm:$0xff] %v650
                %v652 = vld [vmem:[%s224 + $0x13e8] sm:$0xff]
                %653 = vst [vmem:[%s225 + $0x6a8] sm:$0xff] %v652
                %v654 = vld [vmem:[%s224 + $0x1410] sm:$0xff]
                %655 = vst [vmem:[%s225 + $0x6b0] sm:$0xff] %v654
                %v656 = vld [vmem:[%s224 + $0x1418] sm:$0xff]
                %657 = vst [vmem:[%s225 + $0x6b8] sm:$0xff] %v656
                %v658 = vld [vmem:[%s224 + $0x1440] sm:$0xff]
                %659 = vst [vmem:[%s225 + $0x6c0] sm:$0xff] %v658
                %v660 = vld [vmem:[%s224 + $0x1448] sm:$0xff]
                %661 = vst [vmem:[%s225 + $0x6c8] sm:$0xff] %v660
                %v662 = vld [vmem:[%s224 + $0x1470] sm:$0xff]
                %663 = vst [vmem:[%s225 + $0x6d0] sm:$0xff] %v662
                %v664 = vld [vmem:[%s224 + $0x1478] sm:$0xff]
                %665 = vst [vmem:[%s225 + $0x6d8] sm:$0xff] %v664
                %v666 = vld [vmem:[%s224 + $0x14a0] sm:$0xff]
                %667 = vst [vmem:[%s225 + $0x6e0] sm:$0xff] %v666
                %v668 = vld [vmem:[%s224 + $0x14a8] sm:$0xff]
                %669 = vst [vmem:[%s225 + $0x6e8] sm:$0xff] %v668
                %v670 = vld [vmem:[%s224 + $0x14d0] sm:$0xff]
                %671 = vst [vmem:[%s225 + $0x6f0] sm:$0xff] %v670
                %v672 = vld [vmem:[%s224 + $0x14d8] sm:$0xff]
                %673 = vst [vmem:[%s225 + $0x6f8] sm:$0xff] %v672
                %v674 = vld [vmem:[%s224 + $0x1500] sm:$0xff]
                %675 = vst [vmem:[%s225 + $0x700] sm:$0xff] %v674
                %v676 = vld [vmem:[%s224 + $0x1508] sm:$0xff]
                %677 = vst [vmem:[%s225 + $0x708] sm:$0xff] %v676
                %v678 = vld [vmem:[%s224 + $0x1530] sm:$0xff]
                %679 = vst [vmem:[%s225 + $0x710] sm:$0xff] %v678
                %v680 = vld [vmem:[%s224 + $0x1538] sm:$0xff]
                %681 = vst [vmem:[%s225 + $0x718] sm:$0xff] %v680
                %v682 = vld [vmem:[%s224 + $0x1560] sm:$0xff]
                %683 = vst [vmem:[%s225 + $0x720] sm:$0xff] %v682
                %v684 = vld [vmem:[%s224 + $0x1568] sm:$0xff]
                %685 = vst [vmem:[%s225 + $0x728] sm:$0xff] %v684
                %v686 = vld [vmem:[%s224 + $0x1590] sm:$0xff]
                %687 = vst [vmem:[%s225 + $0x730] sm:$0xff] %v686
                %v688 = vld [vmem:[%s224 + $0x1598] sm:$0xff]
                %689 = vst [vmem:[%s225 + $0x738] sm:$0xff] %v688
                %v690 = vld [vmem:[%s224 + $0x15c0] sm:$0xff]
                %691 = vst [vmem:[%s225 + $0x740] sm:$0xff] %v690
                %v692 = vld [vmem:[%s224 + $0x15c8] sm:$0xff]
                %693 = vst [vmem:[%s225 + $0x748] sm:$0xff] %v692
                %v694 = vld [vmem:[%s224 + $0x15f0] sm:$0xff]
                %695 = vst [vmem:[%s225 + $0x750] sm:$0xff] %v694
                %v696 = vld [vmem:[%s224 + $0x15f8] sm:$0xff]
                %697 = vst [vmem:[%s225 + $0x758] sm:$0xff] %v696
                %v698 = vld [vmem:[%s224 + $0x1620] sm:$0xff]
                %699 = vst [vmem:[%s225 + $0x760] sm:$0xff] %v698
                %v700 = vld [vmem:[%s224 + $0x1628] sm:$0xff]
                %701 = vst [vmem:[%s225 + $0x768] sm:$0xff] %v700
                %v702 = vld [vmem:[%s224 + $0x1650] sm:$0xff]
                %703 = vst [vmem:[%s225 + $0x770] sm:$0xff] %v702
                %v704 = vld [vmem:[%s224 + $0x1658] sm:$0xff]
                %705 = vst [vmem:[%s225 + $0x778] sm:$0xff] %v704
                %v706 = vld [vmem:[%s224 + $0x1680] sm:$0xff]
                %707 = vst [vmem:[%s225 + $0x780] sm:$0xff] %v706
                %v708 = vld [vmem:[%s224 + $0x1688] sm:$0xff]
                %709 = vst [vmem:[%s225 + $0x788] sm:$0xff] %v708
                %v710 = vld [vmem:[%s224 + $0x16b0] sm:$0xff]
                %711 = vst [vmem:[%s225 + $0x790] sm:$0xff] %v710
                %v712 = vld [vmem:[%s224 + $0x16b8] sm:$0xff]
                %713 = vst [vmem:[%s225 + $0x798] sm:$0xff] %v712
                %v714 = vld [vmem:[%s224 + $0x16e0] sm:$0xff]
                %715 = vst [vmem:[%s225 + $0x7a0] sm:$0xff] %v714
                %v716 = vld [vmem:[%s224 + $0x16e8] sm:$0xff]
                %717 = vst [vmem:[%s225 + $0x7a8] sm:$0xff] %v716
                %v718 = vld [vmem:[%s224 + $0x1710] sm:$0xff]
                %719 = vst [vmem:[%s225 + $0x7b0] sm:$0xff] %v718
                %v720 = vld [vmem:[%s224 + $0x1718] sm:$0xff]
                %721 = vst [vmem:[%s225 + $0x7b8] sm:$0xff] %v720
                %v722 = vld [vmem:[%s224 + $0x1740] sm:$0xff]
                %723 = vst [vmem:[%s225 + $0x7c0] sm:$0xff] %v722
                %v724 = vld [vmem:[%s224 + $0x1748] sm:$0xff]
                %725 = vst [vmem:[%s225 + $0x7c8] sm:$0xff] %v724
                %v726 = vld [vmem:[%s224 + $0x1770] sm:$0xff]
                %727 = vst [vmem:[%s225 + $0x7d0] sm:$0xff] %v726
                %v728 = vld [vmem:[%s224 + $0x1778] sm:$0xff]
                %729 = vst [vmem:[%s225 + $0x7d8] sm:$0xff] %v728
                %v730 = vld [vmem:[%s224 + $0x17a0] sm:$0xff]
                %731 = vst [vmem:[%s225 + $0x7e0] sm:$0xff] %v730
                %v732 = vld [vmem:[%s224 + $0x17a8] sm:$0xff]
                %733 = vst [vmem:[%s225 + $0x7e8] sm:$0xff] %v732
                %v734 = vld [vmem:[%s224 + $0x17d0] sm:$0xff]
                %735 = vst [vmem:[%s225 + $0x7f0] sm:$0xff] %v734
                %v736 = vld [vmem:[%s224 + $0x17d8] sm:$0xff]
                %737 = vst [vmem:[%s225 + $0x7f8] sm:$0xff] %v736
              $region56: #{lipnet_forward.13} parent=50 // loop_footer
                %s223 = sadd.s32 1, %s219
              $region57: #{lipnet_forward.13} parent=50 // loop_footer_branch
                %218 = sbr.rel target = $region53
              $region58: #{lipnet_forward.13} parent=50 // loop_exit
                _
            $region51: #{lipnet_forward.13} parent=46 // pred_fallthru
              _
            // Predicated region
            $region59: #{lipnet_forward.13} parent=46 // pred_check
              _
            $region60: #{lipnet_forward.13} parent=46 // pred_check_branch
              %739 = sbr.rel target = $region62
            $region61: #{lipnet_forward.13} parent=46 // pred_region
              _
            $region62: #{lipnet_forward.13} parent=46 // pred_fallthru
              _
          $region47: #{lipnet_forward.13} parent=42 // pred_fallthru
            _
          %740 = vnop
        $region43: #{lipnet_forward.13} parent=15 // pred_fallthru
          _
        // Predicated region
        $region63: #{lipnet_forward.13} parent=15 // pred_check
          %p741 = pneg %p104
        $region64: #{lipnet_forward.13} parent=15 // pred_check_branch
          %743 = sbr.rel (%p741) target = $region66
        $region65: #{lipnet_forward.13} parent=15 // pred_region
          %s744 = smul.u32 4, %s17
          %p745 = scmp.lt.s32.totalorder %s744, 11
          %s746 = scalar_select %p745, %s744, 11
          %s747 = scalar_lea.vmem %s2, %s746
          %s748 = smul.u32 4, %s17
        $region66: #{lipnet_forward.13} parent=15 // pred_fallthru
          _
      $region16: #{lipnet_forward.13} parent=5 // pred_fallthru
        _
      %p749 = scmp.le.s32.totalorder 1, %s9
      %p750 = scmp.lt.s32.totalorder %s9, 10
      %p751 = pnand %p749, %p750
      %p752 = pneg %p751
      // Predicated region
      $region67: #{lipnet_forward.13} parent=5 // pred_check
        _
      $region68: #{lipnet_forward.13} parent=5 // pred_check_branch
        %754 = sbr.rel (%p751) target = $region70
      $region69: #{lipnet_forward.13} parent=5 // pred_region
        %s755 = ssub.s32 %s9, 1
        %s756 = sand.u32 %s43, 1
        %s757 = sand.u32 %s43, 1
        %s758 = smul.addr %s757, 64
        %s759 = scalar_lea.vmem [#allocation2], %s758
        // Predicated region
        $region71: #{lipnet_forward.13} parent=69 // pred_check
          %p760 = pneg %p56
        $region72: #{lipnet_forward.13} parent=69 // pred_check_branch
          %762 = sbr.rel (%p760) target = $region74
        $region73: #{lipnet_forward.13} parent=69 // pred_region
          _
        $region74: #{lipnet_forward.13} parent=69 // pred_fallthru
          _
        %s763 = sand.u32 %s71, 1
        %s764 = sand.u32 %s71, 1
        %s765 = smul.addr %s764, 2048
        %s766 = scalar_lea.vmem [#allocation3], %s765
        // Predicated region
        $region75: #{lipnet_forward.13} parent=69 // pred_check
          %p767 = pneg %p84
        $region76: #{lipnet_forward.13} parent=69 // pred_check_branch
          %769 = sbr.rel (%p767) target = $region78
        $region77: #{lipnet_forward.13} parent=69 // pred_region
          _
        $region78: #{lipnet_forward.13} parent=69 // pred_fallthru
          _
        %s770 = sand.u32 %s43, 1
        %s771 = sand.u32 %s43, 1
        %s772 = smul.addr %s771, 64
        %s773 = scalar_lea.vmem [#allocation2], %s772
        %p774 = pneg %p56
        %p775 = pneg %p53
        %s776 = sand.u32 %s71, 1
        %s777 = sand.u32 %s71, 1
        %s778 = smul.addr %s777, 2048
        %s779 = scalar_lea.vmem [#allocation3], %s778
        %p780 = pneg %p84
        %p781 = pneg %p81
        %s782 = smul.u32 4, %s20
        %p783 = scmp.lt.s32.totalorder %s782, 11
        %s784 = scalar_select %p783, %s782, 11
        %s785 = scalar_lea.vmem %s2, %s784
        %p786 = pneg %p110
        %p787 = pneg %p107
        %p788 = pneg %p138
        %p789 = pneg %p135
        %s790 = sand.u32 %s125, 1
        %s791 = sand.u32 %s125, 1
        %s792 = smul.addr %s791, 64
        %s793 = scalar_lea.vmem [#allocation4], %s792
        %s794 = smul.u32 2, %s19
        %s795 = smul.u32 8, %s21
        %s796 = smul.u32 128, %s21
        %s797 = smul.u32 4, %s20
        %s798 = smul.u32 4, %s20
        %p799 = scmp.lt.s32.totalorder %s798, 11
        %s800 = scalar_select %p799, %s798, 11
        %s801 = scalar_lea.vmem %s2, %s800
        %s802 = smul.u32 4, %s20
        %s803 = smul.u32 2, %s19
        %s804 = smul.u32 4, %s20
        %p805 = scmp.eq.s32.totalorder %s21, 0
        // Predicated region
        $region79: #{lipnet_forward.13} parent=69 // pred_check
          %p806 = pneg %p805
        $region80: #{lipnet_forward.13} parent=69 // pred_check_branch
          %808 = sbr.rel (%p806) target = $region82
        $region81: #{lipnet_forward.13} parent=69 // pred_region
          %809 = vst [vmem:[%s793] sm:$0xff] 0.0
          %810 = vst [vmem:[%s793 + $0x8] sm:$0xff] 0.0
          %811 = vst [vmem:[%s793 + $0x10] sm:$0xff] 0.0
          %812 = vst [vmem:[%s793 + $0x18] sm:$0xff] 0.0
          %813 = vst [vmem:[%s793 + $0x20] sm:$0xff] 0.0
          %814 = vst [vmem:[%s793 + $0x28] sm:$0xff] 0.0
          %815 = vst [vmem:[%s793 + $0x30] sm:$0xff] 0.0
          %816 = vst [vmem:[%s793 + $0x38] sm:$0xff] 0.0
        $region82: #{lipnet_forward.13} parent=69 // pred_fallthru
          _
        %v817 = vld [vmem:[%s793] sm:$0xff]
        %v818 = vld [vmem:[%s793 + $0x8] sm:$0xff]
        %v819 = vld [vmem:[%s793 + $0x10] sm:$0xff]
        %v820 = vld [vmem:[%s793 + $0x18] sm:$0xff]
        %v821 = vld [vmem:[%s793 + $0x20] sm:$0xff]
        %v822 = vld [vmem:[%s793 + $0x28] sm:$0xff]
        %v823 = vld [vmem:[%s793 + $0x30] sm:$0xff]
        %v824 = vld [vmem:[%s793 + $0x38] sm:$0xff]
        %v825 = vld [vmem:[%s759] sm:$0xff]
        %v826 = vld [vmem:[%s759 + $0x8] sm:$0xff]
        %v827 = vld [vmem:[%s759 + $0x10] sm:$0xff]
        %v828 = vld [vmem:[%s759 + $0x18] sm:$0xff]
        %v829 = vld [vmem:[%s759 + $0x20] sm:$0xff]
        %v830 = vld [vmem:[%s759 + $0x28] sm:$0xff]
        %v831 = vld [vmem:[%s759 + $0x30] sm:$0xff]
        %v832 = vld [vmem:[%s759 + $0x38] sm:$0xff]
        %v833 = vld [vmem:[%s766] sm:$0xff]
        %v834 = vld [vmem:[%s766 + $0x8] sm:$0xff]
        %v835 = vld [vmem:[%s766 + $0x10] sm:$0xff]
        %v836 = vld [vmem:[%s766 + $0x18] sm:$0xff]
        %v837 = vld [vmem:[%s766 + $0x20] sm:$0xff]
        %v838 = vld [vmem:[%s766 + $0x28] sm:$0xff]
        %v839 = vld [vmem:[%s766 + $0x30] sm:$0xff]
        %v840 = vld [vmem:[%s766 + $0x38] sm:$0xff]
        %v841 = vld [vmem:[%s766 + $0x40] sm:$0xff]
        %v842 = vld [vmem:[%s766 + $0x48] sm:$0xff]
        %v843 = vld [vmem:[%s766 + $0x50] sm:$0xff]
        %v844 = vld [vmem:[%s766 + $0x58] sm:$0xff]
        %v845 = vld [vmem:[%s766 + $0x60] sm:$0xff]
        %v846 = vld [vmem:[%s766 + $0x68] sm:$0xff]
        %v847 = vld [vmem:[%s766 + $0x70] sm:$0xff]
        %v848 = vld [vmem:[%s766 + $0x78] sm:$0xff]
        %v849 = vld [vmem:[%s766 + $0x80] sm:$0xff]
        %v850 = vld [vmem:[%s766 + $0x88] sm:$0xff]
        %v851 = vld [vmem:[%s766 + $0x90] sm:$0xff]
        %v852 = vld [vmem:[%s766 + $0x98] sm:$0xff]
        %v853 = vld [vmem:[%s766 + $0xa0] sm:$0xff]
        %v854 = vld [vmem:[%s766 + $0xa8] sm:$0xff]
        %v855 = vld [vmem:[%s766 + $0xb0] sm:$0xff]
        %v856 = vld [vmem:[%s766 + $0xb8] sm:$0xff]
        %v857 = vld [vmem:[%s766 + $0xc0] sm:$0xff]
        %v858 = vld [vmem:[%s766 + $0xc8] sm:$0xff]
        %v859 = vld [vmem:[%s766 + $0xd0] sm:$0xff]
        %v860 = vld [vmem:[%s766 + $0xd8] sm:$0xff]
        %v861 = vld [vmem:[%s766 + $0xe0] sm:$0xff]
        %v862 = vld [vmem:[%s766 + $0xe8] sm:$0xff]
        %v863 = vld [vmem:[%s766 + $0xf0] sm:$0xff]
        %v864 = vld [vmem:[%s766 + $0xf8] sm:$0xff]
        %v865 = vld [vmem:[%s766 + $0x100] sm:$0xff]
        %v866 = vld [vmem:[%s766 + $0x108] sm:$0xff]
        %v867 = vld [vmem:[%s766 + $0x110] sm:$0xff]
        %v868 = vld [vmem:[%s766 + $0x118] sm:$0xff]
        %v869 = vld [vmem:[%s766 + $0x120] sm:$0xff]
        %v870 = vld [vmem:[%s766 + $0x128] sm:$0xff]
        %v871 = vld [vmem:[%s766 + $0x130] sm:$0xff]
        %v872 = vld [vmem:[%s766 + $0x138] sm:$0xff]
        %v873 = vld [vmem:[%s766 + $0x140] sm:$0xff]
        %v874 = vld [vmem:[%s766 + $0x148] sm:$0xff]
        %v875 = vld [vmem:[%s766 + $0x150] sm:$0xff]
        %v876 = vld [vmem:[%s766 + $0x158] sm:$0xff]
        %v877 = vld [vmem:[%s766 + $0x160] sm:$0xff]
        %v878 = vld [vmem:[%s766 + $0x168] sm:$0xff]
        %v879 = vld [vmem:[%s766 + $0x170] sm:$0xff]
        %v880 = vld [vmem:[%s766 + $0x178] sm:$0xff]
        %v881 = vld [vmem:[%s766 + $0x180] sm:$0xff]
        %v882 = vld [vmem:[%s766 + $0x188] sm:$0xff]
        %v883 = vld [vmem:[%s766 + $0x190] sm:$0xff]
        %v884 = vld [vmem:[%s766 + $0x198] sm:$0xff]
        %v885 = vld [vmem:[%s766 + $0x1a0] sm:$0xff]
        %v886 = vld [vmem:[%s766 + $0x1a8] sm:$0xff]
        %v887 = vld [vmem:[%s766 + $0x1b0] sm:$0xff]
        %v888 = vld [vmem:[%s766 + $0x1b8] sm:$0xff]
        %v889 = vld [vmem:[%s766 + $0x1c0] sm:$0xff]
        %v890 = vld [vmem:[%s766 + $0x1c8] sm:$0xff]
        %v891 = vld [vmem:[%s766 + $0x1d0] sm:$0xff]
        %v892 = vld [vmem:[%s766 + $0x1d8] sm:$0xff]
        %v893 = vld [vmem:[%s766 + $0x1e0] sm:$0xff]
        %v894 = vld [vmem:[%s766 + $0x1e8] sm:$0xff]
        %v895 = vld [vmem:[%s766 + $0x1f0] sm:$0xff]
        %v896 = vld [vmem:[%s766 + $0x1f8] sm:$0xff]
        %v897 = vld [vmem:[%s766 + $0x200] sm:$0xff]
        %v898 = vld [vmem:[%s766 + $0x208] sm:$0xff]
        %v899 = vld [vmem:[%s766 + $0x210] sm:$0xff]
        %v900 = vld [vmem:[%s766 + $0x218] sm:$0xff]
        %v901 = vld [vmem:[%s766 + $0x220] sm:$0xff]
        %v902 = vld [vmem:[%s766 + $0x228] sm:$0xff]
        %v903 = vld [vmem:[%s766 + $0x230] sm:$0xff]
        %v904 = vld [vmem:[%s766 + $0x238] sm:$0xff]
        %v905 = vld [vmem:[%s766 + $0x240] sm:$0xff]
        %v906 = vld [vmem:[%s766 + $0x248] sm:$0xff]
        %v907 = vld [vmem:[%s766 + $0x250] sm:$0xff]
        %v908 = vld [vmem:[%s766 + $0x258] sm:$0xff]
        %v909 = vld [vmem:[%s766 + $0x260] sm:$0xff]
        %v910 = vld [vmem:[%s766 + $0x268] sm:$0xff]
        %v911 = vld [vmem:[%s766 + $0x270] sm:$0xff]
        %v912 = vld [vmem:[%s766 + $0x278] sm:$0xff]
        %v913 = vld [vmem:[%s766 + $0x280] sm:$0xff]
        %v914 = vld [vmem:[%s766 + $0x288] sm:$0xff]
        %v915 = vld [vmem:[%s766 + $0x290] sm:$0xff]
        %v916 = vld [vmem:[%s766 + $0x298] sm:$0xff]
        %v917 = vld [vmem:[%s766 + $0x2a0] sm:$0xff]
        %v918 = vld [vmem:[%s766 + $0x2a8] sm:$0xff]
        %v919 = vld [vmem:[%s766 + $0x2b0] sm:$0xff]
        %v920 = vld [vmem:[%s766 + $0x2b8] sm:$0xff]
        %v921 = vld [vmem:[%s766 + $0x2c0] sm:$0xff]
        %v922 = vld [vmem:[%s766 + $0x2c8] sm:$0xff]
        %v923 = vld [vmem:[%s766 + $0x2d0] sm:$0xff]
        %v924 = vld [vmem:[%s766 + $0x2d8] sm:$0xff]
        %v925 = vld [vmem:[%s766 + $0x2e0] sm:$0xff]
        %v926 = vld [vmem:[%s766 + $0x2e8] sm:$0xff]
        %v927 = vld [vmem:[%s766 + $0x2f0] sm:$0xff]
        %v928 = vld [vmem:[%s766 + $0x2f8] sm:$0xff]
        %v929 = vld [vmem:[%s766 + $0x300] sm:$0xff]
        %v930 = vld [vmem:[%s766 + $0x308] sm:$0xff]
        %v931 = vld [vmem:[%s766 + $0x310] sm:$0xff]
        %v932 = vld [vmem:[%s766 + $0x318] sm:$0xff]
        %v933 = vld [vmem:[%s766 + $0x320] sm:$0xff]
        %v934 = vld [vmem:[%s766 + $0x328] sm:$0xff]
        %v935 = vld [vmem:[%s766 + $0x330] sm:$0xff]
        %v936 = vld [vmem:[%s766 + $0x338] sm:$0xff]
        %v937 = vld [vmem:[%s766 + $0x340] sm:$0xff]
        %v938 = vld [vmem:[%s766 + $0x348] sm:$0xff]
        %v939 = vld [vmem:[%s766 + $0x350] sm:$0xff]
        %v940 = vld [vmem:[%s766 + $0x358] sm:$0xff]
        %v941 = vld [vmem:[%s766 + $0x360] sm:$0xff]
        %v942 = vld [vmem:[%s766 + $0x368] sm:$0xff]
        %v943 = vld [vmem:[%s766 + $0x370] sm:$0xff]
        %v944 = vld [vmem:[%s766 + $0x378] sm:$0xff]
        %v945 = vld [vmem:[%s766 + $0x380] sm:$0xff]
        %v946 = vld [vmem:[%s766 + $0x388] sm:$0xff]
        %v947 = vld [vmem:[%s766 + $0x390] sm:$0xff]
        %v948 = vld [vmem:[%s766 + $0x398] sm:$0xff]
        %v949 = vld [vmem:[%s766 + $0x3a0] sm:$0xff]
        %v950 = vld [vmem:[%s766 + $0x3a8] sm:$0xff]
        %v951 = vld [vmem:[%s766 + $0x3b0] sm:$0xff]
        %v952 = vld [vmem:[%s766 + $0x3b8] sm:$0xff]
        %v953 = vld [vmem:[%s766 + $0x3c0] sm:$0xff]
        %v954 = vld [vmem:[%s766 + $0x3c8] sm:$0xff]
        %v955 = vld [vmem:[%s766 + $0x3d0] sm:$0xff]
        %v956 = vld [vmem:[%s766 + $0x3d8] sm:$0xff]
        %v957 = vld [vmem:[%s766 + $0x3e0] sm:$0xff]
        %v958 = vld [vmem:[%s766 + $0x3e8] sm:$0xff]
        %v959 = vld [vmem:[%s766 + $0x3f0] sm:$0xff]
        %v960 = vld [vmem:[%s766 + $0x3f8] sm:$0xff]
        %v961 = vld [vmem:[%s766 + $0x400] sm:$0xff]
        %v962 = vld [vmem:[%s766 + $0x408] sm:$0xff]
        %v963 = vld [vmem:[%s766 + $0x410] sm:$0xff]
        %v964 = vld [vmem:[%s766 + $0x418] sm:$0xff]
        %v965 = vld [vmem:[%s766 + $0x420] sm:$0xff]
        %v966 = vld [vmem:[%s766 + $0x428] sm:$0xff]
        %v967 = vld [vmem:[%s766 + $0x430] sm:$0xff]
        %v968 = vld [vmem:[%s766 + $0x438] sm:$0xff]
        %v969 = vld [vmem:[%s766 + $0x440] sm:$0xff]
        %v970 = vld [vmem:[%s766 + $0x448] sm:$0xff]
        %v971 = vld [vmem:[%s766 + $0x450] sm:$0xff]
        %v972 = vld [vmem:[%s766 + $0x458] sm:$0xff]
        %v973 = vld [vmem:[%s766 + $0x460] sm:$0xff]
        %v974 = vld [vmem:[%s766 + $0x468] sm:$0xff]
        %v975 = vld [vmem:[%s766 + $0x470] sm:$0xff]
        %v976 = vld [vmem:[%s766 + $0x478] sm:$0xff]
        %v977 = vld [vmem:[%s766 + $0x480] sm:$0xff]
        %v978 = vld [vmem:[%s766 + $0x488] sm:$0xff]
        %v979 = vld [vmem:[%s766 + $0x490] sm:$0xff]
        %v980 = vld [vmem:[%s766 + $0x498] sm:$0xff]
        %v981 = vld [vmem:[%s766 + $0x4a0] sm:$0xff]
        %v982 = vld [vmem:[%s766 + $0x4a8] sm:$0xff]
        %v983 = vld [vmem:[%s766 + $0x4b0] sm:$0xff]
        %v984 = vld [vmem:[%s766 + $0x4b8] sm:$0xff]
        %v985 = vld [vmem:[%s766 + $0x4c0] sm:$0xff]
        %v986 = vld [vmem:[%s766 + $0x4c8] sm:$0xff]
        %v987 = vld [vmem:[%s766 + $0x4d0] sm:$0xff]
        %v988 = vld [vmem:[%s766 + $0x4d8] sm:$0xff]
        %v989 = vld [vmem:[%s766 + $0x4e0] sm:$0xff]
        %v990 = vld [vmem:[%s766 + $0x4e8] sm:$0xff]
        %v991 = vld [vmem:[%s766 + $0x4f0] sm:$0xff]
        %v992 = vld [vmem:[%s766 + $0x4f8] sm:$0xff]
        %v993 = vld [vmem:[%s766 + $0x500] sm:$0xff]
        %v994 = vld [vmem:[%s766 + $0x508] sm:$0xff]
        %v995 = vld [vmem:[%s766 + $0x510] sm:$0xff]
        %v996 = vld [vmem:[%s766 + $0x518] sm:$0xff]
        %v997 = vld [vmem:[%s766 + $0x520] sm:$0xff]
        %v998 = vld [vmem:[%s766 + $0x528] sm:$0xff]
        %v999 = vld [vmem:[%s766 + $0x530] sm:$0xff]
        %v1000 = vld [vmem:[%s766 + $0x538] sm:$0xff]
        %v1001 = vld [vmem:[%s766 + $0x540] sm:$0xff]
        %v1002 = vld [vmem:[%s766 + $0x548] sm:$0xff]
        %v1003 = vld [vmem:[%s766 + $0x550] sm:$0xff]
        %v1004 = vld [vmem:[%s766 + $0x558] sm:$0xff]
        %v1005 = vld [vmem:[%s766 + $0x560] sm:$0xff]
        %v1006 = vld [vmem:[%s766 + $0x568] sm:$0xff]
        %v1007 = vld [vmem:[%s766 + $0x570] sm:$0xff]
        %v1008 = vld [vmem:[%s766 + $0x578] sm:$0xff]
        %v1009 = vld [vmem:[%s766 + $0x580] sm:$0xff]
        %v1010 = vld [vmem:[%s766 + $0x588] sm:$0xff]
        %v1011 = vld [vmem:[%s766 + $0x590] sm:$0xff]
        %v1012 = vld [vmem:[%s766 + $0x598] sm:$0xff]
        %v1013 = vld [vmem:[%s766 + $0x5a0] sm:$0xff]
        %v1014 = vld [vmem:[%s766 + $0x5a8] sm:$0xff]
        %v1015 = vld [vmem:[%s766 + $0x5b0] sm:$0xff]
        %v1016 = vld [vmem:[%s766 + $0x5b8] sm:$0xff]
        %v1017 = vld [vmem:[%s766 + $0x5c0] sm:$0xff]
        %v1018 = vld [vmem:[%s766 + $0x5c8] sm:$0xff]
        %v1019 = vld [vmem:[%s766 + $0x5d0] sm:$0xff]
        %v1020 = vld [vmem:[%s766 + $0x5d8] sm:$0xff]
        %v1021 = vld [vmem:[%s766 + $0x5e0] sm:$0xff]
        %v1022 = vld [vmem:[%s766 + $0x5e8] sm:$0xff]
        %v1023 = vld [vmem:[%s766 + $0x5f0] sm:$0xff]
        %v1024 = vld [vmem:[%s766 + $0x5f8] sm:$0xff]
        %v1025 = vld [vmem:[%s766 + $0x600] sm:$0xff]
        %v1026 = vld [vmem:[%s766 + $0x608] sm:$0xff]
        %v1027 = vld [vmem:[%s766 + $0x610] sm:$0xff]
        %v1028 = vld [vmem:[%s766 + $0x618] sm:$0xff]
        %v1029 = vld [vmem:[%s766 + $0x620] sm:$0xff]
        %v1030 = vld [vmem:[%s766 + $0x628] sm:$0xff]
        %v1031 = vld [vmem:[%s766 + $0x630] sm:$0xff]
        %v1032 = vld [vmem:[%s766 + $0x638] sm:$0xff]
        %v1033 = vld [vmem:[%s766 + $0x640] sm:$0xff]
        %v1034 = vld [vmem:[%s766 + $0x648] sm:$0xff]
        %v1035 = vld [vmem:[%s766 + $0x650] sm:$0xff]
        %v1036 = vld [vmem:[%s766 + $0x658] sm:$0xff]
        %v1037 = vld [vmem:[%s766 + $0x660] sm:$0xff]
        %v1038 = vld [vmem:[%s766 + $0x668] sm:$0xff]
        %v1039 = vld [vmem:[%s766 + $0x670] sm:$0xff]
        %v1040 = vld [vmem:[%s766 + $0x678] sm:$0xff]
        %v1041 = vld [vmem:[%s766 + $0x680] sm:$0xff]
        %v1042 = vld [vmem:[%s766 + $0x688] sm:$0xff]
        %v1043 = vld [vmem:[%s766 + $0x690] sm:$0xff]
        %v1044 = vld [vmem:[%s766 + $0x698] sm:$0xff]
        %v1045 = vld [vmem:[%s766 + $0x6a0] sm:$0xff]
        %v1046 = vld [vmem:[%s766 + $0x6a8] sm:$0xff]
        %v1047 = vld [vmem:[%s766 + $0x6b0] sm:$0xff]
        %v1048 = vld [vmem:[%s766 + $0x6b8] sm:$0xff]
        %v1049 = vld [vmem:[%s766 + $0x6c0] sm:$0xff]
        %v1050 = vld [vmem:[%s766 + $0x6c8] sm:$0xff]
        %v1051 = vld [vmem:[%s766 + $0x6d0] sm:$0xff]
        %v1052 = vld [vmem:[%s766 + $0x6d8] sm:$0xff]
        %v1053 = vld [vmem:[%s766 + $0x6e0] sm:$0xff]
        %v1054 = vld [vmem:[%s766 + $0x6e8] sm:$0xff]
        %v1055 = vld [vmem:[%s766 + $0x6f0] sm:$0xff]
        %v1056 = vld [vmem:[%s766 + $0x6f8] sm:$0xff]
        %v1057 = vld [vmem:[%s766 + $0x700] sm:$0xff]
        %v1058 = vld [vmem:[%s766 + $0x708] sm:$0xff]
        %v1059 = vld [vmem:[%s766 + $0x710] sm:$0xff]
        %v1060 = vld [vmem:[%s766 + $0x718] sm:$0xff]
        %v1061 = vld [vmem:[%s766 + $0x720] sm:$0xff]
        %v1062 = vld [vmem:[%s766 + $0x728] sm:$0xff]
        %v1063 = vld [vmem:[%s766 + $0x730] sm:$0xff]
        %v1064 = vld [vmem:[%s766 + $0x738] sm:$0xff]
        %v1065 = vld [vmem:[%s766 + $0x740] sm:$0xff]
        %v1066 = vld [vmem:[%s766 + $0x748] sm:$0xff]
        %v1067 = vld [vmem:[%s766 + $0x750] sm:$0xff]
        %v1068 = vld [vmem:[%s766 + $0x758] sm:$0xff]
        %v1069 = vld [vmem:[%s766 + $0x760] sm:$0xff]
        %v1070 = vld [vmem:[%s766 + $0x768] sm:$0xff]
        %v1071 = vld [vmem:[%s766 + $0x770] sm:$0xff]
        %v1072 = vld [vmem:[%s766 + $0x778] sm:$0xff]
        %v1073 = vld [vmem:[%s766 + $0x780] sm:$0xff]
        %v1074 = vld [vmem:[%s766 + $0x788] sm:$0xff]
        %v1075 = vld [vmem:[%s766 + $0x790] sm:$0xff]
        %v1076 = vld [vmem:[%s766 + $0x798] sm:$0xff]
        %v1077 = vld [vmem:[%s766 + $0x7a0] sm:$0xff]
        %v1078 = vld [vmem:[%s766 + $0x7a8] sm:$0xff]
        %v1079 = vld [vmem:[%s766 + $0x7b0] sm:$0xff]
        %v1080 = vld [vmem:[%s766 + $0x7b8] sm:$0xff]
        %v1081 = vld [vmem:[%s766 + $0x7c0] sm:$0xff]
        %v1082 = vld [vmem:[%s766 + $0x7c8] sm:$0xff]
        %v1083 = vld [vmem:[%s766 + $0x7d0] sm:$0xff]
        %v1084 = vld [vmem:[%s766 + $0x7d8] sm:$0xff]
        %v1085 = vld [vmem:[%s766 + $0x7e0] sm:$0xff]
        %v1086 = vld [vmem:[%s766 + $0x7e8] sm:$0xff]
        %v1087 = vld [vmem:[%s766 + $0x7f0] sm:$0xff]
        %v1088 = vld [vmem:[%s766 + $0x7f8] sm:$0xff]
        %v1097 = vunpack.c.l.b16 %v825
        %v1098 = vunpack.c.h.b16 %v825
        %v1099 = vunpack.c.l.b16 %v826
        %v1100 = vunpack.c.h.b16 %v826
        %v1101 = vunpack.c.l.b16 %v827
        %v1102 = vunpack.c.h.b16 %v827
        %v1103 = vunpack.c.l.b16 %v828
        %v1104 = vunpack.c.h.b16 %v828
        %v1105 = vunpack.c.l.b16 %v829
        %v1106 = vunpack.c.h.b16 %v829
        %v1107 = vunpack.c.l.b16 %v830
        %v1108 = vunpack.c.h.b16 %v830
        %v1109 = vunpack.c.l.b16 %v831
        %v1110 = vunpack.c.h.b16 %v831
        %v1111 = vunpack.c.l.b16 %v832
        %v1112 = vunpack.c.h.b16 %v832
        %v1113 = vpack.c.b16 %v1105, %v1097
        %v1114 = vpack.c.b16 %v1106, %v1098
        %v1115 = vpack.c.b16 %v1107, %v1099
        %v1116 = vpack.c.b16 %v1108, %v1100
        %v1117 = vpack.c.b16 %v1109, %v1101
        %v1118 = vpack.c.b16 %v1110, %v1102
        %v1119 = vpack.c.b16 %v1111, %v1103
        %v1120 = vpack.c.b16 %v1112, %v1104
        %v1385 = vunpack.c.l.b16 %v833
        %v1386 = vunpack.c.h.b16 %v833
        %v1387 = vunpack.c.l.b16 %v834
        %v1388 = vunpack.c.h.b16 %v834
        %v1389 = vunpack.c.l.b16 %v835
        %v1390 = vunpack.c.h.b16 %v835
        %v1391 = vunpack.c.l.b16 %v836
        %v1392 = vunpack.c.h.b16 %v836
        %v1393 = vunpack.c.l.b16 %v837
        %v1394 = vunpack.c.h.b16 %v837
        %v1395 = vunpack.c.l.b16 %v838
        %v1396 = vunpack.c.h.b16 %v838
        %v1397 = vunpack.c.l.b16 %v839
        %v1398 = vunpack.c.h.b16 %v839
        %v1399 = vunpack.c.l.b16 %v840
        %v1400 = vunpack.c.h.b16 %v840
        %v1401 = vunpack.c.l.b16 %v841
        %v1402 = vunpack.c.h.b16 %v841
        %v1403 = vunpack.c.l.b16 %v842
        %v1404 = vunpack.c.h.b16 %v842
        %v1405 = vunpack.c.l.b16 %v843
        %v1406 = vunpack.c.h.b16 %v843
        %v1407 = vunpack.c.l.b16 %v844
        %v1408 = vunpack.c.h.b16 %v844
        %v1409 = vunpack.c.l.b16 %v845
        %v1410 = vunpack.c.h.b16 %v845
        %v1411 = vunpack.c.l.b16 %v846
        %v1412 = vunpack.c.h.b16 %v846
        %v1413 = vunpack.c.l.b16 %v847
        %v1414 = vunpack.c.h.b16 %v847
        %v1415 = vunpack.c.l.b16 %v848
        %v1416 = vunpack.c.h.b16 %v848
        %v1417 = vunpack.c.l.b16 %v849
        %v1418 = vunpack.c.h.b16 %v849
        %v1419 = vunpack.c.l.b16 %v850
        %v1420 = vunpack.c.h.b16 %v850
        %v1421 = vunpack.c.l.b16 %v851
        %v1422 = vunpack.c.h.b16 %v851
        %v1423 = vunpack.c.l.b16 %v852
        %v1424 = vunpack.c.h.b16 %v852
        %v1425 = vunpack.c.l.b16 %v853
        %v1426 = vunpack.c.h.b16 %v853
        %v1427 = vunpack.c.l.b16 %v854
        %v1428 = vunpack.c.h.b16 %v854
        %v1429 = vunpack.c.l.b16 %v855
        %v1430 = vunpack.c.h.b16 %v855
        %v1431 = vunpack.c.l.b16 %v856
        %v1432 = vunpack.c.h.b16 %v856
        %v1433 = vunpack.c.l.b16 %v857
        %v1434 = vunpack.c.h.b16 %v857
        %v1435 = vunpack.c.l.b16 %v858
        %v1436 = vunpack.c.h.b16 %v858
        %v1437 = vunpack.c.l.b16 %v859
        %v1438 = vunpack.c.h.b16 %v859
        %v1439 = vunpack.c.l.b16 %v860
        %v1440 = vunpack.c.h.b16 %v860
        %v1441 = vunpack.c.l.b16 %v861
        %v1442 = vunpack.c.h.b16 %v861
        %v1443 = vunpack.c.l.b16 %v862
        %v1444 = vunpack.c.h.b16 %v862
        %v1445 = vunpack.c.l.b16 %v863
        %v1446 = vunpack.c.h.b16 %v863
        %v1447 = vunpack.c.l.b16 %v864
        %v1448 = vunpack.c.h.b16 %v864
        %v1449 = vunpack.c.l.b16 %v865
        %v1450 = vunpack.c.h.b16 %v865
        %v1451 = vunpack.c.l.b16 %v866
        %v1452 = vunpack.c.h.b16 %v866
        %v1453 = vunpack.c.l.b16 %v867
        %v1454 = vunpack.c.h.b16 %v867
        %v1455 = vunpack.c.l.b16 %v868
        %v1456 = vunpack.c.h.b16 %v868
        %v1457 = vunpack.c.l.b16 %v869
        %v1458 = vunpack.c.h.b16 %v869
        %v1459 = vunpack.c.l.b16 %v870
        %v1460 = vunpack.c.h.b16 %v870
        %v1461 = vunpack.c.l.b16 %v871
        %v1462 = vunpack.c.h.b16 %v871
        %v1463 = vunpack.c.l.b16 %v872
        %v1464 = vunpack.c.h.b16 %v872
        %v1465 = vunpack.c.l.b16 %v873
        %v1466 = vunpack.c.h.b16 %v873
        %v1467 = vunpack.c.l.b16 %v874
        %v1468 = vunpack.c.h.b16 %v874
        %v1469 = vunpack.c.l.b16 %v875
        %v1470 = vunpack.c.h.b16 %v875
        %v1471 = vunpack.c.l.b16 %v876
        %v1472 = vunpack.c.h.b16 %v876
        %v1473 = vunpack.c.l.b16 %v877
        %v1474 = vunpack.c.h.b16 %v877
        %v1475 = vunpack.c.l.b16 %v878
        %v1476 = vunpack.c.h.b16 %v878
        %v1477 = vunpack.c.l.b16 %v879
        %v1478 = vunpack.c.h.b16 %v879
        %v1479 = vunpack.c.l.b16 %v880
        %v1480 = vunpack.c.h.b16 %v880
        %v1481 = vunpack.c.l.b16 %v881
        %v1482 = vunpack.c.h.b16 %v881
        %v1483 = vunpack.c.l.b16 %v882
        %v1484 = vunpack.c.h.b16 %v882
        %v1485 = vunpack.c.l.b16 %v883
        %v1486 = vunpack.c.h.b16 %v883
        %v1487 = vunpack.c.l.b16 %v884
        %v1488 = vunpack.c.h.b16 %v884
        %v1489 = vunpack.c.l.b16 %v885
        %v1490 = vunpack.c.h.b16 %v885
        %v1491 = vunpack.c.l.b16 %v886
        %v1492 = vunpack.c.h.b16 %v886
        %v1493 = vunpack.c.l.b16 %v887
        %v1494 = vunpack.c.h.b16 %v887
        %v1495 = vunpack.c.l.b16 %v888
        %v1496 = vunpack.c.h.b16 %v888
        %v1497 = vunpack.c.l.b16 %v889
        %v1498 = vunpack.c.h.b16 %v889
        %v1499 = vunpack.c.l.b16 %v890
        %v1500 = vunpack.c.h.b16 %v890
        %v1501 = vunpack.c.l.b16 %v891
        %v1502 = vunpack.c.h.b16 %v891
        %v1503 = vunpack.c.l.b16 %v892
        %v1504 = vunpack.c.h.b16 %v892
        %v1505 = vunpack.c.l.b16 %v893
        %v1506 = vunpack.c.h.b16 %v893
        %v1507 = vunpack.c.l.b16 %v894
        %v1508 = vunpack.c.h.b16 %v894
        %v1509 = vunpack.c.l.b16 %v895
        %v1510 = vunpack.c.h.b16 %v895
        %v1511 = vunpack.c.l.b16 %v896
        %v1512 = vunpack.c.h.b16 %v896
        %v1513 = vunpack.c.l.b16 %v897
        %v1514 = vunpack.c.h.b16 %v897
        %v1515 = vunpack.c.l.b16 %v898
        %v1516 = vunpack.c.h.b16 %v898
        %v1517 = vunpack.c.l.b16 %v899
        %v1518 = vunpack.c.h.b16 %v899
        %v1519 = vunpack.c.l.b16 %v900
        %v1520 = vunpack.c.h.b16 %v900
        %v1521 = vunpack.c.l.b16 %v901
        %v1522 = vunpack.c.h.b16 %v901
        %v1523 = vunpack.c.l.b16 %v902
        %v1524 = vunpack.c.h.b16 %v902
        %v1525 = vunpack.c.l.b16 %v903
        %v1526 = vunpack.c.h.b16 %v903
        %v1527 = vunpack.c.l.b16 %v904
        %v1528 = vunpack.c.h.b16 %v904
        %v1529 = vunpack.c.l.b16 %v905
        %v1530 = vunpack.c.h.b16 %v905
        %v1531 = vunpack.c.l.b16 %v906
        %v1532 = vunpack.c.h.b16 %v906
        %v1533 = vunpack.c.l.b16 %v907
        %v1534 = vunpack.c.h.b16 %v907
        %v1535 = vunpack.c.l.b16 %v908
        %v1536 = vunpack.c.h.b16 %v908
        %v1537 = vunpack.c.l.b16 %v909
        %v1538 = vunpack.c.h.b16 %v909
        %v1539 = vunpack.c.l.b16 %v910
        %v1540 = vunpack.c.h.b16 %v910
        %v1541 = vunpack.c.l.b16 %v911
        %v1542 = vunpack.c.h.b16 %v911
        %v1543 = vunpack.c.l.b16 %v912
        %v1544 = vunpack.c.h.b16 %v912
        %v1545 = vunpack.c.l.b16 %v913
        %v1546 = vunpack.c.h.b16 %v913
        %v1547 = vunpack.c.l.b16 %v914
        %v1548 = vunpack.c.h.b16 %v914
        %v1549 = vunpack.c.l.b16 %v915
        %v1550 = vunpack.c.h.b16 %v915
        %v1551 = vunpack.c.l.b16 %v916
        %v1552 = vunpack.c.h.b16 %v916
        %v1553 = vunpack.c.l.b16 %v917
        %v1554 = vunpack.c.h.b16 %v917
        %v1555 = vunpack.c.l.b16 %v918
        %v1556 = vunpack.c.h.b16 %v918
        %v1557 = vunpack.c.l.b16 %v919
        %v1558 = vunpack.c.h.b16 %v919
        %v1559 = vunpack.c.l.b16 %v920
        %v1560 = vunpack.c.h.b16 %v920
        %v1561 = vunpack.c.l.b16 %v921
        %v1562 = vunpack.c.h.b16 %v921
        %v1563 = vunpack.c.l.b16 %v922
        %v1564 = vunpack.c.h.b16 %v922
        %v1565 = vunpack.c.l.b16 %v923
        %v1566 = vunpack.c.h.b16 %v923
        %v1567 = vunpack.c.l.b16 %v924
        %v1568 = vunpack.c.h.b16 %v924
        %v1569 = vunpack.c.l.b16 %v925
        %v1570 = vunpack.c.h.b16 %v925
        %v1571 = vunpack.c.l.b16 %v926
        %v1572 = vunpack.c.h.b16 %v926
        %v1573 = vunpack.c.l.b16 %v927
        %v1574 = vunpack.c.h.b16 %v927
        %v1575 = vunpack.c.l.b16 %v928
        %v1576 = vunpack.c.h.b16 %v928
        %v1577 = vunpack.c.l.b16 %v929
        %v1578 = vunpack.c.h.b16 %v929
        %v1579 = vunpack.c.l.b16 %v930
        %v1580 = vunpack.c.h.b16 %v930
        %v1581 = vunpack.c.l.b16 %v931
        %v1582 = vunpack.c.h.b16 %v931
        %v1583 = vunpack.c.l.b16 %v932
        %v1584 = vunpack.c.h.b16 %v932
        %v1585 = vunpack.c.l.b16 %v933
        %v1586 = vunpack.c.h.b16 %v933
        %v1587 = vunpack.c.l.b16 %v934
        %v1588 = vunpack.c.h.b16 %v934
        %v1589 = vunpack.c.l.b16 %v935
        %v1590 = vunpack.c.h.b16 %v935
        %v1591 = vunpack.c.l.b16 %v936
        %v1592 = vunpack.c.h.b16 %v936
        %v1593 = vunpack.c.l.b16 %v937
        %v1594 = vunpack.c.h.b16 %v937
        %v1595 = vunpack.c.l.b16 %v938
        %v1596 = vunpack.c.h.b16 %v938
        %v1597 = vunpack.c.l.b16 %v939
        %v1598 = vunpack.c.h.b16 %v939
        %v1599 = vunpack.c.l.b16 %v940
        %v1600 = vunpack.c.h.b16 %v940
        %v1601 = vunpack.c.l.b16 %v941
        %v1602 = vunpack.c.h.b16 %v941
        %v1603 = vunpack.c.l.b16 %v942
        %v1604 = vunpack.c.h.b16 %v942
        %v1605 = vunpack.c.l.b16 %v943
        %v1606 = vunpack.c.h.b16 %v943
        %v1607 = vunpack.c.l.b16 %v944
        %v1608 = vunpack.c.h.b16 %v944
        %v1609 = vunpack.c.l.b16 %v945
        %v1610 = vunpack.c.h.b16 %v945
        %v1611 = vunpack.c.l.b16 %v946
        %v1612 = vunpack.c.h.b16 %v946
        %v1613 = vunpack.c.l.b16 %v947
        %v1614 = vunpack.c.h.b16 %v947
        %v1615 = vunpack.c.l.b16 %v948
        %v1616 = vunpack.c.h.b16 %v948
        %v1617 = vunpack.c.l.b16 %v949
        %v1618 = vunpack.c.h.b16 %v949
        %v1619 = vunpack.c.l.b16 %v950
        %v1620 = vunpack.c.h.b16 %v950
        %v1621 = vunpack.c.l.b16 %v951
        %v1622 = vunpack.c.h.b16 %v951
        %v1623 = vunpack.c.l.b16 %v952
        %v1624 = vunpack.c.h.b16 %v952
        %v1625 = vunpack.c.l.b16 %v953
        %v1626 = vunpack.c.h.b16 %v953
        %v1627 = vunpack.c.l.b16 %v954
        %v1628 = vunpack.c.h.b16 %v954
        %v1629 = vunpack.c.l.b16 %v955
        %v1630 = vunpack.c.h.b16 %v955
        %v1631 = vunpack.c.l.b16 %v956
        %v1632 = vunpack.c.h.b16 %v956
        %v1633 = vunpack.c.l.b16 %v957
        %v1634 = vunpack.c.h.b16 %v957
        %v1635 = vunpack.c.l.b16 %v958
        %v1636 = vunpack.c.h.b16 %v958
        %v1637 = vunpack.c.l.b16 %v959
        %v1638 = vunpack.c.h.b16 %v959
        %v1639 = vunpack.c.l.b16 %v960
        %v1640 = vunpack.c.h.b16 %v960
        %v1641 = vunpack.c.l.b16 %v961
        %v1642 = vunpack.c.h.b16 %v961
        %v1643 = vunpack.c.l.b16 %v962
        %v1644 = vunpack.c.h.b16 %v962
        %v1645 = vunpack.c.l.b16 %v963
        %v1646 = vunpack.c.h.b16 %v963
        %v1647 = vunpack.c.l.b16 %v964
        %v1648 = vunpack.c.h.b16 %v964
        %v1649 = vunpack.c.l.b16 %v965
        %v1650 = vunpack.c.h.b16 %v965
        %v1651 = vunpack.c.l.b16 %v966
        %v1652 = vunpack.c.h.b16 %v966
        %v1653 = vunpack.c.l.b16 %v967
        %v1654 = vunpack.c.h.b16 %v967
        %v1655 = vunpack.c.l.b16 %v968
        %v1656 = vunpack.c.h.b16 %v968
        %v1657 = vunpack.c.l.b16 %v969
        %v1658 = vunpack.c.h.b16 %v969
        %v1659 = vunpack.c.l.b16 %v970
        %v1660 = vunpack.c.h.b16 %v970
        %v1661 = vunpack.c.l.b16 %v971
        %v1662 = vunpack.c.h.b16 %v971
        %v1663 = vunpack.c.l.b16 %v972
        %v1664 = vunpack.c.h.b16 %v972
        %v1665 = vunpack.c.l.b16 %v973
        %v1666 = vunpack.c.h.b16 %v973
        %v1667 = vunpack.c.l.b16 %v974
        %v1668 = vunpack.c.h.b16 %v974
        %v1669 = vunpack.c.l.b16 %v975
        %v1670 = vunpack.c.h.b16 %v975
        %v1671 = vunpack.c.l.b16 %v976
        %v1672 = vunpack.c.h.b16 %v976
        %v1673 = vunpack.c.l.b16 %v977
        %v1674 = vunpack.c.h.b16 %v977
        %v1675 = vunpack.c.l.b16 %v978
        %v1676 = vunpack.c.h.b16 %v978
        %v1677 = vunpack.c.l.b16 %v979
        %v1678 = vunpack.c.h.b16 %v979
        %v1679 = vunpack.c.l.b16 %v980
        %v1680 = vunpack.c.h.b16 %v980
        %v1681 = vunpack.c.l.b16 %v981
        %v1682 = vunpack.c.h.b16 %v981
        %v1683 = vunpack.c.l.b16 %v982
        %v1684 = vunpack.c.h.b16 %v982
        %v1685 = vunpack.c.l.b16 %v983
        %v1686 = vunpack.c.h.b16 %v983
        %v1687 = vunpack.c.l.b16 %v984
        %v1688 = vunpack.c.h.b16 %v984
        %v1689 = vunpack.c.l.b16 %v985
        %v1690 = vunpack.c.h.b16 %v985
        %v1691 = vunpack.c.l.b16 %v986
        %v1692 = vunpack.c.h.b16 %v986
        %v1693 = vunpack.c.l.b16 %v987
        %v1694 = vunpack.c.h.b16 %v987
        %v1695 = vunpack.c.l.b16 %v988
        %v1696 = vunpack.c.h.b16 %v988
        %v1697 = vunpack.c.l.b16 %v989
        %v1698 = vunpack.c.h.b16 %v989
        %v1699 = vunpack.c.l.b16 %v990
        %v1700 = vunpack.c.h.b16 %v990
        %v1701 = vunpack.c.l.b16 %v991
        %v1702 = vunpack.c.h.b16 %v991
        %v1703 = vunpack.c.l.b16 %v992
        %v1704 = vunpack.c.h.b16 %v992
        %v1705 = vunpack.c.l.b16 %v993
        %v1706 = vunpack.c.h.b16 %v993
        %v1707 = vunpack.c.l.b16 %v994
        %v1708 = vunpack.c.h.b16 %v994
        %v1709 = vunpack.c.l.b16 %v995
        %v1710 = vunpack.c.h.b16 %v995
        %v1711 = vunpack.c.l.b16 %v996
        %v1712 = vunpack.c.h.b16 %v996
        %v1713 = vunpack.c.l.b16 %v997
        %v1714 = vunpack.c.h.b16 %v997
        %v1715 = vunpack.c.l.b16 %v998
        %v1716 = vunpack.c.h.b16 %v998
        %v1717 = vunpack.c.l.b16 %v999
        %v1718 = vunpack.c.h.b16 %v999
        %v1719 = vunpack.c.l.b16 %v1000
        %v1720 = vunpack.c.h.b16 %v1000
        %v1721 = vunpack.c.l.b16 %v1001
        %v1722 = vunpack.c.h.b16 %v1001
        %v1723 = vunpack.c.l.b16 %v1002
        %v1724 = vunpack.c.h.b16 %v1002
        %v1725 = vunpack.c.l.b16 %v1003
        %v1726 = vunpack.c.h.b16 %v1003
        %v1727 = vunpack.c.l.b16 %v1004
        %v1728 = vunpack.c.h.b16 %v1004
        %v1729 = vunpack.c.l.b16 %v1005
        %v1730 = vunpack.c.h.b16 %v1005
        %v1731 = vunpack.c.l.b16 %v1006
        %v1732 = vunpack.c.h.b16 %v1006
        %v1733 = vunpack.c.l.b16 %v1007
        %v1734 = vunpack.c.h.b16 %v1007
        %v1735 = vunpack.c.l.b16 %v1008
        %v1736 = vunpack.c.h.b16 %v1008
        %v1737 = vunpack.c.l.b16 %v1009
        %v1738 = vunpack.c.h.b16 %v1009
        %v1739 = vunpack.c.l.b16 %v1010
        %v1740 = vunpack.c.h.b16 %v1010
        %v1741 = vunpack.c.l.b16 %v1011
        %v1742 = vunpack.c.h.b16 %v1011
        %v1743 = vunpack.c.l.b16 %v1012
        %v1744 = vunpack.c.h.b16 %v1012
        %v1745 = vunpack.c.l.b16 %v1013
        %v1746 = vunpack.c.h.b16 %v1013
        %v1747 = vunpack.c.l.b16 %v1014
        %v1748 = vunpack.c.h.b16 %v1014
        %v1749 = vunpack.c.l.b16 %v1015
        %v1750 = vunpack.c.h.b16 %v1015
        %v1751 = vunpack.c.l.b16 %v1016
        %v1752 = vunpack.c.h.b16 %v1016
        %v1753 = vunpack.c.l.b16 %v1017
        %v1754 = vunpack.c.h.b16 %v1017
        %v1755 = vunpack.c.l.b16 %v1018
        %v1756 = vunpack.c.h.b16 %v1018
        %v1757 = vunpack.c.l.b16 %v1019
        %v1758 = vunpack.c.h.b16 %v1019
        %v1759 = vunpack.c.l.b16 %v1020
        %v1760 = vunpack.c.h.b16 %v1020
        %v1761 = vunpack.c.l.b16 %v1021
        %v1762 = vunpack.c.h.b16 %v1021
        %v1763 = vunpack.c.l.b16 %v1022
        %v1764 = vunpack.c.h.b16 %v1022
        %v1765 = vunpack.c.l.b16 %v1023
        %v1766 = vunpack.c.h.b16 %v1023
        %v1767 = vunpack.c.l.b16 %v1024
        %v1768 = vunpack.c.h.b16 %v1024
        %v1769 = vunpack.c.l.b16 %v1025
        %v1770 = vunpack.c.h.b16 %v1025
        %v1771 = vunpack.c.l.b16 %v1026
        %v1772 = vunpack.c.h.b16 %v1026
        %v1773 = vunpack.c.l.b16 %v1027
        %v1774 = vunpack.c.h.b16 %v1027
        %v1775 = vunpack.c.l.b16 %v1028
        %v1776 = vunpack.c.h.b16 %v1028
        %v1777 = vunpack.c.l.b16 %v1029
        %v1778 = vunpack.c.h.b16 %v1029
        %v1779 = vunpack.c.l.b16 %v1030
        %v1780 = vunpack.c.h.b16 %v1030
        %v1781 = vunpack.c.l.b16 %v1031
        %v1782 = vunpack.c.h.b16 %v1031
        %v1783 = vunpack.c.l.b16 %v1032
        %v1784 = vunpack.c.h.b16 %v1032
        %v1785 = vunpack.c.l.b16 %v1033
        %v1786 = vunpack.c.h.b16 %v1033
        %v1787 = vunpack.c.l.b16 %v1034
        %v1788 = vunpack.c.h.b16 %v1034
        %v1789 = vunpack.c.l.b16 %v1035
        %v1790 = vunpack.c.h.b16 %v1035
        %v1791 = vunpack.c.l.b16 %v1036
        %v1792 = vunpack.c.h.b16 %v1036
        %v1793 = vunpack.c.l.b16 %v1037
        %v1794 = vunpack.c.h.b16 %v1037
        %v1795 = vunpack.c.l.b16 %v1038
        %v1796 = vunpack.c.h.b16 %v1038
        %v1797 = vunpack.c.l.b16 %v1039
        %v1798 = vunpack.c.h.b16 %v1039
        %v1799 = vunpack.c.l.b16 %v1040
        %v1800 = vunpack.c.h.b16 %v1040
        %v1801 = vunpack.c.l.b16 %v1041
        %v1802 = vunpack.c.h.b16 %v1041
        %v1803 = vunpack.c.l.b16 %v1042
        %v1804 = vunpack.c.h.b16 %v1042
        %v1805 = vunpack.c.l.b16 %v1043
        %v1806 = vunpack.c.h.b16 %v1043
        %v1807 = vunpack.c.l.b16 %v1044
        %v1808 = vunpack.c.h.b16 %v1044
        %v1809 = vunpack.c.l.b16 %v1045
        %v1810 = vunpack.c.h.b16 %v1045
        %v1811 = vunpack.c.l.b16 %v1046
        %v1812 = vunpack.c.h.b16 %v1046
        %v1813 = vunpack.c.l.b16 %v1047
        %v1814 = vunpack.c.h.b16 %v1047
        %v1815 = vunpack.c.l.b16 %v1048
        %v1816 = vunpack.c.h.b16 %v1048
        %v1817 = vunpack.c.l.b16 %v1049
        %v1818 = vunpack.c.h.b16 %v1049
        %v1819 = vunpack.c.l.b16 %v1050
        %v1820 = vunpack.c.h.b16 %v1050
        %v1821 = vunpack.c.l.b16 %v1051
        %v1822 = vunpack.c.h.b16 %v1051
        %v1823 = vunpack.c.l.b16 %v1052
        %v1824 = vunpack.c.h.b16 %v1052
        %v1825 = vunpack.c.l.b16 %v1053
        %v1826 = vunpack.c.h.b16 %v1053
        %v1827 = vunpack.c.l.b16 %v1054
        %v1828 = vunpack.c.h.b16 %v1054
        %v1829 = vunpack.c.l.b16 %v1055
        %v1830 = vunpack.c.h.b16 %v1055
        %v1831 = vunpack.c.l.b16 %v1056
        %v1832 = vunpack.c.h.b16 %v1056
        %v1833 = vunpack.c.l.b16 %v1057
        %v1834 = vunpack.c.h.b16 %v1057
        %v1835 = vunpack.c.l.b16 %v1058
        %v1836 = vunpack.c.h.b16 %v1058
        %v1837 = vunpack.c.l.b16 %v1059
        %v1838 = vunpack.c.h.b16 %v1059
        %v1839 = vunpack.c.l.b16 %v1060
        %v1840 = vunpack.c.h.b16 %v1060
        %v1841 = vunpack.c.l.b16 %v1061
        %v1842 = vunpack.c.h.b16 %v1061
        %v1843 = vunpack.c.l.b16 %v1062
        %v1844 = vunpack.c.h.b16 %v1062
        %v1845 = vunpack.c.l.b16 %v1063
        %v1846 = vunpack.c.h.b16 %v1063
        %v1847 = vunpack.c.l.b16 %v1064
        %v1848 = vunpack.c.h.b16 %v1064
        %v1849 = vunpack.c.l.b16 %v1065
        %v1850 = vunpack.c.h.b16 %v1065
        %v1851 = vunpack.c.l.b16 %v1066
        %v1852 = vunpack.c.h.b16 %v1066
        %v1853 = vunpack.c.l.b16 %v1067
        %v1854 = vunpack.c.h.b16 %v1067
        %v1855 = vunpack.c.l.b16 %v1068
        %v1856 = vunpack.c.h.b16 %v1068
        %v1857 = vunpack.c.l.b16 %v1069
        %v1858 = vunpack.c.h.b16 %v1069
        %v1859 = vunpack.c.l.b16 %v1070
        %v1860 = vunpack.c.h.b16 %v1070
        %v1861 = vunpack.c.l.b16 %v1071
        %v1862 = vunpack.c.h.b16 %v1071
        %v1863 = vunpack.c.l.b16 %v1072
        %v1864 = vunpack.c.h.b16 %v1072
        %v1865 = vunpack.c.l.b16 %v1073
        %v1866 = vunpack.c.h.b16 %v1073
        %v1867 = vunpack.c.l.b16 %v1074
        %v1868 = vunpack.c.h.b16 %v1074
        %v1869 = vunpack.c.l.b16 %v1075
        %v1870 = vunpack.c.h.b16 %v1075
        %v1871 = vunpack.c.l.b16 %v1076
        %v1872 = vunpack.c.h.b16 %v1076
        %v1873 = vunpack.c.l.b16 %v1077
        %v1874 = vunpack.c.h.b16 %v1077
        %v1875 = vunpack.c.l.b16 %v1078
        %v1876 = vunpack.c.h.b16 %v1078
        %v1877 = vunpack.c.l.b16 %v1079
        %v1878 = vunpack.c.h.b16 %v1079
        %v1879 = vunpack.c.l.b16 %v1080
        %v1880 = vunpack.c.h.b16 %v1080
        %v1881 = vunpack.c.l.b16 %v1081
        %v1882 = vunpack.c.h.b16 %v1081
        %v1883 = vunpack.c.l.b16 %v1082
        %v1884 = vunpack.c.h.b16 %v1082
        %v1885 = vunpack.c.l.b16 %v1083
        %v1886 = vunpack.c.h.b16 %v1083
        %v1887 = vunpack.c.l.b16 %v1084
        %v1888 = vunpack.c.h.b16 %v1084
        %v1889 = vunpack.c.l.b16 %v1085
        %v1890 = vunpack.c.h.b16 %v1085
        %v1891 = vunpack.c.l.b16 %v1086
        %v1892 = vunpack.c.h.b16 %v1086
        %v1893 = vunpack.c.l.b16 %v1087
        %v1894 = vunpack.c.h.b16 %v1087
        %v1895 = vunpack.c.l.b16 %v1088
        %v1896 = vunpack.c.h.b16 %v1088
        %v1897 = vpack.c.b16 %v1389, %v1385
        %v1898 = vpack.c.b16 %v1390, %v1386
        %v1899 = vpack.c.b16 %v1391, %v1387
        %v1900 = vpack.c.b16 %v1392, %v1388
        %v1901 = vpack.c.b16 %v1397, %v1393
        %v1902 = vpack.c.b16 %v1398, %v1394
        %v1903 = vpack.c.b16 %v1399, %v1395
        %v1904 = vpack.c.b16 %v1400, %v1396
        %v1905 = vpack.c.b16 %v1405, %v1401
        %v1906 = vpack.c.b16 %v1406, %v1402
        %v1907 = vpack.c.b16 %v1407, %v1403
        %v1908 = vpack.c.b16 %v1408, %v1404
        %v1909 = vpack.c.b16 %v1413, %v1409
        %v1910 = vpack.c.b16 %v1414, %v1410
        %v1911 = vpack.c.b16 %v1415, %v1411
        %v1912 = vpack.c.b16 %v1416, %v1412
        %v1913 = vpack.c.b16 %v1421, %v1417
        %v1914 = vpack.c.b16 %v1422, %v1418
        %v1915 = vpack.c.b16 %v1423, %v1419
        %v1916 = vpack.c.b16 %v1424, %v1420
        %v1917 = vpack.c.b16 %v1429, %v1425
        %v1918 = vpack.c.b16 %v1430, %v1426
        %v1919 = vpack.c.b16 %v1431, %v1427
        %v1920 = vpack.c.b16 %v1432, %v1428
        %v1921 = vpack.c.b16 %v1437, %v1433
        %v1922 = vpack.c.b16 %v1438, %v1434
        %v1923 = vpack.c.b16 %v1439, %v1435
        %v1924 = vpack.c.b16 %v1440, %v1436
        %v1925 = vpack.c.b16 %v1445, %v1441
        %v1926 = vpack.c.b16 %v1446, %v1442
        %v1927 = vpack.c.b16 %v1447, %v1443
        %v1928 = vpack.c.b16 %v1448, %v1444
        %v1929 = vpack.c.b16 %v1453, %v1449
        %v1930 = vpack.c.b16 %v1454, %v1450
        %v1931 = vpack.c.b16 %v1455, %v1451
        %v1932 = vpack.c.b16 %v1456, %v1452
        %v1933 = vpack.c.b16 %v1461, %v1457
        %v1934 = vpack.c.b16 %v1462, %v1458
        %v1935 = vpack.c.b16 %v1463, %v1459
        %v1936 = vpack.c.b16 %v1464, %v1460
        %v1937 = vpack.c.b16 %v1469, %v1465
        %v1938 = vpack.c.b16 %v1470, %v1466
        %v1939 = vpack.c.b16 %v1471, %v1467
        %v1940 = vpack.c.b16 %v1472, %v1468
        %v1941 = vpack.c.b16 %v1477, %v1473
        %v1942 = vpack.c.b16 %v1478, %v1474
        %v1943 = vpack.c.b16 %v1479, %v1475
        %v1944 = vpack.c.b16 %v1480, %v1476
        %v1945 = vpack.c.b16 %v1485, %v1481
        %v1946 = vpack.c.b16 %v1486, %v1482
        %v1947 = vpack.c.b16 %v1487, %v1483
        %v1948 = vpack.c.b16 %v1488, %v1484
        %v1949 = vpack.c.b16 %v1493, %v1489
        %v1950 = vpack.c.b16 %v1494, %v1490
        %v1951 = vpack.c.b16 %v1495, %v1491
        %v1952 = vpack.c.b16 %v1496, %v1492
        %v1953 = vpack.c.b16 %v1501, %v1497
        %v1954 = vpack.c.b16 %v1502, %v1498
        %v1955 = vpack.c.b16 %v1503, %v1499
        %v1956 = vpack.c.b16 %v1504, %v1500
        %v1957 = vpack.c.b16 %v1509, %v1505
        %v1958 = vpack.c.b16 %v1510, %v1506
        %v1959 = vpack.c.b16 %v1511, %v1507
        %v1960 = vpack.c.b16 %v1512, %v1508
        %v1961 = vpack.c.b16 %v1517, %v1513
        %v1962 = vpack.c.b16 %v1518, %v1514
        %v1963 = vpack.c.b16 %v1519, %v1515
        %v1964 = vpack.c.b16 %v1520, %v1516
        %v1965 = vpack.c.b16 %v1525, %v1521
        %v1966 = vpack.c.b16 %v1526, %v1522
        %v1967 = vpack.c.b16 %v1527, %v1523
        %v1968 = vpack.c.b16 %v1528, %v1524
        %v1969 = vpack.c.b16 %v1533, %v1529
        %v1970 = vpack.c.b16 %v1534, %v1530
        %v1971 = vpack.c.b16 %v1535, %v1531
        %v1972 = vpack.c.b16 %v1536, %v1532
        %v1973 = vpack.c.b16 %v1541, %v1537
        %v1974 = vpack.c.b16 %v1542, %v1538
        %v1975 = vpack.c.b16 %v1543, %v1539
        %v1976 = vpack.c.b16 %v1544, %v1540
        %v1977 = vpack.c.b16 %v1549, %v1545
        %v1978 = vpack.c.b16 %v1550, %v1546
        %v1979 = vpack.c.b16 %v1551, %v1547
        %v1980 = vpack.c.b16 %v1552, %v1548
        %v1981 = vpack.c.b16 %v1557, %v1553
        %v1982 = vpack.c.b16 %v1558, %v1554
        %v1983 = vpack.c.b16 %v1559, %v1555
        %v1984 = vpack.c.b16 %v1560, %v1556
        %v1985 = vpack.c.b16 %v1565, %v1561
        %v1986 = vpack.c.b16 %v1566, %v1562
        %v1987 = vpack.c.b16 %v1567, %v1563
        %v1988 = vpack.c.b16 %v1568, %v1564
        %v1989 = vpack.c.b16 %v1573, %v1569
        %v1990 = vpack.c.b16 %v1574, %v1570
        %v1991 = vpack.c.b16 %v1575, %v1571
        %v1992 = vpack.c.b16 %v1576, %v1572
        %v1993 = vpack.c.b16 %v1581, %v1577
        %v1994 = vpack.c.b16 %v1582, %v1578
        %v1995 = vpack.c.b16 %v1583, %v1579
        %v1996 = vpack.c.b16 %v1584, %v1580
        %v1997 = vpack.c.b16 %v1589, %v1585
        %v1998 = vpack.c.b16 %v1590, %v1586
        %v1999 = vpack.c.b16 %v1591, %v1587
        %v2000 = vpack.c.b16 %v1592, %v1588
        %v2001 = vpack.c.b16 %v1597, %v1593
        %v2002 = vpack.c.b16 %v1598, %v1594
        %v2003 = vpack.c.b16 %v1599, %v1595
        %v2004 = vpack.c.b16 %v1600, %v1596
        %v2005 = vpack.c.b16 %v1605, %v1601
        %v2006 = vpack.c.b16 %v1606, %v1602
        %v2007 = vpack.c.b16 %v1607, %v1603
        %v2008 = vpack.c.b16 %v1608, %v1604
        %v2009 = vpack.c.b16 %v1613, %v1609
        %v2010 = vpack.c.b16 %v1614, %v1610
        %v2011 = vpack.c.b16 %v1615, %v1611
        %v2012 = vpack.c.b16 %v1616, %v1612
        %v2013 = vpack.c.b16 %v1621, %v1617
        %v2014 = vpack.c.b16 %v1622, %v1618
        %v2015 = vpack.c.b16 %v1623, %v1619
        %v2016 = vpack.c.b16 %v1624, %v1620
        %v2017 = vpack.c.b16 %v1629, %v1625
        %v2018 = vpack.c.b16 %v1630, %v1626
        %v2019 = vpack.c.b16 %v1631, %v1627
        %v2020 = vpack.c.b16 %v1632, %v1628
        %v2021 = vpack.c.b16 %v1637, %v1633
        %v2022 = vpack.c.b16 %v1638, %v1634
        %v2023 = vpack.c.b16 %v1639, %v1635
        %v2024 = vpack.c.b16 %v1640, %v1636
        %v2025 = vpack.c.b16 %v1645, %v1641
        %v2026 = vpack.c.b16 %v1646, %v1642
        %v2027 = vpack.c.b16 %v1647, %v1643
        %v2028 = vpack.c.b16 %v1648, %v1644
        %v2029 = vpack.c.b16 %v1653, %v1649
        %v2030 = vpack.c.b16 %v1654, %v1650
        %v2031 = vpack.c.b16 %v1655, %v1651
        %v2032 = vpack.c.b16 %v1656, %v1652
        %v2033 = vpack.c.b16 %v1661, %v1657
        %v2034 = vpack.c.b16 %v1662, %v1658
        %v2035 = vpack.c.b16 %v1663, %v1659
        %v2036 = vpack.c.b16 %v1664, %v1660
        %v2037 = vpack.c.b16 %v1669, %v1665
        %v2038 = vpack.c.b16 %v1670, %v1666
        %v2039 = vpack.c.b16 %v1671, %v1667
        %v2040 = vpack.c.b16 %v1672, %v1668
        %v2041 = vpack.c.b16 %v1677, %v1673
        %v2042 = vpack.c.b16 %v1678, %v1674
        %v2043 = vpack.c.b16 %v1679, %v1675
        %v2044 = vpack.c.b16 %v1680, %v1676
        %v2045 = vpack.c.b16 %v1685, %v1681
        %v2046 = vpack.c.b16 %v1686, %v1682
        %v2047 = vpack.c.b16 %v1687, %v1683
        %v2048 = vpack.c.b16 %v1688, %v1684
        %v2049 = vpack.c.b16 %v1693, %v1689
        %v2050 = vpack.c.b16 %v1694, %v1690
        %v2051 = vpack.c.b16 %v1695, %v1691
        %v2052 = vpack.c.b16 %v1696, %v1692
        %v2053 = vpack.c.b16 %v1701, %v1697
        %v2054 = vpack.c.b16 %v1702, %v1698
        %v2055 = vpack.c.b16 %v1703, %v1699
        %v2056 = vpack.c.b16 %v1704, %v1700
        %v2057 = vpack.c.b16 %v1709, %v1705
        %v2058 = vpack.c.b16 %v1710, %v1706
        %v2059 = vpack.c.b16 %v1711, %v1707
        %v2060 = vpack.c.b16 %v1712, %v1708
        %v2061 = vpack.c.b16 %v1717, %v1713
        %v2062 = vpack.c.b16 %v1718, %v1714
        %v2063 = vpack.c.b16 %v1719, %v1715
        %v2064 = vpack.c.b16 %v1720, %v1716
        %v2065 = vpack.c.b16 %v1725, %v1721
        %v2066 = vpack.c.b16 %v1726, %v1722
        %v2067 = vpack.c.b16 %v1727, %v1723
        %v2068 = vpack.c.b16 %v1728, %v1724
        %v2069 = vpack.c.b16 %v1733, %v1729
        %v2070 = vpack.c.b16 %v1734, %v1730
        %v2071 = vpack.c.b16 %v1735, %v1731
        %v2072 = vpack.c.b16 %v1736, %v1732
        %v2073 = vpack.c.b16 %v1741, %v1737
        %v2074 = vpack.c.b16 %v1742, %v1738
        %v2075 = vpack.c.b16 %v1743, %v1739
        %v2076 = vpack.c.b16 %v1744, %v1740
        %v2077 = vpack.c.b16 %v1749, %v1745
        %v2078 = vpack.c.b16 %v1750, %v1746
        %v2079 = vpack.c.b16 %v1751, %v1747
        %v2080 = vpack.c.b16 %v1752, %v1748
        %v2081 = vpack.c.b16 %v1757, %v1753
        %v2082 = vpack.c.b16 %v1758, %v1754
        %v2083 = vpack.c.b16 %v1759, %v1755
        %v2084 = vpack.c.b16 %v1760, %v1756
        %v2085 = vpack.c.b16 %v1765, %v1761
        %v2086 = vpack.c.b16 %v1766, %v1762
        %v2087 = vpack.c.b16 %v1767, %v1763
        %v2088 = vpack.c.b16 %v1768, %v1764
        %v2089 = vpack.c.b16 %v1773, %v1769
        %v2090 = vpack.c.b16 %v1774, %v1770
        %v2091 = vpack.c.b16 %v1775, %v1771
        %v2092 = vpack.c.b16 %v1776, %v1772
        %v2093 = vpack.c.b16 %v1781, %v1777
        %v2094 = vpack.c.b16 %v1782, %v1778
        %v2095 = vpack.c.b16 %v1783, %v1779
        %v2096 = vpack.c.b16 %v1784, %v1780
        %v2097 = vpack.c.b16 %v1789, %v1785
        %v2098 = vpack.c.b16 %v1790, %v1786
        %v2099 = vpack.c.b16 %v1791, %v1787
        %v2100 = vpack.c.b16 %v1792, %v1788
        %v2101 = vpack.c.b16 %v1797, %v1793
        %v2102 = vpack.c.b16 %v1798, %v1794
        %v2103 = vpack.c.b16 %v1799, %v1795
        %v2104 = vpack.c.b16 %v1800, %v1796
        %v2105 = vpack.c.b16 %v1805, %v1801
        %v2106 = vpack.c.b16 %v1806, %v1802
        %v2107 = vpack.c.b16 %v1807, %v1803
        %v2108 = vpack.c.b16 %v1808, %v1804
        %v2109 = vpack.c.b16 %v1813, %v1809
        %v2110 = vpack.c.b16 %v1814, %v1810
        %v2111 = vpack.c.b16 %v1815, %v1811
        %v2112 = vpack.c.b16 %v1816, %v1812
        %v2113 = vpack.c.b16 %v1821, %v1817
        %v2114 = vpack.c.b16 %v1822, %v1818
        %v2115 = vpack.c.b16 %v1823, %v1819
        %v2116 = vpack.c.b16 %v1824, %v1820
        %v2117 = vpack.c.b16 %v1829, %v1825
        %v2118 = vpack.c.b16 %v1830, %v1826
        %v2119 = vpack.c.b16 %v1831, %v1827
        %v2120 = vpack.c.b16 %v1832, %v1828
        %v2121 = vpack.c.b16 %v1837, %v1833
        %v2122 = vpack.c.b16 %v1838, %v1834
        %v2123 = vpack.c.b16 %v1839, %v1835
        %v2124 = vpack.c.b16 %v1840, %v1836
        %v2125 = vpack.c.b16 %v1845, %v1841
        %v2126 = vpack.c.b16 %v1846, %v1842
        %v2127 = vpack.c.b16 %v1847, %v1843
        %v2128 = vpack.c.b16 %v1848, %v1844
        %v2129 = vpack.c.b16 %v1853, %v1849
        %v2130 = vpack.c.b16 %v1854, %v1850
        %v2131 = vpack.c.b16 %v1855, %v1851
        %v2132 = vpack.c.b16 %v1856, %v1852
        %v2133 = vpack.c.b16 %v1861, %v1857
        %v2134 = vpack.c.b16 %v1862, %v1858
        %v2135 = vpack.c.b16 %v1863, %v1859
        %v2136 = vpack.c.b16 %v1864, %v1860
        %v2137 = vpack.c.b16 %v1869, %v1865
        %v2138 = vpack.c.b16 %v1870, %v1866
        %v2139 = vpack.c.b16 %v1871, %v1867
        %v2140 = vpack.c.b16 %v1872, %v1868
        %v2141 = vpack.c.b16 %v1877, %v1873
        %v2142 = vpack.c.b16 %v1878, %v1874
        %v2143 = vpack.c.b16 %v1879, %v1875
        %v2144 = vpack.c.b16 %v1880, %v1876
        %v2145 = vpack.c.b16 %v1885, %v1881
        %v2146 = vpack.c.b16 %v1886, %v1882
        %v2147 = vpack.c.b16 %v1887, %v1883
        %v2148 = vpack.c.b16 %v1888, %v1884
        %v2149 = vpack.c.b16 %v1893, %v1889
        %v2150 = vpack.c.b16 %v1894, %v1890
        %v2151 = vpack.c.b16 %v1895, %v1891
        %v2152 = vpack.c.b16 %v1896, %v1892
        %2409 = vmatprep.subr.bf16.mxu0 %v1926
        %2410 = vmatpush1.bf16.msra.mxu0 %v1925
        %2411 = vmatprep.subr.bf16.mxu0 %v1922
        %2412 = vmatpush1.bf16.msra.mxu0 %v1921
        %2413 = vmatprep.subr.bf16.mxu0 %v1918
        %2414 = vmatpush1.bf16.msra.mxu0 %v1917
        %2415 = vmatprep.subr.bf16.mxu0 %v1914
        %2416 = vmatpush1.bf16.msra.mxu0 %v1913
        %2417 = vmatprep.subr.bf16.mxu0 %v1910
        %2418 = vmatpush1.bf16.msra.mxu0 %v1909
        %2419 = vmatprep.subr.bf16.mxu0 %v1906
        %2420 = vmatpush1.bf16.msra.mxu0 %v1905
        %2421 = vmatprep.subr.bf16.mxu0 %v1902
        %2422 = vmatpush1.bf16.msra.mxu0 %v1901
        %2423 = vmatprep.subr.bf16.mxu0 %v1898
        %2424 = vmatpush1.bf16.msra.mxu0 %v1897
        %2425 = vmatprep.subr.bf16.mxu0 %v1958
        %2426 = vmatpush2.bf16.msra.mxu0 %v1957
        %2427 = vmatprep.subr.bf16.mxu0 %v1954
        %2428 = vmatpush2.bf16.msra.mxu0 %v1953
        %2429 = vmatprep.subr.bf16.mxu0 %v1950
        %2430 = vmatpush2.bf16.msra.mxu0 %v1949
        %2431 = vmatprep.subr.bf16.mxu0 %v1946
        %2432 = vmatpush2.bf16.msra.mxu0 %v1945
        %2433 = vmatprep.subr.bf16.mxu0 %v1942
        %2434 = vmatpush2.bf16.msra.mxu0 %v1941
        %2435 = vmatprep.subr.bf16.mxu0 %v1938
        %2436 = vmatpush2.bf16.msra.mxu0 %v1937
        %2437 = vmatprep.subr.bf16.mxu0 %v1934
        %2438 = vmatpush2.bf16.msra.mxu0 %v1933
        %2439 = vmatprep.subr.bf16.mxu0 %v1930
        %2440 = vmatpush2.bf16.msra.mxu0 %v1929
        %2441 = vmatprep.mubr.bf16.mxu0 %v1114
        %2442 = vmatmul.mubr.bf16.gmra.mxu0 %v1113
        %v2443 = vpop.f32.mrf.mxu0
        %v2444 = vadd.f32 0.0, %v2443
        %v2445 = vpop.f32.mrf.mxu0
        %v2446 = vadd.f32 0.0, %v2445
        %v2447 = vpop.f32.mrf.mxu0
        %v2448 = vadd.f32 0.0, %v2447
        %v2449 = vpop.f32.mrf.mxu0
        %v2450 = vadd.f32 0.0, %v2449
        %2451 = vdwg.mxu0
        %2452 = vmatprep.subr.bf16.mxu0 %v1990
        %2453 = vmatpush1.bf16.msra.mxu0 %v1989
        %2454 = vmatprep.subr.bf16.mxu0 %v1986
        %2455 = vmatpush1.bf16.msra.mxu0 %v1985
        %2456 = vmatprep.subr.bf16.mxu0 %v1982
        %2457 = vmatpush1.bf16.msra.mxu0 %v1981
        %2458 = vmatprep.subr.bf16.mxu0 %v1978
        %2459 = vmatpush1.bf16.msra.mxu0 %v1977
        %2460 = vmatprep.subr.bf16.mxu0 %v1974
        %2461 = vmatpush1.bf16.msra.mxu0 %v1973
        %2462 = vmatprep.subr.bf16.mxu0 %v1970
        %2463 = vmatpush1.bf16.msra.mxu0 %v1969
        %2464 = vmatprep.subr.bf16.mxu0 %v1966
        %2465 = vmatpush1.bf16.msra.mxu0 %v1965
        %2466 = vmatprep.subr.bf16.mxu0 %v1962
        %2467 = vmatpush1.bf16.msra.mxu0 %v1961
        %2468 = vmatprep.subr.bf16.mxu0 %v2022
        %2469 = vmatpush2.bf16.msra.mxu0 %v2021
        %2470 = vmatprep.subr.bf16.mxu0 %v2018
        %2471 = vmatpush2.bf16.msra.mxu0 %v2017
        %2472 = vmatprep.subr.bf16.mxu0 %v2014
        %2473 = vmatpush2.bf16.msra.mxu0 %v2013
        %2474 = vmatprep.subr.bf16.mxu0 %v2010
        %2475 = vmatpush2.bf16.msra.mxu0 %v2009
        %2476 = vmatprep.subr.bf16.mxu0 %v2006
        %2477 = vmatpush2.bf16.msra.mxu0 %v2005
        %2478 = vmatprep.subr.bf16.mxu0 %v2002
        %2479 = vmatpush2.bf16.msra.mxu0 %v2001
        %2480 = vmatprep.subr.bf16.mxu0 %v1998
        %2481 = vmatpush2.bf16.msra.mxu0 %v1997
        %2482 = vmatprep.subr.bf16.mxu0 %v1994
        %2483 = vmatpush2.bf16.msra.mxu0 %v1993
        %2484 = vmatprep.mubr.bf16.mxu0 %v1116
        %2485 = vmatmul.mubr.bf16.gmra.mxu0 %v1115
        %v2486 = vpop.f32.mrf.mxu0
        %v2487 = vadd.f32 %v2444, %v2486
        %v2488 = vpop.f32.mrf.mxu0
        %v2489 = vadd.f32 %v2446, %v2488
        %v2490 = vpop.f32.mrf.mxu0
        %v2491 = vadd.f32 %v2448, %v2490
        %v2492 = vpop.f32.mrf.mxu0
        %v2493 = vadd.f32 %v2450, %v2492
        %2494 = vdwg.mxu0
        %2495 = vmatprep.subr.bf16.mxu0 %v2054
        %2496 = vmatpush1.bf16.msra.mxu0 %v2053
        %2497 = vmatprep.subr.bf16.mxu0 %v2050
        %2498 = vmatpush1.bf16.msra.mxu0 %v2049
        %2499 = vmatprep.subr.bf16.mxu0 %v2046
        %2500 = vmatpush1.bf16.msra.mxu0 %v2045
        %2501 = vmatprep.subr.bf16.mxu0 %v2042
        %2502 = vmatpush1.bf16.msra.mxu0 %v2041
        %2503 = vmatprep.subr.bf16.mxu0 %v2038
        %2504 = vmatpush1.bf16.msra.mxu0 %v2037
        %2505 = vmatprep.subr.bf16.mxu0 %v2034
        %2506 = vmatpush1.bf16.msra.mxu0 %v2033
        %2507 = vmatprep.subr.bf16.mxu0 %v2030
        %2508 = vmatpush1.bf16.msra.mxu0 %v2029
        %2509 = vmatprep.subr.bf16.mxu0 %v2026
        %2510 = vmatpush1.bf16.msra.mxu0 %v2025
        %2511 = vmatprep.subr.bf16.mxu0 %v2086
        %2512 = vmatpush2.bf16.msra.mxu0 %v2085
        %2513 = vmatprep.subr.bf16.mxu0 %v2082
        %2514 = vmatpush2.bf16.msra.mxu0 %v2081
        %2515 = vmatprep.subr.bf16.mxu0 %v2078
        %2516 = vmatpush2.bf16.msra.mxu0 %v2077
        %2517 = vmatprep.subr.bf16.mxu0 %v2074
        %2518 = vmatpush2.bf16.msra.mxu0 %v2073
        %2519 = vmatprep.subr.bf16.mxu0 %v2070
        %2520 = vmatpush2.bf16.msra.mxu0 %v2069
        %2521 = vmatprep.subr.bf16.mxu0 %v2066
        %2522 = vmatpush2.bf16.msra.mxu0 %v2065
        %2523 = vmatprep.subr.bf16.mxu0 %v2062
        %2524 = vmatpush2.bf16.msra.mxu0 %v2061
        %2525 = vmatprep.subr.bf16.mxu0 %v2058
        %2526 = vmatpush2.bf16.msra.mxu0 %v2057
        %2527 = vmatprep.mubr.bf16.mxu0 %v1118
        %2528 = vmatmul.mubr.bf16.gmra.mxu0 %v1117
        %v2529 = vpop.f32.mrf.mxu0
        %v2530 = vadd.f32 %v2487, %v2529
        %v2531 = vpop.f32.mrf.mxu0
        %v2532 = vadd.f32 %v2489, %v2531
        %v2533 = vpop.f32.mrf.mxu0
        %v2534 = vadd.f32 %v2491, %v2533
        %v2535 = vpop.f32.mrf.mxu0
        %v2536 = vadd.f32 %v2493, %v2535
        %2537 = vdwg.mxu0
        %2538 = vmatprep.subr.bf16.mxu0 %v2118
        %2539 = vmatpush1.bf16.msra.mxu0 %v2117
        %2540 = vmatprep.subr.bf16.mxu0 %v2114
        %2541 = vmatpush1.bf16.msra.mxu0 %v2113
        %2542 = vmatprep.subr.bf16.mxu0 %v2110
        %2543 = vmatpush1.bf16.msra.mxu0 %v2109
        %2544 = vmatprep.subr.bf16.mxu0 %v2106
        %2545 = vmatpush1.bf16.msra.mxu0 %v2105
        %2546 = vmatprep.subr.bf16.mxu0 %v2102
        %2547 = vmatpush1.bf16.msra.mxu0 %v2101
        %2548 = vmatprep.subr.bf16.mxu0 %v2098
        %2549 = vmatpush1.bf16.msra.mxu0 %v2097
        %2550 = vmatprep.subr.bf16.mxu0 %v2094
        %2551 = vmatpush1.bf16.msra.mxu0 %v2093
        %2552 = vmatprep.subr.bf16.mxu0 %v2090
        %2553 = vmatpush1.bf16.msra.mxu0 %v2089
        %2554 = vmatprep.subr.bf16.mxu0 %v2150
        %2555 = vmatpush2.bf16.msra.mxu0 %v2149
        %2556 = vmatprep.subr.bf16.mxu0 %v2146
        %2557 = vmatpush2.bf16.msra.mxu0 %v2145
        %2558 = vmatprep.subr.bf16.mxu0 %v2142
        %2559 = vmatpush2.bf16.msra.mxu0 %v2141
        %2560 = vmatprep.subr.bf16.mxu0 %v2138
        %2561 = vmatpush2.bf16.msra.mxu0 %v2137
        %2562 = vmatprep.subr.bf16.mxu0 %v2134
        %2563 = vmatpush2.bf16.msra.mxu0 %v2133
        %2564 = vmatprep.subr.bf16.mxu0 %v2130
        %2565 = vmatpush2.bf16.msra.mxu0 %v2129
        %2566 = vmatprep.subr.bf16.mxu0 %v2126
        %2567 = vmatpush2.bf16.msra.mxu0 %v2125
        %2568 = vmatprep.subr.bf16.mxu0 %v2122
        %2569 = vmatpush2.bf16.msra.mxu0 %v2121
        %2570 = vmatprep.mubr.bf16.mxu0 %v1120
        %2571 = vmatmul.mubr.bf16.gmra.mxu0 %v1119
        %v2572 = vpop.f32.mrf.mxu0
        %v2573 = vadd.f32 %v2530, %v2572
        %v2574 = vpop.f32.mrf.mxu0
        %v2575 = vadd.f32 %v2532, %v2574
        %v2576 = vpop.f32.mrf.mxu0
        %v2577 = vadd.f32 %v2534, %v2576
        %v2578 = vpop.f32.mrf.mxu0
        %v2579 = vadd.f32 %v2536, %v2578
        %2580 = vdwg.mxu0
        %2581 = vmatprep.subr.bf16.mxu0 %v1928
        %2582 = vmatpush1.bf16.msra.mxu0 %v1927
        %2583 = vmatprep.subr.bf16.mxu0 %v1924
        %2584 = vmatpush1.bf16.msra.mxu0 %v1923
        %2585 = vmatprep.subr.bf16.mxu0 %v1920
        %2586 = vmatpush1.bf16.msra.mxu0 %v1919
        %2587 = vmatprep.subr.bf16.mxu0 %v1916
        %2588 = vmatpush1.bf16.msra.mxu0 %v1915
        %2589 = vmatprep.subr.bf16.mxu0 %v1912
        %2590 = vmatpush1.bf16.msra.mxu0 %v1911
        %2591 = vmatprep.subr.bf16.mxu0 %v1908
        %2592 = vmatpush1.bf16.msra.mxu0 %v1907
        %2593 = vmatprep.subr.bf16.mxu0 %v1904
        %2594 = vmatpush1.bf16.msra.mxu0 %v1903
        %2595 = vmatprep.subr.bf16.mxu0 %v1900
        %2596 = vmatpush1.bf16.msra.mxu0 %v1899
        %2597 = vmatprep.subr.bf16.mxu0 %v1960
        %2598 = vmatpush2.bf16.msra.mxu0 %v1959
        %2599 = vmatprep.subr.bf16.mxu0 %v1956
        %2600 = vmatpush2.bf16.msra.mxu0 %v1955
        %2601 = vmatprep.subr.bf16.mxu0 %v1952
        %2602 = vmatpush2.bf16.msra.mxu0 %v1951
        %2603 = vmatprep.subr.bf16.mxu0 %v1948
        %2604 = vmatpush2.bf16.msra.mxu0 %v1947
        %2605 = vmatprep.subr.bf16.mxu0 %v1944
        %2606 = vmatpush2.bf16.msra.mxu0 %v1943
        %2607 = vmatprep.subr.bf16.mxu0 %v1940
        %2608 = vmatpush2.bf16.msra.mxu0 %v1939
        %2609 = vmatprep.subr.bf16.mxu0 %v1936
        %2610 = vmatpush2.bf16.msra.mxu0 %v1935
        %2611 = vmatprep.subr.bf16.mxu0 %v1932
        %2612 = vmatpush2.bf16.msra.mxu0 %v1931
        %2613 = vmatprep.mubr.bf16.mxu0 %v1114
        %2614 = vmatmul.mubr.bf16.gmra.mxu0 %v1113
        %v2615 = vpop.f32.mrf.mxu0
        %v2616 = vadd.f32 0.0, %v2615
        %v2617 = vpop.f32.mrf.mxu0
        %v2618 = vadd.f32 0.0, %v2617
        %v2619 = vpop.f32.mrf.mxu0
        %v2620 = vadd.f32 0.0, %v2619
        %v2621 = vpop.f32.mrf.mxu0
        %v2622 = vadd.f32 0.0, %v2621
        %2623 = vdwg.mxu0
        %2624 = vmatprep.subr.bf16.mxu0 %v1992
        %2625 = vmatpush1.bf16.msra.mxu0 %v1991
        %2626 = vmatprep.subr.bf16.mxu0 %v1988
        %2627 = vmatpush1.bf16.msra.mxu0 %v1987
        %2628 = vmatprep.subr.bf16.mxu0 %v1984
        %2629 = vmatpush1.bf16.msra.mxu0 %v1983
        %2630 = vmatprep.subr.bf16.mxu0 %v1980
        %2631 = vmatpush1.bf16.msra.mxu0 %v1979
        %2632 = vmatprep.subr.bf16.mxu0 %v1976
        %2633 = vmatpush1.bf16.msra.mxu0 %v1975
        %2634 = vmatprep.subr.bf16.mxu0 %v1972
        %2635 = vmatpush1.bf16.msra.mxu0 %v1971
        %2636 = vmatprep.subr.bf16.mxu0 %v1968
        %2637 = vmatpush1.bf16.msra.mxu0 %v1967
        %2638 = vmatprep.subr.bf16.mxu0 %v1964
        %2639 = vmatpush1.bf16.msra.mxu0 %v1963
        %2640 = vmatprep.subr.bf16.mxu0 %v2024
        %2641 = vmatpush2.bf16.msra.mxu0 %v2023
        %2642 = vmatprep.subr.bf16.mxu0 %v2020
        %2643 = vmatpush2.bf16.msra.mxu0 %v2019
        %2644 = vmatprep.subr.bf16.mxu0 %v2016
        %2645 = vmatpush2.bf16.msra.mxu0 %v2015
        %2646 = vmatprep.subr.bf16.mxu0 %v2012
        %2647 = vmatpush2.bf16.msra.mxu0 %v2011
        %2648 = vmatprep.subr.bf16.mxu0 %v2008
        %2649 = vmatpush2.bf16.msra.mxu0 %v2007
        %2650 = vmatprep.subr.bf16.mxu0 %v2004
        %2651 = vmatpush2.bf16.msra.mxu0 %v2003
        %2652 = vmatprep.subr.bf16.mxu0 %v2000
        %2653 = vmatpush2.bf16.msra.mxu0 %v1999
        %2654 = vmatprep.subr.bf16.mxu0 %v1996
        %2655 = vmatpush2.bf16.msra.mxu0 %v1995
        %2656 = vmatprep.mubr.bf16.mxu0 %v1116
        %2657 = vmatmul.mubr.bf16.gmra.mxu0 %v1115
        %v2658 = vpop.f32.mrf.mxu0
        %v2659 = vadd.f32 %v2616, %v2658
        %v2660 = vpop.f32.mrf.mxu0
        %v2661 = vadd.f32 %v2618, %v2660
        %v2662 = vpop.f32.mrf.mxu0
        %v2663 = vadd.f32 %v2620, %v2662
        %v2664 = vpop.f32.mrf.mxu0
        %v2665 = vadd.f32 %v2622, %v2664
        %2666 = vdwg.mxu0
        %2667 = vmatprep.subr.bf16.mxu0 %v2056
        %2668 = vmatpush1.bf16.msra.mxu0 %v2055
        %2669 = vmatprep.subr.bf16.mxu0 %v2052
        %2670 = vmatpush1.bf16.msra.mxu0 %v2051
        %2671 = vmatprep.subr.bf16.mxu0 %v2048
        %2672 = vmatpush1.bf16.msra.mxu0 %v2047
        %2673 = vmatprep.subr.bf16.mxu0 %v2044
        %2674 = vmatpush1.bf16.msra.mxu0 %v2043
        %2675 = vmatprep.subr.bf16.mxu0 %v2040
        %2676 = vmatpush1.bf16.msra.mxu0 %v2039
        %2677 = vmatprep.subr.bf16.mxu0 %v2036
        %2678 = vmatpush1.bf16.msra.mxu0 %v2035
        %2679 = vmatprep.subr.bf16.mxu0 %v2032
        %2680 = vmatpush1.bf16.msra.mxu0 %v2031
        %2681 = vmatprep.subr.bf16.mxu0 %v2028
        %2682 = vmatpush1.bf16.msra.mxu0 %v2027
        %2683 = vmatprep.subr.bf16.mxu0 %v2088
        %2684 = vmatpush2.bf16.msra.mxu0 %v2087
        %2685 = vmatprep.subr.bf16.mxu0 %v2084
        %2686 = vmatpush2.bf16.msra.mxu0 %v2083
        %2687 = vmatprep.subr.bf16.mxu0 %v2080
        %2688 = vmatpush2.bf16.msra.mxu0 %v2079
        %2689 = vmatprep.subr.bf16.mxu0 %v2076
        %2690 = vmatpush2.bf16.msra.mxu0 %v2075
        %2691 = vmatprep.subr.bf16.mxu0 %v2072
        %2692 = vmatpush2.bf16.msra.mxu0 %v2071
        %2693 = vmatprep.subr.bf16.mxu0 %v2068
        %2694 = vmatpush2.bf16.msra.mxu0 %v2067
        %2695 = vmatprep.subr.bf16.mxu0 %v2064
        %2696 = vmatpush2.bf16.msra.mxu0 %v2063
        %2697 = vmatprep.subr.bf16.mxu0 %v2060
        %2698 = vmatpush2.bf16.msra.mxu0 %v2059
        %2699 = vmatprep.mubr.bf16.mxu0 %v1118
        %2700 = vmatmul.mubr.bf16.gmra.mxu0 %v1117
        %v2701 = vpop.f32.mrf.mxu0
        %v2702 = vadd.f32 %v2659, %v2701
        %v2703 = vpop.f32.mrf.mxu0
        %v2704 = vadd.f32 %v2661, %v2703
        %v2705 = vpop.f32.mrf.mxu0
        %v2706 = vadd.f32 %v2663, %v2705
        %v2707 = vpop.f32.mrf.mxu0
        %v2708 = vadd.f32 %v2665, %v2707
        %2709 = vdwg.mxu0
        %2710 = vmatprep.subr.bf16.mxu0 %v2120
        %2711 = vmatpush1.bf16.msra.mxu0 %v2119
        %2712 = vmatprep.subr.bf16.mxu0 %v2116
        %2713 = vmatpush1.bf16.msra.mxu0 %v2115
        %2714 = vmatprep.subr.bf16.mxu0 %v2112
        %2715 = vmatpush1.bf16.msra.mxu0 %v2111
        %2716 = vmatprep.subr.bf16.mxu0 %v2108
        %2717 = vmatpush1.bf16.msra.mxu0 %v2107
        %2718 = vmatprep.subr.bf16.mxu0 %v2104
        %2719 = vmatpush1.bf16.msra.mxu0 %v2103
        %2720 = vmatprep.subr.bf16.mxu0 %v2100
        %2721 = vmatpush1.bf16.msra.mxu0 %v2099
        %2722 = vmatprep.subr.bf16.mxu0 %v2096
        %2723 = vmatpush1.bf16.msra.mxu0 %v2095
        %2724 = vmatprep.subr.bf16.mxu0 %v2092
        %2725 = vmatpush1.bf16.msra.mxu0 %v2091
        %2726 = vmatprep.subr.bf16.mxu0 %v2152
        %2727 = vmatpush2.bf16.msra.mxu0 %v2151
        %2728 = vmatprep.subr.bf16.mxu0 %v2148
        %2729 = vmatpush2.bf16.msra.mxu0 %v2147
        %2730 = vmatprep.subr.bf16.mxu0 %v2144
        %2731 = vmatpush2.bf16.msra.mxu0 %v2143
        %2732 = vmatprep.subr.bf16.mxu0 %v2140
        %2733 = vmatpush2.bf16.msra.mxu0 %v2139
        %2734 = vmatprep.subr.bf16.mxu0 %v2136
        %2735 = vmatpush2.bf16.msra.mxu0 %v2135
        %2736 = vmatprep.subr.bf16.mxu0 %v2132
        %2737 = vmatpush2.bf16.msra.mxu0 %v2131
        %2738 = vmatprep.subr.bf16.mxu0 %v2128
        %2739 = vmatpush2.bf16.msra.mxu0 %v2127
        %2740 = vmatprep.subr.bf16.mxu0 %v2124
        %2741 = vmatpush2.bf16.msra.mxu0 %v2123
        %2742 = vmatprep.mubr.bf16.mxu0 %v1120
        %2743 = vmatmul.mubr.bf16.gmra.mxu0 %v1119
        %v2744 = vpop.f32.mrf.mxu0
        %v2745 = vadd.f32 %v2702, %v2744
        %v2746 = vpop.f32.mrf.mxu0
        %v2747 = vadd.f32 %v2704, %v2746
        %v2748 = vpop.f32.mrf.mxu0
        %v2749 = vadd.f32 %v2706, %v2748
        %v2750 = vpop.f32.mrf.mxu0
        %v2751 = vadd.f32 %v2708, %v2750
        %2752 = vdwg.mxu0
        %v2753 = vadd.f32 %v817, %v2573
        %v2754 = vadd.f32 %v818, %v2575
        %v2755 = vadd.f32 %v819, %v2745
        %v2756 = vadd.f32 %v820, %v2747
        %v2757 = vadd.f32 %v821, %v2577
        %v2758 = vadd.f32 %v822, %v2579
        %v2759 = vadd.f32 %v823, %v2749
        %v2760 = vadd.f32 %v824, %v2751
        %2761 = vst [vmem:[%s793] sm:$0xff] %v2753
        %2762 = vst [vmem:[%s793 + $0x8] sm:$0xff] %v2754
        %2763 = vst [vmem:[%s793 + $0x10] sm:$0xff] %v2755
        %2764 = vst [vmem:[%s793 + $0x18] sm:$0xff] %v2756
        %2765 = vst [vmem:[%s793 + $0x20] sm:$0xff] %v2757
        %2766 = vst [vmem:[%s793 + $0x28] sm:$0xff] %v2758
        %2767 = vst [vmem:[%s793 + $0x30] sm:$0xff] %v2759
        %2768 = vst [vmem:[%s793 + $0x38] sm:$0xff] %v2760
        %p2769 = scmp.eq.s32.totalorder %s21, 2
        // Predicated region
        $region83: #{lipnet_forward.13} parent=69 // pred_check
          %p2770 = pneg %p2769
        $region84: #{lipnet_forward.13} parent=69 // pred_check_branch
          %2772 = sbr.rel (%p2770) target = $region86
        $region85: #{lipnet_forward.13} parent=69 // pred_region
          %v2773 = vld [vmem:[%s793] sm:$0xff]
          %v2774 = vld [vmem:[%s793 + $0x8] sm:$0xff]
          %v2775 = vld [vmem:[%s793 + $0x10] sm:$0xff]
          %v2776 = vld [vmem:[%s793 + $0x18] sm:$0xff]
          %v2777 = vld [vmem:[%s793 + $0x20] sm:$0xff]
          %v2778 = vld [vmem:[%s793 + $0x28] sm:$0xff]
          %v2779 = vld [vmem:[%s793 + $0x30] sm:$0xff]
          %v2780 = vld [vmem:[%s793 + $0x38] sm:$0xff]
          %v2781 = vld [vmem:[%s801] sm:$0xf]
          %v2783 = vlaneseq
          %v2784 = vshrl.u32 %v2783, 7
          %v2785 = vsub.s32 0, %v2784
          %v2786 = vrot.slane %v2781, %v2785
          %v2787 = vlaneseq
          %v2788 = vshrl.u32 %v2787, 7
          %v2789 = vsub.s32 1, %v2788
          %v2790 = vrot.slane %v2781, %v2789
          %v2791 = vlaneseq
          %v2792 = vshrl.u32 %v2791, 7
          %v2793 = vsub.s32 2, %v2792
          %v2794 = vrot.slane %v2781, %v2793
          %v2795 = vlaneseq
          %v2796 = vshrl.u32 %v2795, 7
          %v2797 = vsub.s32 3, %v2796
          %v2798 = vrot.slane %v2781, %v2797
          %v2803 = vadd.f32 %v2773, %v2786
          %v2804 = vadd.f32 %v2774, %v2790
          %v2805 = vadd.f32 %v2775, %v2794
          %v2806 = vadd.f32 %v2776, %v2798
          %v2807 = vadd.f32 %v2777, %v2786
          %v2808 = vadd.f32 %v2778, %v2790
          %v2809 = vadd.f32 %v2779, %v2794
          %v2810 = vadd.f32 %v2780, %v2798
          %2811 = vst [vmem:[%s793] sm:$0xff] %v2803
          %2812 = vst [vmem:[%s793 + $0x8] sm:$0xff] %v2804
          %2813 = vst [vmem:[%s793 + $0x10] sm:$0xff] %v2805
          %2814 = vst [vmem:[%s793 + $0x18] sm:$0xff] %v2806
          %2815 = vst [vmem:[%s793 + $0x20] sm:$0xff] %v2807
          %2816 = vst [vmem:[%s793 + $0x28] sm:$0xff] %v2808
          %2817 = vst [vmem:[%s793 + $0x30] sm:$0xff] %v2809
          %2818 = vst [vmem:[%s793 + $0x38] sm:$0xff] %v2810
        $region86: #{lipnet_forward.13} parent=69 // pred_fallthru
          _
        %s2819 = sand.u32 %s125, 1
        %s2820 = sand.u32 %s125, 1
        %s2821 = smul.addr %s2820, 64
        %s2822 = scalar_lea.vmem [#allocation4], %s2821
        // Predicated region
        $region87: #{lipnet_forward.13} parent=69 // pred_check
          %p2823 = pneg %p135
        $region88: #{lipnet_forward.13} parent=69 // pred_check_branch
          %2825 = sbr.rel (%p2823) target = $region90
        $region89: #{lipnet_forward.13} parent=69 // pred_region
          %s2826 = smul.u32 2, %s19
          %s2827 = smul.u32 4, %s20
          %s2828 = smul.addr %s2826, 12
          %s2829 = sadd.s32 %s2827, %s2828
          %s2830 = smul.addr %s2829, 8
          %s2831 = scalar_lea.vmem %s3, %s2830
          // Predicated region
          $region91: #{lipnet_forward.13} parent=89 // pred_check
            _
          $region92: #{lipnet_forward.13} parent=89 // pred_check_branch
            %2833 = sbr.rel (0) target = $region94
          $region93: #{lipnet_forward.13} parent=89 // pred_region
            // Predicated region
            $region95: #{lipnet_forward.13} parent=93 // pred_check
              _
            $region96: #{lipnet_forward.13} parent=93 // pred_check_branch
              %2835 = sbr.rel (0) target = $region98
            $region97: #{lipnet_forward.13} parent=93 // pred_region
              loop: start=0, step=1, limit=1
              $region99: #{lipnet_forward.13} parent=97 // loop_pre_header
                _
              $region100: #{lipnet_forward.13} parent=97 // loop_header
                %s2837 = sphi 0, %s2841
                %p2838 = scmp.ge.s32.totalorder %s2837, 1
                %s2842 = sphi %s2822, %s2822
                %s2843 = sphi %s2831, %s2831
              $region101: #{lipnet_forward.13} parent=97 // loop_header_branch
                %2840 = sbr.rel (%p2838) target = $region105
              $region102: #{lipnet_forward.13} parent=97 // loop_body
                %v2844 = vld [vmem:[%s2842] sm:$0xff]
                %2845 = vst [vmem:[%s2843] sm:$0xff] %v2844
                %v2846 = vld [vmem:[%s2842 + $0x8] sm:$0xff]
                %2847 = vst [vmem:[%s2843 + $0x8] sm:$0xff] %v2846
                %v2848 = vld [vmem:[%s2842 + $0x10] sm:$0xff]
                %2849 = vst [vmem:[%s2843 + $0x10] sm:$0xff] %v2848
                %v2850 = vld [vmem:[%s2842 + $0x18] sm:$0xff]
                %2851 = vst [vmem:[%s2843 + $0x18] sm:$0xff] %v2850
                %v2852 = vld [vmem:[%s2842 + $0x20] sm:$0xff]
                %2853 = vst [vmem:[%s2843 + $0x60] sm:$0xff] %v2852
                %v2854 = vld [vmem:[%s2842 + $0x28] sm:$0xff]
                %2855 = vst [vmem:[%s2843 + $0x68] sm:$0xff] %v2854
                %v2856 = vld [vmem:[%s2842 + $0x30] sm:$0xff]
                %2857 = vst [vmem:[%s2843 + $0x70] sm:$0xff] %v2856
                %v2858 = vld [vmem:[%s2842 + $0x38] sm:$0xff]
                %2859 = vst [vmem:[%s2843 + $0x78] sm:$0xff] %v2858
              $region103: #{lipnet_forward.13} parent=97 // loop_footer
                %s2841 = sadd.s32 1, %s2837
              $region104: #{lipnet_forward.13} parent=97 // loop_footer_branch
                %2836 = sbr.rel target = $region100
              $region105: #{lipnet_forward.13} parent=97 // loop_exit
                _
            $region98: #{lipnet_forward.13} parent=93 // pred_fallthru
              _
            // Predicated region
            $region106: #{lipnet_forward.13} parent=93 // pred_check
              _
            $region107: #{lipnet_forward.13} parent=93 // pred_check_branch
              %2861 = sbr.rel target = $region109
            $region108: #{lipnet_forward.13} parent=93 // pred_region
              _
            $region109: #{lipnet_forward.13} parent=93 // pred_fallthru
              _
          $region94: #{lipnet_forward.13} parent=89 // pred_fallthru
            _
          %2862 = vnop
        $region90: #{lipnet_forward.13} parent=69 // pred_fallthru
          _
      $region70: #{lipnet_forward.13} parent=5 // pred_fallthru
        _
      %p2863 = scmp.le.s32.totalorder 2, %s9
      // Predicated region
      $region110: #{lipnet_forward.13} parent=5 // pred_check
        %p2864 = pneg %p2863
      $region111: #{lipnet_forward.13} parent=5 // pred_check_branch
        %2866 = sbr.rel (%p2864) target = $region113
      $region112: #{lipnet_forward.13} parent=5 // pred_region
        %s2867 = ssub.s32 %s9, 2
        // Predicated region
        $region114: #{lipnet_forward.13} parent=112 // pred_check
          %p2868 = pneg %p141
        $region115: #{lipnet_forward.13} parent=112 // pred_check_branch
          %2870 = sbr.rel (%p2868) target = $region117
        $region116: #{lipnet_forward.13} parent=112 // pred_region
          %s2871 = sand.u32 %s126, 1
          %s2872 = sand.u32 %s126, 1
          %s2873 = smul.addr %s2872, 64
          %s2874 = scalar_lea.vmem [#allocation4], %s2873
        $region117: #{lipnet_forward.13} parent=112 // pred_fallthru
          _
      $region113: #{lipnet_forward.13} parent=5 // pred_fallthru
        _
    $region6: #{lipnet_forward.13} parent=1 // loop_footer
      %s13 = sadd.s32 1, %s9
    $region7: #{lipnet_forward.13} parent=1 // loop_footer_branch
      %8 = sbr.rel target = $region3
    $region8: #{lipnet_forward.13} parent=1 // loop_exit
      _

// kernel: lipnet_forward.14
$region0: #{lipnet_forward.14}
  #allocation0 [shape = 'u32[]', space=smem, size = 0x4, offset = 0x4, fixed_abs, tag = 'smem constant byte address 0x4 - core index']
  #allocation1 [shape = 'u32[144,128]{1,0:T(1,128)}', space=vmem, size = 0x12000, scoped, tag = 'internal scratch']
  #allocation2 [shape = 'f32[2,256]{1,0:T(2,128)}', space=vmem, size = 0x800, scoped, tag = 'scratch operand']
  %s0 = inlined_call_operand.vmem [shape: f32[2,8,2,768], index: 0, kind: input, shape index: {}]
  %s1 = inlined_call_operand.vmem [shape: bf16[2,256,768], index: 1, kind: input, shape index: {}]
  %s2 = inlined_call_operand.vmem [shape: f32[2,1,768], index: 2, kind: input, shape index: {}]
  %s3 = inlined_call_operand.vmem [shape: f32[2,8,2,256], index: 3, kind: output, shape index: {}]
  %s4 = sld [smem:[#allocation0]]
  $region52: #{lipnet_forward.14} parent=0
    _
  %s6 = ssub.s32 1, %s4
  %s7 = scalar_select 0, %s6, %s4
  loop: start=0, step=1, limit=4
  $region2: #{lipnet_forward.14} parent=0 // loop_pre_header
    _
  $region3: #{lipnet_forward.14} parent=0 // loop_header
    %s9 = sphi 0, %s13
    %p10 = scmp.ge.s32.totalorder %s9, 4
    %s19 = sphi 0, %s21
    %s22 = sphi 0, %s19
    %s23 = sphi 0, %s22
    %s39 = sphi 0, %s23
    %s45 = sphi 0, %s47
    %s48 = sphi 0, %s45
    %s49 = sphi 0, %s48
    %s65 = sphi 0, %s49
    %s71 = sphi 0, %s73
    %s74 = sphi 0, %s71
    %s75 = sphi 0, %s74
    %s91 = sphi 0, %s75
    %s97 = sphi 0, %s99
    %s100 = sphi 0, %s97
    %s101 = sphi 0, %s100
    %s117 = sphi 0, %s101
  $region4: #{lipnet_forward.14} parent=0 // loop_header_branch
    %12 = sbr.rel (%p10) target = $region8
  $region5: #{lipnet_forward.14} parent=0 // loop_body
    %s14 = ssub.s32 %s9, 1
    %s15 = ssub.s32 %s9, 2
    %s16 = sadd.s32 %s9, 1
    %s17 = ssub.s32 %s9, %s16
    %p18 = scmp.eq.s32.totalorder %s17, 0
    %s20 = sadd.s32 %s19, 1
    %s21 = scalar_select %p18, %s19, %s20
    %p24 = pneg %p18
    %p25 = scmp.eq.s32.totalorder %s9, 1
    %p26 = por %p24, %p25
    %p27 = scmp.ne.s32.totalorder %s19, %s22
    %p28 = scmp.eq.s32.totalorder %s9, 0
    %p29 = por %p27, %p28
    %p30 = scmp.ne.s32.totalorder %s19, %s22
    %p31 = scmp.eq.s32.totalorder %s14, 1
    %p32 = por %p30, %p31
    %p33 = scmp.ne.s32.totalorder %s22, %s23
    %p34 = scmp.eq.s32.totalorder %s14, 0
    %p35 = por %p33, %p34
    %p36 = scmp.ne.s32.totalorder %s22, %s23
    %p37 = scmp.eq.s32.totalorder %s15, 1
    %p38 = por %p36, %p37
    %p40 = scmp.ne.s32.totalorder %s23, %s39
    %p41 = scmp.eq.s32.totalorder %s15, 0
    %p42 = por %p40, %p41
    %s43 = ssub.s32 %s9, %s16
    %p44 = scmp.eq.s32.totalorder %s43, 0
    %s46 = sadd.s32 %s45, 1
    %s47 = scalar_select %p44, %s45, %s46
    %p50 = pneg %p44
    %p51 = scmp.eq.s32.totalorder %s9, 1
    %p52 = por %p50, %p51
    %p53 = scmp.ne.s32.totalorder %s45, %s48
    %p54 = scmp.eq.s32.totalorder %s9, 0
    %p55 = por %p53, %p54
    %p56 = scmp.ne.s32.totalorder %s45, %s48
    %p57 = scmp.eq.s32.totalorder %s14, 1
    %p58 = por %p56, %p57
    %p59 = scmp.ne.s32.totalorder %s48, %s49
    %p60 = scmp.eq.s32.totalorder %s14, 0
    %p61 = por %p59, %p60
    %p62 = scmp.ne.s32.totalorder %s48, %s49
    %p63 = scmp.eq.s32.totalorder %s15, 1
    %p64 = por %p62, %p63
    %p66 = scmp.ne.s32.totalorder %s49, %s65
    %p67 = scmp.eq.s32.totalorder %s15, 0
    %p68 = por %p66, %p67
    %s69 = ssub.s32 %s9, %s16
    %p70 = scmp.eq.s32.totalorder %s69, 0
    %s72 = sadd.s32 %s71, 1
    %s73 = scalar_select %p70, %s71, %s72
    %p76 = pneg %p70
    %p77 = scmp.eq.s32.totalorder %s9, 1
    %p78 = por %p76, %p77
    %p79 = scmp.ne.s32.totalorder %s71, %s74
    %p80 = scmp.eq.s32.totalorder %s9, 0
    %p81 = por %p79, %p80
    %p82 = scmp.ne.s32.totalorder %s71, %s74
    %p83 = scmp.eq.s32.totalorder %s14, 1
    %p84 = por %p82, %p83
    %p85 = scmp.ne.s32.totalorder %s74, %s75
    %p86 = scmp.eq.s32.totalorder %s14, 0
    %p87 = por %p85, %p86
    %p88 = scmp.ne.s32.totalorder %s74, %s75
    %p89 = scmp.eq.s32.totalorder %s15, 1
    %p90 = por %p88, %p89
    %p92 = scmp.ne.s32.totalorder %s75, %s91
    %p93 = scmp.eq.s32.totalorder %s15, 0
    %p94 = por %p92, %p93
    %s95 = ssub.s32 %s9, %s16
    %p96 = scmp.eq.s32.totalorder %s95, 0
    %s98 = sadd.s32 %s97, 1
    %s99 = scalar_select %p96, %s97, %s98
    %p102 = pneg %p96
    %p103 = scmp.eq.s32.totalorder %s9, 1
    %p104 = por %p102, %p103
    %p105 = scmp.ne.s32.totalorder %s97, %s100
    %p106 = scmp.eq.s32.totalorder %s9, 0
    %p107 = por %p105, %p106
    %p108 = scmp.ne.s32.totalorder %s97, %s100
    %p109 = scmp.eq.s32.totalorder %s14, 1
    %p110 = por %p108, %p109
    %p111 = scmp.ne.s32.totalorder %s100, %s101
    %p112 = scmp.eq.s32.totalorder %s14, 0
    %p113 = por %p111, %p112
    %p114 = scmp.ne.s32.totalorder %s100, %s101
    %p115 = scmp.eq.s32.totalorder %s15, 1
    %p116 = por %p114, %p115
    %p118 = scmp.ne.s32.totalorder %s101, %s117
    %p119 = scmp.eq.s32.totalorder %s15, 0
    %p120 = por %p118, %p119
    %p121 = scmp.le.s32.totalorder 1, %s9
    %p122 = scmp.lt.s32.totalorder %s9, 3
    %p123 = pnand %p121, %p122
    %p124 = pneg %p123
    // Predicated region
    $region9: #{lipnet_forward.14} parent=5 // pred_check
      _
    $region10: #{lipnet_forward.14} parent=5 // pred_check_branch
      %126 = sbr.rel (%p123) target = $region12
    $region11: #{lipnet_forward.14} parent=5 // pred_region
      %s127 = ssub.s32 %s9, 1
    $region12: #{lipnet_forward.14} parent=5 // pred_fallthru
      _
    %p128 = scmp.lt.s32.totalorder %s9, 2
    // Predicated region
    $region13: #{lipnet_forward.14} parent=5 // pred_check
      %p129 = pneg %p128
    $region14: #{lipnet_forward.14} parent=5 // pred_check_branch
      %131 = sbr.rel (%p129) target = $region16
    $region15: #{lipnet_forward.14} parent=5 // pred_region
      // Predicated region
      $region17: #{lipnet_forward.14} parent=15 // pred_check
        %p132 = pneg %p29
      $region18: #{lipnet_forward.14} parent=15 // pred_check_branch
        %134 = sbr.rel (%p132) target = $region20
      $region19: #{lipnet_forward.14} parent=15 // pred_region
        %p135 = scmp.lt.s32.totalorder %s9, 1
        %s136 = scalar_select %p135, %s9, 1
        %s137 = smul.addr %s136, 48
        %s138 = smul.addr %s137, 2
        %s139 = scalar_lea.vmem %s0, %s138
      $region20: #{lipnet_forward.14} parent=15 // pred_fallthru
        _
      // Predicated region
      $region21: #{lipnet_forward.14} parent=15 // pred_check
        %p140 = pneg %p55
      $region22: #{lipnet_forward.14} parent=15 // pred_check_branch
        %142 = sbr.rel (%p140) target = $region24
      $region23: #{lipnet_forward.14} parent=15 // pred_region
        %p143 = scmp.lt.s32.totalorder %s9, 1
        %s144 = scalar_select %p143, %s9, 1
        %s145 = smul.addr %s144, 192
        %s146 = smul.addr %s145, 4
        %s147 = scalar_lea.vmem %s1, %s146
      $region24: #{lipnet_forward.14} parent=15 // pred_fallthru
        _
      // Predicated region
      $region25: #{lipnet_forward.14} parent=15 // pred_check
        %p148 = pneg %p81
      $region26: #{lipnet_forward.14} parent=15 // pred_check_branch
        %150 = sbr.rel (%p148) target = $region28
      $region27: #{lipnet_forward.14} parent=15 // pred_region
        %p151 = scmp.lt.s32.totalorder %s9, 1
        %s152 = scalar_select %p151, %s9, 1
        %s153 = smul.addr %s152, 6
        %s154 = scalar_lea.vmem %s2, %s153
      $region28: #{lipnet_forward.14} parent=15 // pred_fallthru
        _
    $region16: #{lipnet_forward.14} parent=5 // pred_fallthru
      _
    %p155 = scmp.le.s32.totalorder 1, %s9
    %p156 = scmp.lt.s32.totalorder %s9, 3
    %p157 = pnand %p155, %p156
    %p158 = pneg %p157
    // Predicated region
    $region29: #{lipnet_forward.14} parent=5 // pred_check
      _
    $region30: #{lipnet_forward.14} parent=5 // pred_check_branch
      %160 = sbr.rel (%p157) target = $region32
    $region31: #{lipnet_forward.14} parent=5 // pred_region
      %s161 = ssub.s32 %s9, 1
      %p162 = scmp.lt.s32.totalorder %s14, 1
      %s163 = scalar_select %p162, %s14, 1
      %s164 = smul.addr %s163, 48
      %s165 = smul.addr %s164, 2
      %s166 = scalar_lea.vmem %s0, %s165
      %p167 = pneg %p35
      %p168 = pneg %p32
      %p169 = scmp.lt.s32.totalorder %s14, 1
      %s170 = scalar_select %p169, %s14, 1
      %s171 = smul.addr %s170, 192
      %s172 = smul.addr %s171, 4
      %s173 = scalar_lea.vmem %s1, %s172
      %p174 = pneg %p61
      %p175 = pneg %p58
      %p176 = scmp.lt.s32.totalorder %s14, 1
      %s177 = scalar_select %p176, %s14, 1
      %s178 = smul.addr %s177, 6
      %s179 = scalar_lea.vmem %s2, %s178
      %p180 = pneg %p87
      %p181 = pneg %p84
      %p182 = pneg %p113
      %p183 = pneg %p110
      %p184 = scmp.lt.s32.totalorder %s14, 1
      %s185 = scalar_select %p184, %s14, 1
      %s186 = smul.addr %s185, 16
      %s187 = smul.addr %s186, 2
      %s188 = scalar_lea.vmem %s3, %s187
      %p189 = scmp.lt.s32.totalorder %s14, 1
      %s190 = scalar_select %p189, %s14, 1
      %s191 = smul.addr %s190, 48
      %s192 = smul.addr %s191, 2
      %s193 = scalar_lea.vmem %s0, %s192
      %p194 = scmp.lt.s32.totalorder %s14, 1
      %s195 = scalar_select %p194, %s14, 1
      %s196 = smul.addr %s195, 192
      %s197 = smul.addr %s196, 4
      %s198 = scalar_lea.vmem %s1, %s197
      %p199 = scmp.lt.s32.totalorder %s14, 1
      %s200 = scalar_select %p199, %s14, 1
      %s201 = smul.addr %s200, 6
      %s202 = scalar_lea.vmem %s2, %s201
      %p203 = scmp.lt.s32.totalorder %s14, 1
      %s204 = scalar_select %p203, %s14, 1
      %s205 = smul.addr %s204, 16
      %s206 = smul.addr %s205, 2
      %s207 = scalar_lea.vmem %s3, %s206
      %208 = vst [vmem:[#allocation2] sm:$0xf] 0.0
      loop: start=0, step=1, limit=8
      $region33: #{lipnet_forward.14} parent=31 // loop_pre_header
        _
      $region34: #{lipnet_forward.14} parent=31 // loop_header
        %s210 = sphi 0, %s214
        %p211 = scmp.ge.s32.totalorder %s210, 8
      $region35: #{lipnet_forward.14} parent=31 // loop_header_branch
        %213 = sbr.rel (%p211) target = $region39
      $region36: #{lipnet_forward.14} parent=31 // loop_body
        %v215 = vld [vmem:[#allocation2] sm:$0xf]
        %s216 = smul.u32 %s210, 6
        %s217 = smul.addr %s216, 2
        %s218 = scalar_lea.vmem %s193, %s217
        %v219 = vld [vmem:[%s218] sm:$0xff]
        %v220 = vld [vmem:[%s218 + $0x8] sm:$0xf]
        %v223 = vunpack.c.l.s4 1983009808
        %v224 = vunpack.c.0.s8 %v223
        %v225 = vlaneseq
        %v226 = vshrl.u32 %v225, 7
        %v227 = vsub.s32 %v224, %v226
        %v228 = vrot.slane %v215, %v227
        %v229 = vcombine.high %v228, %v228
        %v232 = vpack.c.bf16 %v228, %v228
        %v233 = vpack.c.bf16 %v229, %v229
        %v234 = vld [vmem:[%s198] sm:$0xff]
        %v235 = vld [vmem:[%s198 + $0x8] sm:$0xff]
        %v236 = vld [vmem:[%s198 + $0x10] sm:$0xff]
        %v237 = vld [vmem:[%s198 + $0x18] sm:$0xff]
        %v238 = vld [vmem:[%s198 + $0x20] sm:$0xff]
        %v239 = vld [vmem:[%s198 + $0x28] sm:$0xff]
        %v240 = vld [vmem:[%s198 + $0x30] sm:$0xff]
        %v241 = vld [vmem:[%s198 + $0x38] sm:$0xff]
        %v242 = vld [vmem:[%s198 + $0x40] sm:$0xff]
        %v243 = vld [vmem:[%s198 + $0x48] sm:$0xff]
        %v244 = vld [vmem:[%s198 + $0x50] sm:$0xff]
        %v245 = vld [vmem:[%s198 + $0x58] sm:$0xff]
        %v246 = vld [vmem:[%s198 + $0x60] sm:$0xff]
        %v247 = vld [vmem:[%s198 + $0x68] sm:$0xff]
        %v248 = vld [vmem:[%s198 + $0x70] sm:$0xff]
        %v249 = vld [vmem:[%s198 + $0x78] sm:$0xff]
        %v250 = vld [vmem:[%s198 + $0x80] sm:$0xff]
        %v251 = vld [vmem:[%s198 + $0x88] sm:$0xff]
        %v252 = vld [vmem:[%s198 + $0x90] sm:$0xff]
        %v253 = vld [vmem:[%s198 + $0x98] sm:$0xff]
        %v254 = vld [vmem:[%s198 + $0xa0] sm:$0xff]
        %v255 = vld [vmem:[%s198 + $0xa8] sm:$0xff]
        %v256 = vld [vmem:[%s198 + $0xb0] sm:$0xff]
        %v257 = vld [vmem:[%s198 + $0xb8] sm:$0xff]
        %v258 = vld [vmem:[%s198 + $0xc0] sm:$0xff]
        %v259 = vld [vmem:[%s198 + $0xc8] sm:$0xff]
        %v260 = vld [vmem:[%s198 + $0xd0] sm:$0xff]
        %v261 = vld [vmem:[%s198 + $0xd8] sm:$0xff]
        %v262 = vld [vmem:[%s198 + $0xe0] sm:$0xff]
        %v263 = vld [vmem:[%s198 + $0xe8] sm:$0xff]
        %v264 = vld [vmem:[%s198 + $0xf0] sm:$0xff]
        %v265 = vld [vmem:[%s198 + $0xf8] sm:$0xff]
        %v266 = vld [vmem:[%s198 + $0x100] sm:$0xff]
        %v267 = vld [vmem:[%s198 + $0x108] sm:$0xff]
        %v268 = vld [vmem:[%s198 + $0x110] sm:$0xff]
        %v269 = vld [vmem:[%s198 + $0x118] sm:$0xff]
        %v270 = vld [vmem:[%s198 + $0x120] sm:$0xff]
        %v271 = vld [vmem:[%s198 + $0x128] sm:$0xff]
        %v272 = vld [vmem:[%s198 + $0x130] sm:$0xff]
        %v273 = vld [vmem:[%s198 + $0x138] sm:$0xff]
        %v274 = vld [vmem:[%s198 + $0x140] sm:$0xff]
        %v275 = vld [vmem:[%s198 + $0x148] sm:$0xff]
        %v276 = vld [vmem:[%s198 + $0x150] sm:$0xff]
        %v277 = vld [vmem:[%s198 + $0x158] sm:$0xff]
        %v278 = vld [vmem:[%s198 + $0x160] sm:$0xff]
        %v279 = vld [vmem:[%s198 + $0x168] sm:$0xff]
        %v280 = vld [vmem:[%s198 + $0x170] sm:$0xff]
        %v281 = vld [vmem:[%s198 + $0x178] sm:$0xff]
        %v282 = vld [vmem:[%s198 + $0x180] sm:$0xff]
        %v283 = vld [vmem:[%s198 + $0x188] sm:$0xff]
        %v284 = vld [vmem:[%s198 + $0x190] sm:$0xff]
        %v285 = vld [vmem:[%s198 + $0x198] sm:$0xff]
        %v286 = vld [vmem:[%s198 + $0x1a0] sm:$0xff]
        %v287 = vld [vmem:[%s198 + $0x1a8] sm:$0xff]
        %v288 = vld [vmem:[%s198 + $0x1b0] sm:$0xff]
        %v289 = vld [vmem:[%s198 + $0x1b8] sm:$0xff]
        %v290 = vld [vmem:[%s198 + $0x1c0] sm:$0xff]
        %v291 = vld [vmem:[%s198 + $0x1c8] sm:$0xff]
        %v292 = vld [vmem:[%s198 + $0x1d0] sm:$0xff]
        %v293 = vld [vmem:[%s198 + $0x1d8] sm:$0xff]
        %v294 = vld [vmem:[%s198 + $0x1e0] sm:$0xff]
        %v295 = vld [vmem:[%s198 + $0x1e8] sm:$0xff]
        %v296 = vld [vmem:[%s198 + $0x1f0] sm:$0xff]
        %v297 = vld [vmem:[%s198 + $0x1f8] sm:$0xff]
        %v298 = vld [vmem:[%s198 + $0x200] sm:$0xff]
        %v299 = vld [vmem:[%s198 + $0x208] sm:$0xff]
        %v300 = vld [vmem:[%s198 + $0x210] sm:$0xff]
        %v301 = vld [vmem:[%s198 + $0x218] sm:$0xff]
        %v302 = vld [vmem:[%s198 + $0x220] sm:$0xff]
        %v303 = vld [vmem:[%s198 + $0x228] sm:$0xff]
        %v304 = vld [vmem:[%s198 + $0x230] sm:$0xff]
        %v305 = vld [vmem:[%s198 + $0x238] sm:$0xff]
        %v306 = vld [vmem:[%s198 + $0x240] sm:$0xff]
        %v307 = vld [vmem:[%s198 + $0x248] sm:$0xff]
        %v308 = vld [vmem:[%s198 + $0x250] sm:$0xff]
        %v309 = vld [vmem:[%s198 + $0x258] sm:$0xff]
        %v310 = vld [vmem:[%s198 + $0x260] sm:$0xff]
        %v311 = vld [vmem:[%s198 + $0x268] sm:$0xff]
        %v312 = vld [vmem:[%s198 + $0x270] sm:$0xff]
        %v313 = vld [vmem:[%s198 + $0x278] sm:$0xff]
        %v314 = vld [vmem:[%s198 + $0x280] sm:$0xff]
        %v315 = vld [vmem:[%s198 + $0x288] sm:$0xff]
        %v316 = vld [vmem:[%s198 + $0x290] sm:$0xff]
        %v317 = vld [vmem:[%s198 + $0x298] sm:$0xff]
        %v318 = vld [vmem:[%s198 + $0x2a0] sm:$0xff]
        %v319 = vld [vmem:[%s198 + $0x2a8] sm:$0xff]
        %v320 = vld [vmem:[%s198 + $0x2b0] sm:$0xff]
        %v321 = vld [vmem:[%s198 + $0x2b8] sm:$0xff]
        %v322 = vld [vmem:[%s198 + $0x2c0] sm:$0xff]
        %v323 = vld [vmem:[%s198 + $0x2c8] sm:$0xff]
        %v324 = vld [vmem:[%s198 + $0x2d0] sm:$0xff]
        %v325 = vld [vmem:[%s198 + $0x2d8] sm:$0xff]
        %v326 = vld [vmem:[%s198 + $0x2e0] sm:$0xff]
        %v327 = vld [vmem:[%s198 + $0x2e8] sm:$0xff]
        %v328 = vld [vmem:[%s198 + $0x2f0] sm:$0xff]
        %v329 = vld [vmem:[%s198 + $0x2f8] sm:$0xff]
        %v330 = vld [vmem:[%s202] sm:$0x3f]
        %v332 = vlaneseq
        %v333 = vshrl.u32 %v332, 7
        %v334 = vsub.s32 0, %v333
        %v335 = vrot.slane %v330, %v334
        %v336 = vlaneseq
        %v337 = vshrl.u32 %v336, 7
        %v338 = vsub.s32 1, %v337
        %v339 = vrot.slane %v330, %v338
        %v340 = vlaneseq
        %v341 = vshrl.u32 %v340, 7
        %v342 = vsub.s32 2, %v341
        %v343 = vrot.slane %v330, %v342
        %v344 = vlaneseq
        %v345 = vshrl.u32 %v344, 7
        %v346 = vsub.s32 3, %v345
        %v347 = vrot.slane %v330, %v346
        %v348 = vlaneseq
        %v349 = vshrl.u32 %v348, 7
        %v350 = vsub.s32 4, %v349
        %v351 = vrot.slane %v330, %v350
        %v352 = vlaneseq
        %v353 = vshrl.u32 %v352, 7
        %v354 = vsub.s32 5, %v353
        %v355 = vrot.slane %v330, %v354
        %v458 = vunpack.c.l.b16 %v234
        %v459 = vunpack.c.h.b16 %v234
        %v460 = vunpack.c.l.b16 %v235
        %v461 = vunpack.c.h.b16 %v235
        %v462 = vunpack.c.l.b16 %v236
        %v463 = vunpack.c.h.b16 %v236
        %v464 = vunpack.c.l.b16 %v237
        %v465 = vunpack.c.h.b16 %v237
        %v466 = vunpack.c.l.b16 %v238
        %v467 = vunpack.c.h.b16 %v238
        %v468 = vunpack.c.l.b16 %v239
        %v469 = vunpack.c.h.b16 %v239
        %v470 = vunpack.c.l.b16 %v240
        %v471 = vunpack.c.h.b16 %v240
        %v472 = vunpack.c.l.b16 %v241
        %v473 = vunpack.c.h.b16 %v241
        %v474 = vunpack.c.l.b16 %v242
        %v475 = vunpack.c.h.b16 %v242
        %v476 = vunpack.c.l.b16 %v243
        %v477 = vunpack.c.h.b16 %v243
        %v478 = vunpack.c.l.b16 %v244
        %v479 = vunpack.c.h.b16 %v244
        %v480 = vunpack.c.l.b16 %v245
        %v481 = vunpack.c.h.b16 %v245
        %v482 = vunpack.c.l.b16 %v246
        %v483 = vunpack.c.h.b16 %v246
        %v484 = vunpack.c.l.b16 %v247
        %v485 = vunpack.c.h.b16 %v247
        %v486 = vunpack.c.l.b16 %v248
        %v487 = vunpack.c.h.b16 %v248
        %v488 = vunpack.c.l.b16 %v249
        %v489 = vunpack.c.h.b16 %v249
        %v490 = vunpack.c.l.b16 %v250
        %v491 = vunpack.c.h.b16 %v250
        %v492 = vunpack.c.l.b16 %v251
        %v493 = vunpack.c.h.b16 %v251
        %v494 = vunpack.c.l.b16 %v252
        %v495 = vunpack.c.h.b16 %v252
        %v496 = vunpack.c.l.b16 %v253
        %v497 = vunpack.c.h.b16 %v253
        %v498 = vunpack.c.l.b16 %v254
        %v499 = vunpack.c.h.b16 %v254
        %v500 = vunpack.c.l.b16 %v255
        %v501 = vunpack.c.h.b16 %v255
        %v502 = vunpack.c.l.b16 %v256
        %v503 = vunpack.c.h.b16 %v256
        %v504 = vunpack.c.l.b16 %v257
        %v505 = vunpack.c.h.b16 %v257
        %v506 = vunpack.c.l.b16 %v258
        %v507 = vunpack.c.h.b16 %v258
        %v508 = vunpack.c.l.b16 %v259
        %v509 = vunpack.c.h.b16 %v259
        %v510 = vunpack.c.l.b16 %v260
        %v511 = vunpack.c.h.b16 %v260
        %v512 = vunpack.c.l.b16 %v261
        %v513 = vunpack.c.h.b16 %v261
        %v514 = vunpack.c.l.b16 %v262
        %v515 = vunpack.c.h.b16 %v262
        %v516 = vunpack.c.l.b16 %v263
        %v517 = vunpack.c.h.b16 %v263
        %v518 = vunpack.c.l.b16 %v264
        %v519 = vunpack.c.h.b16 %v264
        %v520 = vunpack.c.l.b16 %v265
        %v521 = vunpack.c.h.b16 %v265
        %v522 = vunpack.c.l.b16 %v266
        %v523 = vunpack.c.h.b16 %v266
        %v524 = vunpack.c.l.b16 %v267
        %v525 = vunpack.c.h.b16 %v267
        %v526 = vunpack.c.l.b16 %v268
        %v527 = vunpack.c.h.b16 %v268
        %v528 = vunpack.c.l.b16 %v269
        %v529 = vunpack.c.h.b16 %v269
        %v530 = vunpack.c.l.b16 %v270
        %v531 = vunpack.c.h.b16 %v270
        %v532 = vunpack.c.l.b16 %v271
        %v533 = vunpack.c.h.b16 %v271
        %v534 = vunpack.c.l.b16 %v272
        %v535 = vunpack.c.h.b16 %v272
        %v536 = vunpack.c.l.b16 %v273
        %v537 = vunpack.c.h.b16 %v273
        %v538 = vunpack.c.l.b16 %v274
        %v539 = vunpack.c.h.b16 %v274
        %v540 = vunpack.c.l.b16 %v275
        %v541 = vunpack.c.h.b16 %v275
        %v542 = vunpack.c.l.b16 %v276
        %v543 = vunpack.c.h.b16 %v276
        %v544 = vunpack.c.l.b16 %v277
        %v545 = vunpack.c.h.b16 %v277
        %v546 = vunpack.c.l.b16 %v278
        %v547 = vunpack.c.h.b16 %v278
        %v548 = vunpack.c.l.b16 %v279
        %v549 = vunpack.c.h.b16 %v279
        %v550 = vunpack.c.l.b16 %v280
        %v551 = vunpack.c.h.b16 %v280
        %v552 = vunpack.c.l.b16 %v281
        %v553 = vunpack.c.h.b16 %v281
        %v554 = vunpack.c.l.b16 %v282
        %v555 = vunpack.c.h.b16 %v282
        %v556 = vunpack.c.l.b16 %v283
        %v557 = vunpack.c.h.b16 %v283
        %v558 = vunpack.c.l.b16 %v284
        %v559 = vunpack.c.h.b16 %v284
        %v560 = vunpack.c.l.b16 %v285
        %v561 = vunpack.c.h.b16 %v285
        %v562 = vunpack.c.l.b16 %v286
        %v563 = vunpack.c.h.b16 %v286
        %v564 = vunpack.c.l.b16 %v287
        %v565 = vunpack.c.h.b16 %v287
        %v566 = vunpack.c.l.b16 %v288
        %v567 = vunpack.c.h.b16 %v288
        %v568 = vunpack.c.l.b16 %v289
        %v569 = vunpack.c.h.b16 %v289
        %v570 = vunpack.c.l.b16 %v290
        %v571 = vunpack.c.h.b16 %v290
        %v572 = vunpack.c.l.b16 %v291
        %v573 = vunpack.c.h.b16 %v291
        %v574 = vunpack.c.l.b16 %v292
        %v575 = vunpack.c.h.b16 %v292
        %v576 = vunpack.c.l.b16 %v293
        %v577 = vunpack.c.h.b16 %v293
        %v578 = vunpack.c.l.b16 %v294
        %v579 = vunpack.c.h.b16 %v294
        %v580 = vunpack.c.l.b16 %v295
        %v581 = vunpack.c.h.b16 %v295
        %v582 = vunpack.c.l.b16 %v296
        %v583 = vunpack.c.h.b16 %v296
        %v584 = vunpack.c.l.b16 %v297
        %v585 = vunpack.c.h.b16 %v297
        %v586 = vunpack.c.l.b16 %v298
        %v587 = vunpack.c.h.b16 %v298
        %v588 = vunpack.c.l.b16 %v299
        %v589 = vunpack.c.h.b16 %v299
        %v590 = vunpack.c.l.b16 %v300
        %v591 = vunpack.c.h.b16 %v300
        %v592 = vunpack.c.l.b16 %v301
        %v593 = vunpack.c.h.b16 %v301
        %v594 = vunpack.c.l.b16 %v302
        %v595 = vunpack.c.h.b16 %v302
        %v596 = vunpack.c.l.b16 %v303
        %v597 = vunpack.c.h.b16 %v303
        %v598 = vunpack.c.l.b16 %v304
        %v599 = vunpack.c.h.b16 %v304
        %v600 = vunpack.c.l.b16 %v305
        %v601 = vunpack.c.h.b16 %v305
        %v602 = vunpack.c.l.b16 %v306
        %v603 = vunpack.c.h.b16 %v306
        %v604 = vunpack.c.l.b16 %v307
        %v605 = vunpack.c.h.b16 %v307
        %v606 = vunpack.c.l.b16 %v308
        %v607 = vunpack.c.h.b16 %v308
        %v608 = vunpack.c.l.b16 %v309
        %v609 = vunpack.c.h.b16 %v309
        %v610 = vunpack.c.l.b16 %v310
        %v611 = vunpack.c.h.b16 %v310
        %v612 = vunpack.c.l.b16 %v311
        %v613 = vunpack.c.h.b16 %v311
        %v614 = vunpack.c.l.b16 %v312
        %v615 = vunpack.c.h.b16 %v312
        %v616 = vunpack.c.l.b16 %v313
        %v617 = vunpack.c.h.b16 %v313
        %v618 = vunpack.c.l.b16 %v314
        %v619 = vunpack.c.h.b16 %v314
        %v620 = vunpack.c.l.b16 %v315
        %v621 = vunpack.c.h.b16 %v315
        %v622 = vunpack.c.l.b16 %v316
        %v623 = vunpack.c.h.b16 %v316
        %v624 = vunpack.c.l.b16 %v317
        %v625 = vunpack.c.h.b16 %v317
        %v626 = vunpack.c.l.b16 %v318
        %v627 = vunpack.c.h.b16 %v318
        %v628 = vunpack.c.l.b16 %v319
        %v629 = vunpack.c.h.b16 %v319
        %v630 = vunpack.c.l.b16 %v320
        %v631 = vunpack.c.h.b16 %v320
        %v632 = vunpack.c.l.b16 %v321
        %v633 = vunpack.c.h.b16 %v321
        %v634 = vunpack.c.l.b16 %v322
        %v635 = vunpack.c.h.b16 %v322
        %v636 = vunpack.c.l.b16 %v323
        %v637 = vunpack.c.h.b16 %v323
        %v638 = vunpack.c.l.b16 %v324
        %v639 = vunpack.c.h.b16 %v324
        %v640 = vunpack.c.l.b16 %v325
        %v641 = vunpack.c.h.b16 %v325
        %v642 = vunpack.c.l.b16 %v326
        %v643 = vunpack.c.h.b16 %v326
        %v644 = vunpack.c.l.b16 %v327
        %v645 = vunpack.c.h.b16 %v327
        %v646 = vunpack.c.l.b16 %v328
        %v647 = vunpack.c.h.b16 %v328
        %v648 = vunpack.c.l.b16 %v329
        %v649 = vunpack.c.h.b16 %v329
        %v650 = vpack.c.b16 %v464, %v458
        %v651 = vpack.c.b16 %v465, %v459
        %v652 = vpack.c.b16 %v466, %v460
        %v653 = vpack.c.b16 %v467, %v461
        %v654 = vpack.c.b16 %v468, %v462
        %v655 = vpack.c.b16 %v469, %v463
        %v656 = vpack.c.b16 %v476, %v470
        %v657 = vpack.c.b16 %v477, %v471
        %v658 = vpack.c.b16 %v478, %v472
        %v659 = vpack.c.b16 %v479, %v473
        %v660 = vpack.c.b16 %v480, %v474
        %v661 = vpack.c.b16 %v481, %v475
        %v662 = vpack.c.b16 %v488, %v482
        %v663 = vpack.c.b16 %v489, %v483
        %v664 = vpack.c.b16 %v490, %v484
        %v665 = vpack.c.b16 %v491, %v485
        %v666 = vpack.c.b16 %v492, %v486
        %v667 = vpack.c.b16 %v493, %v487
        %v668 = vpack.c.b16 %v500, %v494
        %v669 = vpack.c.b16 %v501, %v495
        %v670 = vpack.c.b16 %v502, %v496
        %v671 = vpack.c.b16 %v503, %v497
        %v672 = vpack.c.b16 %v504, %v498
        %v673 = vpack.c.b16 %v505, %v499
        %v674 = vpack.c.b16 %v512, %v506
        %v675 = vpack.c.b16 %v513, %v507
        %v676 = vpack.c.b16 %v514, %v508
        %v677 = vpack.c.b16 %v515, %v509
        %v678 = vpack.c.b16 %v516, %v510
        %v679 = vpack.c.b16 %v517, %v511
        %v680 = vpack.c.b16 %v524, %v518
        %v681 = vpack.c.b16 %v525, %v519
        %v682 = vpack.c.b16 %v526, %v520
        %v683 = vpack.c.b16 %v527, %v521
        %v684 = vpack.c.b16 %v528, %v522
        %v685 = vpack.c.b16 %v529, %v523
        %v686 = vpack.c.b16 %v536, %v530
        %v687 = vpack.c.b16 %v537, %v531
        %v688 = vpack.c.b16 %v538, %v532
        %v689 = vpack.c.b16 %v539, %v533
        %v690 = vpack.c.b16 %v540, %v534
        %v691 = vpack.c.b16 %v541, %v535
        %v692 = vpack.c.b16 %v548, %v542
        %v693 = vpack.c.b16 %v549, %v543
        %v694 = vpack.c.b16 %v550, %v544
        %v695 = vpack.c.b16 %v551, %v545
        %v696 = vpack.c.b16 %v552, %v546
        %v697 = vpack.c.b16 %v553, %v547
        %v698 = vpack.c.b16 %v560, %v554
        %v699 = vpack.c.b16 %v561, %v555
        %v700 = vpack.c.b16 %v562, %v556
        %v701 = vpack.c.b16 %v563, %v557
        %v702 = vpack.c.b16 %v564, %v558
        %v703 = vpack.c.b16 %v565, %v559
        %v704 = vpack.c.b16 %v572, %v566
        %v705 = vpack.c.b16 %v573, %v567
        %v706 = vpack.c.b16 %v574, %v568
        %v707 = vpack.c.b16 %v575, %v569
        %v708 = vpack.c.b16 %v576, %v570
        %v709 = vpack.c.b16 %v577, %v571
        %v710 = vpack.c.b16 %v584, %v578
        %v711 = vpack.c.b16 %v585, %v579
        %v712 = vpack.c.b16 %v586, %v580
        %v713 = vpack.c.b16 %v587, %v581
        %v714 = vpack.c.b16 %v588, %v582
        %v715 = vpack.c.b16 %v589, %v583
        %v716 = vpack.c.b16 %v596, %v590
        %v717 = vpack.c.b16 %v597, %v591
        %v718 = vpack.c.b16 %v598, %v592
        %v719 = vpack.c.b16 %v599, %v593
        %v720 = vpack.c.b16 %v600, %v594
        %v721 = vpack.c.b16 %v601, %v595
        %v722 = vpack.c.b16 %v608, %v602
        %v723 = vpack.c.b16 %v609, %v603
        %v724 = vpack.c.b16 %v610, %v604
        %v725 = vpack.c.b16 %v611, %v605
        %v726 = vpack.c.b16 %v612, %v606
        %v727 = vpack.c.b16 %v613, %v607
        %v728 = vpack.c.b16 %v620, %v614
        %v729 = vpack.c.b16 %v621, %v615
        %v730 = vpack.c.b16 %v622, %v616
        %v731 = vpack.c.b16 %v623, %v617
        %v732 = vpack.c.b16 %v624, %v618
        %v733 = vpack.c.b16 %v625, %v619
        %v734 = vpack.c.b16 %v632, %v626
        %v735 = vpack.c.b16 %v633, %v627
        %v736 = vpack.c.b16 %v634, %v628
        %v737 = vpack.c.b16 %v635, %v629
        %v738 = vpack.c.b16 %v636, %v630
        %v739 = vpack.c.b16 %v637, %v631
        %v740 = vpack.c.b16 %v644, %v638
        %v741 = vpack.c.b16 %v645, %v639
        %v742 = vpack.c.b16 %v646, %v640
        %v743 = vpack.c.b16 %v647, %v641
        %v744 = vpack.c.b16 %v648, %v642
        %v745 = vpack.c.b16 %v649, %v643
        %842 = vmatprep.subr.bf16.mxu0 %v693
        %843 = vmatpush1.bf16.msra.mxu0 %v692
        %844 = vmatprep.subr.bf16.mxu0 %v687
        %845 = vmatpush1.bf16.msra.mxu0 %v686
        %846 = vmatprep.subr.bf16.mxu0 %v681
        %847 = vmatpush1.bf16.msra.mxu0 %v680
        %848 = vmatprep.subr.bf16.mxu0 %v675
        %849 = vmatpush1.bf16.msra.mxu0 %v674
        %850 = vmatprep.subr.bf16.mxu0 %v669
        %851 = vmatpush1.bf16.msra.mxu0 %v668
        %852 = vmatprep.subr.bf16.mxu0 %v663
        %853 = vmatpush1.bf16.msra.mxu0 %v662
        %854 = vmatprep.subr.bf16.mxu0 %v657
        %855 = vmatpush1.bf16.msra.mxu0 %v656
        %856 = vmatprep.subr.bf16.mxu0 %v651
        %857 = vmatpush1.bf16.msra.mxu0 %v650
        %858 = vmatprep.subr.bf16.mxu0 %v741
        %859 = vmatpush2.bf16.msra.mxu0 %v740
        %860 = vmatprep.subr.bf16.mxu0 %v735
        %861 = vmatpush2.bf16.msra.mxu0 %v734
        %862 = vmatprep.subr.bf16.mxu0 %v729
        %863 = vmatpush2.bf16.msra.mxu0 %v728
        %864 = vmatprep.subr.bf16.mxu0 %v723
        %865 = vmatpush2.bf16.msra.mxu0 %v722
        %866 = vmatprep.subr.bf16.mxu0 %v717
        %867 = vmatpush2.bf16.msra.mxu0 %v716
        %868 = vmatprep.subr.bf16.mxu0 %v711
        %869 = vmatpush2.bf16.msra.mxu0 %v710
        %870 = vmatprep.subr.bf16.mxu0 %v705
        %871 = vmatpush2.bf16.msra.mxu0 %v704
        %872 = vmatprep.subr.bf16.mxu0 %v699
        %873 = vmatpush2.bf16.msra.mxu0 %v698
        %874 = vmatprep.mubr.bf16.mxu0 %v233
        %875 = vmatmul.mubr.bf16.gmra.mxu0 %v232
        %v876 = vpop.f32.mrf.mxu0
        %v877 = vadd.f32 %v335, %v876
        %v878 = vpop.f32.mrf.mxu0
        %v879 = vadd.f32 %v339, %v878
        %v880 = vpop.f32.mrf.mxu0
        %v881 = vpop.f32.mrf.mxu0
        %882 = vdwg.mxu0
        %883 = vmatprep.subr.bf16.mxu0 %v695
        %884 = vmatpush1.bf16.msra.mxu0 %v694
        %885 = vmatprep.subr.bf16.mxu0 %v689
        %886 = vmatpush1.bf16.msra.mxu0 %v688
        %887 = vmatprep.subr.bf16.mxu0 %v683
        %888 = vmatpush1.bf16.msra.mxu0 %v682
        %889 = vmatprep.subr.bf16.mxu0 %v677
        %890 = vmatpush1.bf16.msra.mxu0 %v676
        %891 = vmatprep.subr.bf16.mxu0 %v671
        %892 = vmatpush1.bf16.msra.mxu0 %v670
        %893 = vmatprep.subr.bf16.mxu0 %v665
        %894 = vmatpush1.bf16.msra.mxu0 %v664
        %895 = vmatprep.subr.bf16.mxu0 %v659
        %896 = vmatpush1.bf16.msra.mxu0 %v658
        %897 = vmatprep.subr.bf16.mxu0 %v653
        %898 = vmatpush1.bf16.msra.mxu0 %v652
        %899 = vmatprep.subr.bf16.mxu0 %v743
        %900 = vmatpush2.bf16.msra.mxu0 %v742
        %901 = vmatprep.subr.bf16.mxu0 %v737
        %902 = vmatpush2.bf16.msra.mxu0 %v736
        %903 = vmatprep.subr.bf16.mxu0 %v731
        %904 = vmatpush2.bf16.msra.mxu0 %v730
        %905 = vmatprep.subr.bf16.mxu0 %v725
        %906 = vmatpush2.bf16.msra.mxu0 %v724
        %907 = vmatprep.subr.bf16.mxu0 %v719
        %908 = vmatpush2.bf16.msra.mxu0 %v718
        %909 = vmatprep.subr.bf16.mxu0 %v713
        %910 = vmatpush2.bf16.msra.mxu0 %v712
        %911 = vmatprep.subr.bf16.mxu0 %v707
        %912 = vmatpush2.bf16.msra.mxu0 %v706
        %913 = vmatprep.subr.bf16.mxu0 %v701
        %914 = vmatpush2.bf16.msra.mxu0 %v700
        %915 = vmatprep.mubr.bf16.mxu0 %v233
        %916 = vmatmul.mubr.bf16.gmra.mxu0 %v232
        %v917 = vpop.f32.mrf.mxu0
        %v918 = vadd.f32 %v343, %v917
        %v919 = vpop.f32.mrf.mxu0
        %v920 = vadd.f32 %v347, %v919
        %v921 = vpop.f32.mrf.mxu0
        %v922 = vpop.f32.mrf.mxu0
        %923 = vdwg.mxu0
        %924 = vmatprep.subr.bf16.mxu0 %v697
        %925 = vmatpush1.bf16.msra.mxu0 %v696
        %926 = vmatprep.subr.bf16.mxu0 %v691
        %927 = vmatpush1.bf16.msra.mxu0 %v690
        %928 = vmatprep.subr.bf16.mxu0 %v685
        %929 = vmatpush1.bf16.msra.mxu0 %v684
        %930 = vmatprep.subr.bf16.mxu0 %v679
        %931 = vmatpush1.bf16.msra.mxu0 %v678
        %932 = vmatprep.subr.bf16.mxu0 %v673
        %933 = vmatpush1.bf16.msra.mxu0 %v672
        %934 = vmatprep.subr.bf16.mxu0 %v667
        %935 = vmatpush1.bf16.msra.mxu0 %v666
        %936 = vmatprep.subr.bf16.mxu0 %v661
        %937 = vmatpush1.bf16.msra.mxu0 %v660
        %938 = vmatprep.subr.bf16.mxu0 %v655
        %939 = vmatpush1.bf16.msra.mxu0 %v654
        %940 = vmatprep.subr.bf16.mxu0 %v745
        %941 = vmatpush2.bf16.msra.mxu0 %v744
        %942 = vmatprep.subr.bf16.mxu0 %v739
        %943 = vmatpush2.bf16.msra.mxu0 %v738
        %944 = vmatprep.subr.bf16.mxu0 %v733
        %945 = vmatpush2.bf16.msra.mxu0 %v732
        %946 = vmatprep.subr.bf16.mxu0 %v727
        %947 = vmatpush2.bf16.msra.mxu0 %v726
        %948 = vmatprep.subr.bf16.mxu0 %v721
        %949 = vmatpush2.bf16.msra.mxu0 %v720
        %950 = vmatprep.subr.bf16.mxu0 %v715
        %951 = vmatpush2.bf16.msra.mxu0 %v714
        %952 = vmatprep.subr.bf16.mxu0 %v709
        %953 = vmatpush2.bf16.msra.mxu0 %v708
        %954 = vmatprep.subr.bf16.mxu0 %v703
        %955 = vmatpush2.bf16.msra.mxu0 %v702
        %956 = vmatprep.mubr.bf16.mxu0 %v233
        %957 = vmatmul.mubr.bf16.gmra.mxu0 %v232
        %v958 = vpop.f32.mrf.mxu0
        %v959 = vadd.f32 %v351, %v958
        %v960 = vpop.f32.mrf.mxu0
        %v961 = vadd.f32 %v355, %v960
        %v962 = vpop.f32.mrf.mxu0
        %v963 = vpop.f32.mrf.mxu0
        %964 = vdwg.mxu0
        %v967 = vcombine.low %v877, %v879
        %v969 = vunpack.c.l.s4 1983009808
        %v970 = vunpack.c.0.s8 %v969
        %v971 = vlaneseq
        %v972 = vshrl.u32 %v971, 7
        %v973 = vsub.s32 %v970, %v972
        %v974 = vrot.slane %v967, %v973
        %v976 = vadd.f32 %v219, %v974
        %v977 = vxor.u32 %v976, 2147483648
        %v978 = vmul.f32 %v977, 1.442695
        %v979 = vpow.pop %v978
        %v980 = vadd.f32 %v979, 1.0
        %v981 = vrcp.pop %v980
        %v982 = vmul.f32 1.0, %v981
        %v984 = vrot.slane %v219, 4
        %v988 = vcombine.low %v918, %v920
        %v990 = vunpack.c.l.s4 1983009808
        %v991 = vunpack.c.0.s8 %v990
        %v992 = vlaneseq
        %v993 = vshrl.u32 %v992, 7
        %v994 = vsub.s32 %v991, %v993
        %v995 = vrot.slane %v988, %v994
        %v997 = vadd.f32 %v984, %v995
        %v998 = vxor.u32 %v997, 2147483648
        %v999 = vmul.f32 %v998, 1.442695
        %v1000 = vpow.pop %v999
        %v1001 = vadd.f32 %v1000, 1.0
        %v1002 = vrcp.pop %v1001
        %v1003 = vmul.f32 1.0, %v1002
        %v1006 = vcombine.low %v959, %v961
        %v1008 = vunpack.c.l.s4 1983009808
        %v1009 = vunpack.c.0.s8 %v1008
        %v1010 = vlaneseq
        %v1011 = vshrl.u32 %v1010, 7
        %v1012 = vsub.s32 %v1009, %v1011
        %v1013 = vrot.slane %v1006, %v1012
        %v1015 = vmul.f32 %v982, %v1013
        %v1016 = vadd.f32 %v220, %v1015
        %v1017 = vtanh.pop %v1016
        %v1018 = vsub.f32 1.0, %v1003
        %v1019 = vmul.f32 %v1018, %v1017
        %v1020 = vmul.f32 %v1003, %v215
        %v1021 = vadd.f32 %v1019, %v1020
        %1022 = vst [vmem:[#allocation2] sm:$0xf] %v1021
        %s1023 = smul.u32 %s210, 2
        %s1024 = smul.addr %s1023, 2
        %s1025 = scalar_lea.vmem %s207, %s1024
        %1026 = vst [vmem:[%s1025] sm:$0xf] %v1021
      $region37: #{lipnet_forward.14} parent=31 // loop_footer
        %s214 = sadd.s32 1, %s210
      $region38: #{lipnet_forward.14} parent=31 // loop_footer_branch
        %209 = sbr.rel target = $region34
      $region39: #{lipnet_forward.14} parent=31 // loop_exit
        _
      %p1027 = scmp.lt.s32.totalorder %s14, 1
      %s1028 = scalar_select %p1027, %s14, 1
      %s1029 = smul.addr %s1028, 16
      %s1030 = smul.addr %s1029, 2
      %s1031 = scalar_lea.vmem %s3, %s1030
      // Predicated region
      $region40: #{lipnet_forward.14} parent=31 // pred_check
        %p1032 = pneg %p110
      $region41: #{lipnet_forward.14} parent=31 // pred_check_branch
        %1034 = sbr.rel (%p1032) target = $region43
      $region42: #{lipnet_forward.14} parent=31 // pred_region
        _
      $region43: #{lipnet_forward.14} parent=31 // pred_fallthru
        _
    $region32: #{lipnet_forward.14} parent=5 // pred_fallthru
      _
    %p1035 = scmp.le.s32.totalorder 2, %s9
    // Predicated region
    $region44: #{lipnet_forward.14} parent=5 // pred_check
      %p1036 = pneg %p1035
    $region45: #{lipnet_forward.14} parent=5 // pred_check_branch
      %1038 = sbr.rel (%p1036) target = $region47
    $region46: #{lipnet_forward.14} parent=5 // pred_region
      %s1039 = ssub.s32 %s9, 2
      // Predicated region
      $region48: #{lipnet_forward.14} parent=46 // pred_check
        %p1040 = pneg %p116
      $region49: #{lipnet_forward.14} parent=46 // pred_check_branch
        %1042 = sbr.rel (%p1040) target = $region51
      $region50: #{lipnet_forward.14} parent=46 // pred_region
        %p1043 = scmp.lt.s32.totalorder %s15, 1
        %s1044 = scalar_select %p1043, %s15, 1
        %s1045 = smul.addr %s1044, 16
        %s1046 = smul.addr %s1045, 2
        %s1047 = scalar_lea.vmem %s3, %s1046
      $region51: #{lipnet_forward.14} parent=46 // pred_fallthru
        _
    $region47: #{lipnet_forward.14} parent=5 // pred_fallthru
      _
  $region6: #{lipnet_forward.14} parent=0 // loop_footer
    %s13 = sadd.s32 1, %s9
  $region7: #{lipnet_forward.14} parent=0 // loop_footer_branch
    %8 = sbr.rel target = $region3
  $region8: #{lipnet_forward.14} parent=0 // loop_exit
    _

// kernel: lipnet_forward.15
$region0: #{lipnet_forward.15}
  #allocation0 [shape = 'u32[]', space=smem, size = 0x4, offset = 0x4, fixed_abs, tag = 'smem constant byte address 0x4 - core index']
  #allocation1 [shape = 'u32[144,128]{1,0:T(1,128)}', space=vmem, size = 0x12000, scoped, tag = 'internal scratch']
  %s0 = inlined_call_operand.vmem [shape: bf16[16,512], index: 0, kind: input, shape index: {}]
  %s1 = inlined_call_operand.vmem [shape: bf16[512,1536], index: 1, kind: input, shape index: {}]
  %s2 = inlined_call_operand.vmem [shape: f32[1,1536], index: 2, kind: input, shape index: {}]
  %s3 = inlined_call_operand.vmem [shape: f32[16,1536], index: 3, kind: output, shape index: {}]
  %s4 = sld [smem:[#allocation0]]
  $region95: #{lipnet_forward.15} parent=0
    _
  %s6 = ssub.s32 1, %s4
  %s7 = scalar_select 0, %s6, %s4
  $region1: #{lipnet_forward.15} parent=0
    #allocation2 [shape = 'u8[1048576]{0}', space=vmem, size = 0x100000, scoped, tag = 'input window, operand 1']
    #allocation3 [shape = 'u8[65536]{0}', space=vmem, size = 0x10000, scoped, tag = 'output window, operand 0']
    loop: start=0, step=1, limit=5
    $region2: #{lipnet_forward.15} parent=1 // loop_pre_header
      _
    $region3: #{lipnet_forward.15} parent=1 // loop_header
      %s9 = sphi 0, %s13
      %p10 = scmp.ge.s32.totalorder %s9, 5
      %s16 = sphi 0, %s35
      %s17 = sphi 0, %s31
      %s18 = sphi 0, %s27
      %s19 = sphi 0, %s16
      %s20 = sphi 0, %s17
      %s21 = sphi 0, %s18
      %s22 = sphi 0, %s19
      %s23 = sphi 0, %s20
      %s24 = sphi 0, %s21
      %s40 = sphi 0, %s42
      %s43 = sphi 0, %s40
      %s44 = sphi 0, %s43
      %s60 = sphi 0, %s44
      %s68 = sphi 0, %s70
      %s71 = sphi 0, %s68
      %s72 = sphi 0, %s71
      %s88 = sphi 0, %s72
      %s94 = sphi 0, %s96
      %s97 = sphi 0, %s94
      %s98 = sphi 0, %s97
      %s114 = sphi 0, %s98
      %s122 = sphi 0, %s124
      %s125 = sphi 0, %s122
      %s126 = sphi 0, %s125
      %s142 = sphi 0, %s126
    $region4: #{lipnet_forward.15} parent=1 // loop_header_branch
      %12 = sbr.rel (%p10) target = $region8
    $region5: #{lipnet_forward.15} parent=1 // loop_body
      %s14 = ssub.s32 %s9, 1
      %s15 = ssub.s32 %s9, 2
      %s25 = sadd.s32 1, %s18
      %p26 = scmp.ge.s32.totalorder %s25, 1
      %s27 = scalar_select %p26, 0, %s25
      %s28 = sadd.s32 1, %s17
      %s29 = scalar_select %p26, %s28, %s17
      %p30 = scmp.ge.s32.totalorder %s29, 3
      %s31 = scalar_select %p30, 0, %s29
      %s32 = sadd.s32 1, %s16
      %s33 = scalar_select %p30, %s32, %s16
      %p34 = scmp.ge.s32.totalorder %s33, 1
      %s35 = scalar_select %p34, 0, %s33
      %s36 = ssub.s32 %s16, %s35
      %s37 = ssub.s32 %s18, %s27
      %s38 = sor.u32 %s36, %s37
      %p39 = scmp.eq.s32.totalorder %s38, 0
      %s41 = sadd.s32 %s40, 1
      %s42 = scalar_select %p39, %s40, %s41
      %p45 = pneg %p39
      %p46 = scmp.eq.s32.totalorder %s9, 2
      %p47 = por %p45, %p46
      %p48 = scmp.ne.s32.totalorder %s40, %s43
      %p49 = scmp.eq.s32.totalorder %s9, 0
      %p50 = por %p48, %p49
      %p51 = scmp.ne.s32.totalorder %s40, %s43
      %p52 = scmp.eq.s32.totalorder %s14, 2
      %p53 = por %p51, %p52
      %p54 = scmp.ne.s32.totalorder %s43, %s44
      %p55 = scmp.eq.s32.totalorder %s14, 0
      %p56 = por %p54, %p55
      %p57 = scmp.ne.s32.totalorder %s43, %s44
      %p58 = scmp.eq.s32.totalorder %s15, 2
      %p59 = por %p57, %p58
      %p61 = scmp.ne.s32.totalorder %s44, %s60
      %p62 = scmp.eq.s32.totalorder %s15, 0
      %p63 = por %p61, %p62
      %s64 = ssub.s32 %s18, %s27
      %s65 = ssub.s32 %s17, %s31
      %s66 = sor.u32 %s64, %s65
      %p67 = scmp.eq.s32.totalorder %s66, 0
      %s69 = sadd.s32 %s68, 1
      %s70 = scalar_select %p67, %s68, %s69
      %p73 = pneg %p67
      %p74 = scmp.eq.s32.totalorder %s9, 2
      %p75 = por %p73, %p74
      %p76 = scmp.ne.s32.totalorder %s68, %s71
      %p77 = scmp.eq.s32.totalorder %s9, 0
      %p78 = por %p76, %p77
      %p79 = scmp.ne.s32.totalorder %s68, %s71
      %p80 = scmp.eq.s32.totalorder %s14, 2
      %p81 = por %p79, %p80
      %p82 = scmp.ne.s32.totalorder %s71, %s72
      %p83 = scmp.eq.s32.totalorder %s14, 0
      %p84 = por %p82, %p83
      %p85 = scmp.ne.s32.totalorder %s71, %s72
      %p86 = scmp.eq.s32.totalorder %s15, 2
      %p87 = por %p85, %p86
      %p89 = scmp.ne.s32.totalorder %s72, %s88
      %p90 = scmp.eq.s32.totalorder %s15, 0
      %p91 = por %p89, %p90
      %s92 = ssub.s32 %s17, %s31
      %p93 = scmp.eq.s32.totalorder %s92, 0
      %s95 = sadd.s32 %s94, 1
      %s96 = scalar_select %p93, %s94, %s95
      %p99 = pneg %p93
      %p100 = scmp.eq.s32.totalorder %s9, 2
      %p101 = por %p99, %p100
      %p102 = scmp.ne.s32.totalorder %s94, %s97
      %p103 = scmp.eq.s32.totalorder %s9, 0
      %p104 = por %p102, %p103
      %p105 = scmp.ne.s32.totalorder %s94, %s97
      %p106 = scmp.eq.s32.totalorder %s14, 2
      %p107 = por %p105, %p106
      %p108 = scmp.ne.s32.totalorder %s97, %s98
      %p109 = scmp.eq.s32.totalorder %s14, 0
      %p110 = por %p108, %p109
      %p111 = scmp.ne.s32.totalorder %s97, %s98
      %p112 = scmp.eq.s32.totalorder %s15, 2
      %p113 = por %p111, %p112
      %p115 = scmp.ne.s32.totalorder %s98, %s114
      %p116 = scmp.eq.s32.totalorder %s15, 0
      %p117 = por %p115, %p116
      %s118 = ssub.s32 %s16, %s35
      %s119 = ssub.s32 %s17, %s31
      %s120 = sor.u32 %s118, %s119
      %p121 = scmp.eq.s32.totalorder %s120, 0
      %s123 = sadd.s32 %s122, 1
      %s124 = scalar_select %p121, %s122, %s123
      %p127 = pneg %p121
      %p128 = scmp.eq.s32.totalorder %s9, 2
      %p129 = por %p127, %p128
      %p130 = scmp.ne.s32.totalorder %s122, %s125
      %p131 = scmp.eq.s32.totalorder %s9, 0
      %p132 = por %p130, %p131
      %p133 = scmp.ne.s32.totalorder %s122, %s125
      %p134 = scmp.eq.s32.totalorder %s14, 2
      %p135 = por %p133, %p134
      %p136 = scmp.ne.s32.totalorder %s125, %s126
      %p137 = scmp.eq.s32.totalorder %s14, 0
      %p138 = por %p136, %p137
      %p139 = scmp.ne.s32.totalorder %s125, %s126
      %p140 = scmp.eq.s32.totalorder %s15, 2
      %p141 = por %p139, %p140
      %p143 = scmp.ne.s32.totalorder %s126, %s142
      %p144 = scmp.eq.s32.totalorder %s15, 0
      %p145 = por %p143, %p144
      %p146 = scmp.le.s32.totalorder 1, %s9
      %p147 = scmp.lt.s32.totalorder %s9, 4
      %p148 = pnand %p146, %p147
      %p149 = pneg %p148
      // Predicated region
      $region9: #{lipnet_forward.15} parent=5 // pred_check
        _
      $region10: #{lipnet_forward.15} parent=5 // pred_check_branch
        %151 = sbr.rel (%p148) target = $region12
      $region11: #{lipnet_forward.15} parent=5 // pred_region
        %s152 = ssub.s32 %s9, 1
        // Predicated region
        $region13: #{lipnet_forward.15} parent=11 // pred_check
          %p153 = pneg %p56
        $region14: #{lipnet_forward.15} parent=11 // pred_check_branch
          %155 = sbr.rel (%p153) target = $region16
        $region15: #{lipnet_forward.15} parent=11 // pred_region
          %s156 = smul.u32 2, %s19
          %s157 = smul.u32 4, %s21
          %p158 = scmp.lt.s32.totalorder %s156, 1
          %s159 = scalar_select %p158, %s156, 1
          %p160 = scmp.lt.s32.totalorder %s157, 3
          %s161 = scalar_select %p160, %s157, 3
          %s162 = smul.addr %s159, 4
          %s163 = sadd.s32 %s161, %s162
          %s164 = smul.addr %s163, 4
          %s165 = scalar_lea.vmem %s0, %s164
          %s166 = smul.u32 2, %s19
          %s167 = smul.u32 4, %s21
        $region16: #{lipnet_forward.15} parent=11 // pred_fallthru
          _
      $region12: #{lipnet_forward.15} parent=5 // pred_fallthru
        _
      %p168 = scmp.lt.s32.totalorder %s9, 3
      // Predicated region
      $region17: #{lipnet_forward.15} parent=5 // pred_check
        %p169 = pneg %p168
      $region18: #{lipnet_forward.15} parent=5 // pred_check_branch
        %171 = sbr.rel (%p169) target = $region20
      $region19: #{lipnet_forward.15} parent=5 // pred_region
        // Predicated region
        $region21: #{lipnet_forward.15} parent=19 // pred_check
          %p172 = pneg %p78
        $region22: #{lipnet_forward.15} parent=19 // pred_check_branch
          %174 = sbr.rel (%p172) target = $region24
        $region23: #{lipnet_forward.15} parent=19 // pred_region
          %s175 = sand.u32 %s68, 1
          %s176 = sand.u32 %s68, 1
          %s177 = smul.addr %s176, 1024
          %s178 = scalar_lea.vmem [#allocation2], %s177
          %s179 = smul.u32 64, %s18
          %s180 = smul.u32 4, %s17
          %s181 = smul.addr %s179, 12
          %s182 = sadd.s32 %s180, %s181
          %s183 = smul.addr %s182, 4
          %s184 = scalar_lea.vmem %s1, %s183
          // Predicated region
          $region25: #{lipnet_forward.15} parent=23 // pred_check
            _
          $region26: #{lipnet_forward.15} parent=23 // pred_check_branch
            %186 = sbr.rel (0) target = $region28
          $region27: #{lipnet_forward.15} parent=23 // pred_region
            // Predicated region
            $region29: #{lipnet_forward.15} parent=27 // pred_check
              _
            $region30: #{lipnet_forward.15} parent=27 // pred_check_branch
              %188 = sbr.rel (0) target = $region32
            $region31: #{lipnet_forward.15} parent=27 // pred_region
              loop: start=0, step=1, limit=1
              $region33: #{lipnet_forward.15} parent=31 // loop_pre_header
                _
              $region34: #{lipnet_forward.15} parent=31 // loop_header
                %s190 = sphi 0, %s194
                %p191 = scmp.ge.s32.totalorder %s190, 1
                %s195 = sphi %s184, %s184
                %s196 = sphi %s178, %s178
              $region35: #{lipnet_forward.15} parent=31 // loop_header_branch
                %193 = sbr.rel (%p191) target = $region39
              $region36: #{lipnet_forward.15} parent=31 // loop_body
                %v197 = vld [vmem:[%s195] sm:$0xff]
                %198 = vst [vmem:[%s196] sm:$0xff] %v197
                %v199 = vld [vmem:[%s195 + $0x8] sm:$0xff]
                %200 = vst [vmem:[%s196 + $0x8] sm:$0xff] %v199
                %v201 = vld [vmem:[%s195 + $0x30] sm:$0xff]
                %202 = vst [vmem:[%s196 + $0x10] sm:$0xff] %v201
                %v203 = vld [vmem:[%s195 + $0x38] sm:$0xff]
                %204 = vst [vmem:[%s196 + $0x18] sm:$0xff] %v203
                %v205 = vld [vmem:[%s195 + $0x60] sm:$0xff]
                %206 = vst [vmem:[%s196 + $0x20] sm:$0xff] %v205
                %v207 = vld [vmem:[%s195 + $0x68] sm:$0xff]
                %208 = vst [vmem:[%s196 + $0x28] sm:$0xff] %v207
                %v209 = vld [vmem:[%s195 + $0x90] sm:$0xff]
                %210 = vst [vmem:[%s196 + $0x30] sm:$0xff] %v209
                %v211 = vld [vmem:[%s195 + $0x98] sm:$0xff]
                %212 = vst [vmem:[%s196 + $0x38] sm:$0xff] %v211
                %v213 = vld [vmem:[%s195 + $0xc0] sm:$0xff]
                %214 = vst [vmem:[%s196 + $0x40] sm:$0xff] %v213
                %v215 = vld [vmem:[%s195 + $0xc8] sm:$0xff]
                %216 = vst [vmem:[%s196 + $0x48] sm:$0xff] %v215
                %v217 = vld [vmem:[%s195 + $0xf0] sm:$0xff]
                %218 = vst [vmem:[%s196 + $0x50] sm:$0xff] %v217
                %v219 = vld [vmem:[%s195 + $0xf8] sm:$0xff]
                %220 = vst [vmem:[%s196 + $0x58] sm:$0xff] %v219
                %v221 = vld [vmem:[%s195 + $0x120] sm:$0xff]
                %222 = vst [vmem:[%s196 + $0x60] sm:$0xff] %v221
                %v223 = vld [vmem:[%s195 + $0x128] sm:$0xff]
                %224 = vst [vmem:[%s196 + $0x68] sm:$0xff] %v223
                %v225 = vld [vmem:[%s195 + $0x150] sm:$0xff]
                %226 = vst [vmem:[%s196 + $0x70] sm:$0xff] %v225
                %v227 = vld [vmem:[%s195 + $0x158] sm:$0xff]
                %228 = vst [vmem:[%s196 + $0x78] sm:$0xff] %v227
                %v229 = vld [vmem:[%s195 + $0x180] sm:$0xff]
                %230 = vst [vmem:[%s196 + $0x80] sm:$0xff] %v229
                %v231 = vld [vmem:[%s195 + $0x188] sm:$0xff]
                %232 = vst [vmem:[%s196 + $0x88] sm:$0xff] %v231
                %v233 = vld [vmem:[%s195 + $0x1b0] sm:$0xff]
                %234 = vst [vmem:[%s196 + $0x90] sm:$0xff] %v233
                %v235 = vld [vmem:[%s195 + $0x1b8] sm:$0xff]
                %236 = vst [vmem:[%s196 + $0x98] sm:$0xff] %v235
                %v237 = vld [vmem:[%s195 + $0x1e0] sm:$0xff]
                %238 = vst [vmem:[%s196 + $0xa0] sm:$0xff] %v237
                %v239 = vld [vmem:[%s195 + $0x1e8] sm:$0xff]
                %240 = vst [vmem:[%s196 + $0xa8] sm:$0xff] %v239
                %v241 = vld [vmem:[%s195 + $0x210] sm:$0xff]
                %242 = vst [vmem:[%s196 + $0xb0] sm:$0xff] %v241
                %v243 = vld [vmem:[%s195 + $0x218] sm:$0xff]
                %244 = vst [vmem:[%s196 + $0xb8] sm:$0xff] %v243
                %v245 = vld [vmem:[%s195 + $0x240] sm:$0xff]
                %246 = vst [vmem:[%s196 + $0xc0] sm:$0xff] %v245
                %v247 = vld [vmem:[%s195 + $0x248] sm:$0xff]
                %248 = vst [vmem:[%s196 + $0xc8] sm:$0xff] %v247
                %v249 = vld [vmem:[%s195 + $0x270] sm:$0xff]
                %250 = vst [vmem:[%s196 + $0xd0] sm:$0xff] %v249
                %v251 = vld [vmem:[%s195 + $0x278] sm:$0xff]
                %252 = vst [vmem:[%s196 + $0xd8] sm:$0xff] %v251
                %v253 = vld [vmem:[%s195 + $0x2a0] sm:$0xff]
                %254 = vst [vmem:[%s196 + $0xe0] sm:$0xff] %v253
                %v255 = vld [vmem:[%s195 + $0x2a8] sm:$0xff]
                %256 = vst [vmem:[%s196 + $0xe8] sm:$0xff] %v255
                %v257 = vld [vmem:[%s195 + $0x2d0] sm:$0xff]
                %258 = vst [vmem:[%s196 + $0xf0] sm:$0xff] %v257
                %v259 = vld [vmem:[%s195 + $0x2d8] sm:$0xff]
                %260 = vst [vmem:[%s196 + $0xf8] sm:$0xff] %v259
                %v261 = vld [vmem:[%s195 + $0x300] sm:$0xff]
                %262 = vst [vmem:[%s196 + $0x100] sm:$0xff] %v261
                %v263 = vld [vmem:[%s195 + $0x308] sm:$0xff]
                %264 = vst [vmem:[%s196 + $0x108] sm:$0xff] %v263
                %v265 = vld [vmem:[%s195 + $0x330] sm:$0xff]
                %266 = vst [vmem:[%s196 + $0x110] sm:$0xff] %v265
                %v267 = vld [vmem:[%s195 + $0x338] sm:$0xff]
                %268 = vst [vmem:[%s196 + $0x118] sm:$0xff] %v267
                %v269 = vld [vmem:[%s195 + $0x360] sm:$0xff]
                %270 = vst [vmem:[%s196 + $0x120] sm:$0xff] %v269
                %v271 = vld [vmem:[%s195 + $0x368] sm:$0xff]
                %272 = vst [vmem:[%s196 + $0x128] sm:$0xff] %v271
                %v273 = vld [vmem:[%s195 + $0x390] sm:$0xff]
                %274 = vst [vmem:[%s196 + $0x130] sm:$0xff] %v273
                %v275 = vld [vmem:[%s195 + $0x398] sm:$0xff]
                %276 = vst [vmem:[%s196 + $0x138] sm:$0xff] %v275
                %v277 = vld [vmem:[%s195 + $0x3c0] sm:$0xff]
                %278 = vst [vmem:[%s196 + $0x140] sm:$0xff] %v277
                %v279 = vld [vmem:[%s195 + $0x3c8] sm:$0xff]
                %280 = vst [vmem:[%s196 + $0x148] sm:$0xff] %v279
                %v281 = vld [vmem:[%s195 + $0x3f0] sm:$0xff]
                %282 = vst [vmem:[%s196 + $0x150] sm:$0xff] %v281
                %v283 = vld [vmem:[%s195 + $0x3f8] sm:$0xff]
                %284 = vst [vmem:[%s196 + $0x158] sm:$0xff] %v283
                %v285 = vld [vmem:[%s195 + $0x420] sm:$0xff]
                %286 = vst [vmem:[%s196 + $0x160] sm:$0xff] %v285
                %v287 = vld [vmem:[%s195 + $0x428] sm:$0xff]
                %288 = vst [vmem:[%s196 + $0x168] sm:$0xff] %v287
                %v289 = vld [vmem:[%s195 + $0x450] sm:$0xff]
                %290 = vst [vmem:[%s196 + $0x170] sm:$0xff] %v289
                %v291 = vld [vmem:[%s195 + $0x458] sm:$0xff]
                %292 = vst [vmem:[%s196 + $0x178] sm:$0xff] %v291
                %v293 = vld [vmem:[%s195 + $0x480] sm:$0xff]
                %294 = vst [vmem:[%s196 + $0x180] sm:$0xff] %v293
                %v295 = vld [vmem:[%s195 + $0x488] sm:$0xff]
                %296 = vst [vmem:[%s196 + $0x188] sm:$0xff] %v295
                %v297 = vld [vmem:[%s195 + $0x4b0] sm:$0xff]
                %298 = vst [vmem:[%s196 + $0x190] sm:$0xff] %v297
                %v299 = vld [vmem:[%s195 + $0x4b8] sm:$0xff]
                %300 = vst [vmem:[%s196 + $0x198] sm:$0xff] %v299
                %v301 = vld [vmem:[%s195 + $0x4e0] sm:$0xff]
                %302 = vst [vmem:[%s196 + $0x1a0] sm:$0xff] %v301
                %v303 = vld [vmem:[%s195 + $0x4e8] sm:$0xff]
                %304 = vst [vmem:[%s196 + $0x1a8] sm:$0xff] %v303
                %v305 = vld [vmem:[%s195 + $0x510] sm:$0xff]
                %306 = vst [vmem:[%s196 + $0x1b0] sm:$0xff] %v305
                %v307 = vld [vmem:[%s195 + $0x518] sm:$0xff]
                %308 = vst [vmem:[%s196 + $0x1b8] sm:$0xff] %v307
                %v309 = vld [vmem:[%s195 + $0x540] sm:$0xff]
                %310 = vst [vmem:[%s196 + $0x1c0] sm:$0xff] %v309
                %v311 = vld [vmem:[%s195 + $0x548] sm:$0xff]
                %312 = vst [vmem:[%s196 + $0x1c8] sm:$0xff] %v311
                %v313 = vld [vmem:[%s195 + $0x570] sm:$0xff]
                %314 = vst [vmem:[%s196 + $0x1d0] sm:$0xff] %v313
                %v315 = vld [vmem:[%s195 + $0x578] sm:$0xff]
                %316 = vst [vmem:[%s196 + $0x1d8] sm:$0xff] %v315
                %v317 = vld [vmem:[%s195 + $0x5a0] sm:$0xff]
                %318 = vst [vmem:[%s196 + $0x1e0] sm:$0xff] %v317
                %v319 = vld [vmem:[%s195 + $0x5a8] sm:$0xff]
                %320 = vst [vmem:[%s196 + $0x1e8] sm:$0xff] %v319
                %v321 = vld [vmem:[%s195 + $0x5d0] sm:$0xff]
                %322 = vst [vmem:[%s196 + $0x1f0] sm:$0xff] %v321
                %v323 = vld [vmem:[%s195 + $0x5d8] sm:$0xff]
                %324 = vst [vmem:[%s196 + $0x1f8] sm:$0xff] %v323
                %v325 = vld [vmem:[%s195 + $0x600] sm:$0xff]
                %326 = vst [vmem:[%s196 + $0x200] sm:$0xff] %v325
                %v327 = vld [vmem:[%s195 + $0x608] sm:$0xff]
                %328 = vst [vmem:[%s196 + $0x208] sm:$0xff] %v327
                %v329 = vld [vmem:[%s195 + $0x630] sm:$0xff]
                %330 = vst [vmem:[%s196 + $0x210] sm:$0xff] %v329
                %v331 = vld [vmem:[%s195 + $0x638] sm:$0xff]
                %332 = vst [vmem:[%s196 + $0x218] sm:$0xff] %v331
                %v333 = vld [vmem:[%s195 + $0x660] sm:$0xff]
                %334 = vst [vmem:[%s196 + $0x220] sm:$0xff] %v333
                %v335 = vld [vmem:[%s195 + $0x668] sm:$0xff]
                %336 = vst [vmem:[%s196 + $0x228] sm:$0xff] %v335
                %v337 = vld [vmem:[%s195 + $0x690] sm:$0xff]
                %338 = vst [vmem:[%s196 + $0x230] sm:$0xff] %v337
                %v339 = vld [vmem:[%s195 + $0x698] sm:$0xff]
                %340 = vst [vmem:[%s196 + $0x238] sm:$0xff] %v339
                %v341 = vld [vmem:[%s195 + $0x6c0] sm:$0xff]
                %342 = vst [vmem:[%s196 + $0x240] sm:$0xff] %v341
                %v343 = vld [vmem:[%s195 + $0x6c8] sm:$0xff]
                %344 = vst [vmem:[%s196 + $0x248] sm:$0xff] %v343
                %v345 = vld [vmem:[%s195 + $0x6f0] sm:$0xff]
                %346 = vst [vmem:[%s196 + $0x250] sm:$0xff] %v345
                %v347 = vld [vmem:[%s195 + $0x6f8] sm:$0xff]
                %348 = vst [vmem:[%s196 + $0x258] sm:$0xff] %v347
                %v349 = vld [vmem:[%s195 + $0x720] sm:$0xff]
                %350 = vst [vmem:[%s196 + $0x260] sm:$0xff] %v349
                %v351 = vld [vmem:[%s195 + $0x728] sm:$0xff]
                %352 = vst [vmem:[%s196 + $0x268] sm:$0xff] %v351
                %v353 = vld [vmem:[%s195 + $0x750] sm:$0xff]
                %354 = vst [vmem:[%s196 + $0x270] sm:$0xff] %v353
                %v355 = vld [vmem:[%s195 + $0x758] sm:$0xff]
                %356 = vst [vmem:[%s196 + $0x278] sm:$0xff] %v355
                %v357 = vld [vmem:[%s195 + $0x780] sm:$0xff]
                %358 = vst [vmem:[%s196 + $0x280] sm:$0xff] %v357
                %v359 = vld [vmem:[%s195 + $0x788] sm:$0xff]
                %360 = vst [vmem:[%s196 + $0x288] sm:$0xff] %v359
                %v361 = vld [vmem:[%s195 + $0x7b0] sm:$0xff]
                %362 = vst [vmem:[%s196 + $0x290] sm:$0xff] %v361
                %v363 = vld [vmem:[%s195 + $0x7b8] sm:$0xff]
                %364 = vst [vmem:[%s196 + $0x298] sm:$0xff] %v363
                %v365 = vld [vmem:[%s195 + $0x7e0] sm:$0xff]
                %366 = vst [vmem:[%s196 + $0x2a0] sm:$0xff] %v365
                %v367 = vld [vmem:[%s195 + $0x7e8] sm:$0xff]
                %368 = vst [vmem:[%s196 + $0x2a8] sm:$0xff] %v367
                %v369 = vld [vmem:[%s195 + $0x810] sm:$0xff]
                %370 = vst [vmem:[%s196 + $0x2b0] sm:$0xff] %v369
                %v371 = vld [vmem:[%s195 + $0x818] sm:$0xff]
                %372 = vst [vmem:[%s196 + $0x2b8] sm:$0xff] %v371
                %v373 = vld [vmem:[%s195 + $0x840] sm:$0xff]
                %374 = vst [vmem:[%s196 + $0x2c0] sm:$0xff] %v373
                %v375 = vld [vmem:[%s195 + $0x848] sm:$0xff]
                %376 = vst [vmem:[%s196 + $0x2c8] sm:$0xff] %v375
                %v377 = vld [vmem:[%s195 + $0x870] sm:$0xff]
                %378 = vst [vmem:[%s196 + $0x2d0] sm:$0xff] %v377
                %v379 = vld [vmem:[%s195 + $0x878] sm:$0xff]
                %380 = vst [vmem:[%s196 + $0x2d8] sm:$0xff] %v379
                %v381 = vld [vmem:[%s195 + $0x8a0] sm:$0xff]
                %382 = vst [vmem:[%s196 + $0x2e0] sm:$0xff] %v381
                %v383 = vld [vmem:[%s195 + $0x8a8] sm:$0xff]
                %384 = vst [vmem:[%s196 + $0x2e8] sm:$0xff] %v383
                %v385 = vld [vmem:[%s195 + $0x8d0] sm:$0xff]
                %386 = vst [vmem:[%s196 + $0x2f0] sm:$0xff] %v385
                %v387 = vld [vmem:[%s195 + $0x8d8] sm:$0xff]
                %388 = vst [vmem:[%s196 + $0x2f8] sm:$0xff] %v387
                %v389 = vld [vmem:[%s195 + $0x900] sm:$0xff]
                %390 = vst [vmem:[%s196 + $0x300] sm:$0xff] %v389
                %v391 = vld [vmem:[%s195 + $0x908] sm:$0xff]
                %392 = vst [vmem:[%s196 + $0x308] sm:$0xff] %v391
                %v393 = vld [vmem:[%s195 + $0x930] sm:$0xff]
                %394 = vst [vmem:[%s196 + $0x310] sm:$0xff] %v393
                %v395 = vld [vmem:[%s195 + $0x938] sm:$0xff]
                %396 = vst [vmem:[%s196 + $0x318] sm:$0xff] %v395
                %v397 = vld [vmem:[%s195 + $0x960] sm:$0xff]
                %398 = vst [vmem:[%s196 + $0x320] sm:$0xff] %v397
                %v399 = vld [vmem:[%s195 + $0x968] sm:$0xff]
                %400 = vst [vmem:[%s196 + $0x328] sm:$0xff] %v399
                %v401 = vld [vmem:[%s195 + $0x990] sm:$0xff]
                %402 = vst [vmem:[%s196 + $0x330] sm:$0xff] %v401
                %v403 = vld [vmem:[%s195 + $0x998] sm:$0xff]
                %404 = vst [vmem:[%s196 + $0x338] sm:$0xff] %v403
                %v405 = vld [vmem:[%s195 + $0x9c0] sm:$0xff]
                %406 = vst [vmem:[%s196 + $0x340] sm:$0xff] %v405
                %v407 = vld [vmem:[%s195 + $0x9c8] sm:$0xff]
                %408 = vst [vmem:[%s196 + $0x348] sm:$0xff] %v407
                %v409 = vld [vmem:[%s195 + $0x9f0] sm:$0xff]
                %410 = vst [vmem:[%s196 + $0x350] sm:$0xff] %v409
                %v411 = vld [vmem:[%s195 + $0x9f8] sm:$0xff]
                %412 = vst [vmem:[%s196 + $0x358] sm:$0xff] %v411
                %v413 = vld [vmem:[%s195 + $0xa20] sm:$0xff]
                %414 = vst [vmem:[%s196 + $0x360] sm:$0xff] %v413
                %v415 = vld [vmem:[%s195 + $0xa28] sm:$0xff]
                %416 = vst [vmem:[%s196 + $0x368] sm:$0xff] %v415
                %v417 = vld [vmem:[%s195 + $0xa50] sm:$0xff]
                %418 = vst [vmem:[%s196 + $0x370] sm:$0xff] %v417
                %v419 = vld [vmem:[%s195 + $0xa58] sm:$0xff]
                %420 = vst [vmem:[%s196 + $0x378] sm:$0xff] %v419
                %v421 = vld [vmem:[%s195 + $0xa80] sm:$0xff]
                %422 = vst [vmem:[%s196 + $0x380] sm:$0xff] %v421
                %v423 = vld [vmem:[%s195 + $0xa88] sm:$0xff]
                %424 = vst [vmem:[%s196 + $0x388] sm:$0xff] %v423
                %v425 = vld [vmem:[%s195 + $0xab0] sm:$0xff]
                %426 = vst [vmem:[%s196 + $0x390] sm:$0xff] %v425
                %v427 = vld [vmem:[%s195 + $0xab8] sm:$0xff]
                %428 = vst [vmem:[%s196 + $0x398] sm:$0xff] %v427
                %v429 = vld [vmem:[%s195 + $0xae0] sm:$0xff]
                %430 = vst [vmem:[%s196 + $0x3a0] sm:$0xff] %v429
                %v431 = vld [vmem:[%s195 + $0xae8] sm:$0xff]
                %432 = vst [vmem:[%s196 + $0x3a8] sm:$0xff] %v431
                %v433 = vld [vmem:[%s195 + $0xb10] sm:$0xff]
                %434 = vst [vmem:[%s196 + $0x3b0] sm:$0xff] %v433
                %v435 = vld [vmem:[%s195 + $0xb18] sm:$0xff]
                %436 = vst [vmem:[%s196 + $0x3b8] sm:$0xff] %v435
                %v437 = vld [vmem:[%s195 + $0xb40] sm:$0xff]
                %438 = vst [vmem:[%s196 + $0x3c0] sm:$0xff] %v437
                %v439 = vld [vmem:[%s195 + $0xb48] sm:$0xff]
                %440 = vst [vmem:[%s196 + $0x3c8] sm:$0xff] %v439
                %v441 = vld [vmem:[%s195 + $0xb70] sm:$0xff]
                %442 = vst [vmem:[%s196 + $0x3d0] sm:$0xff] %v441
                %v443 = vld [vmem:[%s195 + $0xb78] sm:$0xff]
                %444 = vst [vmem:[%s196 + $0x3d8] sm:$0xff] %v443
                %v445 = vld [vmem:[%s195 + $0xba0] sm:$0xff]
                %446 = vst [vmem:[%s196 + $0x3e0] sm:$0xff] %v445
                %v447 = vld [vmem:[%s195 + $0xba8] sm:$0xff]
                %448 = vst [vmem:[%s196 + $0x3e8] sm:$0xff] %v447
                %v449 = vld [vmem:[%s195 + $0xbd0] sm:$0xff]
                %450 = vst [vmem:[%s196 + $0x3f0] sm:$0xff] %v449
                %v451 = vld [vmem:[%s195 + $0xbd8] sm:$0xff]
                %452 = vst [vmem:[%s196 + $0x3f8] sm:$0xff] %v451
              $region37: #{lipnet_forward.15} parent=31 // loop_footer
                %s194 = sadd.s32 1, %s190
              $region38: #{lipnet_forward.15} parent=31 // loop_footer_branch
                %189 = sbr.rel target = $region34
              $region39: #{lipnet_forward.15} parent=31 // loop_exit
                _
            $region32: #{lipnet_forward.15} parent=27 // pred_fallthru
              _
            // Predicated region
            $region40: #{lipnet_forward.15} parent=27 // pred_check
              _
            $region41: #{lipnet_forward.15} parent=27 // pred_check_branch
              %454 = sbr.rel target = $region43
            $region42: #{lipnet_forward.15} parent=27 // pred_region
              _
            $region43: #{lipnet_forward.15} parent=27 // pred_fallthru
              _
          $region28: #{lipnet_forward.15} parent=23 // pred_fallthru
            _
          %455 = vnop
        $region24: #{lipnet_forward.15} parent=19 // pred_fallthru
          _
        // Predicated region
        $region44: #{lipnet_forward.15} parent=19 // pred_check
          %p456 = pneg %p104
        $region45: #{lipnet_forward.15} parent=19 // pred_check_branch
          %458 = sbr.rel (%p456) target = $region47
        $region46: #{lipnet_forward.15} parent=19 // pred_region
          %s459 = smul.u32 4, %s17
          %p460 = scmp.lt.s32.totalorder %s459, 11
          %s461 = scalar_select %p460, %s459, 11
          %s462 = scalar_lea.vmem %s2, %s461
          %s463 = smul.u32 4, %s17
        $region47: #{lipnet_forward.15} parent=19 // pred_fallthru
          _
      $region20: #{lipnet_forward.15} parent=5 // pred_fallthru
        _
      %p464 = scmp.le.s32.totalorder 1, %s9
      %p465 = scmp.lt.s32.totalorder %s9, 4
      %p466 = pnand %p464, %p465
      %p467 = pneg %p466
      // Predicated region
      $region48: #{lipnet_forward.15} parent=5 // pred_check
        _
      $region49: #{lipnet_forward.15} parent=5 // pred_check_branch
        %469 = sbr.rel (%p466) target = $region51
      $region50: #{lipnet_forward.15} parent=5 // pred_region
        %s470 = ssub.s32 %s9, 1
        %s471 = sand.u32 %s71, 1
        %s472 = sand.u32 %s71, 1
        %s473 = smul.addr %s472, 1024
        %s474 = scalar_lea.vmem [#allocation2], %s473
        // Predicated region
        $region52: #{lipnet_forward.15} parent=50 // pred_check
          %p475 = pneg %p84
        $region53: #{lipnet_forward.15} parent=50 // pred_check_branch
          %477 = sbr.rel (%p475) target = $region55
        $region54: #{lipnet_forward.15} parent=50 // pred_region
          _
        $region55: #{lipnet_forward.15} parent=50 // pred_fallthru
          _
        %s478 = smul.u32 2, %s19
        %s479 = smul.u32 4, %s21
        %p480 = scmp.lt.s32.totalorder %s478, 1
        %s481 = scalar_select %p480, %s478, 1
        %p482 = scmp.lt.s32.totalorder %s479, 3
        %s483 = scalar_select %p482, %s479, 3
        %s484 = smul.addr %s481, 4
        %s485 = sadd.s32 %s483, %s484
        %s486 = smul.addr %s485, 4
        %s487 = scalar_lea.vmem %s0, %s486
        %p488 = pneg %p56
        %p489 = pneg %p53
        %s490 = sand.u32 %s71, 1
        %s491 = sand.u32 %s71, 1
        %s492 = smul.addr %s491, 1024
        %s493 = scalar_lea.vmem [#allocation2], %s492
        %p494 = pneg %p84
        %p495 = pneg %p81
        %s496 = smul.u32 4, %s20
        %p497 = scmp.lt.s32.totalorder %s496, 11
        %s498 = scalar_select %p497, %s496, 11
        %s499 = scalar_lea.vmem %s2, %s498
        %p500 = pneg %p110
        %p501 = pneg %p107
        %p502 = pneg %p138
        %p503 = pneg %p135
        %s504 = sand.u32 %s125, 1
        %s505 = sand.u32 %s125, 1
        %s506 = smul.addr %s505, 64
        %s507 = scalar_lea.vmem [#allocation3], %s506
        %s508 = smul.u32 2, %s19
        %s509 = smul.u32 4, %s21
        %p510 = scmp.lt.s32.totalorder %s508, 1
        %s511 = scalar_select %p510, %s508, 1
        %p512 = scmp.lt.s32.totalorder %s509, 3
        %s513 = scalar_select %p512, %s509, 3
        %s514 = smul.addr %s511, 4
        %s515 = sadd.s32 %s513, %s514
        %s516 = smul.addr %s515, 4
        %s517 = scalar_lea.vmem %s0, %s516
        %s518 = smul.u32 2, %s19
        %s519 = smul.u32 4, %s21
        %s520 = smul.u32 64, %s21
        %s521 = smul.u32 4, %s20
        %s522 = smul.u32 4, %s20
        %p523 = scmp.lt.s32.totalorder %s522, 11
        %s524 = scalar_select %p523, %s522, 11
        %s525 = scalar_lea.vmem %s2, %s524
        %s526 = smul.u32 4, %s20
        %s527 = smul.u32 2, %s19
        %s528 = smul.u32 4, %s20
        %p529 = scmp.eq.s32.totalorder %s21, 0
        // Predicated region
        $region56: #{lipnet_forward.15} parent=50 // pred_check
          %p530 = pneg %p529
        $region57: #{lipnet_forward.15} parent=50 // pred_check_branch
          %532 = sbr.rel (%p530) target = $region59
        $region58: #{lipnet_forward.15} parent=50 // pred_region
          %533 = vst [vmem:[%s507] sm:$0xff] 0.0
          %534 = vst [vmem:[%s507 + $0x8] sm:$0xff] 0.0
          %535 = vst [vmem:[%s507 + $0x10] sm:$0xff] 0.0
          %536 = vst [vmem:[%s507 + $0x18] sm:$0xff] 0.0
          %537 = vst [vmem:[%s507 + $0x20] sm:$0xff] 0.0
          %538 = vst [vmem:[%s507 + $0x28] sm:$0xff] 0.0
          %539 = vst [vmem:[%s507 + $0x30] sm:$0xff] 0.0
          %540 = vst [vmem:[%s507 + $0x38] sm:$0xff] 0.0
        $region59: #{lipnet_forward.15} parent=50 // pred_fallthru
          _
        %v541 = vld [vmem:[%s507] sm:$0xff]
        %v542 = vld [vmem:[%s507 + $0x8] sm:$0xff]
        %v543 = vld [vmem:[%s507 + $0x10] sm:$0xff]
        %v544 = vld [vmem:[%s507 + $0x18] sm:$0xff]
        %v545 = vld [vmem:[%s507 + $0x20] sm:$0xff]
        %v546 = vld [vmem:[%s507 + $0x28] sm:$0xff]
        %v547 = vld [vmem:[%s507 + $0x30] sm:$0xff]
        %v548 = vld [vmem:[%s507 + $0x38] sm:$0xff]
        %v549 = vld [vmem:[%s517] sm:$0xff]
        %v550 = vld [vmem:[%s517 + $0x8] sm:$0xff]
        %v551 = vld [vmem:[%s517 + $0x10] sm:$0xff]
        %v552 = vld [vmem:[%s517 + $0x18] sm:$0xff]
        %v553 = vld [vmem:[%s474] sm:$0xff]
        %v554 = vld [vmem:[%s474 + $0x8] sm:$0xff]
        %v555 = vld [vmem:[%s474 + $0x10] sm:$0xff]
        %v556 = vld [vmem:[%s474 + $0x18] sm:$0xff]
        %v557 = vld [vmem:[%s474 + $0x20] sm:$0xff]
        %v558 = vld [vmem:[%s474 + $0x28] sm:$0xff]
        %v559 = vld [vmem:[%s474 + $0x30] sm:$0xff]
        %v560 = vld [vmem:[%s474 + $0x38] sm:$0xff]
        %v561 = vld [vmem:[%s474 + $0x40] sm:$0xff]
        %v562 = vld [vmem:[%s474 + $0x48] sm:$0xff]
        %v563 = vld [vmem:[%s474 + $0x50] sm:$0xff]
        %v564 = vld [vmem:[%s474 + $0x58] sm:$0xff]
        %v565 = vld [vmem:[%s474 + $0x60] sm:$0xff]
        %v566 = vld [vmem:[%s474 + $0x68] sm:$0xff]
        %v567 = vld [vmem:[%s474 + $0x70] sm:$0xff]
        %v568 = vld [vmem:[%s474 + $0x78] sm:$0xff]
        %v569 = vld [vmem:[%s474 + $0x80] sm:$0xff]
        %v570 = vld [vmem:[%s474 + $0x88] sm:$0xff]
        %v571 = vld [vmem:[%s474 + $0x90] sm:$0xff]
        %v572 = vld [vmem:[%s474 + $0x98] sm:$0xff]
        %v573 = vld [vmem:[%s474 + $0xa0] sm:$0xff]
        %v574 = vld [vmem:[%s474 + $0xa8] sm:$0xff]
        %v575 = vld [vmem:[%s474 + $0xb0] sm:$0xff]
        %v576 = vld [vmem:[%s474 + $0xb8] sm:$0xff]
        %v577 = vld [vmem:[%s474 + $0xc0] sm:$0xff]
        %v578 = vld [vmem:[%s474 + $0xc8] sm:$0xff]
        %v579 = vld [vmem:[%s474 + $0xd0] sm:$0xff]
        %v580 = vld [vmem:[%s474 + $0xd8] sm:$0xff]
        %v581 = vld [vmem:[%s474 + $0xe0] sm:$0xff]
        %v582 = vld [vmem:[%s474 + $0xe8] sm:$0xff]
        %v583 = vld [vmem:[%s474 + $0xf0] sm:$0xff]
        %v584 = vld [vmem:[%s474 + $0xf8] sm:$0xff]
        %v585 = vld [vmem:[%s474 + $0x100] sm:$0xff]
        %v586 = vld [vmem:[%s474 + $0x108] sm:$0xff]
        %v587 = vld [vmem:[%s474 + $0x110] sm:$0xff]
        %v588 = vld [vmem:[%s474 + $0x118] sm:$0xff]
        %v589 = vld [vmem:[%s474 + $0x120] sm:$0xff]
        %v590 = vld [vmem:[%s474 + $0x128] sm:$0xff]
        %v591 = vld [vmem:[%s474 + $0x130] sm:$0xff]
        %v592 = vld [vmem:[%s474 + $0x138] sm:$0xff]
        %v593 = vld [vmem:[%s474 + $0x140] sm:$0xff]
        %v594 = vld [vmem:[%s474 + $0x148] sm:$0xff]
        %v595 = vld [vmem:[%s474 + $0x150] sm:$0xff]
        %v596 = vld [vmem:[%s474 + $0x158] sm:$0xff]
        %v597 = vld [vmem:[%s474 + $0x160] sm:$0xff]
        %v598 = vld [vmem:[%s474 + $0x168] sm:$0xff]
        %v599 = vld [vmem:[%s474 + $0x170] sm:$0xff]
        %v600 = vld [vmem:[%s474 + $0x178] sm:$0xff]
        %v601 = vld [vmem:[%s474 + $0x180] sm:$0xff]
        %v602 = vld [vmem:[%s474 + $0x188] sm:$0xff]
        %v603 = vld [vmem:[%s474 + $0x190] sm:$0xff]
        %v604 = vld [vmem:[%s474 + $0x198] sm:$0xff]
        %v605 = vld [vmem:[%s474 + $0x1a0] sm:$0xff]
        %v606 = vld [vmem:[%s474 + $0x1a8] sm:$0xff]
        %v607 = vld [vmem:[%s474 + $0x1b0] sm:$0xff]
        %v608 = vld [vmem:[%s474 + $0x1b8] sm:$0xff]
        %v609 = vld [vmem:[%s474 + $0x1c0] sm:$0xff]
        %v610 = vld [vmem:[%s474 + $0x1c8] sm:$0xff]
        %v611 = vld [vmem:[%s474 + $0x1d0] sm:$0xff]
        %v612 = vld [vmem:[%s474 + $0x1d8] sm:$0xff]
        %v613 = vld [vmem:[%s474 + $0x1e0] sm:$0xff]
        %v614 = vld [vmem:[%s474 + $0x1e8] sm:$0xff]
        %v615 = vld [vmem:[%s474 + $0x1f0] sm:$0xff]
        %v616 = vld [vmem:[%s474 + $0x1f8] sm:$0xff]
        %v617 = vld [vmem:[%s474 + $0x200] sm:$0xff]
        %v618 = vld [vmem:[%s474 + $0x208] sm:$0xff]
        %v619 = vld [vmem:[%s474 + $0x210] sm:$0xff]
        %v620 = vld [vmem:[%s474 + $0x218] sm:$0xff]
        %v621 = vld [vmem:[%s474 + $0x220] sm:$0xff]
        %v622 = vld [vmem:[%s474 + $0x228] sm:$0xff]
        %v623 = vld [vmem:[%s474 + $0x230] sm:$0xff]
        %v624 = vld [vmem:[%s474 + $0x238] sm:$0xff]
        %v625 = vld [vmem:[%s474 + $0x240] sm:$0xff]
        %v626 = vld [vmem:[%s474 + $0x248] sm:$0xff]
        %v627 = vld [vmem:[%s474 + $0x250] sm:$0xff]
        %v628 = vld [vmem:[%s474 + $0x258] sm:$0xff]
        %v629 = vld [vmem:[%s474 + $0x260] sm:$0xff]
        %v630 = vld [vmem:[%s474 + $0x268] sm:$0xff]
        %v631 = vld [vmem:[%s474 + $0x270] sm:$0xff]
        %v632 = vld [vmem:[%s474 + $0x278] sm:$0xff]
        %v633 = vld [vmem:[%s474 + $0x280] sm:$0xff]
        %v634 = vld [vmem:[%s474 + $0x288] sm:$0xff]
        %v635 = vld [vmem:[%s474 + $0x290] sm:$0xff]
        %v636 = vld [vmem:[%s474 + $0x298] sm:$0xff]
        %v637 = vld [vmem:[%s474 + $0x2a0] sm:$0xff]
        %v638 = vld [vmem:[%s474 + $0x2a8] sm:$0xff]
        %v639 = vld [vmem:[%s474 + $0x2b0] sm:$0xff]
        %v640 = vld [vmem:[%s474 + $0x2b8] sm:$0xff]
        %v641 = vld [vmem:[%s474 + $0x2c0] sm:$0xff]
        %v642 = vld [vmem:[%s474 + $0x2c8] sm:$0xff]
        %v643 = vld [vmem:[%s474 + $0x2d0] sm:$0xff]
        %v644 = vld [vmem:[%s474 + $0x2d8] sm:$0xff]
        %v645 = vld [vmem:[%s474 + $0x2e0] sm:$0xff]
        %v646 = vld [vmem:[%s474 + $0x2e8] sm:$0xff]
        %v647 = vld [vmem:[%s474 + $0x2f0] sm:$0xff]
        %v648 = vld [vmem:[%s474 + $0x2f8] sm:$0xff]
        %v649 = vld [vmem:[%s474 + $0x300] sm:$0xff]
        %v650 = vld [vmem:[%s474 + $0x308] sm:$0xff]
        %v651 = vld [vmem:[%s474 + $0x310] sm:$0xff]
        %v652 = vld [vmem:[%s474 + $0x318] sm:$0xff]
        %v653 = vld [vmem:[%s474 + $0x320] sm:$0xff]
        %v654 = vld [vmem:[%s474 + $0x328] sm:$0xff]
        %v655 = vld [vmem:[%s474 + $0x330] sm:$0xff]
        %v656 = vld [vmem:[%s474 + $0x338] sm:$0xff]
        %v657 = vld [vmem:[%s474 + $0x340] sm:$0xff]
        %v658 = vld [vmem:[%s474 + $0x348] sm:$0xff]
        %v659 = vld [vmem:[%s474 + $0x350] sm:$0xff]
        %v660 = vld [vmem:[%s474 + $0x358] sm:$0xff]
        %v661 = vld [vmem:[%s474 + $0x360] sm:$0xff]
        %v662 = vld [vmem:[%s474 + $0x368] sm:$0xff]
        %v663 = vld [vmem:[%s474 + $0x370] sm:$0xff]
        %v664 = vld [vmem:[%s474 + $0x378] sm:$0xff]
        %v665 = vld [vmem:[%s474 + $0x380] sm:$0xff]
        %v666 = vld [vmem:[%s474 + $0x388] sm:$0xff]
        %v667 = vld [vmem:[%s474 + $0x390] sm:$0xff]
        %v668 = vld [vmem:[%s474 + $0x398] sm:$0xff]
        %v669 = vld [vmem:[%s474 + $0x3a0] sm:$0xff]
        %v670 = vld [vmem:[%s474 + $0x3a8] sm:$0xff]
        %v671 = vld [vmem:[%s474 + $0x3b0] sm:$0xff]
        %v672 = vld [vmem:[%s474 + $0x3b8] sm:$0xff]
        %v673 = vld [vmem:[%s474 + $0x3c0] sm:$0xff]
        %v674 = vld [vmem:[%s474 + $0x3c8] sm:$0xff]
        %v675 = vld [vmem:[%s474 + $0x3d0] sm:$0xff]
        %v676 = vld [vmem:[%s474 + $0x3d8] sm:$0xff]
        %v677 = vld [vmem:[%s474 + $0x3e0] sm:$0xff]
        %v678 = vld [vmem:[%s474 + $0x3e8] sm:$0xff]
        %v679 = vld [vmem:[%s474 + $0x3f0] sm:$0xff]
        %v680 = vld [vmem:[%s474 + $0x3f8] sm:$0xff]
        %v685 = vunpack.c.l.b16 %v549
        %v686 = vunpack.c.h.b16 %v549
        %v687 = vunpack.c.l.b16 %v550
        %v688 = vunpack.c.h.b16 %v550
        %v689 = vunpack.c.l.b16 %v551
        %v690 = vunpack.c.h.b16 %v551
        %v691 = vunpack.c.l.b16 %v552
        %v692 = vunpack.c.h.b16 %v552
        %v693 = vpack.c.b16 %v689, %v685
        %v694 = vpack.c.b16 %v690, %v686
        %v695 = vpack.c.b16 %v691, %v687
        %v696 = vpack.c.b16 %v692, %v688
        %v829 = vunpack.c.l.b16 %v553
        %v830 = vunpack.c.h.b16 %v553
        %v831 = vunpack.c.l.b16 %v554
        %v832 = vunpack.c.h.b16 %v554
        %v833 = vunpack.c.l.b16 %v555
        %v834 = vunpack.c.h.b16 %v555
        %v835 = vunpack.c.l.b16 %v556
        %v836 = vunpack.c.h.b16 %v556
        %v837 = vunpack.c.l.b16 %v557
        %v838 = vunpack.c.h.b16 %v557
        %v839 = vunpack.c.l.b16 %v558
        %v840 = vunpack.c.h.b16 %v558
        %v841 = vunpack.c.l.b16 %v559
        %v842 = vunpack.c.h.b16 %v559
        %v843 = vunpack.c.l.b16 %v560
        %v844 = vunpack.c.h.b16 %v560
        %v845 = vunpack.c.l.b16 %v561
        %v846 = vunpack.c.h.b16 %v561
        %v847 = vunpack.c.l.b16 %v562
        %v848 = vunpack.c.h.b16 %v562
        %v849 = vunpack.c.l.b16 %v563
        %v850 = vunpack.c.h.b16 %v563
        %v851 = vunpack.c.l.b16 %v564
        %v852 = vunpack.c.h.b16 %v564
        %v853 = vunpack.c.l.b16 %v565
        %v854 = vunpack.c.h.b16 %v565
        %v855 = vunpack.c.l.b16 %v566
        %v856 = vunpack.c.h.b16 %v566
        %v857 = vunpack.c.l.b16 %v567
        %v858 = vunpack.c.h.b16 %v567
        %v859 = vunpack.c.l.b16 %v568
        %v860 = vunpack.c.h.b16 %v568
        %v861 = vunpack.c.l.b16 %v569
        %v862 = vunpack.c.h.b16 %v569
        %v863 = vunpack.c.l.b16 %v570
        %v864 = vunpack.c.h.b16 %v570
        %v865 = vunpack.c.l.b16 %v571
        %v866 = vunpack.c.h.b16 %v571
        %v867 = vunpack.c.l.b16 %v572
        %v868 = vunpack.c.h.b16 %v572
        %v869 = vunpack.c.l.b16 %v573
        %v870 = vunpack.c.h.b16 %v573
        %v871 = vunpack.c.l.b16 %v574
        %v872 = vunpack.c.h.b16 %v574
        %v873 = vunpack.c.l.b16 %v575
        %v874 = vunpack.c.h.b16 %v575
        %v875 = vunpack.c.l.b16 %v576
        %v876 = vunpack.c.h.b16 %v576
        %v877 = vunpack.c.l.b16 %v577
        %v878 = vunpack.c.h.b16 %v577
        %v879 = vunpack.c.l.b16 %v578
        %v880 = vunpack.c.h.b16 %v578
        %v881 = vunpack.c.l.b16 %v579
        %v882 = vunpack.c.h.b16 %v579
        %v883 = vunpack.c.l.b16 %v580
        %v884 = vunpack.c.h.b16 %v580
        %v885 = vunpack.c.l.b16 %v581
        %v886 = vunpack.c.h.b16 %v581
        %v887 = vunpack.c.l.b16 %v582
        %v888 = vunpack.c.h.b16 %v582
        %v889 = vunpack.c.l.b16 %v583
        %v890 = vunpack.c.h.b16 %v583
        %v891 = vunpack.c.l.b16 %v584
        %v892 = vunpack.c.h.b16 %v584
        %v893 = vunpack.c.l.b16 %v585
        %v894 = vunpack.c.h.b16 %v585
        %v895 = vunpack.c.l.b16 %v586
        %v896 = vunpack.c.h.b16 %v586
        %v897 = vunpack.c.l.b16 %v587
        %v898 = vunpack.c.h.b16 %v587
        %v899 = vunpack.c.l.b16 %v588
        %v900 = vunpack.c.h.b16 %v588
        %v901 = vunpack.c.l.b16 %v589
        %v902 = vunpack.c.h.b16 %v589
        %v903 = vunpack.c.l.b16 %v590
        %v904 = vunpack.c.h.b16 %v590
        %v905 = vunpack.c.l.b16 %v591
        %v906 = vunpack.c.h.b16 %v591
        %v907 = vunpack.c.l.b16 %v592
        %v908 = vunpack.c.h.b16 %v592
        %v909 = vunpack.c.l.b16 %v593
        %v910 = vunpack.c.h.b16 %v593
        %v911 = vunpack.c.l.b16 %v594
        %v912 = vunpack.c.h.b16 %v594
        %v913 = vunpack.c.l.b16 %v595
        %v914 = vunpack.c.h.b16 %v595
        %v915 = vunpack.c.l.b16 %v596
        %v916 = vunpack.c.h.b16 %v596
        %v917 = vunpack.c.l.b16 %v597
        %v918 = vunpack.c.h.b16 %v597
        %v919 = vunpack.c.l.b16 %v598
        %v920 = vunpack.c.h.b16 %v598
        %v921 = vunpack.c.l.b16 %v599
        %v922 = vunpack.c.h.b16 %v599
        %v923 = vunpack.c.l.b16 %v600
        %v924 = vunpack.c.h.b16 %v600
        %v925 = vunpack.c.l.b16 %v601
        %v926 = vunpack.c.h.b16 %v601
        %v927 = vunpack.c.l.b16 %v602
        %v928 = vunpack.c.h.b16 %v602
        %v929 = vunpack.c.l.b16 %v603
        %v930 = vunpack.c.h.b16 %v603
        %v931 = vunpack.c.l.b16 %v604
        %v932 = vunpack.c.h.b16 %v604
        %v933 = vunpack.c.l.b16 %v605
        %v934 = vunpack.c.h.b16 %v605
        %v935 = vunpack.c.l.b16 %v606
        %v936 = vunpack.c.h.b16 %v606
        %v937 = vunpack.c.l.b16 %v607
        %v938 = vunpack.c.h.b16 %v607
        %v939 = vunpack.c.l.b16 %v608
        %v940 = vunpack.c.h.b16 %v608
        %v941 = vunpack.c.l.b16 %v609
        %v942 = vunpack.c.h.b16 %v609
        %v943 = vunpack.c.l.b16 %v610
        %v944 = vunpack.c.h.b16 %v610
        %v945 = vunpack.c.l.b16 %v611
        %v946 = vunpack.c.h.b16 %v611
        %v947 = vunpack.c.l.b16 %v612
        %v948 = vunpack.c.h.b16 %v612
        %v949 = vunpack.c.l.b16 %v613
        %v950 = vunpack.c.h.b16 %v613
        %v951 = vunpack.c.l.b16 %v614
        %v952 = vunpack.c.h.b16 %v614
        %v953 = vunpack.c.l.b16 %v615
        %v954 = vunpack.c.h.b16 %v615
        %v955 = vunpack.c.l.b16 %v616
        %v956 = vunpack.c.h.b16 %v616
        %v957 = vunpack.c.l.b16 %v617
        %v958 = vunpack.c.h.b16 %v617
        %v959 = vunpack.c.l.b16 %v618
        %v960 = vunpack.c.h.b16 %v618
        %v961 = vunpack.c.l.b16 %v619
        %v962 = vunpack.c.h.b16 %v619
        %v963 = vunpack.c.l.b16 %v620
        %v964 = vunpack.c.h.b16 %v620
        %v965 = vunpack.c.l.b16 %v621
        %v966 = vunpack.c.h.b16 %v621
        %v967 = vunpack.c.l.b16 %v622
        %v968 = vunpack.c.h.b16 %v622
        %v969 = vunpack.c.l.b16 %v623
        %v970 = vunpack.c.h.b16 %v623
        %v971 = vunpack.c.l.b16 %v624
        %v972 = vunpack.c.h.b16 %v624
        %v973 = vunpack.c.l.b16 %v625
        %v974 = vunpack.c.h.b16 %v625
        %v975 = vunpack.c.l.b16 %v626
        %v976 = vunpack.c.h.b16 %v626
        %v977 = vunpack.c.l.b16 %v627
        %v978 = vunpack.c.h.b16 %v627
        %v979 = vunpack.c.l.b16 %v628
        %v980 = vunpack.c.h.b16 %v628
        %v981 = vunpack.c.l.b16 %v629
        %v982 = vunpack.c.h.b16 %v629
        %v983 = vunpack.c.l.b16 %v630
        %v984 = vunpack.c.h.b16 %v630
        %v985 = vunpack.c.l.b16 %v631
        %v986 = vunpack.c.h.b16 %v631
        %v987 = vunpack.c.l.b16 %v632
        %v988 = vunpack.c.h.b16 %v632
        %v989 = vunpack.c.l.b16 %v633
        %v990 = vunpack.c.h.b16 %v633
        %v991 = vunpack.c.l.b16 %v634
        %v992 = vunpack.c.h.b16 %v634
        %v993 = vunpack.c.l.b16 %v635
        %v994 = vunpack.c.h.b16 %v635
        %v995 = vunpack.c.l.b16 %v636
        %v996 = vunpack.c.h.b16 %v636
        %v997 = vunpack.c.l.b16 %v637
        %v998 = vunpack.c.h.b16 %v637
        %v999 = vunpack.c.l.b16 %v638
        %v1000 = vunpack.c.h.b16 %v638
        %v1001 = vunpack.c.l.b16 %v639
        %v1002 = vunpack.c.h.b16 %v639
        %v1003 = vunpack.c.l.b16 %v640
        %v1004 = vunpack.c.h.b16 %v640
        %v1005 = vunpack.c.l.b16 %v641
        %v1006 = vunpack.c.h.b16 %v641
        %v1007 = vunpack.c.l.b16 %v642
        %v1008 = vunpack.c.h.b16 %v642
        %v1009 = vunpack.c.l.b16 %v643
        %v1010 = vunpack.c.h.b16 %v643
        %v1011 = vunpack.c.l.b16 %v644
        %v1012 = vunpack.c.h.b16 %v644
        %v1013 = vunpack.c.l.b16 %v645
        %v1014 = vunpack.c.h.b16 %v645
        %v1015 = vunpack.c.l.b16 %v646
        %v1016 = vunpack.c.h.b16 %v646
        %v1017 = vunpack.c.l.b16 %v647
        %v1018 = vunpack.c.h.b16 %v647
        %v1019 = vunpack.c.l.b16 %v648
        %v1020 = vunpack.c.h.b16 %v648
        %v1021 = vunpack.c.l.b16 %v649
        %v1022 = vunpack.c.h.b16 %v649
        %v1023 = vunpack.c.l.b16 %v650
        %v1024 = vunpack.c.h.b16 %v650
        %v1025 = vunpack.c.l.b16 %v651
        %v1026 = vunpack.c.h.b16 %v651
        %v1027 = vunpack.c.l.b16 %v652
        %v1028 = vunpack.c.h.b16 %v652
        %v1029 = vunpack.c.l.b16 %v653
        %v1030 = vunpack.c.h.b16 %v653
        %v1031 = vunpack.c.l.b16 %v654
        %v1032 = vunpack.c.h.b16 %v654
        %v1033 = vunpack.c.l.b16 %v655
        %v1034 = vunpack.c.h.b16 %v655
        %v1035 = vunpack.c.l.b16 %v656
        %v1036 = vunpack.c.h.b16 %v656
        %v1037 = vunpack.c.l.b16 %v657
        %v1038 = vunpack.c.h.b16 %v657
        %v1039 = vunpack.c.l.b16 %v658
        %v1040 = vunpack.c.h.b16 %v658
        %v1041 = vunpack.c.l.b16 %v659
        %v1042 = vunpack.c.h.b16 %v659
        %v1043 = vunpack.c.l.b16 %v660
        %v1044 = vunpack.c.h.b16 %v660
        %v1045 = vunpack.c.l.b16 %v661
        %v1046 = vunpack.c.h.b16 %v661
        %v1047 = vunpack.c.l.b16 %v662
        %v1048 = vunpack.c.h.b16 %v662
        %v1049 = vunpack.c.l.b16 %v663
        %v1050 = vunpack.c.h.b16 %v663
        %v1051 = vunpack.c.l.b16 %v664
        %v1052 = vunpack.c.h.b16 %v664
        %v1053 = vunpack.c.l.b16 %v665
        %v1054 = vunpack.c.h.b16 %v665
        %v1055 = vunpack.c.l.b16 %v666
        %v1056 = vunpack.c.h.b16 %v666
        %v1057 = vunpack.c.l.b16 %v667
        %v1058 = vunpack.c.h.b16 %v667
        %v1059 = vunpack.c.l.b16 %v668
        %v1060 = vunpack.c.h.b16 %v668
        %v1061 = vunpack.c.l.b16 %v669
        %v1062 = vunpack.c.h.b16 %v669
        %v1063 = vunpack.c.l.b16 %v670
        %v1064 = vunpack.c.h.b16 %v670
        %v1065 = vunpack.c.l.b16 %v671
        %v1066 = vunpack.c.h.b16 %v671
        %v1067 = vunpack.c.l.b16 %v672
        %v1068 = vunpack.c.h.b16 %v672
        %v1069 = vunpack.c.l.b16 %v673
        %v1070 = vunpack.c.h.b16 %v673
        %v1071 = vunpack.c.l.b16 %v674
        %v1072 = vunpack.c.h.b16 %v674
        %v1073 = vunpack.c.l.b16 %v675
        %v1074 = vunpack.c.h.b16 %v675
        %v1075 = vunpack.c.l.b16 %v676
        %v1076 = vunpack.c.h.b16 %v676
        %v1077 = vunpack.c.l.b16 %v677
        %v1078 = vunpack.c.h.b16 %v677
        %v1079 = vunpack.c.l.b16 %v678
        %v1080 = vunpack.c.h.b16 %v678
        %v1081 = vunpack.c.l.b16 %v679
        %v1082 = vunpack.c.h.b16 %v679
        %v1083 = vunpack.c.l.b16 %v680
        %v1084 = vunpack.c.h.b16 %v680
        %v1085 = vpack.c.b16 %v833, %v829
        %v1086 = vpack.c.b16 %v834, %v830
        %v1087 = vpack.c.b16 %v835, %v831
        %v1088 = vpack.c.b16 %v836, %v832
        %v1089 = vpack.c.b16 %v841, %v837
        %v1090 = vpack.c.b16 %v842, %v838
        %v1091 = vpack.c.b16 %v843, %v839
        %v1092 = vpack.c.b16 %v844, %v840
        %v1093 = vpack.c.b16 %v849, %v845
        %v1094 = vpack.c.b16 %v850, %v846
        %v1095 = vpack.c.b16 %v851, %v847
        %v1096 = vpack.c.b16 %v852, %v848
        %v1097 = vpack.c.b16 %v857, %v853
        %v1098 = vpack.c.b16 %v858, %v854
        %v1099 = vpack.c.b16 %v859, %v855
        %v1100 = vpack.c.b16 %v860, %v856
        %v1101 = vpack.c.b16 %v865, %v861
        %v1102 = vpack.c.b16 %v866, %v862
        %v1103 = vpack.c.b16 %v867, %v863
        %v1104 = vpack.c.b16 %v868, %v864
        %v1105 = vpack.c.b16 %v873, %v869
        %v1106 = vpack.c.b16 %v874, %v870
        %v1107 = vpack.c.b16 %v875, %v871
        %v1108 = vpack.c.b16 %v876, %v872
        %v1109 = vpack.c.b16 %v881, %v877
        %v1110 = vpack.c.b16 %v882, %v878
        %v1111 = vpack.c.b16 %v883, %v879
        %v1112 = vpack.c.b16 %v884, %v880
        %v1113 = vpack.c.b16 %v889, %v885
        %v1114 = vpack.c.b16 %v890, %v886
        %v1115 = vpack.c.b16 %v891, %v887
        %v1116 = vpack.c.b16 %v892, %v888
        %v1117 = vpack.c.b16 %v897, %v893
        %v1118 = vpack.c.b16 %v898, %v894
        %v1119 = vpack.c.b16 %v899, %v895
        %v1120 = vpack.c.b16 %v900, %v896
        %v1121 = vpack.c.b16 %v905, %v901
        %v1122 = vpack.c.b16 %v906, %v902
        %v1123 = vpack.c.b16 %v907, %v903
        %v1124 = vpack.c.b16 %v908, %v904
        %v1125 = vpack.c.b16 %v913, %v909
        %v1126 = vpack.c.b16 %v914, %v910
        %v1127 = vpack.c.b16 %v915, %v911
        %v1128 = vpack.c.b16 %v916, %v912
        %v1129 = vpack.c.b16 %v921, %v917
        %v1130 = vpack.c.b16 %v922, %v918
        %v1131 = vpack.c.b16 %v923, %v919
        %v1132 = vpack.c.b16 %v924, %v920
        %v1133 = vpack.c.b16 %v929, %v925
        %v1134 = vpack.c.b16 %v930, %v926
        %v1135 = vpack.c.b16 %v931, %v927
        %v1136 = vpack.c.b16 %v932, %v928
        %v1137 = vpack.c.b16 %v937, %v933
        %v1138 = vpack.c.b16 %v938, %v934
        %v1139 = vpack.c.b16 %v939, %v935
        %v1140 = vpack.c.b16 %v940, %v936
        %v1141 = vpack.c.b16 %v945, %v941
        %v1142 = vpack.c.b16 %v946, %v942
        %v1143 = vpack.c.b16 %v947, %v943
        %v1144 = vpack.c.b16 %v948, %v944
        %v1145 = vpack.c.b16 %v953, %v949
        %v1146 = vpack.c.b16 %v954, %v950
        %v1147 = vpack.c.b16 %v955, %v951
        %v1148 = vpack.c.b16 %v956, %v952
        %v1149 = vpack.c.b16 %v961, %v957
        %v1150 = vpack.c.b16 %v962, %v958
        %v1151 = vpack.c.b16 %v963, %v959
        %v1152 = vpack.c.b16 %v964, %v960
        %v1153 = vpack.c.b16 %v969, %v965
        %v1154 = vpack.c.b16 %v970, %v966
        %v1155 = vpack.c.b16 %v971, %v967
        %v1156 = vpack.c.b16 %v972, %v968
        %v1157 = vpack.c.b16 %v977, %v973
        %v1158 = vpack.c.b16 %v978, %v974
        %v1159 = vpack.c.b16 %v979, %v975
        %v1160 = vpack.c.b16 %v980, %v976
        %v1161 = vpack.c.b16 %v985, %v981
        %v1162 = vpack.c.b16 %v986, %v982
        %v1163 = vpack.c.b16 %v987, %v983
        %v1164 = vpack.c.b16 %v988, %v984
        %v1165 = vpack.c.b16 %v993, %v989
        %v1166 = vpack.c.b16 %v994, %v990
        %v1167 = vpack.c.b16 %v995, %v991
        %v1168 = vpack.c.b16 %v996, %v992
        %v1169 = vpack.c.b16 %v1001, %v997
        %v1170 = vpack.c.b16 %v1002, %v998
        %v1171 = vpack.c.b16 %v1003, %v999
        %v1172 = vpack.c.b16 %v1004, %v1000
        %v1173 = vpack.c.b16 %v1009, %v1005
        %v1174 = vpack.c.b16 %v1010, %v1006
        %v1175 = vpack.c.b16 %v1011, %v1007
        %v1176 = vpack.c.b16 %v1012, %v1008
        %v1177 = vpack.c.b16 %v1017, %v1013
        %v1178 = vpack.c.b16 %v1018, %v1014
        %v1179 = vpack.c.b16 %v1019, %v1015
        %v1180 = vpack.c.b16 %v1020, %v1016
        %v1181 = vpack.c.b16 %v1025, %v1021
        %v1182 = vpack.c.b16 %v1026, %v1022
        %v1183 = vpack.c.b16 %v1027, %v1023
        %v1184 = vpack.c.b16 %v1028, %v1024
        %v1185 = vpack.c.b16 %v1033, %v1029
        %v1186 = vpack.c.b16 %v1034, %v1030
        %v1187 = vpack.c.b16 %v1035, %v1031
        %v1188 = vpack.c.b16 %v1036, %v1032
        %v1189 = vpack.c.b16 %v1041, %v1037
        %v1190 = vpack.c.b16 %v1042, %v1038
        %v1191 = vpack.c.b16 %v1043, %v1039
        %v1192 = vpack.c.b16 %v1044, %v1040
        %v1193 = vpack.c.b16 %v1049, %v1045
        %v1194 = vpack.c.b16 %v1050, %v1046
        %v1195 = vpack.c.b16 %v1051, %v1047
        %v1196 = vpack.c.b16 %v1052, %v1048
        %v1197 = vpack.c.b16 %v1057, %v1053
        %v1198 = vpack.c.b16 %v1058, %v1054
        %v1199 = vpack.c.b16 %v1059, %v1055
        %v1200 = vpack.c.b16 %v1060, %v1056
        %v1201 = vpack.c.b16 %v1065, %v1061
        %v1202 = vpack.c.b16 %v1066, %v1062
        %v1203 = vpack.c.b16 %v1067, %v1063
        %v1204 = vpack.c.b16 %v1068, %v1064
        %v1205 = vpack.c.b16 %v1073, %v1069
        %v1206 = vpack.c.b16 %v1074, %v1070
        %v1207 = vpack.c.b16 %v1075, %v1071
        %v1208 = vpack.c.b16 %v1076, %v1072
        %v1209 = vpack.c.b16 %v1081, %v1077
        %v1210 = vpack.c.b16 %v1082, %v1078
        %v1211 = vpack.c.b16 %v1083, %v1079
        %v1212 = vpack.c.b16 %v1084, %v1080
        %1341 = vmatprep.subr.bf16.mxu0 %v1114
        %1342 = vmatpush1.bf16.msra.mxu0 %v1113
        %1343 = vmatprep.subr.bf16.mxu0 %v1110
        %1344 = vmatpush1.bf16.msra.mxu0 %v1109
        %1345 = vmatprep.subr.bf16.mxu0 %v1106
        %1346 = vmatpush1.bf16.msra.mxu0 %v1105
        %1347 = vmatprep.subr.bf16.mxu0 %v1102
        %1348 = vmatpush1.bf16.msra.mxu0 %v1101
        %1349 = vmatprep.subr.bf16.mxu0 %v1098
        %1350 = vmatpush1.bf16.msra.mxu0 %v1097
        %1351 = vmatprep.subr.bf16.mxu0 %v1094
        %1352 = vmatpush1.bf16.msra.mxu0 %v1093
        %1353 = vmatprep.subr.bf16.mxu0 %v1090
        %1354 = vmatpush1.bf16.msra.mxu0 %v1089
        %1355 = vmatprep.subr.bf16.mxu0 %v1086
        %1356 = vmatpush1.bf16.msra.mxu0 %v1085
        %1357 = vmatprep.subr.bf16.mxu0 %v1146
        %1358 = vmatpush2.bf16.msra.mxu0 %v1145
        %1359 = vmatprep.subr.bf16.mxu0 %v1142
        %1360 = vmatpush2.bf16.msra.mxu0 %v1141
        %1361 = vmatprep.subr.bf16.mxu0 %v1138
        %1362 = vmatpush2.bf16.msra.mxu0 %v1137
        %1363 = vmatprep.subr.bf16.mxu0 %v1134
        %1364 = vmatpush2.bf16.msra.mxu0 %v1133
        %1365 = vmatprep.subr.bf16.mxu0 %v1130
        %1366 = vmatpush2.bf16.msra.mxu0 %v1129
        %1367 = vmatprep.subr.bf16.mxu0 %v1126
        %1368 = vmatpush2.bf16.msra.mxu0 %v1125
        %1369 = vmatprep.subr.bf16.mxu0 %v1122
        %1370 = vmatpush2.bf16.msra.mxu0 %v1121
        %1371 = vmatprep.subr.bf16.mxu0 %v1118
        %1372 = vmatpush2.bf16.msra.mxu0 %v1117
        %1373 = vmatprep.mubr.bf16.mxu0 %v694
        %1374 = vmatmul.mubr.bf16.gmra.mxu0 %v693
        %v1375 = vpop.f32.mrf.mxu0
        %v1376 = vadd.f32 0.0, %v1375
        %v1377 = vpop.f32.mrf.mxu0
        %v1378 = vadd.f32 0.0, %v1377
        %v1379 = vpop.f32.mrf.mxu0
        %v1380 = vadd.f32 0.0, %v1379
        %v1381 = vpop.f32.mrf.mxu0
        %v1382 = vadd.f32 0.0, %v1381
        %1383 = vdwg.mxu0
        %1384 = vmatprep.subr.bf16.mxu0 %v1178
        %1385 = vmatpush1.bf16.msra.mxu0 %v1177
        %1386 = vmatprep.subr.bf16.mxu0 %v1174
        %1387 = vmatpush1.bf16.msra.mxu0 %v1173
        %1388 = vmatprep.subr.bf16.mxu0 %v1170
        %1389 = vmatpush1.bf16.msra.mxu0 %v1169
        %1390 = vmatprep.subr.bf16.mxu0 %v1166
        %1391 = vmatpush1.bf16.msra.mxu0 %v1165
        %1392 = vmatprep.subr.bf16.mxu0 %v1162
        %1393 = vmatpush1.bf16.msra.mxu0 %v1161
        %1394 = vmatprep.subr.bf16.mxu0 %v1158
        %1395 = vmatpush1.bf16.msra.mxu0 %v1157
        %1396 = vmatprep.subr.bf16.mxu0 %v1154
        %1397 = vmatpush1.bf16.msra.mxu0 %v1153
        %1398 = vmatprep.subr.bf16.mxu0 %v1150
        %1399 = vmatpush1.bf16.msra.mxu0 %v1149
        %1400 = vmatprep.subr.bf16.mxu0 %v1210
        %1401 = vmatpush2.bf16.msra.mxu0 %v1209
        %1402 = vmatprep.subr.bf16.mxu0 %v1206
        %1403 = vmatpush2.bf16.msra.mxu0 %v1205
        %1404 = vmatprep.subr.bf16.mxu0 %v1202
        %1405 = vmatpush2.bf16.msra.mxu0 %v1201
        %1406 = vmatprep.subr.bf16.mxu0 %v1198
        %1407 = vmatpush2.bf16.msra.mxu0 %v1197
        %1408 = vmatprep.subr.bf16.mxu0 %v1194
        %1409 = vmatpush2.bf16.msra.mxu0 %v1193
        %1410 = vmatprep.subr.bf16.mxu0 %v1190
        %1411 = vmatpush2.bf16.msra.mxu0 %v1189
        %1412 = vmatprep.subr.bf16.mxu0 %v1186
        %1413 = vmatpush2.bf16.msra.mxu0 %v1185
        %1414 = vmatprep.subr.bf16.mxu0 %v1182
        %1415 = vmatpush2.bf16.msra.mxu0 %v1181
        %1416 = vmatprep.mubr.bf16.mxu0 %v696
        %1417 = vmatmul.mubr.bf16.gmra.mxu0 %v695
        %v1418 = vpop.f32.mrf.mxu0
        %v1419 = vadd.f32 %v1376, %v1418
        %v1420 = vpop.f32.mrf.mxu0
        %v1421 = vadd.f32 %v1378, %v1420
        %v1422 = vpop.f32.mrf.mxu0
        %v1423 = vadd.f32 %v1380, %v1422
        %v1424 = vpop.f32.mrf.mxu0
        %v1425 = vadd.f32 %v1382, %v1424
        %1426 = vdwg.mxu0
        %1427 = vmatprep.subr.bf16.mxu0 %v1116
        %1428 = vmatpush1.bf16.msra.mxu0 %v1115
        %1429 = vmatprep.subr.bf16.mxu0 %v1112
        %1430 = vmatpush1.bf16.msra.mxu0 %v1111
        %1431 = vmatprep.subr.bf16.mxu0 %v1108
        %1432 = vmatpush1.bf16.msra.mxu0 %v1107
        %1433 = vmatprep.subr.bf16.mxu0 %v1104
        %1434 = vmatpush1.bf16.msra.mxu0 %v1103
        %1435 = vmatprep.subr.bf16.mxu0 %v1100
        %1436 = vmatpush1.bf16.msra.mxu0 %v1099
        %1437 = vmatprep.subr.bf16.mxu0 %v1096
        %1438 = vmatpush1.bf16.msra.mxu0 %v1095
        %1439 = vmatprep.subr.bf16.mxu0 %v1092
        %1440 = vmatpush1.bf16.msra.mxu0 %v1091
        %1441 = vmatprep.subr.bf16.mxu0 %v1088
        %1442 = vmatpush1.bf16.msra.mxu0 %v1087
        %1443 = vmatprep.subr.bf16.mxu0 %v1148
        %1444 = vmatpush2.bf16.msra.mxu0 %v1147
        %1445 = vmatprep.subr.bf16.mxu0 %v1144
        %1446 = vmatpush2.bf16.msra.mxu0 %v1143
        %1447 = vmatprep.subr.bf16.mxu0 %v1140
        %1448 = vmatpush2.bf16.msra.mxu0 %v1139
        %1449 = vmatprep.subr.bf16.mxu0 %v1136
        %1450 = vmatpush2.bf16.msra.mxu0 %v1135
        %1451 = vmatprep.subr.bf16.mxu0 %v1132
        %1452 = vmatpush2.bf16.msra.mxu0 %v1131
        %1453 = vmatprep.subr.bf16.mxu0 %v1128
        %1454 = vmatpush2.bf16.msra.mxu0 %v1127
        %1455 = vmatprep.subr.bf16.mxu0 %v1124
        %1456 = vmatpush2.bf16.msra.mxu0 %v1123
        %1457 = vmatprep.subr.bf16.mxu0 %v1120
        %1458 = vmatpush2.bf16.msra.mxu0 %v1119
        %1459 = vmatprep.mubr.bf16.mxu0 %v694
        %1460 = vmatmul.mubr.bf16.gmra.mxu0 %v693
        %v1461 = vpop.f32.mrf.mxu0
        %v1462 = vadd.f32 0.0, %v1461
        %v1463 = vpop.f32.mrf.mxu0
        %v1464 = vadd.f32 0.0, %v1463
        %v1465 = vpop.f32.mrf.mxu0
        %v1466 = vadd.f32 0.0, %v1465
        %v1467 = vpop.f32.mrf.mxu0
        %v1468 = vadd.f32 0.0, %v1467
        %1469 = vdwg.mxu0
        %1470 = vmatprep.subr.bf16.mxu0 %v1180
        %1471 = vmatpush1.bf16.msra.mxu0 %v1179
        %1472 = vmatprep.subr.bf16.mxu0 %v1176
        %1473 = vmatpush1.bf16.msra.mxu0 %v1175
        %1474 = vmatprep.subr.bf16.mxu0 %v1172
        %1475 = vmatpush1.bf16.msra.mxu0 %v1171
        %1476 = vmatprep.subr.bf16.mxu0 %v1168
        %1477 = vmatpush1.bf16.msra.mxu0 %v1167
        %1478 = vmatprep.subr.bf16.mxu0 %v1164
        %1479 = vmatpush1.bf16.msra.mxu0 %v1163
        %1480 = vmatprep.subr.bf16.mxu0 %v1160
        %1481 = vmatpush1.bf16.msra.mxu0 %v1159
        %1482 = vmatprep.subr.bf16.mxu0 %v1156
        %1483 = vmatpush1.bf16.msra.mxu0 %v1155
        %1484 = vmatprep.subr.bf16.mxu0 %v1152
        %1485 = vmatpush1.bf16.msra.mxu0 %v1151
        %1486 = vmatprep.subr.bf16.mxu0 %v1212
        %1487 = vmatpush2.bf16.msra.mxu0 %v1211
        %1488 = vmatprep.subr.bf16.mxu0 %v1208
        %1489 = vmatpush2.bf16.msra.mxu0 %v1207
        %1490 = vmatprep.subr.bf16.mxu0 %v1204
        %1491 = vmatpush2.bf16.msra.mxu0 %v1203
        %1492 = vmatprep.subr.bf16.mxu0 %v1200
        %1493 = vmatpush2.bf16.msra.mxu0 %v1199
        %1494 = vmatprep.subr.bf16.mxu0 %v1196
        %1495 = vmatpush2.bf16.msra.mxu0 %v1195
        %1496 = vmatprep.subr.bf16.mxu0 %v1192
        %1497 = vmatpush2.bf16.msra.mxu0 %v1191
        %1498 = vmatprep.subr.bf16.mxu0 %v1188
        %1499 = vmatpush2.bf16.msra.mxu0 %v1187
        %1500 = vmatprep.subr.bf16.mxu0 %v1184
        %1501 = vmatpush2.bf16.msra.mxu0 %v1183
        %1502 = vmatprep.mubr.bf16.mxu0 %v696
        %1503 = vmatmul.mubr.bf16.gmra.mxu0 %v695
        %v1504 = vpop.f32.mrf.mxu0
        %v1505 = vadd.f32 %v1462, %v1504
        %v1506 = vpop.f32.mrf.mxu0
        %v1507 = vadd.f32 %v1464, %v1506
        %v1508 = vpop.f32.mrf.mxu0
        %v1509 = vadd.f32 %v1466, %v1508
        %v1510 = vpop.f32.mrf.mxu0
        %v1511 = vadd.f32 %v1468, %v1510
        %1512 = vdwg.mxu0
        %v1513 = vadd.f32 %v541, %v1419
        %v1514 = vadd.f32 %v542, %v1421
        %v1515 = vadd.f32 %v543, %v1505
        %v1516 = vadd.f32 %v544, %v1507
        %v1517 = vadd.f32 %v545, %v1423
        %v1518 = vadd.f32 %v546, %v1425
        %v1519 = vadd.f32 %v547, %v1509
        %v1520 = vadd.f32 %v548, %v1511
        %1521 = vst [vmem:[%s507] sm:$0xff] %v1513
        %1522 = vst [vmem:[%s507 + $0x8] sm:$0xff] %v1514
        %1523 = vst [vmem:[%s507 + $0x10] sm:$0xff] %v1515
        %1524 = vst [vmem:[%s507 + $0x18] sm:$0xff] %v1516
        %1525 = vst [vmem:[%s507 + $0x20] sm:$0xff] %v1517
        %1526 = vst [vmem:[%s507 + $0x28] sm:$0xff] %v1518
        %1527 = vst [vmem:[%s507 + $0x30] sm:$0xff] %v1519
        %1528 = vst [vmem:[%s507 + $0x38] sm:$0xff] %v1520
        // Predicated region
        $region60: #{lipnet_forward.15} parent=50 // pred_check
          %p1529 = pneg %p529
        $region61: #{lipnet_forward.15} parent=50 // pred_check_branch
          %1531 = sbr.rel (%p1529) target = $region63
        $region62: #{lipnet_forward.15} parent=50 // pred_region
          %v1532 = vld [vmem:[%s507] sm:$0xff]
          %v1533 = vld [vmem:[%s507 + $0x8] sm:$0xff]
          %v1534 = vld [vmem:[%s507 + $0x10] sm:$0xff]
          %v1535 = vld [vmem:[%s507 + $0x18] sm:$0xff]
          %v1536 = vld [vmem:[%s507 + $0x20] sm:$0xff]
          %v1537 = vld [vmem:[%s507 + $0x28] sm:$0xff]
          %v1538 = vld [vmem:[%s507 + $0x30] sm:$0xff]
          %v1539 = vld [vmem:[%s507 + $0x38] sm:$0xff]
          %v1540 = vld [vmem:[%s525] sm:$0xf]
          %v1542 = vlaneseq
          %v1543 = vshrl.u32 %v1542, 7
          %v1544 = vsub.s32 0, %v1543
          %v1545 = vrot.slane %v1540, %v1544
          %v1546 = vlaneseq
          %v1547 = vshrl.u32 %v1546, 7
          %v1548 = vsub.s32 1, %v1547
          %v1549 = vrot.slane %v1540, %v1548
          %v1550 = vlaneseq
          %v1551 = vshrl.u32 %v1550, 7
          %v1552 = vsub.s32 2, %v1551
          %v1553 = vrot.slane %v1540, %v1552
          %v1554 = vlaneseq
          %v1555 = vshrl.u32 %v1554, 7
          %v1556 = vsub.s32 3, %v1555
          %v1557 = vrot.slane %v1540, %v1556
          %v1562 = vadd.f32 %v1532, %v1545
          %v1563 = vadd.f32 %v1533, %v1549
          %v1564 = vadd.f32 %v1534, %v1553
          %v1565 = vadd.f32 %v1535, %v1557
          %v1566 = vadd.f32 %v1536, %v1545
          %v1567 = vadd.f32 %v1537, %v1549
          %v1568 = vadd.f32 %v1538, %v1553
          %v1569 = vadd.f32 %v1539, %v1557
          %1570 = vst [vmem:[%s507] sm:$0xff] %v1562
          %1571 = vst [vmem:[%s507 + $0x8] sm:$0xff] %v1563
          %1572 = vst [vmem:[%s507 + $0x10] sm:$0xff] %v1564
          %1573 = vst [vmem:[%s507 + $0x18] sm:$0xff] %v1565
          %1574 = vst [vmem:[%s507 + $0x20] sm:$0xff] %v1566
          %1575 = vst [vmem:[%s507 + $0x28] sm:$0xff] %v1567
          %1576 = vst [vmem:[%s507 + $0x30] sm:$0xff] %v1568
          %1577 = vst [vmem:[%s507 + $0x38] sm:$0xff] %v1569
        $region63: #{lipnet_forward.15} parent=50 // pred_fallthru
          _
        %s1578 = sand.u32 %s125, 1
        %s1579 = sand.u32 %s125, 1
        %s1580 = smul.addr %s1579, 64
        %s1581 = scalar_lea.vmem [#allocation3], %s1580
        // Predicated region
        $region64: #{lipnet_forward.15} parent=50 // pred_check
          %p1582 = pneg %p135
        $region65: #{lipnet_forward.15} parent=50 // pred_check_branch
          %1584 = sbr.rel (%p1582) target = $region67
        $region66: #{lipnet_forward.15} parent=50 // pred_region
          %s1585 = smul.u32 2, %s19
          %s1586 = smul.u32 4, %s20
          %s1587 = smul.addr %s1585, 12
          %s1588 = sadd.s32 %s1586, %s1587
          %s1589 = smul.addr %s1588, 8
          %s1590 = scalar_lea.vmem %s3, %s1589
          // Predicated region
          $region68: #{lipnet_forward.15} parent=66 // pred_check
            _
          $region69: #{lipnet_forward.15} parent=66 // pred_check_branch
            %1592 = sbr.rel (0) target = $region71
          $region70: #{lipnet_forward.15} parent=66 // pred_region
            // Predicated region
            $region72: #{lipnet_forward.15} parent=70 // pred_check
              _
            $region73: #{lipnet_forward.15} parent=70 // pred_check_branch
              %1594 = sbr.rel (0) target = $region75
            $region74: #{lipnet_forward.15} parent=70 // pred_region
              loop: start=0, step=1, limit=1
              $region76: #{lipnet_forward.15} parent=74 // loop_pre_header
                _
              $region77: #{lipnet_forward.15} parent=74 // loop_header
                %s1596 = sphi 0, %s1600
                %p1597 = scmp.ge.s32.totalorder %s1596, 1
                %s1601 = sphi %s1581, %s1581
                %s1602 = sphi %s1590, %s1590
              $region78: #{lipnet_forward.15} parent=74 // loop_header_branch
                %1599 = sbr.rel (%p1597) target = $region82
              $region79: #{lipnet_forward.15} parent=74 // loop_body
                %v1603 = vld [vmem:[%s1601] sm:$0xff]
                %1604 = vst [vmem:[%s1602] sm:$0xff] %v1603
                %v1605 = vld [vmem:[%s1601 + $0x8] sm:$0xff]
                %1606 = vst [vmem:[%s1602 + $0x8] sm:$0xff] %v1605
                %v1607 = vld [vmem:[%s1601 + $0x10] sm:$0xff]
                %1608 = vst [vmem:[%s1602 + $0x10] sm:$0xff] %v1607
                %v1609 = vld [vmem:[%s1601 + $0x18] sm:$0xff]
                %1610 = vst [vmem:[%s1602 + $0x18] sm:$0xff] %v1609
                %v1611 = vld [vmem:[%s1601 + $0x20] sm:$0xff]
                %1612 = vst [vmem:[%s1602 + $0x60] sm:$0xff] %v1611
                %v1613 = vld [vmem:[%s1601 + $0x28] sm:$0xff]
                %1614 = vst [vmem:[%s1602 + $0x68] sm:$0xff] %v1613
                %v1615 = vld [vmem:[%s1601 + $0x30] sm:$0xff]
                %1616 = vst [vmem:[%s1602 + $0x70] sm:$0xff] %v1615
                %v1617 = vld [vmem:[%s1601 + $0x38] sm:$0xff]
                %1618 = vst [vmem:[%s1602 + $0x78] sm:$0xff] %v1617
              $region80: #{lipnet_forward.15} parent=74 // loop_footer
                %s1600 = sadd.s32 1, %s1596
              $region81: #{lipnet_forward.15} parent=74 // loop_footer_branch
                %1595 = sbr.rel target = $region77
              $region82: #{lipnet_forward.15} parent=74 // loop_exit
                _
            $region75: #{lipnet_forward.15} parent=70 // pred_fallthru
              _
            // Predicated region
            $region83: #{lipnet_forward.15} parent=70 // pred_check
              _
            $region84: #{lipnet_forward.15} parent=70 // pred_check_branch
              %1620 = sbr.rel target = $region86
            $region85: #{lipnet_forward.15} parent=70 // pred_region
              _
            $region86: #{lipnet_forward.15} parent=70 // pred_fallthru
              _
          $region71: #{lipnet_forward.15} parent=66 // pred_fallthru
            _
          %1621 = vnop
        $region67: #{lipnet_forward.15} parent=50 // pred_fallthru
          _
      $region51: #{lipnet_forward.15} parent=5 // pred_fallthru
        _
      %p1622 = scmp.le.s32.totalorder 2, %s9
      // Predicated region
      $region87: #{lipnet_forward.15} parent=5 // pred_check
        %p1623 = pneg %p1622
      $region88: #{lipnet_forward.15} parent=5 // pred_check_branch
        %1625 = sbr.rel (%p1623) target = $region90
      $region89: #{lipnet_forward.15} parent=5 // pred_region
        %s1626 = ssub.s32 %s9, 2
        // Predicated region
        $region91: #{lipnet_forward.15} parent=89 // pred_check
          %p1627 = pneg %p141
        $region92: #{lipnet_forward.15} parent=89 // pred_check_branch
          %1629 = sbr.rel (%p1627) target = $region94
        $region93: #{lipnet_forward.15} parent=89 // pred_region
          %s1630 = sand.u32 %s126, 1
          %s1631 = sand.u32 %s126, 1
          %s1632 = smul.addr %s1631, 64
          %s1633 = scalar_lea.vmem [#allocation3], %s1632
        $region94: #{lipnet_forward.15} parent=89 // pred_fallthru
          _
      $region90: #{lipnet_forward.15} parent=5 // pred_fallthru
        _
    $region6: #{lipnet_forward.15} parent=1 // loop_footer
      %s13 = sadd.s32 1, %s9
    $region7: #{lipnet_forward.15} parent=1 // loop_footer_branch
      %8 = sbr.rel target = $region3
    $region8: #{lipnet_forward.15} parent=1 // loop_exit
      _

// kernel: lipnet_forward.17
$region0: #{lipnet_forward.17}
  #allocation0 [shape = 'u32[]', space=smem, size = 0x4, offset = 0x4, fixed_abs, tag = 'smem constant byte address 0x4 - core index']
  #allocation1 [shape = 'u32[144,128]{1,0:T(1,128)}', space=vmem, size = 0x12000, scoped, tag = 'internal scratch']
  %s0 = inlined_call_operand.vmem [shape: bf16[16,512], index: 0, kind: input, shape index: {}]
  %s1 = inlined_call_operand.vmem [shape: bf16[512,128], index: 1, kind: input, shape index: {}]
  %s2 = inlined_call_operand.vmem [shape: f32[1,128], index: 2, kind: input, shape index: {}]
  %s3 = inlined_call_operand.vmem [shape: f32[16,128], index: 3, kind: output, shape index: {}]
  %s4 = sld [smem:[#allocation0]]
  $region30: #{lipnet_forward.17} parent=0
    _
  %s6 = ssub.s32 1, %s4
  %s7 = scalar_select 0, %s6, %s4
  // Predicated region
  $region2: #{lipnet_forward.17} parent=0 // pred_check
    _
  $region3: #{lipnet_forward.17} parent=0 // pred_check_branch
    %9 = sbr.rel (0) target = $region5
  $region4: #{lipnet_forward.17} parent=0 // pred_region
    _
  $region5: #{lipnet_forward.17} parent=0 // pred_fallthru
    _
  // Predicated region
  $region6: #{lipnet_forward.17} parent=0 // pred_check
    _
  $region7: #{lipnet_forward.17} parent=0 // pred_check_branch
    %11 = sbr.rel (0) target = $region9
  $region8: #{lipnet_forward.17} parent=0 // pred_region
    _
  $region9: #{lipnet_forward.17} parent=0 // pred_fallthru
    _
  // Predicated region
  $region10: #{lipnet_forward.17} parent=0 // pred_check
    _
  $region11: #{lipnet_forward.17} parent=0 // pred_check_branch
    %13 = sbr.rel (0) target = $region13
  $region12: #{lipnet_forward.17} parent=0 // pred_region
    _
  $region13: #{lipnet_forward.17} parent=0 // pred_fallthru
    _
  %p15 = scmp.eq.s32.totalorder 0, 0
  // Predicated region
  $region14: #{lipnet_forward.17} parent=0 // pred_check
    %p16 = pneg %p15
  $region15: #{lipnet_forward.17} parent=0 // pred_check_branch
    %18 = sbr.rel (%p16) target = $region17
  $region16: #{lipnet_forward.17} parent=0 // pred_region
    %19 = vst [vmem:[%s3] sm:$0xff] 0.0
    %20 = vst [vmem:[%s3 + $0x8] sm:$0xff] 0.0
  $region17: #{lipnet_forward.17} parent=0 // pred_fallthru
    _
  %v21 = vld [vmem:[%s3] sm:$0xff]
  %v22 = vld [vmem:[%s3 + $0x8] sm:$0xff]
  %v23 = vld [vmem:[%s0] sm:$0xff]
  %v24 = vld [vmem:[%s0 + $0x8] sm:$0xff]
  %v25 = vld [vmem:[%s0 + $0x10] sm:$0xff]
  %v26 = vld [vmem:[%s0 + $0x18] sm:$0xff]
  %v27 = vld [vmem:[%s1] sm:$0xf]
  %v28 = vld [vmem:[%s1 + $0x4] sm:$0xf]
  %v29 = vld [vmem:[%s1 + $0x8] sm:$0xf]
  %v30 = vld [vmem:[%s1 + $0xc] sm:$0xf]
  %v31 = vld [vmem:[%s1 + $0x10] sm:$0xf]
  %v32 = vld [vmem:[%s1 + $0x14] sm:$0xf]
  %v33 = vld [vmem:[%s1 + $0x18] sm:$0xf]
  %v34 = vld [vmem:[%s1 + $0x1c] sm:$0xf]
  %v35 = vld [vmem:[%s1 + $0x20] sm:$0xf]
  %v36 = vld [vmem:[%s1 + $0x24] sm:$0xf]
  %v37 = vld [vmem:[%s1 + $0x28] sm:$0xf]
  %v38 = vld [vmem:[%s1 + $0x2c] sm:$0xf]
  %v39 = vld [vmem:[%s1 + $0x30] sm:$0xf]
  %v40 = vld [vmem:[%s1 + $0x34] sm:$0xf]
  %v41 = vld [vmem:[%s1 + $0x38] sm:$0xf]
  %v42 = vld [vmem:[%s1 + $0x3c] sm:$0xf]
  %v43 = vld [vmem:[%s1 + $0x40] sm:$0xf]
  %v44 = vld [vmem:[%s1 + $0x44] sm:$0xf]
  %v45 = vld [vmem:[%s1 + $0x48] sm:$0xf]
  %v46 = vld [vmem:[%s1 + $0x4c] sm:$0xf]
  %v47 = vld [vmem:[%s1 + $0x50] sm:$0xf]
  %v48 = vld [vmem:[%s1 + $0x54] sm:$0xf]
  %v49 = vld [vmem:[%s1 + $0x58] sm:$0xf]
  %v50 = vld [vmem:[%s1 + $0x5c] sm:$0xf]
  %v51 = vld [vmem:[%s1 + $0x60] sm:$0xf]
  %v52 = vld [vmem:[%s1 + $0x64] sm:$0xf]
  %v53 = vld [vmem:[%s1 + $0x68] sm:$0xf]
  %v54 = vld [vmem:[%s1 + $0x6c] sm:$0xf]
  %v55 = vld [vmem:[%s1 + $0x70] sm:$0xf]
  %v56 = vld [vmem:[%s1 + $0x74] sm:$0xf]
  %v57 = vld [vmem:[%s1 + $0x78] sm:$0xf]
  %v58 = vld [vmem:[%s1 + $0x7c] sm:$0xf]
  %v59 = vld [vmem:[%s1 + $0x80] sm:$0xf]
  %v60 = vld [vmem:[%s1 + $0x84] sm:$0xf]
  %v61 = vld [vmem:[%s1 + $0x88] sm:$0xf]
  %v62 = vld [vmem:[%s1 + $0x8c] sm:$0xf]
  %v63 = vld [vmem:[%s1 + $0x90] sm:$0xf]
  %v64 = vld [vmem:[%s1 + $0x94] sm:$0xf]
  %v65 = vld [vmem:[%s1 + $0x98] sm:$0xf]
  %v66 = vld [vmem:[%s1 + $0x9c] sm:$0xf]
  %v67 = vld [vmem:[%s1 + $0xa0] sm:$0xf]
  %v68 = vld [vmem:[%s1 + $0xa4] sm:$0xf]
  %v69 = vld [vmem:[%s1 + $0xa8] sm:$0xf]
  %v70 = vld [vmem:[%s1 + $0xac] sm:$0xf]
  %v71 = vld [vmem:[%s1 + $0xb0] sm:$0xf]
  %v72 = vld [vmem:[%s1 + $0xb4] sm:$0xf]
  %v73 = vld [vmem:[%s1 + $0xb8] sm:$0xf]
  %v74 = vld [vmem:[%s1 + $0xbc] sm:$0xf]
  %v75 = vld [vmem:[%s1 + $0xc0] sm:$0xf]
  %v76 = vld [vmem:[%s1 + $0xc4] sm:$0xf]
  %v77 = vld [vmem:[%s1 + $0xc8] sm:$0xf]
  %v78 = vld [vmem:[%s1 + $0xcc] sm:$0xf]
  %v79 = vld [vmem:[%s1 + $0xd0] sm:$0xf]
  %v80 = vld [vmem:[%s1 + $0xd4] sm:$0xf]
  %v81 = vld [vmem:[%s1 + $0xd8] sm:$0xf]
  %v82 = vld [vmem:[%s1 + $0xdc] sm:$0xf]
  %v83 = vld [vmem:[%s1 + $0xe0] sm:$0xf]
  %v84 = vld [vmem:[%s1 + $0xe4] sm:$0xf]
  %v85 = vld [vmem:[%s1 + $0xe8] sm:$0xf]
  %v86 = vld [vmem:[%s1 + $0xec] sm:$0xf]
  %v87 = vld [vmem:[%s1 + $0xf0] sm:$0xf]
  %v88 = vld [vmem:[%s1 + $0xf4] sm:$0xf]
  %v89 = vld [vmem:[%s1 + $0xf8] sm:$0xf]
  %v90 = vld [vmem:[%s1 + $0xfc] sm:$0xf]
  %v95 = vunpack.c.l.b16 %v23
  %v96 = vunpack.c.h.b16 %v23
  %v97 = vunpack.c.l.b16 %v24
  %v98 = vunpack.c.h.b16 %v24
  %v99 = vunpack.c.l.b16 %v25
  %v100 = vunpack.c.h.b16 %v25
  %v101 = vunpack.c.l.b16 %v26
  %v102 = vunpack.c.h.b16 %v26
  %v103 = vpack.c.b16 %v99, %v95
  %v104 = vpack.c.b16 %v100, %v96
  %v105 = vpack.c.b16 %v101, %v97
  %v106 = vpack.c.b16 %v102, %v98
  %v175 = vunpack.c.l.b16 %v27
  %v176 = vunpack.c.l.b16 %v28
  %v177 = vunpack.c.l.b16 %v29
  %v178 = vunpack.c.l.b16 %v30
  %v179 = vunpack.c.l.b16 %v31
  %v180 = vunpack.c.l.b16 %v32
  %v181 = vunpack.c.l.b16 %v33
  %v182 = vunpack.c.l.b16 %v34
  %v183 = vunpack.c.l.b16 %v35
  %v184 = vunpack.c.l.b16 %v36
  %v185 = vunpack.c.l.b16 %v37
  %v186 = vunpack.c.l.b16 %v38
  %v187 = vunpack.c.l.b16 %v39
  %v188 = vunpack.c.l.b16 %v40
  %v189 = vunpack.c.l.b16 %v41
  %v190 = vunpack.c.l.b16 %v42
  %v191 = vunpack.c.l.b16 %v43
  %v192 = vunpack.c.l.b16 %v44
  %v193 = vunpack.c.l.b16 %v45
  %v194 = vunpack.c.l.b16 %v46
  %v195 = vunpack.c.l.b16 %v47
  %v196 = vunpack.c.l.b16 %v48
  %v197 = vunpack.c.l.b16 %v49
  %v198 = vunpack.c.l.b16 %v50
  %v199 = vunpack.c.l.b16 %v51
  %v200 = vunpack.c.l.b16 %v52
  %v201 = vunpack.c.l.b16 %v53
  %v202 = vunpack.c.l.b16 %v54
  %v203 = vunpack.c.l.b16 %v55
  %v204 = vunpack.c.l.b16 %v56
  %v205 = vunpack.c.l.b16 %v57
  %v206 = vunpack.c.l.b16 %v58
  %v207 = vunpack.c.l.b16 %v59
  %v208 = vunpack.c.l.b16 %v60
  %v209 = vunpack.c.l.b16 %v61
  %v210 = vunpack.c.l.b16 %v62
  %v211 = vunpack.c.l.b16 %v63
  %v212 = vunpack.c.l.b16 %v64
  %v213 = vunpack.c.l.b16 %v65
  %v214 = vunpack.c.l.b16 %v66
  %v215 = vunpack.c.l.b16 %v67
  %v216 = vunpack.c.l.b16 %v68
  %v217 = vunpack.c.l.b16 %v69
  %v218 = vunpack.c.l.b16 %v70
  %v219 = vunpack.c.l.b16 %v71
  %v220 = vunpack.c.l.b16 %v72
  %v221 = vunpack.c.l.b16 %v73
  %v222 = vunpack.c.l.b16 %v74
  %v223 = vunpack.c.l.b16 %v75
  %v224 = vunpack.c.l.b16 %v76
  %v225 = vunpack.c.l.b16 %v77
  %v226 = vunpack.c.l.b16 %v78
  %v227 = vunpack.c.l.b16 %v79
  %v228 = vunpack.c.l.b16 %v80
  %v229 = vunpack.c.l.b16 %v81
  %v230 = vunpack.c.l.b16 %v82
  %v231 = vunpack.c.l.b16 %v83
  %v232 = vunpack.c.l.b16 %v84
  %v233 = vunpack.c.l.b16 %v85
  %v234 = vunpack.c.l.b16 %v86
  %v235 = vunpack.c.l.b16 %v87
  %v236 = vunpack.c.l.b16 %v88
  %v237 = vunpack.c.l.b16 %v89
  %v238 = vunpack.c.l.b16 %v90
  %v239 = vpack.c.b16 %v176, %v175
  %v240 = vpack.c.b16 %v178, %v177
  %v241 = vpack.c.b16 %v180, %v179
  %v242 = vpack.c.b16 %v182, %v181
  %v243 = vpack.c.b16 %v184, %v183
  %v244 = vpack.c.b16 %v186, %v185
  %v245 = vpack.c.b16 %v188, %v187
  %v246 = vpack.c.b16 %v190, %v189
  %v247 = vpack.c.b16 %v192, %v191
  %v248 = vpack.c.b16 %v194, %v193
  %v249 = vpack.c.b16 %v196, %v195
  %v250 = vpack.c.b16 %v198, %v197
  %v251 = vpack.c.b16 %v200, %v199
  %v252 = vpack.c.b16 %v202, %v201
  %v253 = vpack.c.b16 %v204, %v203
  %v254 = vpack.c.b16 %v206, %v205
  %v255 = vpack.c.b16 %v208, %v207
  %v256 = vpack.c.b16 %v210, %v209
  %v257 = vpack.c.b16 %v212, %v211
  %v258 = vpack.c.b16 %v214, %v213
  %v259 = vpack.c.b16 %v216, %v215
  %v260 = vpack.c.b16 %v218, %v217
  %v261 = vpack.c.b16 %v220, %v219
  %v262 = vpack.c.b16 %v222, %v221
  %v263 = vpack.c.b16 %v224, %v223
  %v264 = vpack.c.b16 %v226, %v225
  %v265 = vpack.c.b16 %v228, %v227
  %v266 = vpack.c.b16 %v230, %v229
  %v267 = vpack.c.b16 %v232, %v231
  %v268 = vpack.c.b16 %v234, %v233
  %v269 = vpack.c.b16 %v236, %v235
  %v270 = vpack.c.b16 %v238, %v237
  %303 = vmatprep.subr.bf16.mxu0 0
  %304 = vmatpush1.bf16.msra.mxu0 %v246
  %305 = vmatprep.subr.bf16.mxu0 0
  %306 = vmatpush1.bf16.msra.mxu0 %v245
  %307 = vmatprep.subr.bf16.mxu0 0
  %308 = vmatpush1.bf16.msra.mxu0 %v244
  %309 = vmatprep.subr.bf16.mxu0 0
  %310 = vmatpush1.bf16.msra.mxu0 %v243
  %311 = vmatprep.subr.bf16.mxu0 0
  %312 = vmatpush1.bf16.msra.mxu0 %v242
  %313 = vmatprep.subr.bf16.mxu0 0
  %314 = vmatpush1.bf16.msra.mxu0 %v241
  %315 = vmatprep.subr.bf16.mxu0 0
  %316 = vmatpush1.bf16.msra.mxu0 %v240
  %317 = vmatprep.subr.bf16.mxu0 0
  %318 = vmatpush1.bf16.msra.mxu0 %v239
  %319 = vmatprep.subr.bf16.mxu0 0
  %320 = vmatpush2.bf16.msra.mxu0 %v254
  %321 = vmatprep.subr.bf16.mxu0 0
  %322 = vmatpush2.bf16.msra.mxu0 %v253
  %323 = vmatprep.subr.bf16.mxu0 0
  %324 = vmatpush2.bf16.msra.mxu0 %v252
  %325 = vmatprep.subr.bf16.mxu0 0
  %326 = vmatpush2.bf16.msra.mxu0 %v251
  %327 = vmatprep.subr.bf16.mxu0 0
  %328 = vmatpush2.bf16.msra.mxu0 %v250
  %329 = vmatprep.subr.bf16.mxu0 0
  %330 = vmatpush2.bf16.msra.mxu0 %v249
  %331 = vmatprep.subr.bf16.mxu0 0
  %332 = vmatpush2.bf16.msra.mxu0 %v248
  %333 = vmatprep.subr.bf16.mxu0 0
  %334 = vmatpush2.bf16.msra.mxu0 %v247
  %335 = vmatprep.mubr.bf16.mxu0 %v104
  %336 = vmatmul.mubr.bf16.gmra.mxu0 %v103
  %v337 = vpop.f32.mrf.mxu0
  %v338 = vadd.f32 0.0, %v337
  %v339 = vpop.f32.mrf.mxu0
  %v340 = vpop.f32.mrf.mxu0
  %v341 = vadd.f32 0.0, %v340
  %v342 = vpop.f32.mrf.mxu0
  %343 = vdwg.mxu0
  %344 = vmatprep.subr.bf16.mxu0 0
  %345 = vmatpush1.bf16.msra.mxu0 %v262
  %346 = vmatprep.subr.bf16.mxu0 0
  %347 = vmatpush1.bf16.msra.mxu0 %v261
  %348 = vmatprep.subr.bf16.mxu0 0
  %349 = vmatpush1.bf16.msra.mxu0 %v260
  %350 = vmatprep.subr.bf16.mxu0 0
  %351 = vmatpush1.bf16.msra.mxu0 %v259
  %352 = vmatprep.subr.bf16.mxu0 0
  %353 = vmatpush1.bf16.msra.mxu0 %v258
  %354 = vmatprep.subr.bf16.mxu0 0
  %355 = vmatpush1.bf16.msra.mxu0 %v257
  %356 = vmatprep.subr.bf16.mxu0 0
  %357 = vmatpush1.bf16.msra.mxu0 %v256
  %358 = vmatprep.subr.bf16.mxu0 0
  %359 = vmatpush1.bf16.msra.mxu0 %v255
  %360 = vmatprep.subr.bf16.mxu0 0
  %361 = vmatpush2.bf16.msra.mxu0 %v270
  %362 = vmatprep.subr.bf16.mxu0 0
  %363 = vmatpush2.bf16.msra.mxu0 %v269
  %364 = vmatprep.subr.bf16.mxu0 0
  %365 = vmatpush2.bf16.msra.mxu0 %v268
  %366 = vmatprep.subr.bf16.mxu0 0
  %367 = vmatpush2.bf16.msra.mxu0 %v267
  %368 = vmatprep.subr.bf16.mxu0 0
  %369 = vmatpush2.bf16.msra.mxu0 %v266
  %370 = vmatprep.subr.bf16.mxu0 0
  %371 = vmatpush2.bf16.msra.mxu0 %v265
  %372 = vmatprep.subr.bf16.mxu0 0
  %373 = vmatpush2.bf16.msra.mxu0 %v264
  %374 = vmatprep.subr.bf16.mxu0 0
  %375 = vmatpush2.bf16.msra.mxu0 %v263
  %376 = vmatprep.mubr.bf16.mxu0 %v106
  %377 = vmatmul.mubr.bf16.gmra.mxu0 %v105
  %v378 = vpop.f32.mrf.mxu0
  %v379 = vadd.f32 %v338, %v378
  %v380 = vpop.f32.mrf.mxu0
  %v381 = vpop.f32.mrf.mxu0
  %v382 = vadd.f32 %v341, %v381
  %v383 = vpop.f32.mrf.mxu0
  %384 = vdwg.mxu0
  %v385 = vadd.f32 %v21, %v379
  %v386 = vadd.f32 %v22, %v382
  %387 = vst [vmem:[%s3] sm:$0xff] %v385
  %388 = vst [vmem:[%s3 + $0x8] sm:$0xff] %v386
  // Predicated region
  $region18: #{lipnet_forward.17} parent=0 // pred_check
    %p389 = pneg %p15
  $region19: #{lipnet_forward.17} parent=0 // pred_check_branch
    %391 = sbr.rel (%p389) target = $region21
  $region20: #{lipnet_forward.17} parent=0 // pred_region
    %v392 = vld [vmem:[%s3] sm:$0xff]
    %v393 = vld [vmem:[%s3 + $0x8] sm:$0xff]
    %v394 = vld [vmem:[%s2] sm:$0x1]
    %v396 = vlaneseq
    %v397 = vshrl.u32 %v396, 7
    %v398 = vsub.s32 0, %v397
    %v399 = vrot.slane %v394, %v398
    %v401 = vadd.f32 %v392, %v399
    %v402 = vadd.f32 %v393, %v399
    %403 = vst [vmem:[%s3] sm:$0xff] %v401
    %404 = vst [vmem:[%s3 + $0x8] sm:$0xff] %v402
  $region21: #{lipnet_forward.17} parent=0 // pred_fallthru
    _
  // Predicated region
  $region22: #{lipnet_forward.17} parent=0 // pred_check
    _
  $region23: #{lipnet_forward.17} parent=0 // pred_check_branch
    %406 = sbr.rel (0) target = $region25
  $region24: #{lipnet_forward.17} parent=0 // pred_region
    _
  $region25: #{lipnet_forward.17} parent=0 // pred_fallthru
    _
  // Predicated region
  $region26: #{lipnet_forward.17} parent=0 // pred_check
    _
  $region27: #{lipnet_forward.17} parent=0 // pred_check_branch
    %408 = sbr.rel (0) target = $region29
  $region28: #{lipnet_forward.17} parent=0 // pred_region
    _
  $region29: #{lipnet_forward.17} parent=0 // pred_fallthru
    _

</llo_original>
